<compile_context>
chip_gen: v7x
topology: tpu7x:2x2x1
jax: 0.10.0
libtpu: 0.0.40
codegen_flags: <defaults>
</compile_context>

<pallas_src>
import jax
import jax.numpy as jnp
from jax.experimental import pallas as pl
from jax.experimental.pallas import tpu as pltpu


# --------------------------------------------------------------------- kernel

def _lenet_kernel(x_ref, w1c_ref, b1c_ref, w2c_ref, b2c_ref, s2_ref,
                  wf1_ref, bf1_ref, wf2_ref, bf2_ref, wf3_ref, bf3_ref,
                  wf4_ref, bf4_ref, o_ref,
                  im1_ref, im2_ref, hflat_ref):
    f32 = jnp.float32
    B = x_ref.shape[0]

    # One-time zero fill: the padded sublane rows of each 4-/8-row tap block
    # are never overwritten and must contribute exact zeros to the matmuls
    # (stale VMEM could otherwise hold NaN bit patterns).
    im1_ref[...] = jnp.zeros_like(im1_ref)
    im2_ref[...] = jnp.zeros_like(im2_ref)

    for b in range(B):  # B is small & static -> unrolled.
        # ---- conv1 im2col: flat (3, 1024) image -> (100, 892) scratch; tap
        #      t = 5*kh + kw occupies sublanes [4t, 4t+3), lane offset 32*kh+kw.
        for kh in range(5):
            for kw in range(5):
                t = 5 * kh + kw
                off = 32 * kh + kw
                im1_ref[4 * t:4 * t + 3, :] = x_ref[b, :, off:off + 892]
        # conv1 + bias + ReLU as ONE (6,100)@(100,892) MXU matmul.  Output
        # column q = 32*oh + ow; columns with ow >= 28 hold finite wrapped
        # image data (never NaN) and are never selected downstream.
        y1 = jnp.maximum(
            jnp.dot(w1c_ref[...], im1_ref[...], preferred_element_type=f32)
            + b1c_ref[...], 0.0)

        # ---- maxpool1 (2x2/2), kept SPARSE in the 32-wide layout: pooled
        #      pixel (i, j) lives at column 64*i + 2*j of m1 (6, 859).
        m1 = jnp.maximum(jnp.maximum(y1[:, 0:859], y1[:, 1:860]),
                         jnp.maximum(y1[:, 32:891], y1[:, 33:892]))

        # ---- conv2 im2col straight off the sparse pool1 map (no compaction
        #      matmul): tap (kh, kw) reads at offset 64*kh + 2*kw, producing
        #      sparse output columns q2 = 64*oh2 + 2*ow2 (595 wide).
        for kh in range(5):
            for kw in range(5):
                t = 5 * kh + kw
                off = 64 * kh + 2 * kw
                im2_ref[8 * t:8 * t + 6, :] = m1[:, off:off + 595]
        y2 = jnp.maximum(
            jnp.dot(w2c_ref[...], im2_ref[...], preferred_element_type=f32)
            + b2c_ref[...], 0.0)

        # ---- maxpool2 on the sparse conv2 map: pooled (i, j) at 128*i + 4*j.
        h2s = jnp.maximum(jnp.maximum(y2[:, 0:529], y2[:, 2:531]),
                          jnp.maximum(y2[:, 64:593], y2[:, 66:595]))

        # ---- compact the 25 valid pooled columns (128*i + 4*j -> 5*i + j)
        #      with a tiny 0/1 matmul, then lane-pack the 16 channel rows into
        #      PyTorch NCHW flatten order (c*25 + 5*i + j) so fc1 is a single
        #      batched matmul against the UNMODIFIED (400, 120) weight.
        h2c = jnp.dot(h2s, s2_ref[...], preferred_element_type=f32)  # (16, 25)
        for c in range(16):
            hflat_ref[b:b + 1, 25 * c:25 * c + 25] = h2c[c:c + 1, :]

    # ---- fully-connected tail, batched over the whole batch (M = B).
    h = jnp.maximum(
        jnp.dot(hflat_ref[...], wf1_ref[...], preferred_element_type=f32)
        + bf1_ref[...], 0.0)
    h = jnp.maximum(
        jnp.dot(h, wf2_ref[...], preferred_element_type=f32) + bf2_ref[...],
        0.0)
    h = jnp.maximum(
        jnp.dot(h, wf3_ref[...], preferred_element_type=f32) + bf3_ref[...],
        0.0)
    o_ref[...] = (jnp.dot(h, wf4_ref[...], preferred_element_type=f32)
                  + bf4_ref[...])


# -------------------------------------------------------------------- wrapper

def prepare_params(p):
    """One-time repack of LeNet params into kernel-ready layouts.

    Hoisted out of the per-call path (perf review item #1): call once, reuse
    the returned arrays for every forward pass.
    """
    f32 = jnp.float32
    # Conv weights folded to (Cout, 25 taps * padded Cin); K index = pad*t + ci.
    w1c = jnp.transpose(p["conv1_w"], (0, 2, 3, 1)).reshape(6, 25, 3)
    w1c = jnp.pad(w1c, ((0, 0), (0, 0), (0, 1))).reshape(6, 100).astype(f32)
    w2c = jnp.transpose(p["conv2_w"], (0, 2, 3, 1)).reshape(16, 25, 6)
    w2c = jnp.pad(w2c, ((0, 0), (0, 0), (0, 2))).reshape(16, 200).astype(f32)
    b1c = p["conv1_b"].reshape(6, 1).astype(f32)
    b2c = p["conv2_b"].reshape(16, 1).astype(f32)
    # pool2 compaction: sparse column 128*i + 4*j -> dense column 5*i + j.
    ij = jnp.arange(5)
    src = (128 * ij[:, None] + 4 * ij[None, :]).reshape(25)
    s2 = jnp.zeros((529, 25), f32).at[src, jnp.arange(25)].set(1.0)
    return dict(w1c=w1c, b1c=b1c, w2c=w2c, b2c=b2c, s2=s2,
                w1=p["w1"].astype(f32), b1=p["b1"].astype(f32),
                w2=p["w2"].astype(f32), b2=p["b2"].astype(f32),
                w3=p["w3"].astype(f32), b3=p["b3"].astype(f32),
                w4=p["w4"].astype(f32), b4=p["b4"].astype(f32))


def lenet_forward(x, pp):
    """x: (B, 3, 32, 32) float32, pp: prepare_params(...) -> (B, num_class)."""
    B = x.shape[0]
    num_class = pp["w4"].shape[1]
    x_flat = x.reshape(B, 3, 1024).astype(jnp.float32)

    in_specs = [pl.BlockSpec(memory_space=pltpu.MemorySpace.VMEM)
                for _ in range(14)]
    return pl.pallas_call(
        _lenet_kernel,
        out_shape=jax.ShapeDtypeStruct((B, num_class), jnp.float32),
        in_specs=in_specs,
        out_specs=pl.BlockSpec(memory_space=pltpu.MemorySpace.VMEM),
        scratch_shapes=[
            pltpu.VMEM((100, 892), jnp.float32),   # conv1 im2col (K-folded)
            pltpu.VMEM((200, 595), jnp.float32),   # conv2 im2col (sparse N)
            pltpu.VMEM((B, 400), jnp.float32),     # flattened fc1 input
        ],
    )(x_flat, pp["w1c"], pp["b1c"], pp["w2c"], pp["b2c"], pp["s2"],
      pp["w1"], pp["b1"], pp["w2"], pp["b2"],
      pp["w3"], pp["b3"], pp["w4"], pp["b4"])


# ---------------------------------------------------------------- params / ref

def init_params(key, num_class):
    """Deterministic init mimicking PyTorch default uniform(-1/sqrt(fan_in), +)."""
    def uni(k, shape, fan_in):
        bound = 1.0 / jnp.sqrt(float(fan_in))
        return jax.random.uniform(k, shape, jnp.float32, -bound, bound)

    ks = jax.random.split(key, 12)
    p = {}
    p["conv1_w"] = uni(ks[0], (6, 3, 5, 5), 3 * 5 * 5)
    p["conv1_b"] = uni(ks[1], (6,), 3 * 5 * 5)
    p["conv2_w"] = uni(ks[2], (16, 6, 5, 5), 6 * 5 * 5)
    p["conv2_b"] = uni(ks[3], (16,), 6 * 5 * 5)
    # Linear weights stored as (in, out) (PyTorch stores (out, in)).
    p["w1"] = uni(ks[4], (400, 120), 400)
    p["b1"] = uni(ks[5], (1, 120), 400)
    p["w2"] = uni(ks[6], (120, 84), 120)
    p["b2"] = uni(ks[7], (1, 84), 120)
    p["w3"] = uni(ks[8], (84, 10), 84)
    p["b3"] = uni(ks[9], (1, 10), 84)
    p["w4"] = uni(ks[10], (10, num_class), 10)
    p["b4"] = uni(ks[11], (1, num_class), 10)
    return p


def lenet_reference(x, p):
    """Pure-JAX reference (HIGHEST precision so the check can be tight)."""
    hi = jax.lax.Precision.HIGHEST

    def conv(x, w, b):
        y = jax.lax.conv_general_dilated(
            x, w, window_strides=(1, 1), padding="VALID",
            dimension_numbers=("NCHW", "OIHW", "NCHW"), precision=hi)
        return jnp.maximum(y + b[None, :, None, None], 0.0)

    def pool(x):
        return jax.lax.reduce_window(
            x, -jnp.inf, jax.lax.max,
            window_dimensions=(1, 1, 2, 2), window_strides=(1, 1, 2, 2),
            padding="VALID")

    x = pool(conv(x, p["conv1_w"], p["conv1_b"]))
    x = pool(conv(x, p["conv2_w"], p["conv2_b"]))
    x = x.reshape(x.shape[0], -1)
    x = jnp.maximum(jnp.dot(x, p["w1"], precision=hi) + p["b1"], 0.0)
    x = jnp.maximum(jnp.dot(x, p["w2"], precision=hi) + p["b2"], 0.0)
    x = jnp.maximum(jnp.dot(x, p["w3"], precision=hi) + p["b3"], 0.0)
    return jnp.dot(x, p["w4"], precision=hi) + p["b4"]


# ------------------------------------------------------------------------ main

if __name__ == "__main__":
    num_class = 5
    key = jax.random.PRNGKey(0)
    k_x, k_p = jax.random.split(key)

    # LeNet requires 32x32 spatial input so the flatten is 16*5*5 = 400.
    x = jax.random.normal(k_x, (2, 3, 32, 32), jnp.float32)
    params = init_params(k_p, num_class)
    packed = prepare_params(params)      # one-time, outside the jitted path

    fwd = jax.jit(lenet_forward)
    out = jax.block_until_ready(fwd(x, packed))
    ref = jax.block_until_ready(lenet_reference(x, params))

    assert out.shape == (2, num_class), out.shape
    # All-f32 path -> 5x tighter check than before (2e-3 vs 1e-2); the
    # remaining slack covers accumulation-order differences between the MXU
    # matmul decomposition and XLA's conv/dot lowering.
    assert jnp.allclose(out, ref, rtol=2e-3, atol=2e-3), (
        "mismatch vs reference: max abs err "
        f"{float(jnp.max(jnp.abs(out - ref)))}")

    print("KERNEL_OK")
</pallas_src>

<mosaic_0001>
module attributes {stable_mosaic.version = 11 : i64} {
  func.func @_lenet_kernel(%arg0: memref<2x3x1024xf32, #tpu.memory_space<vmem>>, %arg1: memref<6x100xf32, #tpu.memory_space<vmem>>, %arg2: memref<6x1xf32, #tpu.memory_space<vmem>>, %arg3: memref<16x200xf32, #tpu.memory_space<vmem>>, %arg4: memref<16x1xf32, #tpu.memory_space<vmem>>, %arg5: memref<529x25xf32, #tpu.memory_space<vmem>>, %arg6: memref<400x120xf32, #tpu.memory_space<vmem>>, %arg7: memref<1x120xf32, #tpu.memory_space<vmem>>, %arg8: memref<120x84xf32, #tpu.memory_space<vmem>>, %arg9: memref<1x84xf32, #tpu.memory_space<vmem>>, %arg10: memref<84x10xf32, #tpu.memory_space<vmem>>, %arg11: memref<1x10xf32, #tpu.memory_space<vmem>>, %arg12: memref<10x5xf32, #tpu.memory_space<vmem>>, %arg13: memref<1x5xf32, #tpu.memory_space<vmem>>, %arg14: memref<2x5xf32, #tpu.memory_space<vmem>>, %arg15: memref<100x892xf32, #tpu.memory_space<vmem>>, %arg16: memref<200x595xf32, #tpu.memory_space<vmem>>, %arg17: memref<2x400xf32, #tpu.memory_space<vmem>>) attributes {dimension_semantics = [], scalar_prefetch = 0 : i64, scratch_operands = 3 : i64, tpu.core_type = #tpu.core_type<tc>} {
    %cst = arith.constant 0.000000e+00 : f32
    %0 = vector.broadcast %cst : f32 to vector<100x892xf32>
    %c0 = arith.constant 0 : index
    %c0_0 = arith.constant 0 : index
    %1 = vector.load %arg15[%c0, %c0_0] : memref<100x892xf32, #tpu.memory_space<vmem>>, vector<100x892xf32>
    tpu.vector_store %arg15[%c0, %c0_0], %0 {strides = array<i32>} : memref<100x892xf32, #tpu.memory_space<vmem>>, vector<100x892xf32>,
    %cst_1 = arith.constant 0.000000e+00 : f32
    %2 = vector.broadcast %cst_1 : f32 to vector<200x595xf32>
    %c0_2 = arith.constant 0 : index
    %c0_3 = arith.constant 0 : index
    %3 = vector.load %arg16[%c0_2, %c0_3] : memref<200x595xf32, #tpu.memory_space<vmem>>, vector<200x595xf32>
    tpu.vector_store %arg16[%c0_2, %c0_3], %2 {strides = array<i32>} : memref<200x595xf32, #tpu.memory_space<vmem>>, vector<200x595xf32>,
    %c0_4 = arith.constant 0 : index
    %c0_5 = arith.constant 0 : index
    %c0_6 = arith.constant 0 : index
    %4 = vector.load %arg0[%c0_4, %c0_5, %c0_6] : memref<2x3x1024xf32, #tpu.memory_space<vmem>>, vector<1x3x892xf32>
    %5 = vector.shape_cast %4 : vector<1x3x892xf32> to vector<3x892xf32>
    %c0_7 = arith.constant 0 : index
    %c0_8 = arith.constant 0 : index
    %6 = vector.load %arg15[%c0_7, %c0_8] : memref<100x892xf32, #tpu.memory_space<vmem>>, vector<3x892xf32>
    tpu.vector_store %arg15[%c0_7, %c0_8], %5 {strides = array<i32>} : memref<100x892xf32, #tpu.memory_space<vmem>>, vector<3x892xf32>,
    %c0_9 = arith.constant 0 : index
    %c0_10 = arith.constant 0 : index
    %c1 = arith.constant 1 : index
    %7 = vector.load %arg0[%c0_9, %c0_10, %c1] : memref<2x3x1024xf32, #tpu.memory_space<vmem>>, vector<1x3x892xf32>
    %8 = vector.shape_cast %7 : vector<1x3x892xf32> to vector<3x892xf32>
    %c4 = arith.constant 4 : index
    %c0_11 = arith.constant 0 : index
    %9 = vector.load %arg15[%c4, %c0_11] : memref<100x892xf32, #tpu.memory_space<vmem>>, vector<3x892xf32>
    tpu.vector_store %arg15[%c4, %c0_11], %8 {strides = array<i32>} : memref<100x892xf32, #tpu.memory_space<vmem>>, vector<3x892xf32>,
    %c0_12 = arith.constant 0 : index
    %c0_13 = arith.constant 0 : index
    %c2 = arith.constant 2 : index
    %10 = vector.load %arg0[%c0_12, %c0_13, %c2] : memref<2x3x1024xf32, #tpu.memory_space<vmem>>, vector<1x3x892xf32>
    %11 = vector.shape_cast %10 : vector<1x3x892xf32> to vector<3x892xf32>
    %c8 = arith.constant 8 : index
    %c0_14 = arith.constant 0 : index
    %12 = vector.load %arg15[%c8, %c0_14] : memref<100x892xf32, #tpu.memory_space<vmem>>, vector<3x892xf32>
    tpu.vector_store %arg15[%c8, %c0_14], %11 {strides = array<i32>} : memref<100x892xf32, #tpu.memory_space<vmem>>, vector<3x892xf32>,
    %c0_15 = arith.constant 0 : index
    %c0_16 = arith.constant 0 : index
    %c3 = arith.constant 3 : index
    %13 = vector.load %arg0[%c0_15, %c0_16, %c3] : memref<2x3x1024xf32, #tpu.memory_space<vmem>>, vector<1x3x892xf32>
    %14 = vector.shape_cast %13 : vector<1x3x892xf32> to vector<3x892xf32>
    %c12 = arith.constant 12 : index
    %c0_17 = arith.constant 0 : index
    %15 = vector.load %arg15[%c12, %c0_17] : memref<100x892xf32, #tpu.memory_space<vmem>>, vector<3x892xf32>
    tpu.vector_store %arg15[%c12, %c0_17], %14 {strides = array<i32>} : memref<100x892xf32, #tpu.memory_space<vmem>>, vector<3x892xf32>,
    %c0_18 = arith.constant 0 : index
    %c0_19 = arith.constant 0 : index
    %c4_20 = arith.constant 4 : index
    %16 = vector.load %arg0[%c0_18, %c0_19, %c4_20] : memref<2x3x1024xf32, #tpu.memory_space<vmem>>, vector<1x3x892xf32>
    %17 = vector.shape_cast %16 : vector<1x3x892xf32> to vector<3x892xf32>
    %c16 = arith.constant 16 : index
    %c0_21 = arith.constant 0 : index
    %18 = vector.load %arg15[%c16, %c0_21] : memref<100x892xf32, #tpu.memory_space<vmem>>, vector<3x892xf32>
    tpu.vector_store %arg15[%c16, %c0_21], %17 {strides = array<i32>} : memref<100x892xf32, #tpu.memory_space<vmem>>, vector<3x892xf32>,
    %c0_22 = arith.constant 0 : index
    %c0_23 = arith.constant 0 : index
    %c32 = arith.constant 32 : index
    %19 = vector.load %arg0[%c0_22, %c0_23, %c32] : memref<2x3x1024xf32, #tpu.memory_space<vmem>>, vector<1x3x892xf32>
    %20 = vector.shape_cast %19 : vector<1x3x892xf32> to vector<3x892xf32>
    %c20 = arith.constant 20 : index
    %c0_24 = arith.constant 0 : index
    %21 = vector.load %arg15[%c20, %c0_24] : memref<100x892xf32, #tpu.memory_space<vmem>>, vector<3x892xf32>
    tpu.vector_store %arg15[%c20, %c0_24], %20 {strides = array<i32>} : memref<100x892xf32, #tpu.memory_space<vmem>>, vector<3x892xf32>,
    %c0_25 = arith.constant 0 : index
    %c0_26 = arith.constant 0 : index
    %c33 = arith.constant 33 : index
    %22 = vector.load %arg0[%c0_25, %c0_26, %c33] : memref<2x3x1024xf32, #tpu.memory_space<vmem>>, vector<1x3x892xf32>
    %23 = vector.shape_cast %22 : vector<1x3x892xf32> to vector<3x892xf32>
    %c24 = arith.constant 24 : index
    %c0_27 = arith.constant 0 : index
    %24 = vector.load %arg15[%c24, %c0_27] : memref<100x892xf32, #tpu.memory_space<vmem>>, vector<3x892xf32>
    tpu.vector_store %arg15[%c24, %c0_27], %23 {strides = array<i32>} : memref<100x892xf32, #tpu.memory_space<vmem>>, vector<3x892xf32>,
    %c0_28 = arith.constant 0 : index
    %c0_29 = arith.constant 0 : index
    %c34 = arith.constant 34 : index
    %25 = vector.load %arg0[%c0_28, %c0_29, %c34] : memref<2x3x1024xf32, #tpu.memory_space<vmem>>, vector<1x3x892xf32>
    %26 = vector.shape_cast %25 : vector<1x3x892xf32> to vector<3x892xf32>
    %c28 = arith.constant 28 : index
    %c0_30 = arith.constant 0 : index
    %27 = vector.load %arg15[%c28, %c0_30] : memref<100x892xf32, #tpu.memory_space<vmem>>, vector<3x892xf32>
    tpu.vector_store %arg15[%c28, %c0_30], %26 {strides = array<i32>} : memref<100x892xf32, #tpu.memory_space<vmem>>, vector<3x892xf32>,
    %c0_31 = arith.constant 0 : index
    %c0_32 = arith.constant 0 : index
    %c35 = arith.constant 35 : index
    %28 = vector.load %arg0[%c0_31, %c0_32, %c35] : memref<2x3x1024xf32, #tpu.memory_space<vmem>>, vector<1x3x892xf32>
    %29 = vector.shape_cast %28 : vector<1x3x892xf32> to vector<3x892xf32>
    %c32_33 = arith.constant 32 : index
    %c0_34 = arith.constant 0 : index
    %30 = vector.load %arg15[%c32_33, %c0_34] : memref<100x892xf32, #tpu.memory_space<vmem>>, vector<3x892xf32>
    tpu.vector_store %arg15[%c32_33, %c0_34], %29 {strides = array<i32>} : memref<100x892xf32, #tpu.memory_space<vmem>>, vector<3x892xf32>,
    %c0_35 = arith.constant 0 : index
    %c0_36 = arith.constant 0 : index
    %c36 = arith.constant 36 : index
    %31 = vector.load %arg0[%c0_35, %c0_36, %c36] : memref<2x3x1024xf32, #tpu.memory_space<vmem>>, vector<1x3x892xf32>
    %32 = vector.shape_cast %31 : vector<1x3x892xf32> to vector<3x892xf32>
    %c36_37 = arith.constant 36 : index
    %c0_38 = arith.constant 0 : index
    %33 = vector.load %arg15[%c36_37, %c0_38] : memref<100x892xf32, #tpu.memory_space<vmem>>, vector<3x892xf32>
    tpu.vector_store %arg15[%c36_37, %c0_38], %32 {strides = array<i32>} : memref<100x892xf32, #tpu.memory_space<vmem>>, vector<3x892xf32>,
    %c0_39 = arith.constant 0 : index
    %c0_40 = arith.constant 0 : index
    %c64 = arith.constant 64 : index
    %34 = vector.load %arg0[%c0_39, %c0_40, %c64] : memref<2x3x1024xf32, #tpu.memory_space<vmem>>, vector<1x3x892xf32>
    %35 = vector.shape_cast %34 : vector<1x3x892xf32> to vector<3x892xf32>
    %c40 = arith.constant 40 : index
    %c0_41 = arith.constant 0 : index
    %36 = vector.load %arg15[%c40, %c0_41] : memref<100x892xf32, #tpu.memory_space<vmem>>, vector<3x892xf32>
    tpu.vector_store %arg15[%c40, %c0_41], %35 {strides = array<i32>} : memref<100x892xf32, #tpu.memory_space<vmem>>, vector<3x892xf32>,
    %c0_42 = arith.constant 0 : index
    %c0_43 = arith.constant 0 : index
    %c65 = arith.constant 65 : index
    %37 = vector.load %arg0[%c0_42, %c0_43, %c65] : memref<2x3x1024xf32, #tpu.memory_space<vmem>>, vector<1x3x892xf32>
    %38 = vector.shape_cast %37 : vector<1x3x892xf32> to vector<3x892xf32>
    %c44 = arith.constant 44 : index
    %c0_44 = arith.constant 0 : index
    %39 = vector.load %arg15[%c44, %c0_44] : memref<100x892xf32, #tpu.memory_space<vmem>>, vector<3x892xf32>
    tpu.vector_store %arg15[%c44, %c0_44], %38 {strides = array<i32>} : memref<100x892xf32, #tpu.memory_space<vmem>>, vector<3x892xf32>,
    %c0_45 = arith.constant 0 : index
    %c0_46 = arith.constant 0 : index
    %c66 = arith.constant 66 : index
    %40 = vector.load %arg0[%c0_45, %c0_46, %c66] : memref<2x3x1024xf32, #tpu.memory_space<vmem>>, vector<1x3x892xf32>
    %41 = vector.shape_cast %40 : vector<1x3x892xf32> to vector<3x892xf32>
    %c48 = arith.constant 48 : index
    %c0_47 = arith.constant 0 : index
    %42 = vector.load %arg15[%c48, %c0_47] : memref<100x892xf32, #tpu.memory_space<vmem>>, vector<3x892xf32>
    tpu.vector_store %arg15[%c48, %c0_47], %41 {strides = array<i32>} : memref<100x892xf32, #tpu.memory_space<vmem>>, vector<3x892xf32>,
    %c0_48 = arith.constant 0 : index
    %c0_49 = arith.constant 0 : index
    %c67 = arith.constant 67 : index
    %43 = vector.load %arg0[%c0_48, %c0_49, %c67] : memref<2x3x1024xf32, #tpu.memory_space<vmem>>, vector<1x3x892xf32>
    %44 = vector.shape_cast %43 : vector<1x3x892xf32> to vector<3x892xf32>
    %c52 = arith.constant 52 : index
    %c0_50 = arith.constant 0 : index
    %45 = vector.load %arg15[%c52, %c0_50] : memref<100x892xf32, #tpu.memory_space<vmem>>, vector<3x892xf32>
    tpu.vector_store %arg15[%c52, %c0_50], %44 {strides = array<i32>} : memref<100x892xf32, #tpu.memory_space<vmem>>, vector<3x892xf32>,
    %c0_51 = arith.constant 0 : index
    %c0_52 = arith.constant 0 : index
    %c68 = arith.constant 68 : index
    %46 = vector.load %arg0[%c0_51, %c0_52, %c68] : memref<2x3x1024xf32, #tpu.memory_space<vmem>>, vector<1x3x892xf32>
    %47 = vector.shape_cast %46 : vector<1x3x892xf32> to vector<3x892xf32>
    %c56 = arith.constant 56 : index
    %c0_53 = arith.constant 0 : index
    %48 = vector.load %arg15[%c56, %c0_53] : memref<100x892xf32, #tpu.memory_space<vmem>>, vector<3x892xf32>
    tpu.vector_store %arg15[%c56, %c0_53], %47 {strides = array<i32>} : memref<100x892xf32, #tpu.memory_space<vmem>>, vector<3x892xf32>,
    %c0_54 = arith.constant 0 : index
    %c0_55 = arith.constant 0 : index
    %c96 = arith.constant 96 : index
    %49 = vector.load %arg0[%c0_54, %c0_55, %c96] : memref<2x3x1024xf32, #tpu.memory_space<vmem>>, vector<1x3x892xf32>
    %50 = vector.shape_cast %49 : vector<1x3x892xf32> to vector<3x892xf32>
    %c60 = arith.constant 60 : index
    %c0_56 = arith.constant 0 : index
    %51 = vector.load %arg15[%c60, %c0_56] : memref<100x892xf32, #tpu.memory_space<vmem>>, vector<3x892xf32>
    tpu.vector_store %arg15[%c60, %c0_56], %50 {strides = array<i32>} : memref<100x892xf32, #tpu.memory_space<vmem>>, vector<3x892xf32>,
    %c0_57 = arith.constant 0 : index
    %c0_58 = arith.constant 0 : index
    %c97 = arith.constant 97 : index
    %52 = vector.load %arg0[%c0_57, %c0_58, %c97] : memref<2x3x1024xf32, #tpu.memory_space<vmem>>, vector<1x3x892xf32>
    %53 = vector.shape_cast %52 : vector<1x3x892xf32> to vector<3x892xf32>
    %c64_59 = arith.constant 64 : index
    %c0_60 = arith.constant 0 : index
    %54 = vector.load %arg15[%c64_59, %c0_60] : memref<100x892xf32, #tpu.memory_space<vmem>>, vector<3x892xf32>
    tpu.vector_store %arg15[%c64_59, %c0_60], %53 {strides = array<i32>} : memref<100x892xf32, #tpu.memory_space<vmem>>, vector<3x892xf32>,
    %c0_61 = arith.constant 0 : index
    %c0_62 = arith.constant 0 : index
    %c98 = arith.constant 98 : index
    %55 = vector.load %arg0[%c0_61, %c0_62, %c98] : memref<2x3x1024xf32, #tpu.memory_space<vmem>>, vector<1x3x892xf32>
    %56 = vector.shape_cast %55 : vector<1x3x892xf32> to vector<3x892xf32>
    %c68_63 = arith.constant 68 : index
    %c0_64 = arith.constant 0 : index
    %57 = vector.load %arg15[%c68_63, %c0_64] : memref<100x892xf32, #tpu.memory_space<vmem>>, vector<3x892xf32>
    tpu.vector_store %arg15[%c68_63, %c0_64], %56 {strides = array<i32>} : memref<100x892xf32, #tpu.memory_space<vmem>>, vector<3x892xf32>,
    %c0_65 = arith.constant 0 : index
    %c0_66 = arith.constant 0 : index
    %c99 = arith.constant 99 : index
    %58 = vector.load %arg0[%c0_65, %c0_66, %c99] : memref<2x3x1024xf32, #tpu.memory_space<vmem>>, vector<1x3x892xf32>
    %59 = vector.shape_cast %58 : vector<1x3x892xf32> to vector<3x892xf32>
    %c72 = arith.constant 72 : index
    %c0_67 = arith.constant 0 : index
    %60 = vector.load %arg15[%c72, %c0_67] : memref<100x892xf32, #tpu.memory_space<vmem>>, vector<3x892xf32>
    tpu.vector_store %arg15[%c72, %c0_67], %59 {strides = array<i32>} : memref<100x892xf32, #tpu.memory_space<vmem>>, vector<3x892xf32>,
    %c0_68 = arith.constant 0 : index
    %c0_69 = arith.constant 0 : index
    %c100 = arith.constant 100 : index
    %61 = vector.load %arg0[%c0_68, %c0_69, %c100] : memref<2x3x1024xf32, #tpu.memory_space<vmem>>, vector<1x3x892xf32>
    %62 = vector.shape_cast %61 : vector<1x3x892xf32> to vector<3x892xf32>
    %c76 = arith.constant 76 : index
    %c0_70 = arith.constant 0 : index
    %63 = vector.load %arg15[%c76, %c0_70] : memref<100x892xf32, #tpu.memory_space<vmem>>, vector<3x892xf32>
    tpu.vector_store %arg15[%c76, %c0_70], %62 {strides = array<i32>} : memref<100x892xf32, #tpu.memory_space<vmem>>, vector<3x892xf32>,
    %c0_71 = arith.constant 0 : index
    %c0_72 = arith.constant 0 : index
    %c128 = arith.constant 128 : index
    %64 = vector.load %arg0[%c0_71, %c0_72, %c128] : memref<2x3x1024xf32, #tpu.memory_space<vmem>>, vector<1x3x892xf32>
    %65 = vector.shape_cast %64 : vector<1x3x892xf32> to vector<3x892xf32>
    %c80 = arith.constant 80 : index
    %c0_73 = arith.constant 0 : index
    %66 = vector.load %arg15[%c80, %c0_73] : memref<100x892xf32, #tpu.memory_space<vmem>>, vector<3x892xf32>
    tpu.vector_store %arg15[%c80, %c0_73], %65 {strides = array<i32>} : memref<100x892xf32, #tpu.memory_space<vmem>>, vector<3x892xf32>,
    %c0_74 = arith.constant 0 : index
    %c0_75 = arith.constant 0 : index
    %c129 = arith.constant 129 : index
    %67 = vector.load %arg0[%c0_74, %c0_75, %c129] : memref<2x3x1024xf32, #tpu.memory_space<vmem>>, vector<1x3x892xf32>
    %68 = vector.shape_cast %67 : vector<1x3x892xf32> to vector<3x892xf32>
    %c84 = arith.constant 84 : index
    %c0_76 = arith.constant 0 : index
    %69 = vector.load %arg15[%c84, %c0_76] : memref<100x892xf32, #tpu.memory_space<vmem>>, vector<3x892xf32>
    tpu.vector_store %arg15[%c84, %c0_76], %68 {strides = array<i32>} : memref<100x892xf32, #tpu.memory_space<vmem>>, vector<3x892xf32>,
    %c0_77 = arith.constant 0 : index
    %c0_78 = arith.constant 0 : index
    %c130 = arith.constant 130 : index
    %70 = vector.load %arg0[%c0_77, %c0_78, %c130] : memref<2x3x1024xf32, #tpu.memory_space<vmem>>, vector<1x3x892xf32>
    %71 = vector.shape_cast %70 : vector<1x3x892xf32> to vector<3x892xf32>
    %c88 = arith.constant 88 : index
    %c0_79 = arith.constant 0 : index
    %72 = vector.load %arg15[%c88, %c0_79] : memref<100x892xf32, #tpu.memory_space<vmem>>, vector<3x892xf32>
    tpu.vector_store %arg15[%c88, %c0_79], %71 {strides = array<i32>} : memref<100x892xf32, #tpu.memory_space<vmem>>, vector<3x892xf32>,
    %c0_80 = arith.constant 0 : index
    %c0_81 = arith.constant 0 : index
    %c131 = arith.constant 131 : index
    %73 = vector.load %arg0[%c0_80, %c0_81, %c131] : memref<2x3x1024xf32, #tpu.memory_space<vmem>>, vector<1x3x892xf32>
    %74 = vector.shape_cast %73 : vector<1x3x892xf32> to vector<3x892xf32>
    %c92 = arith.constant 92 : index
    %c0_82 = arith.constant 0 : index
    %75 = vector.load %arg15[%c92, %c0_82] : memref<100x892xf32, #tpu.memory_space<vmem>>, vector<3x892xf32>
    tpu.vector_store %arg15[%c92, %c0_82], %74 {strides = array<i32>} : memref<100x892xf32, #tpu.memory_space<vmem>>, vector<3x892xf32>,
    %c0_83 = arith.constant 0 : index
    %c0_84 = arith.constant 0 : index
    %c132 = arith.constant 132 : index
    %76 = vector.load %arg0[%c0_83, %c0_84, %c132] : memref<2x3x1024xf32, #tpu.memory_space<vmem>>, vector<1x3x892xf32>
    %77 = vector.shape_cast %76 : vector<1x3x892xf32> to vector<3x892xf32>
    %c96_85 = arith.constant 96 : index
    %c0_86 = arith.constant 0 : index
    %78 = vector.load %arg15[%c96_85, %c0_86] : memref<100x892xf32, #tpu.memory_space<vmem>>, vector<3x892xf32>
    tpu.vector_store %arg15[%c96_85, %c0_86], %77 {strides = array<i32>} : memref<100x892xf32, #tpu.memory_space<vmem>>, vector<3x892xf32>,
    %c0_87 = arith.constant 0 : index
    %c0_88 = arith.constant 0 : index
    %79 = vector.load %arg1[%c0_87, %c0_88] : memref<6x100xf32, #tpu.memory_space<vmem>>, vector<6x100xf32>
    %c0_89 = arith.constant 0 : index
    %c0_90 = arith.constant 0 : index
    %80 = vector.load %arg15[%c0_89, %c0_90] : memref<100x892xf32, #tpu.memory_space<vmem>>, vector<100x892xf32>
    %cst_91 = arith.constant dense<0.000000e+00> : vector<6x892xf32>
    %81 = tpu.matmul %79, %80, %cst_91 {dimension_numbers = #tpu.dot_dimension_numbers<[1], [0], [0], [1], [0, 0, 1, 1], [], []>} : vector<6x100xf32>, vector<100x892xf32>, vector<6x892xf32> -> vector<6x892xf32>
    %c0_92 = arith.constant 0 : index
    %c0_93 = arith.constant 0 : index
    %82 = vector.load %arg2[%c0_92, %c0_93] : memref<6x1xf32, #tpu.memory_space<vmem>>, vector<6x1xf32>
    %83 = vector.broadcast %82 : vector<6x1xf32> to vector<6x892xf32>
    %84 = arith.addf %81, %83 : vector<6x892xf32>
    %cst_94 = arith.constant 0.000000e+00 : f32
    %85 = vector.broadcast %cst_94 : f32 to vector<6x892xf32>
    %86 = arith.maximumf %84, %85 : vector<6x892xf32>
    %87 = vector.extract_strided_slice %86 {offsets = [0, 0], sizes = [6, 859], strides = [1, 1]} : vector<6x892xf32> to vector<6x859xf32>
    %88 = vector.extract_strided_slice %86 {offsets = [0, 1], sizes = [6, 859], strides = [1, 1]} : vector<6x892xf32> to vector<6x859xf32>
    %89 = arith.maximumf %87, %88 : vector<6x859xf32>
    %90 = vector.extract_strided_slice %86 {offsets = [0, 32], sizes = [6, 859], strides = [1, 1]} : vector<6x892xf32> to vector<6x859xf32>
    %91 = vector.extract_strided_slice %86 {offsets = [0, 33], sizes = [6, 859], strides = [1, 1]} : vector<6x892xf32> to vector<6x859xf32>
    %92 = arith.maximumf %90, %91 : vector<6x859xf32>
    %93 = arith.maximumf %89, %92 : vector<6x859xf32>
    %94 = vector.extract_strided_slice %93 {offsets = [0, 0], sizes = [6, 595], strides = [1, 1]} : vector<6x859xf32> to vector<6x595xf32>
    %c0_95 = arith.constant 0 : index
    %c0_96 = arith.constant 0 : index
    %95 = vector.load %arg16[%c0_95, %c0_96] : memref<200x595xf32, #tpu.memory_space<vmem>>, vector<6x595xf32>
    tpu.vector_store %arg16[%c0_95, %c0_96], %94 {strides = array<i32>} : memref<200x595xf32, #tpu.memory_space<vmem>>, vector<6x595xf32>,
    %96 = vector.extract_strided_slice %93 {offsets = [0, 2], sizes = [6, 595], strides = [1, 1]} : vector<6x859xf32> to vector<6x595xf32>
    %c8_97 = arith.constant 8 : index
    %c0_98 = arith.constant 0 : index
    %97 = vector.load %arg16[%c8_97, %c0_98] : memref<200x595xf32, #tpu.memory_space<vmem>>, vector<6x595xf32>
    tpu.vector_store %arg16[%c8_97, %c0_98], %96 {strides = array<i32>} : memref<200x595xf32, #tpu.memory_space<vmem>>, vector<6x595xf32>,
    %98 = vector.extract_strided_slice %93 {offsets = [0, 4], sizes = [6, 595], strides = [1, 1]} : vector<6x859xf32> to vector<6x595xf32>
    %c16_99 = arith.constant 16 : index
    %c0_100 = arith.constant 0 : index
    %99 = vector.load %arg16[%c16_99, %c0_100] : memref<200x595xf32, #tpu.memory_space<vmem>>, vector<6x595xf32>
    tpu.vector_store %arg16[%c16_99, %c0_100], %98 {strides = array<i32>} : memref<200x595xf32, #tpu.memory_space<vmem>>, vector<6x595xf32>,
    %100 = vector.extract_strided_slice %93 {offsets = [0, 6], sizes = [6, 595], strides = [1, 1]} : vector<6x859xf32> to vector<6x595xf32>
    %c24_101 = arith.constant 24 : index
    %c0_102 = arith.constant 0 : index
    %101 = vector.load %arg16[%c24_101, %c0_102] : memref<200x595xf32, #tpu.memory_space<vmem>>, vector<6x595xf32>
    tpu.vector_store %arg16[%c24_101, %c0_102], %100 {strides = array<i32>} : memref<200x595xf32, #tpu.memory_space<vmem>>, vector<6x595xf32>,
    %102 = vector.extract_strided_slice %93 {offsets = [0, 8], sizes = [6, 595], strides = [1, 1]} : vector<6x859xf32> to vector<6x595xf32>
    %c32_103 = arith.constant 32 : index
    %c0_104 = arith.constant 0 : index
    %103 = vector.load %arg16[%c32_103, %c0_104] : memref<200x595xf32, #tpu.memory_space<vmem>>, vector<6x595xf32>
    tpu.vector_store %arg16[%c32_103, %c0_104], %102 {strides = array<i32>} : memref<200x595xf32, #tpu.memory_space<vmem>>, vector<6x595xf32>,
    %104 = vector.extract_strided_slice %93 {offsets = [0, 64], sizes = [6, 595], strides = [1, 1]} : vector<6x859xf32> to vector<6x595xf32>
    %c40_105 = arith.constant 40 : index
    %c0_106 = arith.constant 0 : index
    %105 = vector.load %arg16[%c40_105, %c0_106] : memref<200x595xf32, #tpu.memory_space<vmem>>, vector<6x595xf32>
    tpu.vector_store %arg16[%c40_105, %c0_106], %104 {strides = array<i32>} : memref<200x595xf32, #tpu.memory_space<vmem>>, vector<6x595xf32>,
    %106 = vector.extract_strided_slice %93 {offsets = [0, 66], sizes = [6, 595], strides = [1, 1]} : vector<6x859xf32> to vector<6x595xf32>
    %c48_107 = arith.constant 48 : index
    %c0_108 = arith.constant 0 : index
    %107 = vector.load %arg16[%c48_107, %c0_108] : memref<200x595xf32, #tpu.memory_space<vmem>>, vector<6x595xf32>
    tpu.vector_store %arg16[%c48_107, %c0_108], %106 {strides = array<i32>} : memref<200x595xf32, #tpu.memory_space<vmem>>, vector<6x595xf32>,
    %108 = vector.extract_strided_slice %93 {offsets = [0, 68], sizes = [6, 595], strides = [1, 1]} : vector<6x859xf32> to vector<6x595xf32>
    %c56_109 = arith.constant 56 : index
    %c0_110 = arith.constant 0 : index
    %109 = vector.load %arg16[%c56_109, %c0_110] : memref<200x595xf32, #tpu.memory_space<vmem>>, vector<6x595xf32>
    tpu.vector_store %arg16[%c56_109, %c0_110], %108 {strides = array<i32>} : memref<200x595xf32, #tpu.memory_space<vmem>>, vector<6x595xf32>,
    %110 = vector.extract_strided_slice %93 {offsets = [0, 70], sizes = [6, 595], strides = [1, 1]} : vector<6x859xf32> to vector<6x595xf32>
    %c64_111 = arith.constant 64 : index
    %c0_112 = arith.constant 0 : index
    %111 = vector.load %arg16[%c64_111, %c0_112] : memref<200x595xf32, #tpu.memory_space<vmem>>, vector<6x595xf32>
    tpu.vector_store %arg16[%c64_111, %c0_112], %110 {strides = array<i32>} : memref<200x595xf32, #tpu.memory_space<vmem>>, vector<6x595xf32>,
    %112 = vector.extract_strided_slice %93 {offsets = [0, 72], sizes = [6, 595], strides = [1, 1]} : vector<6x859xf32> to vector<6x595xf32>
    %c72_113 = arith.constant 72 : index
    %c0_114 = arith.constant 0 : index
    %113 = vector.load %arg16[%c72_113, %c0_114] : memref<200x595xf32, #tpu.memory_space<vmem>>, vector<6x595xf32>
    tpu.vector_store %arg16[%c72_113, %c0_114], %112 {strides = array<i32>} : memref<200x595xf32, #tpu.memory_space<vmem>>, vector<6x595xf32>,
    %114 = vector.extract_strided_slice %93 {offsets = [0, 128], sizes = [6, 595], strides = [1, 1]} : vector<6x859xf32> to vector<6x595xf32>
    %c80_115 = arith.constant 80 : index
    %c0_116 = arith.constant 0 : index
    %115 = vector.load %arg16[%c80_115, %c0_116] : memref<200x595xf32, #tpu.memory_space<vmem>>, vector<6x595xf32>
    tpu.vector_store %arg16[%c80_115, %c0_116], %114 {strides = array<i32>} : memref<200x595xf32, #tpu.memory_space<vmem>>, vector<6x595xf32>,
    %116 = vector.extract_strided_slice %93 {offsets = [0, 130], sizes = [6, 595], strides = [1, 1]} : vector<6x859xf32> to vector<6x595xf32>
    %c88_117 = arith.constant 88 : index
    %c0_118 = arith.constant 0 : index
    %117 = vector.load %arg16[%c88_117, %c0_118] : memref<200x595xf32, #tpu.memory_space<vmem>>, vector<6x595xf32>
    tpu.vector_store %arg16[%c88_117, %c0_118], %116 {strides = array<i32>} : memref<200x595xf32, #tpu.memory_space<vmem>>, vector<6x595xf32>,
    %118 = vector.extract_strided_slice %93 {offsets = [0, 132], sizes = [6, 595], strides = [1, 1]} : vector<6x859xf32> to vector<6x595xf32>
    %c96_119 = arith.constant 96 : index
    %c0_120 = arith.constant 0 : index
    %119 = vector.load %arg16[%c96_119, %c0_120] : memref<200x595xf32, #tpu.memory_space<vmem>>, vector<6x595xf32>
    tpu.vector_store %arg16[%c96_119, %c0_120], %118 {strides = array<i32>} : memref<200x595xf32, #tpu.memory_space<vmem>>, vector<6x595xf32>,
    %120 = vector.extract_strided_slice %93 {offsets = [0, 134], sizes = [6, 595], strides = [1, 1]} : vector<6x859xf32> to vector<6x595xf32>
    %c104 = arith.constant 104 : index
    %c0_121 = arith.constant 0 : index
    %121 = vector.load %arg16[%c104, %c0_121] : memref<200x595xf32, #tpu.memory_space<vmem>>, vector<6x595xf32>
    tpu.vector_store %arg16[%c104, %c0_121], %120 {strides = array<i32>} : memref<200x595xf32, #tpu.memory_space<vmem>>, vector<6x595xf32>,
    %122 = vector.extract_strided_slice %93 {offsets = [0, 136], sizes = [6, 595], strides = [1, 1]} : vector<6x859xf32> to vector<6x595xf32>
    %c112 = arith.constant 112 : index
    %c0_122 = arith.constant 0 : index
    %123 = vector.load %arg16[%c112, %c0_122] : memref<200x595xf32, #tpu.memory_space<vmem>>, vector<6x595xf32>
    tpu.vector_store %arg16[%c112, %c0_122], %122 {strides = array<i32>} : memref<200x595xf32, #tpu.memory_space<vmem>>, vector<6x595xf32>,
    %124 = vector.extract_strided_slice %93 {offsets = [0, 192], sizes = [6, 595], strides = [1, 1]} : vector<6x859xf32> to vector<6x595xf32>
    %c120 = arith.constant 120 : index
    %c0_123 = arith.constant 0 : index
    %125 = vector.load %arg16[%c120, %c0_123] : memref<200x595xf32, #tpu.memory_space<vmem>>, vector<6x595xf32>
    tpu.vector_store %arg16[%c120, %c0_123], %124 {strides = array<i32>} : memref<200x595xf32, #tpu.memory_space<vmem>>, vector<6x595xf32>,
    %126 = vector.extract_strided_slice %93 {offsets = [0, 194], sizes = [6, 595], strides = [1, 1]} : vector<6x859xf32> to vector<6x595xf32>
    %c128_124 = arith.constant 128 : index
    %c0_125 = arith.constant 0 : index
    %127 = vector.load %arg16[%c128_124, %c0_125] : memref<200x595xf32, #tpu.memory_space<vmem>>, vector<6x595xf32>
    tpu.vector_store %arg16[%c128_124, %c0_125], %126 {strides = array<i32>} : memref<200x595xf32, #tpu.memory_space<vmem>>, vector<6x595xf32>,
    %128 = vector.extract_strided_slice %93 {offsets = [0, 196], sizes = [6, 595], strides = [1, 1]} : vector<6x859xf32> to vector<6x595xf32>
    %c136 = arith.constant 136 : index
    %c0_126 = arith.constant 0 : index
    %129 = vector.load %arg16[%c136, %c0_126] : memref<200x595xf32, #tpu.memory_space<vmem>>, vector<6x595xf32>
    tpu.vector_store %arg16[%c136, %c0_126], %128 {strides = array<i32>} : memref<200x595xf32, #tpu.memory_space<vmem>>, vector<6x595xf32>,
    %130 = vector.extract_strided_slice %93 {offsets = [0, 198], sizes = [6, 595], strides = [1, 1]} : vector<6x859xf32> to vector<6x595xf32>
    %c144 = arith.constant 144 : index
    %c0_127 = arith.constant 0 : index
    %131 = vector.load %arg16[%c144, %c0_127] : memref<200x595xf32, #tpu.memory_space<vmem>>, vector<6x595xf32>
    tpu.vector_store %arg16[%c144, %c0_127], %130 {strides = array<i32>} : memref<200x595xf32, #tpu.memory_space<vmem>>, vector<6x595xf32>,
    %132 = vector.extract_strided_slice %93 {offsets = [0, 200], sizes = [6, 595], strides = [1, 1]} : vector<6x859xf32> to vector<6x595xf32>
    %c152 = arith.constant 152 : index
    %c0_128 = arith.constant 0 : index
    %133 = vector.load %arg16[%c152, %c0_128] : memref<200x595xf32, #tpu.memory_space<vmem>>, vector<6x595xf32>
    tpu.vector_store %arg16[%c152, %c0_128], %132 {strides = array<i32>} : memref<200x595xf32, #tpu.memory_space<vmem>>, vector<6x595xf32>,
    %134 = vector.extract_strided_slice %93 {offsets = [0, 256], sizes = [6, 595], strides = [1, 1]} : vector<6x859xf32> to vector<6x595xf32>
    %c160 = arith.constant 160 : index
    %c0_129 = arith.constant 0 : index
    %135 = vector.load %arg16[%c160, %c0_129] : memref<200x595xf32, #tpu.memory_space<vmem>>, vector<6x595xf32>
    tpu.vector_store %arg16[%c160, %c0_129], %134 {strides = array<i32>} : memref<200x595xf32, #tpu.memory_space<vmem>>, vector<6x595xf32>,
    %136 = vector.extract_strided_slice %93 {offsets = [0, 258], sizes = [6, 595], strides = [1, 1]} : vector<6x859xf32> to vector<6x595xf32>
    %c168 = arith.constant 168 : index
    %c0_130 = arith.constant 0 : index
    %137 = vector.load %arg16[%c168, %c0_130] : memref<200x595xf32, #tpu.memory_space<vmem>>, vector<6x595xf32>
    tpu.vector_store %arg16[%c168, %c0_130], %136 {strides = array<i32>} : memref<200x595xf32, #tpu.memory_space<vmem>>, vector<6x595xf32>,
    %138 = vector.extract_strided_slice %93 {offsets = [0, 260], sizes = [6, 595], strides = [1, 1]} : vector<6x859xf32> to vector<6x595xf32>
    %c176 = arith.constant 176 : index
    %c0_131 = arith.constant 0 : index
    %139 = vector.load %arg16[%c176, %c0_131] : memref<200x595xf32, #tpu.memory_space<vmem>>, vector<6x595xf32>
    tpu.vector_store %arg16[%c176, %c0_131], %138 {strides = array<i32>} : memref<200x595xf32, #tpu.memory_space<vmem>>, vector<6x595xf32>,
    %140 = vector.extract_strided_slice %93 {offsets = [0, 262], sizes = [6, 595], strides = [1, 1]} : vector<6x859xf32> to vector<6x595xf32>
    %c184 = arith.constant 184 : index
    %c0_132 = arith.constant 0 : index
    %141 = vector.load %arg16[%c184, %c0_132] : memref<200x595xf32, #tpu.memory_space<vmem>>, vector<6x595xf32>
    tpu.vector_store %arg16[%c184, %c0_132], %140 {strides = array<i32>} : memref<200x595xf32, #tpu.memory_space<vmem>>, vector<6x595xf32>,
    %142 = vector.extract_strided_slice %93 {offsets = [0, 264], sizes = [6, 595], strides = [1, 1]} : vector<6x859xf32> to vector<6x595xf32>
    %c192 = arith.constant 192 : index
    %c0_133 = arith.constant 0 : index
    %143 = vector.load %arg16[%c192, %c0_133] : memref<200x595xf32, #tpu.memory_space<vmem>>, vector<6x595xf32>
    tpu.vector_store %arg16[%c192, %c0_133], %142 {strides = array<i32>} : memref<200x595xf32, #tpu.memory_space<vmem>>, vector<6x595xf32>,
    %c0_134 = arith.constant 0 : index
    %c0_135 = arith.constant 0 : index
    %144 = vector.load %arg3[%c0_134, %c0_135] : memref<16x200xf32, #tpu.memory_space<vmem>>, vector<16x200xf32>
    %c0_136 = arith.constant 0 : index
    %c0_137 = arith.constant 0 : index
    %145 = vector.load %arg16[%c0_136, %c0_137] : memref<200x595xf32, #tpu.memory_space<vmem>>, vector<200x595xf32>
    %cst_138 = arith.constant dense<0.000000e+00> : vector<16x595xf32>
    %146 = tpu.matmul %144, %145, %cst_138 {dimension_numbers = #tpu.dot_dimension_numbers<[1], [0], [0], [1], [0, 0, 1, 1], [], []>} : vector<16x200xf32>, vector<200x595xf32>, vector<16x595xf32> -> vector<16x595xf32>
    %c0_139 = arith.constant 0 : index
    %c0_140 = arith.constant 0 : index
    %147 = vector.load %arg4[%c0_139, %c0_140] : memref<16x1xf32, #tpu.memory_space<vmem>>, vector<16x1xf32>
    %148 = vector.broadcast %147 : vector<16x1xf32> to vector<16x595xf32>
    %149 = arith.addf %146, %148 : vector<16x595xf32>
    %cst_141 = arith.constant 0.000000e+00 : f32
    %150 = vector.broadcast %cst_141 : f32 to vector<16x595xf32>
    %151 = arith.maximumf %149, %150 : vector<16x595xf32>
    %152 = vector.extract_strided_slice %151 {offsets = [0, 0], sizes = [16, 529], strides = [1, 1]} : vector<16x595xf32> to vector<16x529xf32>
    %153 = vector.extract_strided_slice %151 {offsets = [0, 2], sizes = [16, 529], strides = [1, 1]} : vector<16x595xf32> to vector<16x529xf32>
    %154 = arith.maximumf %152, %153 : vector<16x529xf32>
    %155 = vector.extract_strided_slice %151 {offsets = [0, 64], sizes = [16, 529], strides = [1, 1]} : vector<16x595xf32> to vector<16x529xf32>
    %156 = vector.extract_strided_slice %151 {offsets = [0, 66], sizes = [16, 529], strides = [1, 1]} : vector<16x595xf32> to vector<16x529xf32>
    %157 = arith.maximumf %155, %156 : vector<16x529xf32>
    %158 = arith.maximumf %154, %157 : vector<16x529xf32>
    %c0_142 = arith.constant 0 : index
    %c0_143 = arith.constant 0 : index
    %159 = vector.load %arg5[%c0_142, %c0_143] : memref<529x25xf32, #tpu.memory_space<vmem>>, vector<529x25xf32>
    %cst_144 = arith.constant dense<0.000000e+00> : vector<16x25xf32>
    %160 = tpu.matmul %158, %159, %cst_144 {dimension_numbers = #tpu.dot_dimension_numbers<[1], [0], [0], [1], [0, 0, 1, 1], [], []>} : vector<16x529xf32>, vector<529x25xf32>, vector<16x25xf32> -> vector<16x25xf32>
    %161 = vector.extract_strided_slice %160 {offsets = [0, 0], sizes = [1, 25], strides = [1, 1]} : vector<16x25xf32> to vector<1x25xf32>
    %c0_145 = arith.constant 0 : index
    %c0_146 = arith.constant 0 : index
    %162 = vector.load %arg17[%c0_145, %c0_146] : memref<2x400xf32, #tpu.memory_space<vmem>>, vector<1x25xf32>
    tpu.vector_store %arg17[%c0_145, %c0_146], %161 {strides = array<i32>} : memref<2x400xf32, #tpu.memory_space<vmem>>, vector<1x25xf32>,
    %163 = vector.extract_strided_slice %160 {offsets = [1, 0], sizes = [1, 25], strides = [1, 1]} : vector<16x25xf32> to vector<1x25xf32>
    %c0_147 = arith.constant 0 : index
    %c25 = arith.constant 25 : index
    %164 = vector.load %arg17[%c0_147, %c25] : memref<2x400xf32, #tpu.memory_space<vmem>>, vector<1x25xf32>
    tpu.vector_store %arg17[%c0_147, %c25], %163 {strides = array<i32>} : memref<2x400xf32, #tpu.memory_space<vmem>>, vector<1x25xf32>,
    %165 = vector.extract_strided_slice %160 {offsets = [2, 0], sizes = [1, 25], strides = [1, 1]} : vector<16x25xf32> to vector<1x25xf32>
    %c0_148 = arith.constant 0 : index
    %c50 = arith.constant 50 : index
    %166 = vector.load %arg17[%c0_148, %c50] : memref<2x400xf32, #tpu.memory_space<vmem>>, vector<1x25xf32>
    tpu.vector_store %arg17[%c0_148, %c50], %165 {strides = array<i32>} : memref<2x400xf32, #tpu.memory_space<vmem>>, vector<1x25xf32>,
    %167 = vector.extract_strided_slice %160 {offsets = [3, 0], sizes = [1, 25], strides = [1, 1]} : vector<16x25xf32> to vector<1x25xf32>
    %c0_149 = arith.constant 0 : index
    %c75 = arith.constant 75 : index
    %168 = vector.load %arg17[%c0_149, %c75] : memref<2x400xf32, #tpu.memory_space<vmem>>, vector<1x25xf32>
    tpu.vector_store %arg17[%c0_149, %c75], %167 {strides = array<i32>} : memref<2x400xf32, #tpu.memory_space<vmem>>, vector<1x25xf32>,
    %169 = vector.extract_strided_slice %160 {offsets = [4, 0], sizes = [1, 25], strides = [1, 1]} : vector<16x25xf32> to vector<1x25xf32>
    %c0_150 = arith.constant 0 : index
    %c100_151 = arith.constant 100 : index
    %170 = vector.load %arg17[%c0_150, %c100_151] : memref<2x400xf32, #tpu.memory_space<vmem>>, vector<1x25xf32>
    tpu.vector_store %arg17[%c0_150, %c100_151], %169 {strides = array<i32>} : memref<2x400xf32, #tpu.memory_space<vmem>>, vector<1x25xf32>,
    %171 = vector.extract_strided_slice %160 {offsets = [5, 0], sizes = [1, 25], strides = [1, 1]} : vector<16x25xf32> to vector<1x25xf32>
    %c0_152 = arith.constant 0 : index
    %c125 = arith.constant 125 : index
    %172 = vector.load %arg17[%c0_152, %c125] : memref<2x400xf32, #tpu.memory_space<vmem>>, vector<1x25xf32>
    tpu.vector_store %arg17[%c0_152, %c125], %171 {strides = array<i32>} : memref<2x400xf32, #tpu.memory_space<vmem>>, vector<1x25xf32>,
    %173 = vector.extract_strided_slice %160 {offsets = [6, 0], sizes = [1, 25], strides = [1, 1]} : vector<16x25xf32> to vector<1x25xf32>
    %c0_153 = arith.constant 0 : index
    %c150 = arith.constant 150 : index
    %174 = vector.load %arg17[%c0_153, %c150] : memref<2x400xf32, #tpu.memory_space<vmem>>, vector<1x25xf32>
    tpu.vector_store %arg17[%c0_153, %c150], %173 {strides = array<i32>} : memref<2x400xf32, #tpu.memory_space<vmem>>, vector<1x25xf32>,
    %175 = vector.extract_strided_slice %160 {offsets = [7, 0], sizes = [1, 25], strides = [1, 1]} : vector<16x25xf32> to vector<1x25xf32>
    %c0_154 = arith.constant 0 : index
    %c175 = arith.constant 175 : index
    %176 = vector.load %arg17[%c0_154, %c175] : memref<2x400xf32, #tpu.memory_space<vmem>>, vector<1x25xf32>
    tpu.vector_store %arg17[%c0_154, %c175], %175 {strides = array<i32>} : memref<2x400xf32, #tpu.memory_space<vmem>>, vector<1x25xf32>,
    %177 = vector.extract_strided_slice %160 {offsets = [8, 0], sizes = [1, 25], strides = [1, 1]} : vector<16x25xf32> to vector<1x25xf32>
    %c0_155 = arith.constant 0 : index
    %c200 = arith.constant 200 : index
    %178 = vector.load %arg17[%c0_155, %c200] : memref<2x400xf32, #tpu.memory_space<vmem>>, vector<1x25xf32>
    tpu.vector_store %arg17[%c0_155, %c200], %177 {strides = array<i32>} : memref<2x400xf32, #tpu.memory_space<vmem>>, vector<1x25xf32>,
    %179 = vector.extract_strided_slice %160 {offsets = [9, 0], sizes = [1, 25], strides = [1, 1]} : vector<16x25xf32> to vector<1x25xf32>
    %c0_156 = arith.constant 0 : index
    %c225 = arith.constant 225 : index
    %180 = vector.load %arg17[%c0_156, %c225] : memref<2x400xf32, #tpu.memory_space<vmem>>, vector<1x25xf32>
    tpu.vector_store %arg17[%c0_156, %c225], %179 {strides = array<i32>} : memref<2x400xf32, #tpu.memory_space<vmem>>, vector<1x25xf32>,
    %181 = vector.extract_strided_slice %160 {offsets = [10, 0], sizes = [1, 25], strides = [1, 1]} : vector<16x25xf32> to vector<1x25xf32>
    %c0_157 = arith.constant 0 : index
    %c250 = arith.constant 250 : index
    %182 = vector.load %arg17[%c0_157, %c250] : memref<2x400xf32, #tpu.memory_space<vmem>>, vector<1x25xf32>
    tpu.vector_store %arg17[%c0_157, %c250], %181 {strides = array<i32>} : memref<2x400xf32, #tpu.memory_space<vmem>>, vector<1x25xf32>,
    %183 = vector.extract_strided_slice %160 {offsets = [11, 0], sizes = [1, 25], strides = [1, 1]} : vector<16x25xf32> to vector<1x25xf32>
    %c0_158 = arith.constant 0 : index
    %c275 = arith.constant 275 : index
    %184 = vector.load %arg17[%c0_158, %c275] : memref<2x400xf32, #tpu.memory_space<vmem>>, vector<1x25xf32>
    tpu.vector_store %arg17[%c0_158, %c275], %183 {strides = array<i32>} : memref<2x400xf32, #tpu.memory_space<vmem>>, vector<1x25xf32>,
    %185 = vector.extract_strided_slice %160 {offsets = [12, 0], sizes = [1, 25], strides = [1, 1]} : vector<16x25xf32> to vector<1x25xf32>
    %c0_159 = arith.constant 0 : index
    %c300 = arith.constant 300 : index
    %186 = vector.load %arg17[%c0_159, %c300] : memref<2x400xf32, #tpu.memory_space<vmem>>, vector<1x25xf32>
    tpu.vector_store %arg17[%c0_159, %c300], %185 {strides = array<i32>} : memref<2x400xf32, #tpu.memory_space<vmem>>, vector<1x25xf32>,
    %187 = vector.extract_strided_slice %160 {offsets = [13, 0], sizes = [1, 25], strides = [1, 1]} : vector<16x25xf32> to vector<1x25xf32>
    %c0_160 = arith.constant 0 : index
    %c325 = arith.constant 325 : index
    %188 = vector.load %arg17[%c0_160, %c325] : memref<2x400xf32, #tpu.memory_space<vmem>>, vector<1x25xf32>
    tpu.vector_store %arg17[%c0_160, %c325], %187 {strides = array<i32>} : memref<2x400xf32, #tpu.memory_space<vmem>>, vector<1x25xf32>,
    %189 = vector.extract_strided_slice %160 {offsets = [14, 0], sizes = [1, 25], strides = [1, 1]} : vector<16x25xf32> to vector<1x25xf32>
    %c0_161 = arith.constant 0 : index
    %c350 = arith.constant 350 : index
    %190 = vector.load %arg17[%c0_161, %c350] : memref<2x400xf32, #tpu.memory_space<vmem>>, vector<1x25xf32>
    tpu.vector_store %arg17[%c0_161, %c350], %189 {strides = array<i32>} : memref<2x400xf32, #tpu.memory_space<vmem>>, vector<1x25xf32>,
    %191 = vector.extract_strided_slice %160 {offsets = [15, 0], sizes = [1, 25], strides = [1, 1]} : vector<16x25xf32> to vector<1x25xf32>
    %c0_162 = arith.constant 0 : index
    %c375 = arith.constant 375 : index
    %192 = vector.load %arg17[%c0_162, %c375] : memref<2x400xf32, #tpu.memory_space<vmem>>, vector<1x25xf32>
    tpu.vector_store %arg17[%c0_162, %c375], %191 {strides = array<i32>} : memref<2x400xf32, #tpu.memory_space<vmem>>, vector<1x25xf32>,
    %c1_163 = arith.constant 1 : index
    %c0_164 = arith.constant 0 : index
    %c0_165 = arith.constant 0 : index
    %193 = vector.load %arg0[%c1_163, %c0_164, %c0_165] : memref<2x3x1024xf32, #tpu.memory_space<vmem>>, vector<1x3x892xf32>
    %194 = vector.shape_cast %193 : vector<1x3x892xf32> to vector<3x892xf32>
    %c0_166 = arith.constant 0 : index
    %c0_167 = arith.constant 0 : index
    %195 = vector.load %arg15[%c0_166, %c0_167] : memref<100x892xf32, #tpu.memory_space<vmem>>, vector<3x892xf32>
    tpu.vector_store %arg15[%c0_166, %c0_167], %194 {strides = array<i32>} : memref<100x892xf32, #tpu.memory_space<vmem>>, vector<3x892xf32>,
    %c1_168 = arith.constant 1 : index
    %c0_169 = arith.constant 0 : index
    %c1_170 = arith.constant 1 : index
    %196 = vector.load %arg0[%c1_168, %c0_169, %c1_170] : memref<2x3x1024xf32, #tpu.memory_space<vmem>>, vector<1x3x892xf32>
    %197 = vector.shape_cast %196 : vector<1x3x892xf32> to vector<3x892xf32>
    %c4_171 = arith.constant 4 : index
    %c0_172 = arith.constant 0 : index
    %198 = vector.load %arg15[%c4_171, %c0_172] : memref<100x892xf32, #tpu.memory_space<vmem>>, vector<3x892xf32>
    tpu.vector_store %arg15[%c4_171, %c0_172], %197 {strides = array<i32>} : memref<100x892xf32, #tpu.memory_space<vmem>>, vector<3x892xf32>,
    %c1_173 = arith.constant 1 : index
    %c0_174 = arith.constant 0 : index
    %c2_175 = arith.constant 2 : index
    %199 = vector.load %arg0[%c1_173, %c0_174, %c2_175] : memref<2x3x1024xf32, #tpu.memory_space<vmem>>, vector<1x3x892xf32>
    %200 = vector.shape_cast %199 : vector<1x3x892xf32> to vector<3x892xf32>
    %c8_176 = arith.constant 8 : index
    %c0_177 = arith.constant 0 : index
    %201 = vector.load %arg15[%c8_176, %c0_177] : memref<100x892xf32, #tpu.memory_space<vmem>>, vector<3x892xf32>
    tpu.vector_store %arg15[%c8_176, %c0_177], %200 {strides = array<i32>} : memref<100x892xf32, #tpu.memory_space<vmem>>, vector<3x892xf32>,
    %c1_178 = arith.constant 1 : index
    %c0_179 = arith.constant 0 : index
    %c3_180 = arith.constant 3 : index
    %202 = vector.load %arg0[%c1_178, %c0_179, %c3_180] : memref<2x3x1024xf32, #tpu.memory_space<vmem>>, vector<1x3x892xf32>
    %203 = vector.shape_cast %202 : vector<1x3x892xf32> to vector<3x892xf32>
    %c12_181 = arith.constant 12 : index
    %c0_182 = arith.constant 0 : index
    %204 = vector.load %arg15[%c12_181, %c0_182] : memref<100x892xf32, #tpu.memory_space<vmem>>, vector<3x892xf32>
    tpu.vector_store %arg15[%c12_181, %c0_182], %203 {strides = array<i32>} : memref<100x892xf32, #tpu.memory_space<vmem>>, vector<3x892xf32>,
    %c1_183 = arith.constant 1 : index
    %c0_184 = arith.constant 0 : index
    %c4_185 = arith.constant 4 : index
    %205 = vector.load %arg0[%c1_183, %c0_184, %c4_185] : memref<2x3x1024xf32, #tpu.memory_space<vmem>>, vector<1x3x892xf32>
    %206 = vector.shape_cast %205 : vector<1x3x892xf32> to vector<3x892xf32>
    %c16_186 = arith.constant 16 : index
    %c0_187 = arith.constant 0 : index
    %207 = vector.load %arg15[%c16_186, %c0_187] : memref<100x892xf32, #tpu.memory_space<vmem>>, vector<3x892xf32>
    tpu.vector_store %arg15[%c16_186, %c0_187], %206 {strides = array<i32>} : memref<100x892xf32, #tpu.memory_space<vmem>>, vector<3x892xf32>,
    %c1_188 = arith.constant 1 : index
    %c0_189 = arith.constant 0 : index
    %c32_190 = arith.constant 32 : index
    %208 = vector.load %arg0[%c1_188, %c0_189, %c32_190] : memref<2x3x1024xf32, #tpu.memory_space<vmem>>, vector<1x3x892xf32>
    %209 = vector.shape_cast %208 : vector<1x3x892xf32> to vector<3x892xf32>
    %c20_191 = arith.constant 20 : index
    %c0_192 = arith.constant 0 : index
    %210 = vector.load %arg15[%c20_191, %c0_192] : memref<100x892xf32, #tpu.memory_space<vmem>>, vector<3x892xf32>
    tpu.vector_store %arg15[%c20_191, %c0_192], %209 {strides = array<i32>} : memref<100x892xf32, #tpu.memory_space<vmem>>, vector<3x892xf32>,
    %c1_193 = arith.constant 1 : index
    %c0_194 = arith.constant 0 : index
    %c33_195 = arith.constant 33 : index
    %211 = vector.load %arg0[%c1_193, %c0_194, %c33_195] : memref<2x3x1024xf32, #tpu.memory_space<vmem>>, vector<1x3x892xf32>
    %212 = vector.shape_cast %211 : vector<1x3x892xf32> to vector<3x892xf32>
    %c24_196 = arith.constant 24 : index
    %c0_197 = arith.constant 0 : index
    %213 = vector.load %arg15[%c24_196, %c0_197] : memref<100x892xf32, #tpu.memory_space<vmem>>, vector<3x892xf32>
    tpu.vector_store %arg15[%c24_196, %c0_197], %212 {strides = array<i32>} : memref<100x892xf32, #tpu.memory_space<vmem>>, vector<3x892xf32>,
    %c1_198 = arith.constant 1 : index
    %c0_199 = arith.constant 0 : index
    %c34_200 = arith.constant 34 : index
    %214 = vector.load %arg0[%c1_198, %c0_199, %c34_200] : memref<2x3x1024xf32, #tpu.memory_space<vmem>>, vector<1x3x892xf32>
    %215 = vector.shape_cast %214 : vector<1x3x892xf32> to vector<3x892xf32>
    %c28_201 = arith.constant 28 : index
    %c0_202 = arith.constant 0 : index
    %216 = vector.load %arg15[%c28_201, %c0_202] : memref<100x892xf32, #tpu.memory_space<vmem>>, vector<3x892xf32>
    tpu.vector_store %arg15[%c28_201, %c0_202], %215 {strides = array<i32>} : memref<100x892xf32, #tpu.memory_space<vmem>>, vector<3x892xf32>,
    %c1_203 = arith.constant 1 : index
    %c0_204 = arith.constant 0 : index
    %c35_205 = arith.constant 35 : index
    %217 = vector.load %arg0[%c1_203, %c0_204, %c35_205] : memref<2x3x1024xf32, #tpu.memory_space<vmem>>, vector<1x3x892xf32>
    %218 = vector.shape_cast %217 : vector<1x3x892xf32> to vector<3x892xf32>
    %c32_206 = arith.constant 32 : index
    %c0_207 = arith.constant 0 : index
    %219 = vector.load %arg15[%c32_206, %c0_207] : memref<100x892xf32, #tpu.memory_space<vmem>>, vector<3x892xf32>
    tpu.vector_store %arg15[%c32_206, %c0_207], %218 {strides = array<i32>} : memref<100x892xf32, #tpu.memory_space<vmem>>, vector<3x892xf32>,
    %c1_208 = arith.constant 1 : index
    %c0_209 = arith.constant 0 : index
    %c36_210 = arith.constant 36 : index
    %220 = vector.load %arg0[%c1_208, %c0_209, %c36_210] : memref<2x3x1024xf32, #tpu.memory_space<vmem>>, vector<1x3x892xf32>
    %221 = vector.shape_cast %220 : vector<1x3x892xf32> to vector<3x892xf32>
    %c36_211 = arith.constant 36 : index
    %c0_212 = arith.constant 0 : index
    %222 = vector.load %arg15[%c36_211, %c0_212] : memref<100x892xf32, #tpu.memory_space<vmem>>, vector<3x892xf32>
    tpu.vector_store %arg15[%c36_211, %c0_212], %221 {strides = array<i32>} : memref<100x892xf32, #tpu.memory_space<vmem>>, vector<3x892xf32>,
    %c1_213 = arith.constant 1 : index
    %c0_214 = arith.constant 0 : index
    %c64_215 = arith.constant 64 : index
    %223 = vector.load %arg0[%c1_213, %c0_214, %c64_215] : memref<2x3x1024xf32, #tpu.memory_space<vmem>>, vector<1x3x892xf32>
    %224 = vector.shape_cast %223 : vector<1x3x892xf32> to vector<3x892xf32>
    %c40_216 = arith.constant 40 : index
    %c0_217 = arith.constant 0 : index
    %225 = vector.load %arg15[%c40_216, %c0_217] : memref<100x892xf32, #tpu.memory_space<vmem>>, vector<3x892xf32>
    tpu.vector_store %arg15[%c40_216, %c0_217], %224 {strides = array<i32>} : memref<100x892xf32, #tpu.memory_space<vmem>>, vector<3x892xf32>,
    %c1_218 = arith.constant 1 : index
    %c0_219 = arith.constant 0 : index
    %c65_220 = arith.constant 65 : index
    %226 = vector.load %arg0[%c1_218, %c0_219, %c65_220] : memref<2x3x1024xf32, #tpu.memory_space<vmem>>, vector<1x3x892xf32>
    %227 = vector.shape_cast %226 : vector<1x3x892xf32> to vector<3x892xf32>
    %c44_221 = arith.constant 44 : index
    %c0_222 = arith.constant 0 : index
    %228 = vector.load %arg15[%c44_221, %c0_222] : memref<100x892xf32, #tpu.memory_space<vmem>>, vector<3x892xf32>
    tpu.vector_store %arg15[%c44_221, %c0_222], %227 {strides = array<i32>} : memref<100x892xf32, #tpu.memory_space<vmem>>, vector<3x892xf32>,
    %c1_223 = arith.constant 1 : index
    %c0_224 = arith.constant 0 : index
    %c66_225 = arith.constant 66 : index
    %229 = vector.load %arg0[%c1_223, %c0_224, %c66_225] : memref<2x3x1024xf32, #tpu.memory_space<vmem>>, vector<1x3x892xf32>
    %230 = vector.shape_cast %229 : vector<1x3x892xf32> to vector<3x892xf32>
    %c48_226 = arith.constant 48 : index
    %c0_227 = arith.constant 0 : index
    %231 = vector.load %arg15[%c48_226, %c0_227] : memref<100x892xf32, #tpu.memory_space<vmem>>, vector<3x892xf32>
    tpu.vector_store %arg15[%c48_226, %c0_227], %230 {strides = array<i32>} : memref<100x892xf32, #tpu.memory_space<vmem>>, vector<3x892xf32>,
    %c1_228 = arith.constant 1 : index
    %c0_229 = arith.constant 0 : index
    %c67_230 = arith.constant 67 : index
    %232 = vector.load %arg0[%c1_228, %c0_229, %c67_230] : memref<2x3x1024xf32, #tpu.memory_space<vmem>>, vector<1x3x892xf32>
    %233 = vector.shape_cast %232 : vector<1x3x892xf32> to vector<3x892xf32>
    %c52_231 = arith.constant 52 : index
    %c0_232 = arith.constant 0 : index
    %234 = vector.load %arg15[%c52_231, %c0_232] : memref<100x892xf32, #tpu.memory_space<vmem>>, vector<3x892xf32>
    tpu.vector_store %arg15[%c52_231, %c0_232], %233 {strides = array<i32>} : memref<100x892xf32, #tpu.memory_space<vmem>>, vector<3x892xf32>,
    %c1_233 = arith.constant 1 : index
    %c0_234 = arith.constant 0 : index
    %c68_235 = arith.constant 68 : index
    %235 = vector.load %arg0[%c1_233, %c0_234, %c68_235] : memref<2x3x1024xf32, #tpu.memory_space<vmem>>, vector<1x3x892xf32>
    %236 = vector.shape_cast %235 : vector<1x3x892xf32> to vector<3x892xf32>
    %c56_236 = arith.constant 56 : index
    %c0_237 = arith.constant 0 : index
    %237 = vector.load %arg15[%c56_236, %c0_237] : memref<100x892xf32, #tpu.memory_space<vmem>>, vector<3x892xf32>
    tpu.vector_store %arg15[%c56_236, %c0_237], %236 {strides = array<i32>} : memref<100x892xf32, #tpu.memory_space<vmem>>, vector<3x892xf32>,
    %c1_238 = arith.constant 1 : index
    %c0_239 = arith.constant 0 : index
    %c96_240 = arith.constant 96 : index
    %238 = vector.load %arg0[%c1_238, %c0_239, %c96_240] : memref<2x3x1024xf32, #tpu.memory_space<vmem>>, vector<1x3x892xf32>
    %239 = vector.shape_cast %238 : vector<1x3x892xf32> to vector<3x892xf32>
    %c60_241 = arith.constant 60 : index
    %c0_242 = arith.constant 0 : index
    %240 = vector.load %arg15[%c60_241, %c0_242] : memref<100x892xf32, #tpu.memory_space<vmem>>, vector<3x892xf32>
    tpu.vector_store %arg15[%c60_241, %c0_242], %239 {strides = array<i32>} : memref<100x892xf32, #tpu.memory_space<vmem>>, vector<3x892xf32>,
    %c1_243 = arith.constant 1 : index
    %c0_244 = arith.constant 0 : index
    %c97_245 = arith.constant 97 : index
    %241 = vector.load %arg0[%c1_243, %c0_244, %c97_245] : memref<2x3x1024xf32, #tpu.memory_space<vmem>>, vector<1x3x892xf32>
    %242 = vector.shape_cast %241 : vector<1x3x892xf32> to vector<3x892xf32>
    %c64_246 = arith.constant 64 : index
    %c0_247 = arith.constant 0 : index
    %243 = vector.load %arg15[%c64_246, %c0_247] : memref<100x892xf32, #tpu.memory_space<vmem>>, vector<3x892xf32>
    tpu.vector_store %arg15[%c64_246, %c0_247], %242 {strides = array<i32>} : memref<100x892xf32, #tpu.memory_space<vmem>>, vector<3x892xf32>,
    %c1_248 = arith.constant 1 : index
    %c0_249 = arith.constant 0 : index
    %c98_250 = arith.constant 98 : index
    %244 = vector.load %arg0[%c1_248, %c0_249, %c98_250] : memref<2x3x1024xf32, #tpu.memory_space<vmem>>, vector<1x3x892xf32>
    %245 = vector.shape_cast %244 : vector<1x3x892xf32> to vector<3x892xf32>
    %c68_251 = arith.constant 68 : index
    %c0_252 = arith.constant 0 : index
    %246 = vector.load %arg15[%c68_251, %c0_252] : memref<100x892xf32, #tpu.memory_space<vmem>>, vector<3x892xf32>
    tpu.vector_store %arg15[%c68_251, %c0_252], %245 {strides = array<i32>} : memref<100x892xf32, #tpu.memory_space<vmem>>, vector<3x892xf32>,
    %c1_253 = arith.constant 1 : index
    %c0_254 = arith.constant 0 : index
    %c99_255 = arith.constant 99 : index
    %247 = vector.load %arg0[%c1_253, %c0_254, %c99_255] : memref<2x3x1024xf32, #tpu.memory_space<vmem>>, vector<1x3x892xf32>
    %248 = vector.shape_cast %247 : vector<1x3x892xf32> to vector<3x892xf32>
    %c72_256 = arith.constant 72 : index
    %c0_257 = arith.constant 0 : index
    %249 = vector.load %arg15[%c72_256, %c0_257] : memref<100x892xf32, #tpu.memory_space<vmem>>, vector<3x892xf32>
    tpu.vector_store %arg15[%c72_256, %c0_257], %248 {strides = array<i32>} : memref<100x892xf32, #tpu.memory_space<vmem>>, vector<3x892xf32>,
    %c1_258 = arith.constant 1 : index
    %c0_259 = arith.constant 0 : index
    %c100_260 = arith.constant 100 : index
    %250 = vector.load %arg0[%c1_258, %c0_259, %c100_260] : memref<2x3x1024xf32, #tpu.memory_space<vmem>>, vector<1x3x892xf32>
    %251 = vector.shape_cast %250 : vector<1x3x892xf32> to vector<3x892xf32>
    %c76_261 = arith.constant 76 : index
    %c0_262 = arith.constant 0 : index
    %252 = vector.load %arg15[%c76_261, %c0_262] : memref<100x892xf32, #tpu.memory_space<vmem>>, vector<3x892xf32>
    tpu.vector_store %arg15[%c76_261, %c0_262], %251 {strides = array<i32>} : memref<100x892xf32, #tpu.memory_space<vmem>>, vector<3x892xf32>,
    %c1_263 = arith.constant 1 : index
    %c0_264 = arith.constant 0 : index
    %c128_265 = arith.constant 128 : index
    %253 = vector.load %arg0[%c1_263, %c0_264, %c128_265] : memref<2x3x1024xf32, #tpu.memory_space<vmem>>, vector<1x3x892xf32>
    %254 = vector.shape_cast %253 : vector<1x3x892xf32> to vector<3x892xf32>
    %c80_266 = arith.constant 80 : index
    %c0_267 = arith.constant 0 : index
    %255 = vector.load %arg15[%c80_266, %c0_267] : memref<100x892xf32, #tpu.memory_space<vmem>>, vector<3x892xf32>
    tpu.vector_store %arg15[%c80_266, %c0_267], %254 {strides = array<i32>} : memref<100x892xf32, #tpu.memory_space<vmem>>, vector<3x892xf32>,
    %c1_268 = arith.constant 1 : index
    %c0_269 = arith.constant 0 : index
    %c129_270 = arith.constant 129 : index
    %256 = vector.load %arg0[%c1_268, %c0_269, %c129_270] : memref<2x3x1024xf32, #tpu.memory_space<vmem>>, vector<1x3x892xf32>
    %257 = vector.shape_cast %256 : vector<1x3x892xf32> to vector<3x892xf32>
    %c84_271 = arith.constant 84 : index
    %c0_272 = arith.constant 0 : index
    %258 = vector.load %arg15[%c84_271, %c0_272] : memref<100x892xf32, #tpu.memory_space<vmem>>, vector<3x892xf32>
    tpu.vector_store %arg15[%c84_271, %c0_272], %257 {strides = array<i32>} : memref<100x892xf32, #tpu.memory_space<vmem>>, vector<3x892xf32>,
    %c1_273 = arith.constant 1 : index
    %c0_274 = arith.constant 0 : index
    %c130_275 = arith.constant 130 : index
    %259 = vector.load %arg0[%c1_273, %c0_274, %c130_275] : memref<2x3x1024xf32, #tpu.memory_space<vmem>>, vector<1x3x892xf32>
    %260 = vector.shape_cast %259 : vector<1x3x892xf32> to vector<3x892xf32>
    %c88_276 = arith.constant 88 : index
    %c0_277 = arith.constant 0 : index
    %261 = vector.load %arg15[%c88_276, %c0_277] : memref<100x892xf32, #tpu.memory_space<vmem>>, vector<3x892xf32>
    tpu.vector_store %arg15[%c88_276, %c0_277], %260 {strides = array<i32>} : memref<100x892xf32, #tpu.memory_space<vmem>>, vector<3x892xf32>,
    %c1_278 = arith.constant 1 : index
    %c0_279 = arith.constant 0 : index
    %c131_280 = arith.constant 131 : index
    %262 = vector.load %arg0[%c1_278, %c0_279, %c131_280] : memref<2x3x1024xf32, #tpu.memory_space<vmem>>, vector<1x3x892xf32>
    %263 = vector.shape_cast %262 : vector<1x3x892xf32> to vector<3x892xf32>
    %c92_281 = arith.constant 92 : index
    %c0_282 = arith.constant 0 : index
    %264 = vector.load %arg15[%c92_281, %c0_282] : memref<100x892xf32, #tpu.memory_space<vmem>>, vector<3x892xf32>
    tpu.vector_store %arg15[%c92_281, %c0_282], %263 {strides = array<i32>} : memref<100x892xf32, #tpu.memory_space<vmem>>, vector<3x892xf32>,
    %c1_283 = arith.constant 1 : index
    %c0_284 = arith.constant 0 : index
    %c132_285 = arith.constant 132 : index
    %265 = vector.load %arg0[%c1_283, %c0_284, %c132_285] : memref<2x3x1024xf32, #tpu.memory_space<vmem>>, vector<1x3x892xf32>
    %266 = vector.shape_cast %265 : vector<1x3x892xf32> to vector<3x892xf32>
    %c96_286 = arith.constant 96 : index
    %c0_287 = arith.constant 0 : index
    %267 = vector.load %arg15[%c96_286, %c0_287] : memref<100x892xf32, #tpu.memory_space<vmem>>, vector<3x892xf32>
    tpu.vector_store %arg15[%c96_286, %c0_287], %266 {strides = array<i32>} : memref<100x892xf32, #tpu.memory_space<vmem>>, vector<3x892xf32>,
    %c0_288 = arith.constant 0 : index
    %c0_289 = arith.constant 0 : index
    %268 = vector.load %arg1[%c0_288, %c0_289] : memref<6x100xf32, #tpu.memory_space<vmem>>, vector<6x100xf32>
    %c0_290 = arith.constant 0 : index
    %c0_291 = arith.constant 0 : index
    %269 = vector.load %arg15[%c0_290, %c0_291] : memref<100x892xf32, #tpu.memory_space<vmem>>, vector<100x892xf32>
    %cst_292 = arith.constant dense<0.000000e+00> : vector<6x892xf32>
    %270 = tpu.matmul %268, %269, %cst_292 {dimension_numbers = #tpu.dot_dimension_numbers<[1], [0], [0], [1], [0, 0, 1, 1], [], []>} : vector<6x100xf32>, vector<100x892xf32>, vector<6x892xf32> -> vector<6x892xf32>
    %c0_293 = arith.constant 0 : index
    %c0_294 = arith.constant 0 : index
    %271 = vector.load %arg2[%c0_293, %c0_294] : memref<6x1xf32, #tpu.memory_space<vmem>>, vector<6x1xf32>
    %272 = vector.broadcast %271 : vector<6x1xf32> to vector<6x892xf32>
    %273 = arith.addf %270, %272 : vector<6x892xf32>
    %cst_295 = arith.constant 0.000000e+00 : f32
    %274 = vector.broadcast %cst_295 : f32 to vector<6x892xf32>
    %275 = arith.maximumf %273, %274 : vector<6x892xf32>
    %276 = vector.extract_strided_slice %275 {offsets = [0, 0], sizes = [6, 859], strides = [1, 1]} : vector<6x892xf32> to vector<6x859xf32>
    %277 = vector.extract_strided_slice %275 {offsets = [0, 1], sizes = [6, 859], strides = [1, 1]} : vector<6x892xf32> to vector<6x859xf32>
    %278 = arith.maximumf %276, %277 : vector<6x859xf32>
    %279 = vector.extract_strided_slice %275 {offsets = [0, 32], sizes = [6, 859], strides = [1, 1]} : vector<6x892xf32> to vector<6x859xf32>
    %280 = vector.extract_strided_slice %275 {offsets = [0, 33], sizes = [6, 859], strides = [1, 1]} : vector<6x892xf32> to vector<6x859xf32>
    %281 = arith.maximumf %279, %280 : vector<6x859xf32>
    %282 = arith.maximumf %278, %281 : vector<6x859xf32>
    %283 = vector.extract_strided_slice %282 {offsets = [0, 0], sizes = [6, 595], strides = [1, 1]} : vector<6x859xf32> to vector<6x595xf32>
    %c0_296 = arith.constant 0 : index
    %c0_297 = arith.constant 0 : index
    %284 = vector.load %arg16[%c0_296, %c0_297] : memref<200x595xf32, #tpu.memory_space<vmem>>, vector<6x595xf32>
    tpu.vector_store %arg16[%c0_296, %c0_297], %283 {strides = array<i32>} : memref<200x595xf32, #tpu.memory_space<vmem>>, vector<6x595xf32>,
    %285 = vector.extract_strided_slice %282 {offsets = [0, 2], sizes = [6, 595], strides = [1, 1]} : vector<6x859xf32> to vector<6x595xf32>
    %c8_298 = arith.constant 8 : index
    %c0_299 = arith.constant 0 : index
    %286 = vector.load %arg16[%c8_298, %c0_299] : memref<200x595xf32, #tpu.memory_space<vmem>>, vector<6x595xf32>
    tpu.vector_store %arg16[%c8_298, %c0_299], %285 {strides = array<i32>} : memref<200x595xf32, #tpu.memory_space<vmem>>, vector<6x595xf32>,
    %287 = vector.extract_strided_slice %282 {offsets = [0, 4], sizes = [6, 595], strides = [1, 1]} : vector<6x859xf32> to vector<6x595xf32>
    %c16_300 = arith.constant 16 : index
    %c0_301 = arith.constant 0 : index
    %288 = vector.load %arg16[%c16_300, %c0_301] : memref<200x595xf32, #tpu.memory_space<vmem>>, vector<6x595xf32>
    tpu.vector_store %arg16[%c16_300, %c0_301], %287 {strides = array<i32>} : memref<200x595xf32, #tpu.memory_space<vmem>>, vector<6x595xf32>,
    %289 = vector.extract_strided_slice %282 {offsets = [0, 6], sizes = [6, 595], strides = [1, 1]} : vector<6x859xf32> to vector<6x595xf32>
    %c24_302 = arith.constant 24 : index
    %c0_303 = arith.constant 0 : index
    %290 = vector.load %arg16[%c24_302, %c0_303] : memref<200x595xf32, #tpu.memory_space<vmem>>, vector<6x595xf32>
    tpu.vector_store %arg16[%c24_302, %c0_303], %289 {strides = array<i32>} : memref<200x595xf32, #tpu.memory_space<vmem>>, vector<6x595xf32>,
    %291 = vector.extract_strided_slice %282 {offsets = [0, 8], sizes = [6, 595], strides = [1, 1]} : vector<6x859xf32> to vector<6x595xf32>
    %c32_304 = arith.constant 32 : index
    %c0_305 = arith.constant 0 : index
    %292 = vector.load %arg16[%c32_304, %c0_305] : memref<200x595xf32, #tpu.memory_space<vmem>>, vector<6x595xf32>
    tpu.vector_store %arg16[%c32_304, %c0_305], %291 {strides = array<i32>} : memref<200x595xf32, #tpu.memory_space<vmem>>, vector<6x595xf32>,
    %293 = vector.extract_strided_slice %282 {offsets = [0, 64], sizes = [6, 595], strides = [1, 1]} : vector<6x859xf32> to vector<6x595xf32>
    %c40_306 = arith.constant 40 : index
    %c0_307 = arith.constant 0 : index
    %294 = vector.load %arg16[%c40_306, %c0_307] : memref<200x595xf32, #tpu.memory_space<vmem>>, vector<6x595xf32>
    tpu.vector_store %arg16[%c40_306, %c0_307], %293 {strides = array<i32>} : memref<200x595xf32, #tpu.memory_space<vmem>>, vector<6x595xf32>,
    %295 = vector.extract_strided_slice %282 {offsets = [0, 66], sizes = [6, 595], strides = [1, 1]} : vector<6x859xf32> to vector<6x595xf32>
    %c48_308 = arith.constant 48 : index
    %c0_309 = arith.constant 0 : index
    %296 = vector.load %arg16[%c48_308, %c0_309] : memref<200x595xf32, #tpu.memory_space<vmem>>, vector<6x595xf32>
    tpu.vector_store %arg16[%c48_308, %c0_309], %295 {strides = array<i32>} : memref<200x595xf32, #tpu.memory_space<vmem>>, vector<6x595xf32>,
    %297 = vector.extract_strided_slice %282 {offsets = [0, 68], sizes = [6, 595], strides = [1, 1]} : vector<6x859xf32> to vector<6x595xf32>
    %c56_310 = arith.constant 56 : index
    %c0_311 = arith.constant 0 : index
    %298 = vector.load %arg16[%c56_310, %c0_311] : memref<200x595xf32, #tpu.memory_space<vmem>>, vector<6x595xf32>
    tpu.vector_store %arg16[%c56_310, %c0_311], %297 {strides = array<i32>} : memref<200x595xf32, #tpu.memory_space<vmem>>, vector<6x595xf32>,
    %299 = vector.extract_strided_slice %282 {offsets = [0, 70], sizes = [6, 595], strides = [1, 1]} : vector<6x859xf32> to vector<6x595xf32>
    %c64_312 = arith.constant 64 : index
    %c0_313 = arith.constant 0 : index
    %300 = vector.load %arg16[%c64_312, %c0_313] : memref<200x595xf32, #tpu.memory_space<vmem>>, vector<6x595xf32>
    tpu.vector_store %arg16[%c64_312, %c0_313], %299 {strides = array<i32>} : memref<200x595xf32, #tpu.memory_space<vmem>>, vector<6x595xf32>,
    %301 = vector.extract_strided_slice %282 {offsets = [0, 72], sizes = [6, 595], strides = [1, 1]} : vector<6x859xf32> to vector<6x595xf32>
    %c72_314 = arith.constant 72 : index
    %c0_315 = arith.constant 0 : index
    %302 = vector.load %arg16[%c72_314, %c0_315] : memref<200x595xf32, #tpu.memory_space<vmem>>, vector<6x595xf32>
    tpu.vector_store %arg16[%c72_314, %c0_315], %301 {strides = array<i32>} : memref<200x595xf32, #tpu.memory_space<vmem>>, vector<6x595xf32>,
    %303 = vector.extract_strided_slice %282 {offsets = [0, 128], sizes = [6, 595], strides = [1, 1]} : vector<6x859xf32> to vector<6x595xf32>
    %c80_316 = arith.constant 80 : index
    %c0_317 = arith.constant 0 : index
    %304 = vector.load %arg16[%c80_316, %c0_317] : memref<200x595xf32, #tpu.memory_space<vmem>>, vector<6x595xf32>
    tpu.vector_store %arg16[%c80_316, %c0_317], %303 {strides = array<i32>} : memref<200x595xf32, #tpu.memory_space<vmem>>, vector<6x595xf32>,
    %305 = vector.extract_strided_slice %282 {offsets = [0, 130], sizes = [6, 595], strides = [1, 1]} : vector<6x859xf32> to vector<6x595xf32>
    %c88_318 = arith.constant 88 : index
    %c0_319 = arith.constant 0 : index
    %306 = vector.load %arg16[%c88_318, %c0_319] : memref<200x595xf32, #tpu.memory_space<vmem>>, vector<6x595xf32>
    tpu.vector_store %arg16[%c88_318, %c0_319], %305 {strides = array<i32>} : memref<200x595xf32, #tpu.memory_space<vmem>>, vector<6x595xf32>,
    %307 = vector.extract_strided_slice %282 {offsets = [0, 132], sizes = [6, 595], strides = [1, 1]} : vector<6x859xf32> to vector<6x595xf32>
    %c96_320 = arith.constant 96 : index
    %c0_321 = arith.constant 0 : index
    %308 = vector.load %arg16[%c96_320, %c0_321] : memref<200x595xf32, #tpu.memory_space<vmem>>, vector<6x595xf32>
    tpu.vector_store %arg16[%c96_320, %c0_321], %307 {strides = array<i32>} : memref<200x595xf32, #tpu.memory_space<vmem>>, vector<6x595xf32>,
    %309 = vector.extract_strided_slice %282 {offsets = [0, 134], sizes = [6, 595], strides = [1, 1]} : vector<6x859xf32> to vector<6x595xf32>
    %c104_322 = arith.constant 104 : index
    %c0_323 = arith.constant 0 : index
    %310 = vector.load %arg16[%c104_322, %c0_323] : memref<200x595xf32, #tpu.memory_space<vmem>>, vector<6x595xf32>
    tpu.vector_store %arg16[%c104_322, %c0_323], %309 {strides = array<i32>} : memref<200x595xf32, #tpu.memory_space<vmem>>, vector<6x595xf32>,
    %311 = vector.extract_strided_slice %282 {offsets = [0, 136], sizes = [6, 595], strides = [1, 1]} : vector<6x859xf32> to vector<6x595xf32>
    %c112_324 = arith.constant 112 : index
    %c0_325 = arith.constant 0 : index
    %312 = vector.load %arg16[%c112_324, %c0_325] : memref<200x595xf32, #tpu.memory_space<vmem>>, vector<6x595xf32>
    tpu.vector_store %arg16[%c112_324, %c0_325], %311 {strides = array<i32>} : memref<200x595xf32, #tpu.memory_space<vmem>>, vector<6x595xf32>,
    %313 = vector.extract_strided_slice %282 {offsets = [0, 192], sizes = [6, 595], strides = [1, 1]} : vector<6x859xf32> to vector<6x595xf32>
    %c120_326 = arith.constant 120 : index
    %c0_327 = arith.constant 0 : index
    %314 = vector.load %arg16[%c120_326, %c0_327] : memref<200x595xf32, #tpu.memory_space<vmem>>, vector<6x595xf32>
    tpu.vector_store %arg16[%c120_326, %c0_327], %313 {strides = array<i32>} : memref<200x595xf32, #tpu.memory_space<vmem>>, vector<6x595xf32>,
    %315 = vector.extract_strided_slice %282 {offsets = [0, 194], sizes = [6, 595], strides = [1, 1]} : vector<6x859xf32> to vector<6x595xf32>
    %c128_328 = arith.constant 128 : index
    %c0_329 = arith.constant 0 : index
    %316 = vector.load %arg16[%c128_328, %c0_329] : memref<200x595xf32, #tpu.memory_space<vmem>>, vector<6x595xf32>
    tpu.vector_store %arg16[%c128_328, %c0_329], %315 {strides = array<i32>} : memref<200x595xf32, #tpu.memory_space<vmem>>, vector<6x595xf32>,
    %317 = vector.extract_strided_slice %282 {offsets = [0, 196], sizes = [6, 595], strides = [1, 1]} : vector<6x859xf32> to vector<6x595xf32>
    %c136_330 = arith.constant 136 : index
    %c0_331 = arith.constant 0 : index
    %318 = vector.load %arg16[%c136_330, %c0_331] : memref<200x595xf32, #tpu.memory_space<vmem>>, vector<6x595xf32>
    tpu.vector_store %arg16[%c136_330, %c0_331], %317 {strides = array<i32>} : memref<200x595xf32, #tpu.memory_space<vmem>>, vector<6x595xf32>,
    %319 = vector.extract_strided_slice %282 {offsets = [0, 198], sizes = [6, 595], strides = [1, 1]} : vector<6x859xf32> to vector<6x595xf32>
    %c144_332 = arith.constant 144 : index
    %c0_333 = arith.constant 0 : index
    %320 = vector.load %arg16[%c144_332, %c0_333] : memref<200x595xf32, #tpu.memory_space<vmem>>, vector<6x595xf32>
    tpu.vector_store %arg16[%c144_332, %c0_333], %319 {strides = array<i32>} : memref<200x595xf32, #tpu.memory_space<vmem>>, vector<6x595xf32>,
    %321 = vector.extract_strided_slice %282 {offsets = [0, 200], sizes = [6, 595], strides = [1, 1]} : vector<6x859xf32> to vector<6x595xf32>
    %c152_334 = arith.constant 152 : index
    %c0_335 = arith.constant 0 : index
    %322 = vector.load %arg16[%c152_334, %c0_335] : memref<200x595xf32, #tpu.memory_space<vmem>>, vector<6x595xf32>
    tpu.vector_store %arg16[%c152_334, %c0_335], %321 {strides = array<i32>} : memref<200x595xf32, #tpu.memory_space<vmem>>, vector<6x595xf32>,
    %323 = vector.extract_strided_slice %282 {offsets = [0, 256], sizes = [6, 595], strides = [1, 1]} : vector<6x859xf32> to vector<6x595xf32>
    %c160_336 = arith.constant 160 : index
    %c0_337 = arith.constant 0 : index
    %324 = vector.load %arg16[%c160_336, %c0_337] : memref<200x595xf32, #tpu.memory_space<vmem>>, vector<6x595xf32>
    tpu.vector_store %arg16[%c160_336, %c0_337], %323 {strides = array<i32>} : memref<200x595xf32, #tpu.memory_space<vmem>>, vector<6x595xf32>,
    %325 = vector.extract_strided_slice %282 {offsets = [0, 258], sizes = [6, 595], strides = [1, 1]} : vector<6x859xf32> to vector<6x595xf32>
    %c168_338 = arith.constant 168 : index
    %c0_339 = arith.constant 0 : index
    %326 = vector.load %arg16[%c168_338, %c0_339] : memref<200x595xf32, #tpu.memory_space<vmem>>, vector<6x595xf32>
    tpu.vector_store %arg16[%c168_338, %c0_339], %325 {strides = array<i32>} : memref<200x595xf32, #tpu.memory_space<vmem>>, vector<6x595xf32>,
    %327 = vector.extract_strided_slice %282 {offsets = [0, 260], sizes = [6, 595], strides = [1, 1]} : vector<6x859xf32> to vector<6x595xf32>
    %c176_340 = arith.constant 176 : index
    %c0_341 = arith.constant 0 : index
    %328 = vector.load %arg16[%c176_340, %c0_341] : memref<200x595xf32, #tpu.memory_space<vmem>>, vector<6x595xf32>
    tpu.vector_store %arg16[%c176_340, %c0_341], %327 {strides = array<i32>} : memref<200x595xf32, #tpu.memory_space<vmem>>, vector<6x595xf32>,
    %329 = vector.extract_strided_slice %282 {offsets = [0, 262], sizes = [6, 595], strides = [1, 1]} : vector<6x859xf32> to vector<6x595xf32>
    %c184_342 = arith.constant 184 : index
    %c0_343 = arith.constant 0 : index
    %330 = vector.load %arg16[%c184_342, %c0_343] : memref<200x595xf32, #tpu.memory_space<vmem>>, vector<6x595xf32>
    tpu.vector_store %arg16[%c184_342, %c0_343], %329 {strides = array<i32>} : memref<200x595xf32, #tpu.memory_space<vmem>>, vector<6x595xf32>,
    %331 = vector.extract_strided_slice %282 {offsets = [0, 264], sizes = [6, 595], strides = [1, 1]} : vector<6x859xf32> to vector<6x595xf32>
    %c192_344 = arith.constant 192 : index
    %c0_345 = arith.constant 0 : index
    %332 = vector.load %arg16[%c192_344, %c0_345] : memref<200x595xf32, #tpu.memory_space<vmem>>, vector<6x595xf32>
    tpu.vector_store %arg16[%c192_344, %c0_345], %331 {strides = array<i32>} : memref<200x595xf32, #tpu.memory_space<vmem>>, vector<6x595xf32>,
    %c0_346 = arith.constant 0 : index
    %c0_347 = arith.constant 0 : index
    %333 = vector.load %arg3[%c0_346, %c0_347] : memref<16x200xf32, #tpu.memory_space<vmem>>, vector<16x200xf32>
    %c0_348 = arith.constant 0 : index
    %c0_349 = arith.constant 0 : index
    %334 = vector.load %arg16[%c0_348, %c0_349] : memref<200x595xf32, #tpu.memory_space<vmem>>, vector<200x595xf32>
    %cst_350 = arith.constant dense<0.000000e+00> : vector<16x595xf32>
    %335 = tpu.matmul %333, %334, %cst_350 {dimension_numbers = #tpu.dot_dimension_numbers<[1], [0], [0], [1], [0, 0, 1, 1], [], []>} : vector<16x200xf32>, vector<200x595xf32>, vector<16x595xf32> -> vector<16x595xf32>
    %c0_351 = arith.constant 0 : index
    %c0_352 = arith.constant 0 : index
    %336 = vector.load %arg4[%c0_351, %c0_352] : memref<16x1xf32, #tpu.memory_space<vmem>>, vector<16x1xf32>
    %337 = vector.broadcast %336 : vector<16x1xf32> to vector<16x595xf32>
    %338 = arith.addf %335, %337 : vector<16x595xf32>
    %cst_353 = arith.constant 0.000000e+00 : f32
    %339 = vector.broadcast %cst_353 : f32 to vector<16x595xf32>
    %340 = arith.maximumf %338, %339 : vector<16x595xf32>
    %341 = vector.extract_strided_slice %340 {offsets = [0, 0], sizes = [16, 529], strides = [1, 1]} : vector<16x595xf32> to vector<16x529xf32>
    %342 = vector.extract_strided_slice %340 {offsets = [0, 2], sizes = [16, 529], strides = [1, 1]} : vector<16x595xf32> to vector<16x529xf32>
    %343 = arith.maximumf %341, %342 : vector<16x529xf32>
    %344 = vector.extract_strided_slice %340 {offsets = [0, 64], sizes = [16, 529], strides = [1, 1]} : vector<16x595xf32> to vector<16x529xf32>
    %345 = vector.extract_strided_slice %340 {offsets = [0, 66], sizes = [16, 529], strides = [1, 1]} : vector<16x595xf32> to vector<16x529xf32>
    %346 = arith.maximumf %344, %345 : vector<16x529xf32>
    %347 = arith.maximumf %343, %346 : vector<16x529xf32>
    %c0_354 = arith.constant 0 : index
    %c0_355 = arith.constant 0 : index
    %348 = vector.load %arg5[%c0_354, %c0_355] : memref<529x25xf32, #tpu.memory_space<vmem>>, vector<529x25xf32>
    %cst_356 = arith.constant dense<0.000000e+00> : vector<16x25xf32>
    %349 = tpu.matmul %347, %348, %cst_356 {dimension_numbers = #tpu.dot_dimension_numbers<[1], [0], [0], [1], [0, 0, 1, 1], [], []>} : vector<16x529xf32>, vector<529x25xf32>, vector<16x25xf32> -> vector<16x25xf32>
    %350 = vector.extract_strided_slice %349 {offsets = [0, 0], sizes = [1, 25], strides = [1, 1]} : vector<16x25xf32> to vector<1x25xf32>
    %c1_357 = arith.constant 1 : index
    %c0_358 = arith.constant 0 : index
    %351 = vector.load %arg17[%c1_357, %c0_358] : memref<2x400xf32, #tpu.memory_space<vmem>>, vector<1x25xf32>
    tpu.vector_store %arg17[%c1_357, %c0_358], %350 {strides = array<i32>} : memref<2x400xf32, #tpu.memory_space<vmem>>, vector<1x25xf32>,
    %352 = vector.extract_strided_slice %349 {offsets = [1, 0], sizes = [1, 25], strides = [1, 1]} : vector<16x25xf32> to vector<1x25xf32>
    %c1_359 = arith.constant 1 : index
    %c25_360 = arith.constant 25 : index
    %353 = vector.load %arg17[%c1_359, %c25_360] : memref<2x400xf32, #tpu.memory_space<vmem>>, vector<1x25xf32>
    tpu.vector_store %arg17[%c1_359, %c25_360], %352 {strides = array<i32>} : memref<2x400xf32, #tpu.memory_space<vmem>>, vector<1x25xf32>,
    %354 = vector.extract_strided_slice %349 {offsets = [2, 0], sizes = [1, 25], strides = [1, 1]} : vector<16x25xf32> to vector<1x25xf32>
    %c1_361 = arith.constant 1 : index
    %c50_362 = arith.constant 50 : index
    %355 = vector.load %arg17[%c1_361, %c50_362] : memref<2x400xf32, #tpu.memory_space<vmem>>, vector<1x25xf32>
    tpu.vector_store %arg17[%c1_361, %c50_362], %354 {strides = array<i32>} : memref<2x400xf32, #tpu.memory_space<vmem>>, vector<1x25xf32>,
    %356 = vector.extract_strided_slice %349 {offsets = [3, 0], sizes = [1, 25], strides = [1, 1]} : vector<16x25xf32> to vector<1x25xf32>
    %c1_363 = arith.constant 1 : index
    %c75_364 = arith.constant 75 : index
    %357 = vector.load %arg17[%c1_363, %c75_364] : memref<2x400xf32, #tpu.memory_space<vmem>>, vector<1x25xf32>
    tpu.vector_store %arg17[%c1_363, %c75_364], %356 {strides = array<i32>} : memref<2x400xf32, #tpu.memory_space<vmem>>, vector<1x25xf32>,
    %358 = vector.extract_strided_slice %349 {offsets = [4, 0], sizes = [1, 25], strides = [1, 1]} : vector<16x25xf32> to vector<1x25xf32>
    %c1_365 = arith.constant 1 : index
    %c100_366 = arith.constant 100 : index
    %359 = vector.load %arg17[%c1_365, %c100_366] : memref<2x400xf32, #tpu.memory_space<vmem>>, vector<1x25xf32>
    tpu.vector_store %arg17[%c1_365, %c100_366], %358 {strides = array<i32>} : memref<2x400xf32, #tpu.memory_space<vmem>>, vector<1x25xf32>,
    %360 = vector.extract_strided_slice %349 {offsets = [5, 0], sizes = [1, 25], strides = [1, 1]} : vector<16x25xf32> to vector<1x25xf32>
    %c1_367 = arith.constant 1 : index
    %c125_368 = arith.constant 125 : index
    %361 = vector.load %arg17[%c1_367, %c125_368] : memref<2x400xf32, #tpu.memory_space<vmem>>, vector<1x25xf32>
    tpu.vector_store %arg17[%c1_367, %c125_368], %360 {strides = array<i32>} : memref<2x400xf32, #tpu.memory_space<vmem>>, vector<1x25xf32>,
    %362 = vector.extract_strided_slice %349 {offsets = [6, 0], sizes = [1, 25], strides = [1, 1]} : vector<16x25xf32> to vector<1x25xf32>
    %c1_369 = arith.constant 1 : index
    %c150_370 = arith.constant 150 : index
    %363 = vector.load %arg17[%c1_369, %c150_370] : memref<2x400xf32, #tpu.memory_space<vmem>>, vector<1x25xf32>
    tpu.vector_store %arg17[%c1_369, %c150_370], %362 {strides = array<i32>} : memref<2x400xf32, #tpu.memory_space<vmem>>, vector<1x25xf32>,
    %364 = vector.extract_strided_slice %349 {offsets = [7, 0], sizes = [1, 25], strides = [1, 1]} : vector<16x25xf32> to vector<1x25xf32>
    %c1_371 = arith.constant 1 : index
    %c175_372 = arith.constant 175 : index
    %365 = vector.load %arg17[%c1_371, %c175_372] : memref<2x400xf32, #tpu.memory_space<vmem>>, vector<1x25xf32>
    tpu.vector_store %arg17[%c1_371, %c175_372], %364 {strides = array<i32>} : memref<2x400xf32, #tpu.memory_space<vmem>>, vector<1x25xf32>,
    %366 = vector.extract_strided_slice %349 {offsets = [8, 0], sizes = [1, 25], strides = [1, 1]} : vector<16x25xf32> to vector<1x25xf32>
    %c1_373 = arith.constant 1 : index
    %c200_374 = arith.constant 200 : index
    %367 = vector.load %arg17[%c1_373, %c200_374] : memref<2x400xf32, #tpu.memory_space<vmem>>, vector<1x25xf32>
    tpu.vector_store %arg17[%c1_373, %c200_374], %366 {strides = array<i32>} : memref<2x400xf32, #tpu.memory_space<vmem>>, vector<1x25xf32>,
    %368 = vector.extract_strided_slice %349 {offsets = [9, 0], sizes = [1, 25], strides = [1, 1]} : vector<16x25xf32> to vector<1x25xf32>
    %c1_375 = arith.constant 1 : index
    %c225_376 = arith.constant 225 : index
    %369 = vector.load %arg17[%c1_375, %c225_376] : memref<2x400xf32, #tpu.memory_space<vmem>>, vector<1x25xf32>
    tpu.vector_store %arg17[%c1_375, %c225_376], %368 {strides = array<i32>} : memref<2x400xf32, #tpu.memory_space<vmem>>, vector<1x25xf32>,
    %370 = vector.extract_strided_slice %349 {offsets = [10, 0], sizes = [1, 25], strides = [1, 1]} : vector<16x25xf32> to vector<1x25xf32>
    %c1_377 = arith.constant 1 : index
    %c250_378 = arith.constant 250 : index
    %371 = vector.load %arg17[%c1_377, %c250_378] : memref<2x400xf32, #tpu.memory_space<vmem>>, vector<1x25xf32>
    tpu.vector_store %arg17[%c1_377, %c250_378], %370 {strides = array<i32>} : memref<2x400xf32, #tpu.memory_space<vmem>>, vector<1x25xf32>,
    %372 = vector.extract_strided_slice %349 {offsets = [11, 0], sizes = [1, 25], strides = [1, 1]} : vector<16x25xf32> to vector<1x25xf32>
    %c1_379 = arith.constant 1 : index
    %c275_380 = arith.constant 275 : index
    %373 = vector.load %arg17[%c1_379, %c275_380] : memref<2x400xf32, #tpu.memory_space<vmem>>, vector<1x25xf32>
    tpu.vector_store %arg17[%c1_379, %c275_380], %372 {strides = array<i32>} : memref<2x400xf32, #tpu.memory_space<vmem>>, vector<1x25xf32>,
    %374 = vector.extract_strided_slice %349 {offsets = [12, 0], sizes = [1, 25], strides = [1, 1]} : vector<16x25xf32> to vector<1x25xf32>
    %c1_381 = arith.constant 1 : index
    %c300_382 = arith.constant 300 : index
    %375 = vector.load %arg17[%c1_381, %c300_382] : memref<2x400xf32, #tpu.memory_space<vmem>>, vector<1x25xf32>
    tpu.vector_store %arg17[%c1_381, %c300_382], %374 {strides = array<i32>} : memref<2x400xf32, #tpu.memory_space<vmem>>, vector<1x25xf32>,
    %376 = vector.extract_strided_slice %349 {offsets = [13, 0], sizes = [1, 25], strides = [1, 1]} : vector<16x25xf32> to vector<1x25xf32>
    %c1_383 = arith.constant 1 : index
    %c325_384 = arith.constant 325 : index
    %377 = vector.load %arg17[%c1_383, %c325_384] : memref<2x400xf32, #tpu.memory_space<vmem>>, vector<1x25xf32>
    tpu.vector_store %arg17[%c1_383, %c325_384], %376 {strides = array<i32>} : memref<2x400xf32, #tpu.memory_space<vmem>>, vector<1x25xf32>,
    %378 = vector.extract_strided_slice %349 {offsets = [14, 0], sizes = [1, 25], strides = [1, 1]} : vector<16x25xf32> to vector<1x25xf32>
    %c1_385 = arith.constant 1 : index
    %c350_386 = arith.constant 350 : index
    %379 = vector.load %arg17[%c1_385, %c350_386] : memref<2x400xf32, #tpu.memory_space<vmem>>, vector<1x25xf32>
    tpu.vector_store %arg17[%c1_385, %c350_386], %378 {strides = array<i32>} : memref<2x400xf32, #tpu.memory_space<vmem>>, vector<1x25xf32>,
    %380 = vector.extract_strided_slice %349 {offsets = [15, 0], sizes = [1, 25], strides = [1, 1]} : vector<16x25xf32> to vector<1x25xf32>
    %c1_387 = arith.constant 1 : index
    %c375_388 = arith.constant 375 : index
    %381 = vector.load %arg17[%c1_387, %c375_388] : memref<2x400xf32, #tpu.memory_space<vmem>>, vector<1x25xf32>
    tpu.vector_store %arg17[%c1_387, %c375_388], %380 {strides = array<i32>} : memref<2x400xf32, #tpu.memory_space<vmem>>, vector<1x25xf32>,
    %c0_389 = arith.constant 0 : index
    %c0_390 = arith.constant 0 : index
    %382 = vector.load %arg17[%c0_389, %c0_390] : memref<2x400xf32, #tpu.memory_space<vmem>>, vector<2x400xf32>
    %c0_391 = arith.constant 0 : index
    %c0_392 = arith.constant 0 : index
    %383 = vector.load %arg6[%c0_391, %c0_392] : memref<400x120xf32, #tpu.memory_space<vmem>>, vector<400x120xf32>
    %cst_393 = arith.constant dense<0.000000e+00> : vector<2x120xf32>
    %384 = tpu.matmul %382, %383, %cst_393 {dimension_numbers = #tpu.dot_dimension_numbers<[1], [0], [0], [1], [0, 0, 1, 1], [], []>} : vector<2x400xf32>, vector<400x120xf32>, vector<2x120xf32> -> vector<2x120xf32>
    %c0_394 = arith.constant 0 : index
    %c0_395 = arith.constant 0 : index
    %385 = vector.load %arg7[%c0_394, %c0_395] : memref<1x120xf32, #tpu.memory_space<vmem>>, vector<1x120xf32>
    %386 = vector.broadcast %385 : vector<1x120xf32> to vector<2x120xf32>
    %387 = arith.addf %384, %386 : vector<2x120xf32>
    %cst_396 = arith.constant 0.000000e+00 : f32
    %388 = vector.broadcast %cst_396 : f32 to vector<2x120xf32>
    %389 = arith.maximumf %387, %388 : vector<2x120xf32>
    %c0_397 = arith.constant 0 : index
    %c0_398 = arith.constant 0 : index
    %390 = vector.load %arg8[%c0_397, %c0_398] : memref<120x84xf32, #tpu.memory_space<vmem>>, vector<120x84xf32>
    %cst_399 = arith.constant dense<0.000000e+00> : vector<2x84xf32>
    %391 = tpu.matmul %389, %390, %cst_399 {dimension_numbers = #tpu.dot_dimension_numbers<[1], [0], [0], [1], [0, 0, 1, 1], [], []>} : vector<2x120xf32>, vector<120x84xf32>, vector<2x84xf32> -> vector<2x84xf32>
    %c0_400 = arith.constant 0 : index
    %c0_401 = arith.constant 0 : index
    %392 = vector.load %arg9[%c0_400, %c0_401] : memref<1x84xf32, #tpu.memory_space<vmem>>, vector<1x84xf32>
    %393 = vector.broadcast %392 : vector<1x84xf32> to vector<2x84xf32>
    %394 = arith.addf %391, %393 : vector<2x84xf32>
    %cst_402 = arith.constant 0.000000e+00 : f32
    %395 = vector.broadcast %cst_402 : f32 to vector<2x84xf32>
    %396 = arith.maximumf %394, %395 : vector<2x84xf32>
    %c0_403 = arith.constant 0 : index
    %c0_404 = arith.constant 0 : index
    %397 = vector.load %arg10[%c0_403, %c0_404] : memref<84x10xf32, #tpu.memory_space<vmem>>, vector<84x10xf32>
    %cst_405 = arith.constant dense<0.000000e+00> : vector<2x10xf32>
    %398 = tpu.matmul %396, %397, %cst_405 {dimension_numbers = #tpu.dot_dimension_numbers<[1], [0], [0], [1], [0, 0, 1, 1], [], []>} : vector<2x84xf32>, vector<84x10xf32>, vector<2x10xf32> -> vector<2x10xf32>
    %c0_406 = arith.constant 0 : index
    %c0_407 = arith.constant 0 : index
    %399 = vector.load %arg11[%c0_406, %c0_407] : memref<1x10xf32, #tpu.memory_space<vmem>>, vector<1x10xf32>
    %400 = vector.broadcast %399 : vector<1x10xf32> to vector<2x10xf32>
    %401 = arith.addf %398, %400 : vector<2x10xf32>
    %cst_408 = arith.constant 0.000000e+00 : f32
    %402 = vector.broadcast %cst_408 : f32 to vector<2x10xf32>
    %403 = arith.maximumf %401, %402 : vector<2x10xf32>
    %c0_409 = arith.constant 0 : index
    %c0_410 = arith.constant 0 : index
    %404 = vector.load %arg12[%c0_409, %c0_410] : memref<10x5xf32, #tpu.memory_space<vmem>>, vector<10x5xf32>
    %cst_411 = arith.constant dense<0.000000e+00> : vector<2x5xf32>
    %405 = tpu.matmul %403, %404, %cst_411 {dimension_numbers = #tpu.dot_dimension_numbers<[1], [0], [0], [1], [0, 0, 1, 1], [], []>} : vector<2x10xf32>, vector<10x5xf32>, vector<2x5xf32> -> vector<2x5xf32>
    %c0_412 = arith.constant 0 : index
    %c0_413 = arith.constant 0 : index
    %406 = vector.load %arg13[%c0_412, %c0_413] : memref<1x5xf32, #tpu.memory_space<vmem>>, vector<1x5xf32>
    %407 = vector.broadcast %406 : vector<1x5xf32> to vector<2x5xf32>
    %408 = arith.addf %405, %407 : vector<2x5xf32>
    %c0_414 = arith.constant 0 : index
    %c0_415 = arith.constant 0 : index
    %409 = vector.load %arg14[%c0_414, %c0_415] : memref<2x5xf32, #tpu.memory_space<vmem>>, vector<2x5xf32>
    tpu.vector_store %arg14[%c0_414, %c0_415], %408 {strides = array<i32>} : memref<2x5xf32, #tpu.memory_space<vmem>>, vector<2x5xf32>,
    return
  }
}

</mosaic_0001>

<llo_original>
// kernel: lenet_forward.1
$region0: #{lenet_forward.1}
  #allocation0 [shape = 'u32[]', space=smem, size = 0x4, offset = 0x4, fixed_abs, tag = 'smem constant byte address 0x4 - core index']
  #allocation1 [shape = 'u32[144,128]{1,0:T(1,128)}', space=vmem, size = 0x12000, scoped, tag = 'internal scratch']
  #allocation2 [shape = 'f32[100,892]{1,0:T(8,128)}', space=vmem, size = 0x5b000, scoped, tag = 'scratch operand']
  #allocation3 [shape = 'f32[200,595]{1,0:T(8,128)}', space=vmem, size = 0x7d000, scoped, tag = 'scratch operand']
  #allocation4 [shape = 'f32[2,400]{1,0:T(2,128)}', space=vmem, size = 0x1000, scoped, tag = 'scratch operand']
  %s0 = inlined_call_operand.vmem [shape: f32[2,3,1024], index: 0, kind: input, shape index: {}]
  %s1 = inlined_call_operand.vmem [shape: f32[6,100], index: 1, kind: input, shape index: {}]
  %s2 = inlined_call_operand.vmem [shape: f32[6,1], index: 2, kind: input, shape index: {}]
  %s3 = inlined_call_operand.vmem [shape: f32[16,200], index: 3, kind: input, shape index: {}]
  %s4 = inlined_call_operand.vmem [shape: f32[16,1], index: 4, kind: input, shape index: {}]
  %s5 = inlined_call_operand.vmem [shape: f32[529,25], index: 5, kind: input, shape index: {}]
  %s6 = inlined_call_operand.vmem [shape: f32[400,120], index: 6, kind: input, shape index: {}]
  %s7 = inlined_call_operand.vmem [shape: f32[1,120], index: 7, kind: input, shape index: {}]
  %s8 = inlined_call_operand.vmem [shape: f32[120,84], index: 8, kind: input, shape index: {}]
  %s9 = inlined_call_operand.vmem [shape: f32[1,84], index: 9, kind: input, shape index: {}]
  %s10 = inlined_call_operand.vmem [shape: f32[84,10], index: 10, kind: input, shape index: {}]
  %s11 = inlined_call_operand.vmem [shape: f32[1,10], index: 11, kind: input, shape index: {}]
  %s12 = inlined_call_operand.vmem [shape: f32[10,5], index: 12, kind: input, shape index: {}]
  %s13 = inlined_call_operand.vmem [shape: f32[1,5], index: 13, kind: input, shape index: {}]
  %s14 = inlined_call_operand.hbm [shape: f32[2,5], index: 14, kind: output, shape index: {}]
  %s15 = sld [smem:[#allocation0]]
  $region66: #{lenet_forward.1} parent=0
    _
  %s17 = ssub.s32 1, %s15
  %s18 = scalar_select 0, %s17, %s15
  $region1: #{lenet_forward.1} parent=0
    #allocation5 [shape = 'u8[1024]{0}', space=vmem, size = 0x400, scoped, tag = 'output window, operand 0, single buffered']
    #allocation6 [shape = 's32[1]{0}', space=sflag, size = 0x4, scoped, tag = 'scoped memory for lenet_forward.1']
    %19 = vsyncpa [#allocation6], 0
    // Predicated region
    $region2: #{lenet_forward.1} parent=1 // pred_check
      _
    $region3: #{lenet_forward.1} parent=1 // pred_check_branch
      %21 = sbr.rel (0) target = $region5
    $region4: #{lenet_forward.1} parent=1 // pred_region
      _
    $region5: #{lenet_forward.1} parent=1 // pred_fallthru
      _
    // Predicated region
    $region6: #{lenet_forward.1} parent=1 // pred_check
      _
    $region7: #{lenet_forward.1} parent=1 // pred_check_branch
      %23 = sbr.rel (0) target = $region9
    $region8: #{lenet_forward.1} parent=1 // pred_region
      _
    $region9: #{lenet_forward.1} parent=1 // pred_fallthru
      _
    // Predicated region
    $region10: #{lenet_forward.1} parent=1 // pred_check
      _
    $region11: #{lenet_forward.1} parent=1 // pred_check_branch
      %25 = sbr.rel (0) target = $region13
    $region12: #{lenet_forward.1} parent=1 // pred_region
      _
    $region13: #{lenet_forward.1} parent=1 // pred_fallthru
      _
    // Predicated region
    $region14: #{lenet_forward.1} parent=1 // pred_check
      _
    $region15: #{lenet_forward.1} parent=1 // pred_check_branch
      %27 = sbr.rel (0) target = $region17
    $region16: #{lenet_forward.1} parent=1 // pred_region
      _
    $region17: #{lenet_forward.1} parent=1 // pred_fallthru
      _
    // Predicated region
    $region18: #{lenet_forward.1} parent=1 // pred_check
      _
    $region19: #{lenet_forward.1} parent=1 // pred_check_branch
      %29 = sbr.rel (0) target = $region21
    $region20: #{lenet_forward.1} parent=1 // pred_region
      _
    $region21: #{lenet_forward.1} parent=1 // pred_fallthru
      _
    // Predicated region
    $region22: #{lenet_forward.1} parent=1 // pred_check
      _
    $region23: #{lenet_forward.1} parent=1 // pred_check_branch
      %31 = sbr.rel (0) target = $region25
    $region24: #{lenet_forward.1} parent=1 // pred_region
      _
    $region25: #{lenet_forward.1} parent=1 // pred_fallthru
      _
    // Predicated region
    $region26: #{lenet_forward.1} parent=1 // pred_check
      _
    $region27: #{lenet_forward.1} parent=1 // pred_check_branch
      %33 = sbr.rel (0) target = $region29
    $region28: #{lenet_forward.1} parent=1 // pred_region
      _
    $region29: #{lenet_forward.1} parent=1 // pred_fallthru
      _
    // Predicated region
    $region30: #{lenet_forward.1} parent=1 // pred_check
      _
    $region31: #{lenet_forward.1} parent=1 // pred_check_branch
      %35 = sbr.rel (0) target = $region33
    $region32: #{lenet_forward.1} parent=1 // pred_region
      _
    $region33: #{lenet_forward.1} parent=1 // pred_fallthru
      _
    // Predicated region
    $region34: #{lenet_forward.1} parent=1 // pred_check
      _
    $region35: #{lenet_forward.1} parent=1 // pred_check_branch
      %37 = sbr.rel (0) target = $region37
    $region36: #{lenet_forward.1} parent=1 // pred_region
      _
    $region37: #{lenet_forward.1} parent=1 // pred_fallthru
      _
    // Predicated region
    $region38: #{lenet_forward.1} parent=1 // pred_check
      _
    $region39: #{lenet_forward.1} parent=1 // pred_check_branch
      %39 = sbr.rel (0) target = $region41
    $region40: #{lenet_forward.1} parent=1 // pred_region
      _
    $region41: #{lenet_forward.1} parent=1 // pred_fallthru
      _
    // Predicated region
    $region42: #{lenet_forward.1} parent=1 // pred_check
      _
    $region43: #{lenet_forward.1} parent=1 // pred_check_branch
      %41 = sbr.rel (0) target = $region45
    $region44: #{lenet_forward.1} parent=1 // pred_region
      _
    $region45: #{lenet_forward.1} parent=1 // pred_fallthru
      _
    // Predicated region
    $region46: #{lenet_forward.1} parent=1 // pred_check
      _
    $region47: #{lenet_forward.1} parent=1 // pred_check_branch
      %43 = sbr.rel (0) target = $region49
    $region48: #{lenet_forward.1} parent=1 // pred_region
      _
    $region49: #{lenet_forward.1} parent=1 // pred_fallthru
      _
    // Predicated region
    $region50: #{lenet_forward.1} parent=1 // pred_check
      _
    $region51: #{lenet_forward.1} parent=1 // pred_check_branch
      %45 = sbr.rel (0) target = $region53
    $region52: #{lenet_forward.1} parent=1 // pred_region
      _
    $region53: #{lenet_forward.1} parent=1 // pred_fallthru
      _
    // Predicated region
    $region54: #{lenet_forward.1} parent=1 // pred_check
      _
    $region55: #{lenet_forward.1} parent=1 // pred_check_branch
      %47 = sbr.rel (0) target = $region57
    $region56: #{lenet_forward.1} parent=1 // pred_region
      _
    $region57: #{lenet_forward.1} parent=1 // pred_fallthru
      _
    %48 = vst [vmem:[#allocation2] sm:$0xff] 0.0
    %49 = vst [vmem:[#allocation2 + $0x8] sm:$0xff] 0.0
    %50 = vst [vmem:[#allocation2 + $0x10] sm:$0xff] 0.0
    %51 = vst [vmem:[#allocation2 + $0x18] sm:$0xff] 0.0
    %52 = vst [vmem:[#allocation2 + $0x20] sm:$0xff] 0.0
    %53 = vst [vmem:[#allocation2 + $0x28] sm:$0xff] 0.0
    %vm54 = vcmask 1014784
    %55 = vst.msk [vmem:[#allocation2 + $0x30] sm:$0xff] %vm54, 0.0
    %56 = vst [vmem:[#allocation2 + $0x38] sm:$0xff] 0.0
    %57 = vst [vmem:[#allocation2 + $0x40] sm:$0xff] 0.0
    %58 = vst [vmem:[#allocation2 + $0x48] sm:$0xff] 0.0
    %59 = vst [vmem:[#allocation2 + $0x50] sm:$0xff] 0.0
    %60 = vst [vmem:[#allocation2 + $0x58] sm:$0xff] 0.0
    %61 = vst [vmem:[#allocation2 + $0x60] sm:$0xff] 0.0
    %62 = vst.msk [vmem:[#allocation2 + $0x68] sm:$0xff] %vm54, 0.0
    %63 = vst [vmem:[#allocation2 + $0x70] sm:$0xff] 0.0
    %64 = vst [vmem:[#allocation2 + $0x78] sm:$0xff] 0.0
    %65 = vst [vmem:[#allocation2 + $0x80] sm:$0xff] 0.0
    %66 = vst [vmem:[#allocation2 + $0x88] sm:$0xff] 0.0
    %67 = vst [vmem:[#allocation2 + $0x90] sm:$0xff] 0.0
    %68 = vst [vmem:[#allocation2 + $0x98] sm:$0xff] 0.0
    %69 = vst.msk [vmem:[#allocation2 + $0xa0] sm:$0xff] %vm54, 0.0
    %70 = vst [vmem:[#allocation2 + $0xa8] sm:$0xff] 0.0
    %71 = vst [vmem:[#allocation2 + $0xb0] sm:$0xff] 0.0
    %72 = vst [vmem:[#allocation2 + $0xb8] sm:$0xff] 0.0
    %73 = vst [vmem:[#allocation2 + $0xc0] sm:$0xff] 0.0
    %74 = vst [vmem:[#allocation2 + $0xc8] sm:$0xff] 0.0
    %75 = vst [vmem:[#allocation2 + $0xd0] sm:$0xff] 0.0
    %76 = vst.msk [vmem:[#allocation2 + $0xd8] sm:$0xff] %vm54, 0.0
    %77 = vst [vmem:[#allocation2 + $0xe0] sm:$0xff] 0.0
    %78 = vst [vmem:[#allocation2 + $0xe8] sm:$0xff] 0.0
    %79 = vst [vmem:[#allocation2 + $0xf0] sm:$0xff] 0.0
    %80 = vst [vmem:[#allocation2 + $0xf8] sm:$0xff] 0.0
    %81 = vst [vmem:[#allocation2 + $0x100] sm:$0xff] 0.0
    %82 = vst [vmem:[#allocation2 + $0x108] sm:$0xff] 0.0
    %83 = vst.msk [vmem:[#allocation2 + $0x110] sm:$0xff] %vm54, 0.0
    %84 = vst [vmem:[#allocation2 + $0x118] sm:$0xff] 0.0
    %85 = vst [vmem:[#allocation2 + $0x120] sm:$0xff] 0.0
    %86 = vst [vmem:[#allocation2 + $0x128] sm:$0xff] 0.0
    %87 = vst [vmem:[#allocation2 + $0x130] sm:$0xff] 0.0
    %88 = vst [vmem:[#allocation2 + $0x138] sm:$0xff] 0.0
    %89 = vst [vmem:[#allocation2 + $0x140] sm:$0xff] 0.0
    %90 = vst.msk [vmem:[#allocation2 + $0x148] sm:$0xff] %vm54, 0.0
    %91 = vst [vmem:[#allocation2 + $0x150] sm:$0xff] 0.0
    %92 = vst [vmem:[#allocation2 + $0x158] sm:$0xff] 0.0
    %93 = vst [vmem:[#allocation2 + $0x160] sm:$0xff] 0.0
    %94 = vst [vmem:[#allocation2 + $0x168] sm:$0xff] 0.0
    %95 = vst [vmem:[#allocation2 + $0x170] sm:$0xff] 0.0
    %96 = vst [vmem:[#allocation2 + $0x178] sm:$0xff] 0.0
    %97 = vst.msk [vmem:[#allocation2 + $0x180] sm:$0xff] %vm54, 0.0
    %98 = vst [vmem:[#allocation2 + $0x188] sm:$0xff] 0.0
    %99 = vst [vmem:[#allocation2 + $0x190] sm:$0xff] 0.0
    %100 = vst [vmem:[#allocation2 + $0x198] sm:$0xff] 0.0
    %101 = vst [vmem:[#allocation2 + $0x1a0] sm:$0xff] 0.0
    %102 = vst [vmem:[#allocation2 + $0x1a8] sm:$0xff] 0.0
    %103 = vst [vmem:[#allocation2 + $0x1b0] sm:$0xff] 0.0
    %104 = vst.msk [vmem:[#allocation2 + $0x1b8] sm:$0xff] %vm54, 0.0
    %105 = vst [vmem:[#allocation2 + $0x1c0] sm:$0xff] 0.0
    %106 = vst [vmem:[#allocation2 + $0x1c8] sm:$0xff] 0.0
    %107 = vst [vmem:[#allocation2 + $0x1d0] sm:$0xff] 0.0
    %108 = vst [vmem:[#allocation2 + $0x1d8] sm:$0xff] 0.0
    %109 = vst [vmem:[#allocation2 + $0x1e0] sm:$0xff] 0.0
    %110 = vst [vmem:[#allocation2 + $0x1e8] sm:$0xff] 0.0
    %111 = vst.msk [vmem:[#allocation2 + $0x1f0] sm:$0xff] %vm54, 0.0
    %112 = vst [vmem:[#allocation2 + $0x1f8] sm:$0xff] 0.0
    %113 = vst [vmem:[#allocation2 + $0x200] sm:$0xff] 0.0
    %114 = vst [vmem:[#allocation2 + $0x208] sm:$0xff] 0.0
    %115 = vst [vmem:[#allocation2 + $0x210] sm:$0xff] 0.0
    %116 = vst [vmem:[#allocation2 + $0x218] sm:$0xff] 0.0
    %117 = vst [vmem:[#allocation2 + $0x220] sm:$0xff] 0.0
    %118 = vst.msk [vmem:[#allocation2 + $0x228] sm:$0xff] %vm54, 0.0
    %119 = vst [vmem:[#allocation2 + $0x230] sm:$0xff] 0.0
    %120 = vst [vmem:[#allocation2 + $0x238] sm:$0xff] 0.0
    %121 = vst [vmem:[#allocation2 + $0x240] sm:$0xff] 0.0
    %122 = vst [vmem:[#allocation2 + $0x248] sm:$0xff] 0.0
    %123 = vst [vmem:[#allocation2 + $0x250] sm:$0xff] 0.0
    %124 = vst [vmem:[#allocation2 + $0x258] sm:$0xff] 0.0
    %125 = vst.msk [vmem:[#allocation2 + $0x260] sm:$0xff] %vm54, 0.0
    %126 = vst [vmem:[#allocation2 + $0x268] sm:$0xff] 0.0
    %127 = vst [vmem:[#allocation2 + $0x270] sm:$0xff] 0.0
    %128 = vst [vmem:[#allocation2 + $0x278] sm:$0xff] 0.0
    %129 = vst [vmem:[#allocation2 + $0x280] sm:$0xff] 0.0
    %130 = vst [vmem:[#allocation2 + $0x288] sm:$0xff] 0.0
    %131 = vst [vmem:[#allocation2 + $0x290] sm:$0xff] 0.0
    %132 = vst.msk [vmem:[#allocation2 + $0x298] sm:$0xff] %vm54, 0.0
    %133 = vst [vmem:[#allocation2 + $0x2a0] sm:$0xf] 0.0
    %134 = vst [vmem:[#allocation2 + $0x2a8] sm:$0xf] 0.0
    %135 = vst [vmem:[#allocation2 + $0x2b0] sm:$0xf] 0.0
    %136 = vst [vmem:[#allocation2 + $0x2b8] sm:$0xf] 0.0
    %137 = vst [vmem:[#allocation2 + $0x2c0] sm:$0xf] 0.0
    %138 = vst [vmem:[#allocation2 + $0x2c8] sm:$0xf] 0.0
    %vm139 = vcmask 1010688
    %140 = vst.msk [vmem:[#allocation2 + $0x2d0] sm:$0xf] %vm139, 0.0
    %141 = vst [vmem:[#allocation3] sm:$0xff] 0.0
    %142 = vst [vmem:[#allocation3 + $0x8] sm:$0xff] 0.0
    %143 = vst [vmem:[#allocation3 + $0x10] sm:$0xff] 0.0
    %144 = vst [vmem:[#allocation3 + $0x18] sm:$0xff] 0.0
    %vm145 = vcmask 678912
    %146 = vst.msk [vmem:[#allocation3 + $0x20] sm:$0xff] %vm145, 0.0
    %147 = vst [vmem:[#allocation3 + $0x28] sm:$0xff] 0.0
    %148 = vst [vmem:[#allocation3 + $0x30] sm:$0xff] 0.0
    %149 = vst [vmem:[#allocation3 + $0x38] sm:$0xff] 0.0
    %150 = vst [vmem:[#allocation3 + $0x40] sm:$0xff] 0.0
    %151 = vst.msk [vmem:[#allocation3 + $0x48] sm:$0xff] %vm145, 0.0
    %152 = vst [vmem:[#allocation3 + $0x50] sm:$0xff] 0.0
    %153 = vst [vmem:[#allocation3 + $0x58] sm:$0xff] 0.0
    %154 = vst [vmem:[#allocation3 + $0x60] sm:$0xff] 0.0
    %155 = vst [vmem:[#allocation3 + $0x68] sm:$0xff] 0.0
    %156 = vst.msk [vmem:[#allocation3 + $0x70] sm:$0xff] %vm145, 0.0
    %157 = vst [vmem:[#allocation3 + $0x78] sm:$0xff] 0.0
    %158 = vst [vmem:[#allocation3 + $0x80] sm:$0xff] 0.0
    %159 = vst [vmem:[#allocation3 + $0x88] sm:$0xff] 0.0
    %160 = vst [vmem:[#allocation3 + $0x90] sm:$0xff] 0.0
    %161 = vst.msk [vmem:[#allocation3 + $0x98] sm:$0xff] %vm145, 0.0
    %162 = vst [vmem:[#allocation3 + $0xa0] sm:$0xff] 0.0
    %163 = vst [vmem:[#allocation3 + $0xa8] sm:$0xff] 0.0
    %164 = vst [vmem:[#allocation3 + $0xb0] sm:$0xff] 0.0
    %165 = vst [vmem:[#allocation3 + $0xb8] sm:$0xff] 0.0
    %166 = vst.msk [vmem:[#allocation3 + $0xc0] sm:$0xff] %vm145, 0.0
    %167 = vst [vmem:[#allocation3 + $0xc8] sm:$0xff] 0.0
    %168 = vst [vmem:[#allocation3 + $0xd0] sm:$0xff] 0.0
    %169 = vst [vmem:[#allocation3 + $0xd8] sm:$0xff] 0.0
    %170 = vst [vmem:[#allocation3 + $0xe0] sm:$0xff] 0.0
    %171 = vst.msk [vmem:[#allocation3 + $0xe8] sm:$0xff] %vm145, 0.0
    %172 = vst [vmem:[#allocation3 + $0xf0] sm:$0xff] 0.0
    %173 = vst [vmem:[#allocation3 + $0xf8] sm:$0xff] 0.0
    %174 = vst [vmem:[#allocation3 + $0x100] sm:$0xff] 0.0
    %175 = vst [vmem:[#allocation3 + $0x108] sm:$0xff] 0.0
    %176 = vst.msk [vmem:[#allocation3 + $0x110] sm:$0xff] %vm145, 0.0
    %177 = vst [vmem:[#allocation3 + $0x118] sm:$0xff] 0.0
    %178 = vst [vmem:[#allocation3 + $0x120] sm:$0xff] 0.0
    %179 = vst [vmem:[#allocation3 + $0x128] sm:$0xff] 0.0
    %180 = vst [vmem:[#allocation3 + $0x130] sm:$0xff] 0.0
    %181 = vst.msk [vmem:[#allocation3 + $0x138] sm:$0xff] %vm145, 0.0
    %182 = vst [vmem:[#allocation3 + $0x140] sm:$0xff] 0.0
    %183 = vst [vmem:[#allocation3 + $0x148] sm:$0xff] 0.0
    %184 = vst [vmem:[#allocation3 + $0x150] sm:$0xff] 0.0
    %185 = vst [vmem:[#allocation3 + $0x158] sm:$0xff] 0.0
    %186 = vst.msk [vmem:[#allocation3 + $0x160] sm:$0xff] %vm145, 0.0
    %187 = vst [vmem:[#allocation3 + $0x168] sm:$0xff] 0.0
    %188 = vst [vmem:[#allocation3 + $0x170] sm:$0xff] 0.0
    %189 = vst [vmem:[#allocation3 + $0x178] sm:$0xff] 0.0
    %190 = vst [vmem:[#allocation3 + $0x180] sm:$0xff] 0.0
    %191 = vst.msk [vmem:[#allocation3 + $0x188] sm:$0xff] %vm145, 0.0
    %192 = vst [vmem:[#allocation3 + $0x190] sm:$0xff] 0.0
    %193 = vst [vmem:[#allocation3 + $0x198] sm:$0xff] 0.0
    %194 = vst [vmem:[#allocation3 + $0x1a0] sm:$0xff] 0.0
    %195 = vst [vmem:[#allocation3 + $0x1a8] sm:$0xff] 0.0
    %196 = vst.msk [vmem:[#allocation3 + $0x1b0] sm:$0xff] %vm145, 0.0
    %197 = vst [vmem:[#allocation3 + $0x1b8] sm:$0xff] 0.0
    %198 = vst [vmem:[#allocation3 + $0x1c0] sm:$0xff] 0.0
    %199 = vst [vmem:[#allocation3 + $0x1c8] sm:$0xff] 0.0
    %200 = vst [vmem:[#allocation3 + $0x1d0] sm:$0xff] 0.0
    %201 = vst.msk [vmem:[#allocation3 + $0x1d8] sm:$0xff] %vm145, 0.0
    %202 = vst [vmem:[#allocation3 + $0x1e0] sm:$0xff] 0.0
    %203 = vst [vmem:[#allocation3 + $0x1e8] sm:$0xff] 0.0
    %204 = vst [vmem:[#allocation3 + $0x1f0] sm:$0xff] 0.0
    %205 = vst [vmem:[#allocation3 + $0x1f8] sm:$0xff] 0.0
    %206 = vst.msk [vmem:[#allocation3 + $0x200] sm:$0xff] %vm145, 0.0
    %207 = vst [vmem:[#allocation3 + $0x208] sm:$0xff] 0.0
    %208 = vst [vmem:[#allocation3 + $0x210] sm:$0xff] 0.0
    %209 = vst [vmem:[#allocation3 + $0x218] sm:$0xff] 0.0
    %210 = vst [vmem:[#allocation3 + $0x220] sm:$0xff] 0.0
    %211 = vst.msk [vmem:[#allocation3 + $0x228] sm:$0xff] %vm145, 0.0
    %212 = vst [vmem:[#allocation3 + $0x230] sm:$0xff] 0.0
    %213 = vst [vmem:[#allocation3 + $0x238] sm:$0xff] 0.0
    %214 = vst [vmem:[#allocation3 + $0x240] sm:$0xff] 0.0
    %215 = vst [vmem:[#allocation3 + $0x248] sm:$0xff] 0.0
    %216 = vst.msk [vmem:[#allocation3 + $0x250] sm:$0xff] %vm145, 0.0
    %217 = vst [vmem:[#allocation3 + $0x258] sm:$0xff] 0.0
    %218 = vst [vmem:[#allocation3 + $0x260] sm:$0xff] 0.0
    %219 = vst [vmem:[#allocation3 + $0x268] sm:$0xff] 0.0
    %220 = vst [vmem:[#allocation3 + $0x270] sm:$0xff] 0.0
    %221 = vst.msk [vmem:[#allocation3 + $0x278] sm:$0xff] %vm145, 0.0
    %222 = vst [vmem:[#allocation3 + $0x280] sm:$0xff] 0.0
    %223 = vst [vmem:[#allocation3 + $0x288] sm:$0xff] 0.0
    %224 = vst [vmem:[#allocation3 + $0x290] sm:$0xff] 0.0
    %225 = vst [vmem:[#allocation3 + $0x298] sm:$0xff] 0.0
    %226 = vst.msk [vmem:[#allocation3 + $0x2a0] sm:$0xff] %vm145, 0.0
    %227 = vst [vmem:[#allocation3 + $0x2a8] sm:$0xff] 0.0
    %228 = vst [vmem:[#allocation3 + $0x2b0] sm:$0xff] 0.0
    %229 = vst [vmem:[#allocation3 + $0x2b8] sm:$0xff] 0.0
    %230 = vst [vmem:[#allocation3 + $0x2c0] sm:$0xff] 0.0
    %231 = vst.msk [vmem:[#allocation3 + $0x2c8] sm:$0xff] %vm145, 0.0
    %232 = vst [vmem:[#allocation3 + $0x2d0] sm:$0xff] 0.0
    %233 = vst [vmem:[#allocation3 + $0x2d8] sm:$0xff] 0.0
    %234 = vst [vmem:[#allocation3 + $0x2e0] sm:$0xff] 0.0
    %235 = vst [vmem:[#allocation3 + $0x2e8] sm:$0xff] 0.0
    %236 = vst.msk [vmem:[#allocation3 + $0x2f0] sm:$0xff] %vm145, 0.0
    %237 = vst [vmem:[#allocation3 + $0x2f8] sm:$0xff] 0.0
    %238 = vst [vmem:[#allocation3 + $0x300] sm:$0xff] 0.0
    %239 = vst [vmem:[#allocation3 + $0x308] sm:$0xff] 0.0
    %240 = vst [vmem:[#allocation3 + $0x310] sm:$0xff] 0.0
    %241 = vst.msk [vmem:[#allocation3 + $0x318] sm:$0xff] %vm145, 0.0
    %242 = vst [vmem:[#allocation3 + $0x320] sm:$0xff] 0.0
    %243 = vst [vmem:[#allocation3 + $0x328] sm:$0xff] 0.0
    %244 = vst [vmem:[#allocation3 + $0x330] sm:$0xff] 0.0
    %245 = vst [vmem:[#allocation3 + $0x338] sm:$0xff] 0.0
    %246 = vst.msk [vmem:[#allocation3 + $0x340] sm:$0xff] %vm145, 0.0
    %247 = vst [vmem:[#allocation3 + $0x348] sm:$0xff] 0.0
    %248 = vst [vmem:[#allocation3 + $0x350] sm:$0xff] 0.0
    %249 = vst [vmem:[#allocation3 + $0x358] sm:$0xff] 0.0
    %250 = vst [vmem:[#allocation3 + $0x360] sm:$0xff] 0.0
    %251 = vst.msk [vmem:[#allocation3 + $0x368] sm:$0xff] %vm145, 0.0
    %252 = vst [vmem:[#allocation3 + $0x370] sm:$0xff] 0.0
    %253 = vst [vmem:[#allocation3 + $0x378] sm:$0xff] 0.0
    %254 = vst [vmem:[#allocation3 + $0x380] sm:$0xff] 0.0
    %255 = vst [vmem:[#allocation3 + $0x388] sm:$0xff] 0.0
    %256 = vst.msk [vmem:[#allocation3 + $0x390] sm:$0xff] %vm145, 0.0
    %257 = vst [vmem:[#allocation3 + $0x398] sm:$0xff] 0.0
    %258 = vst [vmem:[#allocation3 + $0x3a0] sm:$0xff] 0.0
    %259 = vst [vmem:[#allocation3 + $0x3a8] sm:$0xff] 0.0
    %260 = vst [vmem:[#allocation3 + $0x3b0] sm:$0xff] 0.0
    %261 = vst.msk [vmem:[#allocation3 + $0x3b8] sm:$0xff] %vm145, 0.0
    %262 = vst [vmem:[#allocation3 + $0x3c0] sm:$0xff] 0.0
    %263 = vst [vmem:[#allocation3 + $0x3c8] sm:$0xff] 0.0
    %264 = vst [vmem:[#allocation3 + $0x3d0] sm:$0xff] 0.0
    %265 = vst [vmem:[#allocation3 + $0x3d8] sm:$0xff] 0.0
    %266 = vst.msk [vmem:[#allocation3 + $0x3e0] sm:$0xff] %vm145, 0.0
    %v267 = vld [vmem:[%s0] sm:$0x77]
    %v268 = vld [vmem:[%s0 + $0x8] sm:$0x77]
    %v269 = vld [vmem:[%s0 + $0x10] sm:$0x77]
    %v270 = vld [vmem:[%s0 + $0x18] sm:$0x7]
    %v274 = vcombine.high %v267, %v267
    %v275 = vcombine.high %v268, %v268
    %v276 = vcombine.high %v269, %v269
    %280 = vst [vmem:[#allocation2] sm:$0x7] %v267
    %281 = vst [vmem:[#allocation2 + $0x8] sm:$0x7] %v274
    %282 = vst [vmem:[#allocation2 + $0x10] sm:$0x7] %v268
    %283 = vst [vmem:[#allocation2 + $0x18] sm:$0x7] %v275
    %284 = vst [vmem:[#allocation2 + $0x20] sm:$0x7] %v269
    %285 = vst [vmem:[#allocation2 + $0x28] sm:$0x7] %v276
    %vm286 = vcmask 1009664
    %287 = vst.msk [vmem:[#allocation2 + $0x30] sm:$0x7] %vm286, %v270
    %v288 = vld [vmem:[%s0] sm:$0x77]
    %v289 = vld [vmem:[%s0 + $0x8] sm:$0x77]
    %v290 = vld [vmem:[%s0 + $0x10] sm:$0x77]
    %v291 = vld [vmem:[%s0 + $0x18] sm:$0x7]
    %v296 = vcombine.low %v288, %v288
    %v297 = vcombine.low %v289, %v289
    %v298 = vcombine.low %v290, %v290
    %v299 = vcombine.low %v291, %v291
    %300 = vrot.lane.b32.xlu0 %v296, 127
    %v301 = vpop.permute.xlu0 %300
    %302 = vrot.lane.b32.xlu0 %v288, 127
    %v303 = vpop.permute.xlu0 %302
    %304 = vrot.lane.b32.xlu0 %v297, 127
    %v305 = vpop.permute.xlu0 %304
    %306 = vrot.lane.b32.xlu0 %v289, 127
    %v307 = vpop.permute.xlu0 %306
    %308 = vrot.lane.b32.xlu0 %v298, 127
    %v309 = vpop.permute.xlu0 %308
    %310 = vrot.lane.b32.xlu0 %v290, 127
    %v311 = vpop.permute.xlu0 %310
    %312 = vrot.lane.b32.xlu0 %v299, 127
    %v313 = vpop.permute.xlu0 %312
    %vm314 = vcmask 1039360
    %v315 = vsel %vm314, %v301, %v303
    %v316 = vsel %vm314, %v303, %v305
    %v317 = vsel %vm314, %v305, %v307
    %v318 = vsel %vm314, %v307, %v309
    %v319 = vsel %vm314, %v309, %v311
    %v320 = vsel %vm314, %v311, %v313
    %328 = vst [vmem:[#allocation2] sm:$0x70] %v315
    %329 = vst [vmem:[#allocation2 + $0x8] sm:$0x70] %v316
    %330 = vst [vmem:[#allocation2 + $0x10] sm:$0x70] %v317
    %331 = vst [vmem:[#allocation2 + $0x18] sm:$0x70] %v318
    %332 = vst [vmem:[#allocation2 + $0x20] sm:$0x70] %v319
    %333 = vst [vmem:[#allocation2 + $0x28] sm:$0x70] %v320
    %vm334 = vcmask 1013764
    %335 = vst.msk [vmem:[#allocation2 + $0x30] sm:$0x70] %vm334, %v313
    %v336 = vld [vmem:[%s0] sm:$0x77]
    %v337 = vld [vmem:[%s0 + $0x8] sm:$0x77]
    %v338 = vld [vmem:[%s0 + $0x10] sm:$0x77]
    %v339 = vld [vmem:[%s0 + $0x18] sm:$0x7]
    %v344 = vcombine.high %v336, %v336
    %v345 = vcombine.high %v337, %v337
    %v346 = vcombine.high %v338, %v338
    %347 = vrot.lane.b32.xlu0 %v336, 126
    %v348 = vpop.permute.xlu0 %347
    %349 = vrot.lane.b32.xlu0 %v344, 126
    %v350 = vpop.permute.xlu0 %349
    %351 = vrot.lane.b32.xlu0 %v337, 126
    %v352 = vpop.permute.xlu0 %351
    %353 = vrot.lane.b32.xlu0 %v345, 126
    %v354 = vpop.permute.xlu0 %353
    %355 = vrot.lane.b32.xlu0 %v338, 126
    %v356 = vpop.permute.xlu0 %355
    %357 = vrot.lane.b32.xlu0 %v346, 126
    %v358 = vpop.permute.xlu0 %357
    %359 = vrot.lane.b32.xlu0 %v339, 126
    %v360 = vpop.permute.xlu0 %359
    %vm361 = vcmask 1031168
    %v362 = vsel %vm361, %v348, %v350
    %v363 = vsel %vm361, %v350, %v352
    %v364 = vsel %vm361, %v352, %v354
    %v365 = vsel %vm361, %v354, %v356
    %v366 = vsel %vm361, %v356, %v358
    %v367 = vsel %vm361, %v358, %v360
    %375 = vst [vmem:[#allocation2 + $0x38] sm:$0x7] %v362
    %376 = vst [vmem:[#allocation2 + $0x40] sm:$0x7] %v363
    %377 = vst [vmem:[#allocation2 + $0x48] sm:$0x7] %v364
    %378 = vst [vmem:[#allocation2 + $0x50] sm:$0x7] %v365
    %379 = vst [vmem:[#allocation2 + $0x58] sm:$0x7] %v366
    %380 = vst [vmem:[#allocation2 + $0x60] sm:$0x7] %v367
    %381 = vst.msk [vmem:[#allocation2 + $0x68] sm:$0x7] %vm286, %v360
    %v382 = vld [vmem:[%s0] sm:$0x77]
    %v383 = vld [vmem:[%s0 + $0x8] sm:$0x77]
    %v384 = vld [vmem:[%s0 + $0x10] sm:$0x77]
    %v385 = vld [vmem:[%s0 + $0x18] sm:$0x7]
    %v390 = vcombine.low %v382, %v382
    %v391 = vcombine.low %v383, %v383
    %v392 = vcombine.low %v384, %v384
    %v393 = vcombine.low %v385, %v385
    %394 = vrot.lane.b32.xlu0 %v390, 125
    %v395 = vpop.permute.xlu0 %394
    %396 = vrot.lane.b32.xlu0 %v382, 125
    %v397 = vpop.permute.xlu0 %396
    %398 = vrot.lane.b32.xlu0 %v391, 125
    %v399 = vpop.permute.xlu0 %398
    %400 = vrot.lane.b32.xlu0 %v383, 125
    %v401 = vpop.permute.xlu0 %400
    %402 = vrot.lane.b32.xlu0 %v392, 125
    %v403 = vpop.permute.xlu0 %402
    %404 = vrot.lane.b32.xlu0 %v384, 125
    %v405 = vpop.permute.xlu0 %404
    %406 = vrot.lane.b32.xlu0 %v393, 125
    %v407 = vpop.permute.xlu0 %406
    %vm408 = vcmask 1022976
    %v409 = vsel %vm408, %v395, %v397
    %v410 = vsel %vm408, %v397, %v399
    %v411 = vsel %vm408, %v399, %v401
    %v412 = vsel %vm408, %v401, %v403
    %v413 = vsel %vm408, %v403, %v405
    %v414 = vsel %vm408, %v405, %v407
    %422 = vst [vmem:[#allocation2 + $0x38] sm:$0x70] %v409
    %423 = vst [vmem:[#allocation2 + $0x40] sm:$0x70] %v410
    %424 = vst [vmem:[#allocation2 + $0x48] sm:$0x70] %v411
    %425 = vst [vmem:[#allocation2 + $0x50] sm:$0x70] %v412
    %426 = vst [vmem:[#allocation2 + $0x58] sm:$0x70] %v413
    %427 = vst [vmem:[#allocation2 + $0x60] sm:$0x70] %v414
    %428 = vst.msk [vmem:[#allocation2 + $0x68] sm:$0x70] %vm334, %v407
    %v429 = vld [vmem:[%s0] sm:$0x77]
    %v430 = vld [vmem:[%s0 + $0x8] sm:$0x77]
    %v431 = vld [vmem:[%s0 + $0x10] sm:$0x77]
    %v432 = vld [vmem:[%s0 + $0x18] sm:$0x7]
    %v437 = vcombine.high %v429, %v429
    %v438 = vcombine.high %v430, %v430
    %v439 = vcombine.high %v431, %v431
    %440 = vrot.lane.b32.xlu0 %v429, 124
    %v441 = vpop.permute.xlu0 %440
    %442 = vrot.lane.b32.xlu0 %v437, 124
    %v443 = vpop.permute.xlu0 %442
    %444 = vrot.lane.b32.xlu0 %v430, 124
    %v445 = vpop.permute.xlu0 %444
    %446 = vrot.lane.b32.xlu0 %v438, 124
    %v447 = vpop.permute.xlu0 %446
    %448 = vrot.lane.b32.xlu0 %v431, 124
    %v449 = vpop.permute.xlu0 %448
    %450 = vrot.lane.b32.xlu0 %v439, 124
    %v451 = vpop.permute.xlu0 %450
    %452 = vrot.lane.b32.xlu0 %v432, 124
    %v453 = vpop.permute.xlu0 %452
    %v454 = vsel %vm54, %v441, %v443
    %v455 = vsel %vm54, %v443, %v445
    %v456 = vsel %vm54, %v445, %v447
    %v457 = vsel %vm54, %v447, %v449
    %v458 = vsel %vm54, %v449, %v451
    %v459 = vsel %vm54, %v451, %v453
    %467 = vst [vmem:[#allocation2 + $0x70] sm:$0x7] %v454
    %468 = vst [vmem:[#allocation2 + $0x78] sm:$0x7] %v455
    %469 = vst [vmem:[#allocation2 + $0x80] sm:$0x7] %v456
    %470 = vst [vmem:[#allocation2 + $0x88] sm:$0x7] %v457
    %471 = vst [vmem:[#allocation2 + $0x90] sm:$0x7] %v458
    %472 = vst [vmem:[#allocation2 + $0x98] sm:$0x7] %v459
    %473 = vst.msk [vmem:[#allocation2 + $0xa0] sm:$0x7] %vm286, %v453
    %v474 = vld [vmem:[%s0] sm:$0x77]
    %v475 = vld [vmem:[%s0 + $0x8] sm:$0x77]
    %v476 = vld [vmem:[%s0 + $0x10] sm:$0x77]
    %v477 = vld [vmem:[%s0 + $0x18] sm:$0x77]
    %v482 = vcombine.low %v474, %v474
    %v483 = vcombine.low %v475, %v475
    %v484 = vcombine.low %v476, %v476
    %v485 = vcombine.low %v477, %v477
    %486 = vrot.lane.b32.xlu0 %v482, 96
    %v487 = vpop.permute.xlu0 %486
    %488 = vrot.lane.b32.xlu0 %v474, 96
    %v489 = vpop.permute.xlu0 %488
    %490 = vrot.lane.b32.xlu0 %v483, 96
    %v491 = vpop.permute.xlu0 %490
    %492 = vrot.lane.b32.xlu0 %v475, 96
    %v493 = vpop.permute.xlu0 %492
    %494 = vrot.lane.b32.xlu0 %v484, 96
    %v495 = vpop.permute.xlu0 %494
    %496 = vrot.lane.b32.xlu0 %v476, 96
    %v497 = vpop.permute.xlu0 %496
    %498 = vrot.lane.b32.xlu0 %v485, 96
    %v499 = vpop.permute.xlu0 %498
    %500 = vrot.lane.b32.xlu0 %v477, 96
    %v501 = vpop.permute.xlu0 %500
    %vm502 = vcmask 785408
    %v503 = vsel %vm502, %v487, %v489
    %v504 = vsel %vm502, %v489, %v491
    %v505 = vsel %vm502, %v491, %v493
    %v506 = vsel %vm502, %v493, %v495
    %v507 = vsel %vm502, %v495, %v497
    %v508 = vsel %vm502, %v497, %v499
    %v509 = vsel %vm502, %v499, %v501
    %517 = vst [vmem:[#allocation2 + $0x70] sm:$0x70] %v503
    %518 = vst [vmem:[#allocation2 + $0x78] sm:$0x70] %v504
    %519 = vst [vmem:[#allocation2 + $0x80] sm:$0x70] %v505
    %520 = vst [vmem:[#allocation2 + $0x88] sm:$0x70] %v506
    %521 = vst [vmem:[#allocation2 + $0x90] sm:$0x70] %v507
    %522 = vst [vmem:[#allocation2 + $0x98] sm:$0x70] %v508
    %523 = vst.msk [vmem:[#allocation2 + $0xa0] sm:$0x70] %vm334, %v509
    %v524 = vld [vmem:[%s0] sm:$0x77]
    %v525 = vld [vmem:[%s0 + $0x8] sm:$0x77]
    %v526 = vld [vmem:[%s0 + $0x10] sm:$0x77]
    %v527 = vld [vmem:[%s0 + $0x18] sm:$0x77]
    %v532 = vcombine.high %v524, %v524
    %v533 = vcombine.high %v525, %v525
    %v534 = vcombine.high %v526, %v526
    %v535 = vcombine.high %v527, %v527
    %536 = vrot.lane.b32.xlu0 %v524, 95
    %v537 = vpop.permute.xlu0 %536
    %538 = vrot.lane.b32.xlu0 %v532, 95
    %v539 = vpop.permute.xlu0 %538
    %540 = vrot.lane.b32.xlu0 %v525, 95
    %v541 = vpop.permute.xlu0 %540
    %542 = vrot.lane.b32.xlu0 %v533, 95
    %v543 = vpop.permute.xlu0 %542
    %544 = vrot.lane.b32.xlu0 %v526, 95
    %v545 = vpop.permute.xlu0 %544
    %546 = vrot.lane.b32.xlu0 %v534, 95
    %v547 = vpop.permute.xlu0 %546
    %548 = vrot.lane.b32.xlu0 %v527, 95
    %v549 = vpop.permute.xlu0 %548
    %550 = vrot.lane.b32.xlu0 %v535, 95
    %v551 = vpop.permute.xlu0 %550
    %vm552 = vcmask 777216
    %v553 = vsel %vm552, %v537, %v539
    %v554 = vsel %vm552, %v539, %v541
    %v555 = vsel %vm552, %v541, %v543
    %v556 = vsel %vm552, %v543, %v545
    %v557 = vsel %vm552, %v545, %v547
    %v558 = vsel %vm552, %v547, %v549
    %v559 = vsel %vm552, %v549, %v551
    %567 = vst [vmem:[#allocation2 + $0xa8] sm:$0x7] %v553
    %568 = vst [vmem:[#allocation2 + $0xb0] sm:$0x7] %v554
    %569 = vst [vmem:[#allocation2 + $0xb8] sm:$0x7] %v555
    %570 = vst [vmem:[#allocation2 + $0xc0] sm:$0x7] %v556
    %571 = vst [vmem:[#allocation2 + $0xc8] sm:$0x7] %v557
    %572 = vst [vmem:[#allocation2 + $0xd0] sm:$0x7] %v558
    %573 = vst.msk [vmem:[#allocation2 + $0xd8] sm:$0x7] %vm286, %v559
    %v574 = vld [vmem:[%s0] sm:$0x77]
    %v575 = vld [vmem:[%s0 + $0x8] sm:$0x77]
    %v576 = vld [vmem:[%s0 + $0x10] sm:$0x77]
    %v577 = vld [vmem:[%s0 + $0x18] sm:$0x77]
    %v582 = vcombine.low %v574, %v574
    %v583 = vcombine.low %v575, %v575
    %v584 = vcombine.low %v576, %v576
    %v585 = vcombine.low %v577, %v577
    %586 = vrot.lane.b32.xlu0 %v582, 94
    %v587 = vpop.permute.xlu0 %586
    %588 = vrot.lane.b32.xlu0 %v574, 94
    %v589 = vpop.permute.xlu0 %588
    %590 = vrot.lane.b32.xlu0 %v583, 94
    %v591 = vpop.permute.xlu0 %590
    %592 = vrot.lane.b32.xlu0 %v575, 94
    %v593 = vpop.permute.xlu0 %592
    %594 = vrot.lane.b32.xlu0 %v584, 94
    %v595 = vpop.permute.xlu0 %594
    %596 = vrot.lane.b32.xlu0 %v576, 94
    %v597 = vpop.permute.xlu0 %596
    %598 = vrot.lane.b32.xlu0 %v585, 94
    %v599 = vpop.permute.xlu0 %598
    %600 = vrot.lane.b32.xlu0 %v577, 94
    %v601 = vpop.permute.xlu0 %600
    %vm602 = vcmask 769024
    %v603 = vsel %vm602, %v587, %v589
    %v604 = vsel %vm602, %v589, %v591
    %v605 = vsel %vm602, %v591, %v593
    %v606 = vsel %vm602, %v593, %v595
    %v607 = vsel %vm602, %v595, %v597
    %v608 = vsel %vm602, %v597, %v599
    %v609 = vsel %vm602, %v599, %v601
    %617 = vst [vmem:[#allocation2 + $0xa8] sm:$0x70] %v603
    %618 = vst [vmem:[#allocation2 + $0xb0] sm:$0x70] %v604
    %619 = vst [vmem:[#allocation2 + $0xb8] sm:$0x70] %v605
    %620 = vst [vmem:[#allocation2 + $0xc0] sm:$0x70] %v606
    %621 = vst [vmem:[#allocation2 + $0xc8] sm:$0x70] %v607
    %622 = vst [vmem:[#allocation2 + $0xd0] sm:$0x70] %v608
    %623 = vst.msk [vmem:[#allocation2 + $0xd8] sm:$0x70] %vm334, %v609
    %v624 = vld [vmem:[%s0] sm:$0x77]
    %v625 = vld [vmem:[%s0 + $0x8] sm:$0x77]
    %v626 = vld [vmem:[%s0 + $0x10] sm:$0x77]
    %v627 = vld [vmem:[%s0 + $0x18] sm:$0x77]
    %v632 = vcombine.high %v624, %v624
    %v633 = vcombine.high %v625, %v625
    %v634 = vcombine.high %v626, %v626
    %v635 = vcombine.high %v627, %v627
    %636 = vrot.lane.b32.xlu0 %v624, 93
    %v637 = vpop.permute.xlu0 %636
    %638 = vrot.lane.b32.xlu0 %v632, 93
    %v639 = vpop.permute.xlu0 %638
    %640 = vrot.lane.b32.xlu0 %v625, 93
    %v641 = vpop.permute.xlu0 %640
    %642 = vrot.lane.b32.xlu0 %v633, 93
    %v643 = vpop.permute.xlu0 %642
    %644 = vrot.lane.b32.xlu0 %v626, 93
    %v645 = vpop.permute.xlu0 %644
    %646 = vrot.lane.b32.xlu0 %v634, 93
    %v647 = vpop.permute.xlu0 %646
    %648 = vrot.lane.b32.xlu0 %v627, 93
    %v649 = vpop.permute.xlu0 %648
    %650 = vrot.lane.b32.xlu0 %v635, 93
    %v651 = vpop.permute.xlu0 %650
    %vm652 = vcmask 760832
    %v653 = vsel %vm652, %v637, %v639
    %v654 = vsel %vm652, %v639, %v641
    %v655 = vsel %vm652, %v641, %v643
    %v656 = vsel %vm652, %v643, %v645
    %v657 = vsel %vm652, %v645, %v647
    %v658 = vsel %vm652, %v647, %v649
    %v659 = vsel %vm652, %v649, %v651
    %667 = vst [vmem:[#allocation2 + $0xe0] sm:$0x7] %v653
    %668 = vst [vmem:[#allocation2 + $0xe8] sm:$0x7] %v654
    %669 = vst [vmem:[#allocation2 + $0xf0] sm:$0x7] %v655
    %670 = vst [vmem:[#allocation2 + $0xf8] sm:$0x7] %v656
    %671 = vst [vmem:[#allocation2 + $0x100] sm:$0x7] %v657
    %672 = vst [vmem:[#allocation2 + $0x108] sm:$0x7] %v658
    %673 = vst.msk [vmem:[#allocation2 + $0x110] sm:$0x7] %vm286, %v659
    %v674 = vld [vmem:[%s0] sm:$0x77]
    %v675 = vld [vmem:[%s0 + $0x8] sm:$0x77]
    %v676 = vld [vmem:[%s0 + $0x10] sm:$0x77]
    %v677 = vld [vmem:[%s0 + $0x18] sm:$0x77]
    %v682 = vcombine.low %v674, %v674
    %v683 = vcombine.low %v675, %v675
    %v684 = vcombine.low %v676, %v676
    %v685 = vcombine.low %v677, %v677
    %686 = vrot.lane.b32.xlu0 %v682, 92
    %v687 = vpop.permute.xlu0 %686
    %688 = vrot.lane.b32.xlu0 %v674, 92
    %v689 = vpop.permute.xlu0 %688
    %690 = vrot.lane.b32.xlu0 %v683, 92
    %v691 = vpop.permute.xlu0 %690
    %692 = vrot.lane.b32.xlu0 %v675, 92
    %v693 = vpop.permute.xlu0 %692
    %694 = vrot.lane.b32.xlu0 %v684, 92
    %v695 = vpop.permute.xlu0 %694
    %696 = vrot.lane.b32.xlu0 %v676, 92
    %v697 = vpop.permute.xlu0 %696
    %698 = vrot.lane.b32.xlu0 %v685, 92
    %v699 = vpop.permute.xlu0 %698
    %700 = vrot.lane.b32.xlu0 %v677, 92
    %v701 = vpop.permute.xlu0 %700
    %vm702 = vcmask 752640
    %v703 = vsel %vm702, %v687, %v689
    %v704 = vsel %vm702, %v689, %v691
    %v705 = vsel %vm702, %v691, %v693
    %v706 = vsel %vm702, %v693, %v695
    %v707 = vsel %vm702, %v695, %v697
    %v708 = vsel %vm702, %v697, %v699
    %v709 = vsel %vm702, %v699, %v701
    %717 = vst [vmem:[#allocation2 + $0xe0] sm:$0x70] %v703
    %718 = vst [vmem:[#allocation2 + $0xe8] sm:$0x70] %v704
    %719 = vst [vmem:[#allocation2 + $0xf0] sm:$0x70] %v705
    %720 = vst [vmem:[#allocation2 + $0xf8] sm:$0x70] %v706
    %721 = vst [vmem:[#allocation2 + $0x100] sm:$0x70] %v707
    %722 = vst [vmem:[#allocation2 + $0x108] sm:$0x70] %v708
    %723 = vst.msk [vmem:[#allocation2 + $0x110] sm:$0x70] %vm334, %v709
    %v724 = vld [vmem:[%s0] sm:$0x77]
    %v725 = vld [vmem:[%s0 + $0x8] sm:$0x77]
    %v726 = vld [vmem:[%s0 + $0x10] sm:$0x77]
    %v727 = vld [vmem:[%s0 + $0x18] sm:$0x77]
    %v732 = vcombine.high %v724, %v724
    %v733 = vcombine.high %v725, %v725
    %v734 = vcombine.high %v726, %v726
    %v735 = vcombine.high %v727, %v727
    %736 = vrot.lane.b32.xlu0 %v724, 64
    %v737 = vpop.permute.xlu0 %736
    %738 = vrot.lane.b32.xlu0 %v732, 64
    %v739 = vpop.permute.xlu0 %738
    %740 = vrot.lane.b32.xlu0 %v725, 64
    %v741 = vpop.permute.xlu0 %740
    %742 = vrot.lane.b32.xlu0 %v733, 64
    %v743 = vpop.permute.xlu0 %742
    %744 = vrot.lane.b32.xlu0 %v726, 64
    %v745 = vpop.permute.xlu0 %744
    %746 = vrot.lane.b32.xlu0 %v734, 64
    %v747 = vpop.permute.xlu0 %746
    %748 = vrot.lane.b32.xlu0 %v727, 64
    %v749 = vpop.permute.xlu0 %748
    %750 = vrot.lane.b32.xlu0 %v735, 64
    %v751 = vpop.permute.xlu0 %750
    %vm752 = vcmask 523264
    %v753 = vsel %vm752, %v737, %v739
    %v754 = vsel %vm752, %v739, %v741
    %v755 = vsel %vm752, %v741, %v743
    %v756 = vsel %vm752, %v743, %v745
    %v757 = vsel %vm752, %v745, %v747
    %v758 = vsel %vm752, %v747, %v749
    %v759 = vsel %vm752, %v749, %v751
    %767 = vst [vmem:[#allocation2 + $0x118] sm:$0x7] %v753
    %768 = vst [vmem:[#allocation2 + $0x120] sm:$0x7] %v754
    %769 = vst [vmem:[#allocation2 + $0x128] sm:$0x7] %v755
    %770 = vst [vmem:[#allocation2 + $0x130] sm:$0x7] %v756
    %771 = vst [vmem:[#allocation2 + $0x138] sm:$0x7] %v757
    %772 = vst [vmem:[#allocation2 + $0x140] sm:$0x7] %v758
    %773 = vst.msk [vmem:[#allocation2 + $0x148] sm:$0x7] %vm286, %v759
    %v774 = vld [vmem:[%s0] sm:$0x77]
    %v775 = vld [vmem:[%s0 + $0x8] sm:$0x77]
    %v776 = vld [vmem:[%s0 + $0x10] sm:$0x77]
    %v777 = vld [vmem:[%s0 + $0x18] sm:$0x77]
    %v782 = vcombine.low %v774, %v774
    %v783 = vcombine.low %v775, %v775
    %v784 = vcombine.low %v776, %v776
    %v785 = vcombine.low %v777, %v777
    %786 = vrot.lane.b32.xlu0 %v782, 63
    %v787 = vpop.permute.xlu0 %786
    %788 = vrot.lane.b32.xlu0 %v774, 63
    %v789 = vpop.permute.xlu0 %788
    %790 = vrot.lane.b32.xlu0 %v783, 63
    %v791 = vpop.permute.xlu0 %790
    %792 = vrot.lane.b32.xlu0 %v775, 63
    %v793 = vpop.permute.xlu0 %792
    %794 = vrot.lane.b32.xlu0 %v784, 63
    %v795 = vpop.permute.xlu0 %794
    %796 = vrot.lane.b32.xlu0 %v776, 63
    %v797 = vpop.permute.xlu0 %796
    %798 = vrot.lane.b32.xlu0 %v785, 63
    %v799 = vpop.permute.xlu0 %798
    %800 = vrot.lane.b32.xlu0 %v777, 63
    %v801 = vpop.permute.xlu0 %800
    %vm802 = vcmask 515072
    %v803 = vsel %vm802, %v787, %v789
    %v804 = vsel %vm802, %v789, %v791
    %v805 = vsel %vm802, %v791, %v793
    %v806 = vsel %vm802, %v793, %v795
    %v807 = vsel %vm802, %v795, %v797
    %v808 = vsel %vm802, %v797, %v799
    %v809 = vsel %vm802, %v799, %v801
    %817 = vst [vmem:[#allocation2 + $0x118] sm:$0x70] %v803
    %818 = vst [vmem:[#allocation2 + $0x120] sm:$0x70] %v804
    %819 = vst [vmem:[#allocation2 + $0x128] sm:$0x70] %v805
    %820 = vst [vmem:[#allocation2 + $0x130] sm:$0x70] %v806
    %821 = vst [vmem:[#allocation2 + $0x138] sm:$0x70] %v807
    %822 = vst [vmem:[#allocation2 + $0x140] sm:$0x70] %v808
    %823 = vst.msk [vmem:[#allocation2 + $0x148] sm:$0x70] %vm334, %v809
    %v824 = vld [vmem:[%s0] sm:$0x77]
    %v825 = vld [vmem:[%s0 + $0x8] sm:$0x77]
    %v826 = vld [vmem:[%s0 + $0x10] sm:$0x77]
    %v827 = vld [vmem:[%s0 + $0x18] sm:$0x77]
    %v832 = vcombine.high %v824, %v824
    %v833 = vcombine.high %v825, %v825
    %v834 = vcombine.high %v826, %v826
    %v835 = vcombine.high %v827, %v827
    %836 = vrot.lane.b32.xlu0 %v824, 62
    %v837 = vpop.permute.xlu0 %836
    %838 = vrot.lane.b32.xlu0 %v832, 62
    %v839 = vpop.permute.xlu0 %838
    %840 = vrot.lane.b32.xlu0 %v825, 62
    %v841 = vpop.permute.xlu0 %840
    %842 = vrot.lane.b32.xlu0 %v833, 62
    %v843 = vpop.permute.xlu0 %842
    %844 = vrot.lane.b32.xlu0 %v826, 62
    %v845 = vpop.permute.xlu0 %844
    %846 = vrot.lane.b32.xlu0 %v834, 62
    %v847 = vpop.permute.xlu0 %846
    %848 = vrot.lane.b32.xlu0 %v827, 62
    %v849 = vpop.permute.xlu0 %848
    %850 = vrot.lane.b32.xlu0 %v835, 62
    %v851 = vpop.permute.xlu0 %850
    %vm852 = vcmask 506880
    %v853 = vsel %vm852, %v837, %v839
    %v854 = vsel %vm852, %v839, %v841
    %v855 = vsel %vm852, %v841, %v843
    %v856 = vsel %vm852, %v843, %v845
    %v857 = vsel %vm852, %v845, %v847
    %v858 = vsel %vm852, %v847, %v849
    %v859 = vsel %vm852, %v849, %v851
    %867 = vst [vmem:[#allocation2 + $0x150] sm:$0x7] %v853
    %868 = vst [vmem:[#allocation2 + $0x158] sm:$0x7] %v854
    %869 = vst [vmem:[#allocation2 + $0x160] sm:$0x7] %v855
    %870 = vst [vmem:[#allocation2 + $0x168] sm:$0x7] %v856
    %871 = vst [vmem:[#allocation2 + $0x170] sm:$0x7] %v857
    %872 = vst [vmem:[#allocation2 + $0x178] sm:$0x7] %v858
    %873 = vst.msk [vmem:[#allocation2 + $0x180] sm:$0x7] %vm286, %v859
    %v874 = vld [vmem:[%s0] sm:$0x77]
    %v875 = vld [vmem:[%s0 + $0x8] sm:$0x77]
    %v876 = vld [vmem:[%s0 + $0x10] sm:$0x77]
    %v877 = vld [vmem:[%s0 + $0x18] sm:$0x77]
    %v882 = vcombine.low %v874, %v874
    %v883 = vcombine.low %v875, %v875
    %v884 = vcombine.low %v876, %v876
    %v885 = vcombine.low %v877, %v877
    %886 = vrot.lane.b32.xlu0 %v882, 61
    %v887 = vpop.permute.xlu0 %886
    %888 = vrot.lane.b32.xlu0 %v874, 61
    %v889 = vpop.permute.xlu0 %888
    %890 = vrot.lane.b32.xlu0 %v883, 61
    %v891 = vpop.permute.xlu0 %890
    %892 = vrot.lane.b32.xlu0 %v875, 61
    %v893 = vpop.permute.xlu0 %892
    %894 = vrot.lane.b32.xlu0 %v884, 61
    %v895 = vpop.permute.xlu0 %894
    %896 = vrot.lane.b32.xlu0 %v876, 61
    %v897 = vpop.permute.xlu0 %896
    %898 = vrot.lane.b32.xlu0 %v885, 61
    %v899 = vpop.permute.xlu0 %898
    %900 = vrot.lane.b32.xlu0 %v877, 61
    %v901 = vpop.permute.xlu0 %900
    %vm902 = vcmask 498688
    %v903 = vsel %vm902, %v887, %v889
    %v904 = vsel %vm902, %v889, %v891
    %v905 = vsel %vm902, %v891, %v893
    %v906 = vsel %vm902, %v893, %v895
    %v907 = vsel %vm902, %v895, %v897
    %v908 = vsel %vm902, %v897, %v899
    %v909 = vsel %vm902, %v899, %v901
    %917 = vst [vmem:[#allocation2 + $0x150] sm:$0x70] %v903
    %918 = vst [vmem:[#allocation2 + $0x158] sm:$0x70] %v904
    %919 = vst [vmem:[#allocation2 + $0x160] sm:$0x70] %v905
    %920 = vst [vmem:[#allocation2 + $0x168] sm:$0x70] %v906
    %921 = vst [vmem:[#allocation2 + $0x170] sm:$0x70] %v907
    %922 = vst [vmem:[#allocation2 + $0x178] sm:$0x70] %v908
    %923 = vst.msk [vmem:[#allocation2 + $0x180] sm:$0x70] %vm334, %v909
    %v924 = vld [vmem:[%s0] sm:$0x77]
    %v925 = vld [vmem:[%s0 + $0x8] sm:$0x77]
    %v926 = vld [vmem:[%s0 + $0x10] sm:$0x77]
    %v927 = vld [vmem:[%s0 + $0x18] sm:$0x77]
    %v932 = vcombine.high %v924, %v924
    %v933 = vcombine.high %v925, %v925
    %v934 = vcombine.high %v926, %v926
    %v935 = vcombine.high %v927, %v927
    %936 = vrot.lane.b32.xlu0 %v924, 60
    %v937 = vpop.permute.xlu0 %936
    %938 = vrot.lane.b32.xlu0 %v932, 60
    %v939 = vpop.permute.xlu0 %938
    %940 = vrot.lane.b32.xlu0 %v925, 60
    %v941 = vpop.permute.xlu0 %940
    %942 = vrot.lane.b32.xlu0 %v933, 60
    %v943 = vpop.permute.xlu0 %942
    %944 = vrot.lane.b32.xlu0 %v926, 60
    %v945 = vpop.permute.xlu0 %944
    %946 = vrot.lane.b32.xlu0 %v934, 60
    %v947 = vpop.permute.xlu0 %946
    %948 = vrot.lane.b32.xlu0 %v927, 60
    %v949 = vpop.permute.xlu0 %948
    %950 = vrot.lane.b32.xlu0 %v935, 60
    %v951 = vpop.permute.xlu0 %950
    %vm952 = vcmask 490496
    %v953 = vsel %vm952, %v937, %v939
    %v954 = vsel %vm952, %v939, %v941
    %v955 = vsel %vm952, %v941, %v943
    %v956 = vsel %vm952, %v943, %v945
    %v957 = vsel %vm952, %v945, %v947
    %v958 = vsel %vm952, %v947, %v949
    %v959 = vsel %vm952, %v949, %v951
    %967 = vst [vmem:[#allocation2 + $0x188] sm:$0x7] %v953
    %968 = vst [vmem:[#allocation2 + $0x190] sm:$0x7] %v954
    %969 = vst [vmem:[#allocation2 + $0x198] sm:$0x7] %v955
    %970 = vst [vmem:[#allocation2 + $0x1a0] sm:$0x7] %v956
    %971 = vst [vmem:[#allocation2 + $0x1a8] sm:$0x7] %v957
    %972 = vst [vmem:[#allocation2 + $0x1b0] sm:$0x7] %v958
    %973 = vst.msk [vmem:[#allocation2 + $0x1b8] sm:$0x7] %vm286, %v959
    %v974 = vld [vmem:[%s0] sm:$0x77]
    %v975 = vld [vmem:[%s0 + $0x8] sm:$0x77]
    %v976 = vld [vmem:[%s0 + $0x10] sm:$0x77]
    %v977 = vld [vmem:[%s0 + $0x18] sm:$0x77]
    %v982 = vcombine.low %v974, %v974
    %v983 = vcombine.low %v975, %v975
    %v984 = vcombine.low %v976, %v976
    %v985 = vcombine.low %v977, %v977
    %986 = vrot.lane.b32.xlu0 %v982, 32
    %v987 = vpop.permute.xlu0 %986
    %988 = vrot.lane.b32.xlu0 %v974, 32
    %v989 = vpop.permute.xlu0 %988
    %990 = vrot.lane.b32.xlu0 %v983, 32
    %v991 = vpop.permute.xlu0 %990
    %992 = vrot.lane.b32.xlu0 %v975, 32
    %v993 = vpop.permute.xlu0 %992
    %994 = vrot.lane.b32.xlu0 %v984, 32
    %v995 = vpop.permute.xlu0 %994
    %996 = vrot.lane.b32.xlu0 %v976, 32
    %v997 = vpop.permute.xlu0 %996
    %998 = vrot.lane.b32.xlu0 %v985, 32
    %v999 = vpop.permute.xlu0 %998
    %1000 = vrot.lane.b32.xlu0 %v977, 32
    %v1001 = vpop.permute.xlu0 %1000
    %vm1002 = vcmask 261120
    %v1003 = vsel %vm1002, %v987, %v989
    %v1004 = vsel %vm1002, %v989, %v991
    %v1005 = vsel %vm1002, %v991, %v993
    %v1006 = vsel %vm1002, %v993, %v995
    %v1007 = vsel %vm1002, %v995, %v997
    %v1008 = vsel %vm1002, %v997, %v999
    %v1009 = vsel %vm1002, %v999, %v1001
    %1017 = vst [vmem:[#allocation2 + $0x188] sm:$0x70] %v1003
    %1018 = vst [vmem:[#allocation2 + $0x190] sm:$0x70] %v1004
    %1019 = vst [vmem:[#allocation2 + $0x198] sm:$0x70] %v1005
    %1020 = vst [vmem:[#allocation2 + $0x1a0] sm:$0x70] %v1006
    %1021 = vst [vmem:[#allocation2 + $0x1a8] sm:$0x70] %v1007
    %1022 = vst [vmem:[#allocation2 + $0x1b0] sm:$0x70] %v1008
    %1023 = vst.msk [vmem:[#allocation2 + $0x1b8] sm:$0x70] %vm334, %v1009
    %v1024 = vld [vmem:[%s0] sm:$0x77]
    %v1025 = vld [vmem:[%s0 + $0x8] sm:$0x77]
    %v1026 = vld [vmem:[%s0 + $0x10] sm:$0x77]
    %v1027 = vld [vmem:[%s0 + $0x18] sm:$0x77]
    %v1032 = vcombine.high %v1024, %v1024
    %v1033 = vcombine.high %v1025, %v1025
    %v1034 = vcombine.high %v1026, %v1026
    %v1035 = vcombine.high %v1027, %v1027
    %1036 = vrot.lane.b32.xlu0 %v1024, 31
    %v1037 = vpop.permute.xlu0 %1036
    %1038 = vrot.lane.b32.xlu0 %v1032, 31
    %v1039 = vpop.permute.xlu0 %1038
    %1040 = vrot.lane.b32.xlu0 %v1025, 31
    %v1041 = vpop.permute.xlu0 %1040
    %1042 = vrot.lane.b32.xlu0 %v1033, 31
    %v1043 = vpop.permute.xlu0 %1042
    %1044 = vrot.lane.b32.xlu0 %v1026, 31
    %v1045 = vpop.permute.xlu0 %1044
    %1046 = vrot.lane.b32.xlu0 %v1034, 31
    %v1047 = vpop.permute.xlu0 %1046
    %1048 = vrot.lane.b32.xlu0 %v1027, 31
    %v1049 = vpop.permute.xlu0 %1048
    %1050 = vrot.lane.b32.xlu0 %v1035, 31
    %v1051 = vpop.permute.xlu0 %1050
    %vm1052 = vcmask 252928
    %v1053 = vsel %vm1052, %v1037, %v1039
    %v1054 = vsel %vm1052, %v1039, %v1041
    %v1055 = vsel %vm1052, %v1041, %v1043
    %v1056 = vsel %vm1052, %v1043, %v1045
    %v1057 = vsel %vm1052, %v1045, %v1047
    %v1058 = vsel %vm1052, %v1047, %v1049
    %v1059 = vsel %vm1052, %v1049, %v1051
    %1067 = vst [vmem:[#allocation2 + $0x1c0] sm:$0x7] %v1053
    %1068 = vst [vmem:[#allocation2 + $0x1c8] sm:$0x7] %v1054
    %1069 = vst [vmem:[#allocation2 + $0x1d0] sm:$0x7] %v1055
    %1070 = vst [vmem:[#allocation2 + $0x1d8] sm:$0x7] %v1056
    %1071 = vst [vmem:[#allocation2 + $0x1e0] sm:$0x7] %v1057
    %1072 = vst [vmem:[#allocation2 + $0x1e8] sm:$0x7] %v1058
    %1073 = vst.msk [vmem:[#allocation2 + $0x1f0] sm:$0x7] %vm286, %v1059
    %v1074 = vld [vmem:[%s0] sm:$0x77]
    %v1075 = vld [vmem:[%s0 + $0x8] sm:$0x77]
    %v1076 = vld [vmem:[%s0 + $0x10] sm:$0x77]
    %v1077 = vld [vmem:[%s0 + $0x18] sm:$0x77]
    %v1082 = vcombine.low %v1074, %v1074
    %v1083 = vcombine.low %v1075, %v1075
    %v1084 = vcombine.low %v1076, %v1076
    %v1085 = vcombine.low %v1077, %v1077
    %1086 = vrot.lane.b32.xlu0 %v1082, 30
    %v1087 = vpop.permute.xlu0 %1086
    %1088 = vrot.lane.b32.xlu0 %v1074, 30
    %v1089 = vpop.permute.xlu0 %1088
    %1090 = vrot.lane.b32.xlu0 %v1083, 30
    %v1091 = vpop.permute.xlu0 %1090
    %1092 = vrot.lane.b32.xlu0 %v1075, 30
    %v1093 = vpop.permute.xlu0 %1092
    %1094 = vrot.lane.b32.xlu0 %v1084, 30
    %v1095 = vpop.permute.xlu0 %1094
    %1096 = vrot.lane.b32.xlu0 %v1076, 30
    %v1097 = vpop.permute.xlu0 %1096
    %1098 = vrot.lane.b32.xlu0 %v1085, 30
    %v1099 = vpop.permute.xlu0 %1098
    %1100 = vrot.lane.b32.xlu0 %v1077, 30
    %v1101 = vpop.permute.xlu0 %1100
    %vm1102 = vcmask 244736
    %v1103 = vsel %vm1102, %v1087, %v1089
    %v1104 = vsel %vm1102, %v1089, %v1091
    %v1105 = vsel %vm1102, %v1091, %v1093
    %v1106 = vsel %vm1102, %v1093, %v1095
    %v1107 = vsel %vm1102, %v1095, %v1097
    %v1108 = vsel %vm1102, %v1097, %v1099
    %v1109 = vsel %vm1102, %v1099, %v1101
    %1117 = vst [vmem:[#allocation2 + $0x1c0] sm:$0x70] %v1103
    %1118 = vst [vmem:[#allocation2 + $0x1c8] sm:$0x70] %v1104
    %1119 = vst [vmem:[#allocation2 + $0x1d0] sm:$0x70] %v1105
    %1120 = vst [vmem:[#allocation2 + $0x1d8] sm:$0x70] %v1106
    %1121 = vst [vmem:[#allocation2 + $0x1e0] sm:$0x70] %v1107
    %1122 = vst [vmem:[#allocation2 + $0x1e8] sm:$0x70] %v1108
    %1123 = vst.msk [vmem:[#allocation2 + $0x1f0] sm:$0x70] %vm334, %v1109
    %v1124 = vld [vmem:[%s0] sm:$0x77]
    %v1125 = vld [vmem:[%s0 + $0x8] sm:$0x77]
    %v1126 = vld [vmem:[%s0 + $0x10] sm:$0x77]
    %v1127 = vld [vmem:[%s0 + $0x18] sm:$0x77]
    %v1132 = vcombine.high %v1124, %v1124
    %v1133 = vcombine.high %v1125, %v1125
    %v1134 = vcombine.high %v1126, %v1126
    %v1135 = vcombine.high %v1127, %v1127
    %1136 = vrot.lane.b32.xlu0 %v1124, 29
    %v1137 = vpop.permute.xlu0 %1136
    %1138 = vrot.lane.b32.xlu0 %v1132, 29
    %v1139 = vpop.permute.xlu0 %1138
    %1140 = vrot.lane.b32.xlu0 %v1125, 29
    %v1141 = vpop.permute.xlu0 %1140
    %1142 = vrot.lane.b32.xlu0 %v1133, 29
    %v1143 = vpop.permute.xlu0 %1142
    %1144 = vrot.lane.b32.xlu0 %v1126, 29
    %v1145 = vpop.permute.xlu0 %1144
    %1146 = vrot.lane.b32.xlu0 %v1134, 29
    %v1147 = vpop.permute.xlu0 %1146
    %1148 = vrot.lane.b32.xlu0 %v1127, 29
    %v1149 = vpop.permute.xlu0 %1148
    %1150 = vrot.lane.b32.xlu0 %v1135, 29
    %v1151 = vpop.permute.xlu0 %1150
    %vm1152 = vcmask 236544
    %v1153 = vsel %vm1152, %v1137, %v1139
    %v1154 = vsel %vm1152, %v1139, %v1141
    %v1155 = vsel %vm1152, %v1141, %v1143
    %v1156 = vsel %vm1152, %v1143, %v1145
    %v1157 = vsel %vm1152, %v1145, %v1147
    %v1158 = vsel %vm1152, %v1147, %v1149
    %v1159 = vsel %vm1152, %v1149, %v1151
    %1167 = vst [vmem:[#allocation2 + $0x1f8] sm:$0x7] %v1153
    %1168 = vst [vmem:[#allocation2 + $0x200] sm:$0x7] %v1154
    %1169 = vst [vmem:[#allocation2 + $0x208] sm:$0x7] %v1155
    %1170 = vst [vmem:[#allocation2 + $0x210] sm:$0x7] %v1156
    %1171 = vst [vmem:[#allocation2 + $0x218] sm:$0x7] %v1157
    %1172 = vst [vmem:[#allocation2 + $0x220] sm:$0x7] %v1158
    %1173 = vst.msk [vmem:[#allocation2 + $0x228] sm:$0x7] %vm286, %v1159
    %v1174 = vld [vmem:[%s0] sm:$0x77]
    %v1175 = vld [vmem:[%s0 + $0x8] sm:$0x77]
    %v1176 = vld [vmem:[%s0 + $0x10] sm:$0x77]
    %v1177 = vld [vmem:[%s0 + $0x18] sm:$0x77]
    %v1182 = vcombine.low %v1174, %v1174
    %v1183 = vcombine.low %v1175, %v1175
    %v1184 = vcombine.low %v1176, %v1176
    %v1185 = vcombine.low %v1177, %v1177
    %1186 = vrot.lane.b32.xlu0 %v1182, 28
    %v1187 = vpop.permute.xlu0 %1186
    %1188 = vrot.lane.b32.xlu0 %v1174, 28
    %v1189 = vpop.permute.xlu0 %1188
    %1190 = vrot.lane.b32.xlu0 %v1183, 28
    %v1191 = vpop.permute.xlu0 %1190
    %1192 = vrot.lane.b32.xlu0 %v1175, 28
    %v1193 = vpop.permute.xlu0 %1192
    %1194 = vrot.lane.b32.xlu0 %v1184, 28
    %v1195 = vpop.permute.xlu0 %1194
    %1196 = vrot.lane.b32.xlu0 %v1176, 28
    %v1197 = vpop.permute.xlu0 %1196
    %1198 = vrot.lane.b32.xlu0 %v1185, 28
    %v1199 = vpop.permute.xlu0 %1198
    %1200 = vrot.lane.b32.xlu0 %v1177, 28
    %v1201 = vpop.permute.xlu0 %1200
    %vm1202 = vcmask 228352
    %v1203 = vsel %vm1202, %v1187, %v1189
    %v1204 = vsel %vm1202, %v1189, %v1191
    %v1205 = vsel %vm1202, %v1191, %v1193
    %v1206 = vsel %vm1202, %v1193, %v1195
    %v1207 = vsel %vm1202, %v1195, %v1197
    %v1208 = vsel %vm1202, %v1197, %v1199
    %v1209 = vsel %vm1202, %v1199, %v1201
    %1217 = vst [vmem:[#allocation2 + $0x1f8] sm:$0x70] %v1203
    %1218 = vst [vmem:[#allocation2 + $0x200] sm:$0x70] %v1204
    %1219 = vst [vmem:[#allocation2 + $0x208] sm:$0x70] %v1205
    %1220 = vst [vmem:[#allocation2 + $0x210] sm:$0x70] %v1206
    %1221 = vst [vmem:[#allocation2 + $0x218] sm:$0x70] %v1207
    %1222 = vst [vmem:[#allocation2 + $0x220] sm:$0x70] %v1208
    %1223 = vst.msk [vmem:[#allocation2 + $0x228] sm:$0x70] %vm334, %v1209
    %v1224 = vld [vmem:[%s0 + $0x4] sm:$0x77]
    %v1225 = vld [vmem:[%s0 + $0xc] sm:$0x77]
    %v1226 = vld [vmem:[%s0 + $0x14] sm:$0x77]
    %v1227 = vld [vmem:[%s0 + $0x1c] sm:$0x7]
    %v1231 = vcombine.high %v1224, %v1224
    %v1232 = vcombine.high %v1225, %v1225
    %v1233 = vcombine.high %v1226, %v1226
    %1237 = vst [vmem:[#allocation2 + $0x230] sm:$0x7] %v1224
    %1238 = vst [vmem:[#allocation2 + $0x238] sm:$0x7] %v1231
    %1239 = vst [vmem:[#allocation2 + $0x240] sm:$0x7] %v1225
    %1240 = vst [vmem:[#allocation2 + $0x248] sm:$0x7] %v1232
    %1241 = vst [vmem:[#allocation2 + $0x250] sm:$0x7] %v1226
    %1242 = vst [vmem:[#allocation2 + $0x258] sm:$0x7] %v1233
    %1243 = vst.msk [vmem:[#allocation2 + $0x260] sm:$0x7] %vm286, %v1227
    %v1244 = vld [vmem:[%s0 + $0x4] sm:$0x77]
    %v1245 = vld [vmem:[%s0 + $0xc] sm:$0x77]
    %v1246 = vld [vmem:[%s0 + $0x14] sm:$0x77]
    %v1247 = vld [vmem:[%s0 + $0x1c] sm:$0x7]
    %v1252 = vcombine.low %v1244, %v1244
    %v1253 = vcombine.low %v1245, %v1245
    %v1254 = vcombine.low %v1246, %v1246
    %v1255 = vcombine.low %v1247, %v1247
    %1256 = vrot.lane.b32.xlu0 %v1252, 127
    %v1257 = vpop.permute.xlu0 %1256
    %1258 = vrot.lane.b32.xlu0 %v1244, 127
    %v1259 = vpop.permute.xlu0 %1258
    %1260 = vrot.lane.b32.xlu0 %v1253, 127
    %v1261 = vpop.permute.xlu0 %1260
    %1262 = vrot.lane.b32.xlu0 %v1245, 127
    %v1263 = vpop.permute.xlu0 %1262
    %1264 = vrot.lane.b32.xlu0 %v1254, 127
    %v1265 = vpop.permute.xlu0 %1264
    %1266 = vrot.lane.b32.xlu0 %v1246, 127
    %v1267 = vpop.permute.xlu0 %1266
    %1268 = vrot.lane.b32.xlu0 %v1255, 127
    %v1269 = vpop.permute.xlu0 %1268
    %v1270 = vsel %vm314, %v1257, %v1259
    %v1271 = vsel %vm314, %v1259, %v1261
    %v1272 = vsel %vm314, %v1261, %v1263
    %v1273 = vsel %vm314, %v1263, %v1265
    %v1274 = vsel %vm314, %v1265, %v1267
    %v1275 = vsel %vm314, %v1267, %v1269
    %1283 = vst [vmem:[#allocation2 + $0x230] sm:$0x70] %v1270
    %1284 = vst [vmem:[#allocation2 + $0x238] sm:$0x70] %v1271
    %1285 = vst [vmem:[#allocation2 + $0x240] sm:$0x70] %v1272
    %1286 = vst [vmem:[#allocation2 + $0x248] sm:$0x70] %v1273
    %1287 = vst [vmem:[#allocation2 + $0x250] sm:$0x70] %v1274
    %1288 = vst [vmem:[#allocation2 + $0x258] sm:$0x70] %v1275
    %1289 = vst.msk [vmem:[#allocation2 + $0x260] sm:$0x70] %vm334, %v1269
    %v1290 = vld [vmem:[%s0 + $0x4] sm:$0x77]
    %v1291 = vld [vmem:[%s0 + $0xc] sm:$0x77]
    %v1292 = vld [vmem:[%s0 + $0x14] sm:$0x77]
    %v1293 = vld [vmem:[%s0 + $0x1c] sm:$0x7]
    %v1298 = vcombine.high %v1290, %v1290
    %v1299 = vcombine.high %v1291, %v1291
    %v1300 = vcombine.high %v1292, %v1292
    %1301 = vrot.lane.b32.xlu0 %v1290, 126
    %v1302 = vpop.permute.xlu0 %1301
    %1303 = vrot.lane.b32.xlu0 %v1298, 126
    %v1304 = vpop.permute.xlu0 %1303
    %1305 = vrot.lane.b32.xlu0 %v1291, 126
    %v1306 = vpop.permute.xlu0 %1305
    %1307 = vrot.lane.b32.xlu0 %v1299, 126
    %v1308 = vpop.permute.xlu0 %1307
    %1309 = vrot.lane.b32.xlu0 %v1292, 126
    %v1310 = vpop.permute.xlu0 %1309
    %1311 = vrot.lane.b32.xlu0 %v1300, 126
    %v1312 = vpop.permute.xlu0 %1311
    %1313 = vrot.lane.b32.xlu0 %v1293, 126
    %v1314 = vpop.permute.xlu0 %1313
    %v1315 = vsel %vm361, %v1302, %v1304
    %v1316 = vsel %vm361, %v1304, %v1306
    %v1317 = vsel %vm361, %v1306, %v1308
    %v1318 = vsel %vm361, %v1308, %v1310
    %v1319 = vsel %vm361, %v1310, %v1312
    %v1320 = vsel %vm361, %v1312, %v1314
    %1328 = vst [vmem:[#allocation2 + $0x268] sm:$0x7] %v1315
    %1329 = vst [vmem:[#allocation2 + $0x270] sm:$0x7] %v1316
    %1330 = vst [vmem:[#allocation2 + $0x278] sm:$0x7] %v1317
    %1331 = vst [vmem:[#allocation2 + $0x280] sm:$0x7] %v1318
    %1332 = vst [vmem:[#allocation2 + $0x288] sm:$0x7] %v1319
    %1333 = vst [vmem:[#allocation2 + $0x290] sm:$0x7] %v1320
    %1334 = vst.msk [vmem:[#allocation2 + $0x298] sm:$0x7] %vm286, %v1314
    %v1335 = vld [vmem:[%s0 + $0x4] sm:$0x77]
    %v1336 = vld [vmem:[%s0 + $0xc] sm:$0x77]
    %v1337 = vld [vmem:[%s0 + $0x14] sm:$0x77]
    %v1338 = vld [vmem:[%s0 + $0x1c] sm:$0x7]
    %v1343 = vcombine.low %v1335, %v1335
    %v1344 = vcombine.low %v1336, %v1336
    %v1345 = vcombine.low %v1337, %v1337
    %v1346 = vcombine.low %v1338, %v1338
    %1347 = vrot.lane.b32.xlu0 %v1343, 125
    %v1348 = vpop.permute.xlu0 %1347
    %1349 = vrot.lane.b32.xlu0 %v1335, 125
    %v1350 = vpop.permute.xlu0 %1349
    %1351 = vrot.lane.b32.xlu0 %v1344, 125
    %v1352 = vpop.permute.xlu0 %1351
    %1353 = vrot.lane.b32.xlu0 %v1336, 125
    %v1354 = vpop.permute.xlu0 %1353
    %1355 = vrot.lane.b32.xlu0 %v1345, 125
    %v1356 = vpop.permute.xlu0 %1355
    %1357 = vrot.lane.b32.xlu0 %v1337, 125
    %v1358 = vpop.permute.xlu0 %1357
    %1359 = vrot.lane.b32.xlu0 %v1346, 125
    %v1360 = vpop.permute.xlu0 %1359
    %v1361 = vsel %vm408, %v1348, %v1350
    %v1362 = vsel %vm408, %v1350, %v1352
    %v1363 = vsel %vm408, %v1352, %v1354
    %v1364 = vsel %vm408, %v1354, %v1356
    %v1365 = vsel %vm408, %v1356, %v1358
    %v1366 = vsel %vm408, %v1358, %v1360
    %1374 = vst [vmem:[#allocation2 + $0x268] sm:$0x70] %v1361
    %1375 = vst [vmem:[#allocation2 + $0x270] sm:$0x70] %v1362
    %1376 = vst [vmem:[#allocation2 + $0x278] sm:$0x70] %v1363
    %1377 = vst [vmem:[#allocation2 + $0x280] sm:$0x70] %v1364
    %1378 = vst [vmem:[#allocation2 + $0x288] sm:$0x70] %v1365
    %1379 = vst [vmem:[#allocation2 + $0x290] sm:$0x70] %v1366
    %1380 = vst.msk [vmem:[#allocation2 + $0x298] sm:$0x70] %vm334, %v1360
    %v1381 = vld [vmem:[%s0 + $0x4] sm:$0x77]
    %v1382 = vld [vmem:[%s0 + $0xc] sm:$0x77]
    %v1383 = vld [vmem:[%s0 + $0x14] sm:$0x77]
    %v1384 = vld [vmem:[%s0 + $0x1c] sm:$0x7]
    %v1389 = vcombine.high %v1381, %v1381
    %v1390 = vcombine.high %v1382, %v1382
    %v1391 = vcombine.high %v1383, %v1383
    %1392 = vrot.lane.b32.xlu0 %v1381, 124
    %v1393 = vpop.permute.xlu0 %1392
    %1394 = vrot.lane.b32.xlu0 %v1389, 124
    %v1395 = vpop.permute.xlu0 %1394
    %1396 = vrot.lane.b32.xlu0 %v1382, 124
    %v1397 = vpop.permute.xlu0 %1396
    %1398 = vrot.lane.b32.xlu0 %v1390, 124
    %v1399 = vpop.permute.xlu0 %1398
    %1400 = vrot.lane.b32.xlu0 %v1383, 124
    %v1401 = vpop.permute.xlu0 %1400
    %1402 = vrot.lane.b32.xlu0 %v1391, 124
    %v1403 = vpop.permute.xlu0 %1402
    %1404 = vrot.lane.b32.xlu0 %v1384, 124
    %v1405 = vpop.permute.xlu0 %1404
    %v1406 = vsel %vm54, %v1393, %v1395
    %v1407 = vsel %vm54, %v1395, %v1397
    %v1408 = vsel %vm54, %v1397, %v1399
    %v1409 = vsel %vm54, %v1399, %v1401
    %v1410 = vsel %vm54, %v1401, %v1403
    %v1411 = vsel %vm54, %v1403, %v1405
    %1419 = vst [vmem:[#allocation2 + $0x2a0] sm:$0x7] %v1406
    %1420 = vst [vmem:[#allocation2 + $0x2a8] sm:$0x7] %v1407
    %1421 = vst [vmem:[#allocation2 + $0x2b0] sm:$0x7] %v1408
    %1422 = vst [vmem:[#allocation2 + $0x2b8] sm:$0x7] %v1409
    %1423 = vst [vmem:[#allocation2 + $0x2c0] sm:$0x7] %v1410
    %1424 = vst [vmem:[#allocation2 + $0x2c8] sm:$0x7] %v1411
    %1425 = vst.msk [vmem:[#allocation2 + $0x2d0] sm:$0x7] %vm286, %v1405
    %v1426 = vld [vmem:[%s1] sm:$0x3f]
    %v1427 = vld [vmem:[#allocation2] sm:$0xff]
    %v1428 = vld [vmem:[#allocation2 + $0x8] sm:$0xff]
    %v1429 = vld [vmem:[#allocation2 + $0x10] sm:$0xff]
    %v1430 = vld [vmem:[#allocation2 + $0x18] sm:$0xff]
    %v1431 = vld [vmem:[#allocation2 + $0x20] sm:$0xff]
    %v1432 = vld [vmem:[#allocation2 + $0x28] sm:$0xff]
    %v1433 = vld [vmem:[#allocation2 + $0x30] sm:$0xff]
    %v1434 = vld [vmem:[#allocation2 + $0x38] sm:$0xff]
    %v1435 = vld [vmem:[#allocation2 + $0x40] sm:$0xff]
    %v1436 = vld [vmem:[#allocation2 + $0x48] sm:$0xff]
    %v1437 = vld [vmem:[#allocation2 + $0x50] sm:$0xff]
    %v1438 = vld [vmem:[#allocation2 + $0x58] sm:$0xff]
    %v1439 = vld [vmem:[#allocation2 + $0x60] sm:$0xff]
    %v1440 = vld [vmem:[#allocation2 + $0x68] sm:$0xff]
    %v1441 = vld [vmem:[#allocation2 + $0x70] sm:$0xff]
    %v1442 = vld [vmem:[#allocation2 + $0x78] sm:$0xff]
    %v1443 = vld [vmem:[#allocation2 + $0x80] sm:$0xff]
    %v1444 = vld [vmem:[#allocation2 + $0x88] sm:$0xff]
    %v1445 = vld [vmem:[#allocation2 + $0x90] sm:$0xff]
    %v1446 = vld [vmem:[#allocation2 + $0x98] sm:$0xff]
    %v1447 = vld [vmem:[#allocation2 + $0xa0] sm:$0xff]
    %v1448 = vld [vmem:[#allocation2 + $0xa8] sm:$0xff]
    %v1449 = vld [vmem:[#allocation2 + $0xb0] sm:$0xff]
    %v1450 = vld [vmem:[#allocation2 + $0xb8] sm:$0xff]
    %v1451 = vld [vmem:[#allocation2 + $0xc0] sm:$0xff]
    %v1452 = vld [vmem:[#allocation2 + $0xc8] sm:$0xff]
    %v1453 = vld [vmem:[#allocation2 + $0xd0] sm:$0xff]
    %v1454 = vld [vmem:[#allocation2 + $0xd8] sm:$0xff]
    %v1455 = vld [vmem:[#allocation2 + $0xe0] sm:$0xff]
    %v1456 = vld [vmem:[#allocation2 + $0xe8] sm:$0xff]
    %v1457 = vld [vmem:[#allocation2 + $0xf0] sm:$0xff]
    %v1458 = vld [vmem:[#allocation2 + $0xf8] sm:$0xff]
    %v1459 = vld [vmem:[#allocation2 + $0x100] sm:$0xff]
    %v1460 = vld [vmem:[#allocation2 + $0x108] sm:$0xff]
    %v1461 = vld [vmem:[#allocation2 + $0x110] sm:$0xff]
    %v1462 = vld [vmem:[#allocation2 + $0x118] sm:$0xff]
    %v1463 = vld [vmem:[#allocation2 + $0x120] sm:$0xff]
    %v1464 = vld [vmem:[#allocation2 + $0x128] sm:$0xff]
    %v1465 = vld [vmem:[#allocation2 + $0x130] sm:$0xff]
    %v1466 = vld [vmem:[#allocation2 + $0x138] sm:$0xff]
    %v1467 = vld [vmem:[#allocation2 + $0x140] sm:$0xff]
    %v1468 = vld [vmem:[#allocation2 + $0x148] sm:$0xff]
    %v1469 = vld [vmem:[#allocation2 + $0x150] sm:$0xff]
    %v1470 = vld [vmem:[#allocation2 + $0x158] sm:$0xff]
    %v1471 = vld [vmem:[#allocation2 + $0x160] sm:$0xff]
    %v1472 = vld [vmem:[#allocation2 + $0x168] sm:$0xff]
    %v1473 = vld [vmem:[#allocation2 + $0x170] sm:$0xff]
    %v1474 = vld [vmem:[#allocation2 + $0x178] sm:$0xff]
    %v1475 = vld [vmem:[#allocation2 + $0x180] sm:$0xff]
    %v1476 = vld [vmem:[#allocation2 + $0x188] sm:$0xff]
    %v1477 = vld [vmem:[#allocation2 + $0x190] sm:$0xff]
    %v1478 = vld [vmem:[#allocation2 + $0x198] sm:$0xff]
    %v1479 = vld [vmem:[#allocation2 + $0x1a0] sm:$0xff]
    %v1480 = vld [vmem:[#allocation2 + $0x1a8] sm:$0xff]
    %v1481 = vld [vmem:[#allocation2 + $0x1b0] sm:$0xff]
    %v1482 = vld [vmem:[#allocation2 + $0x1b8] sm:$0xff]
    %v1483 = vld [vmem:[#allocation2 + $0x1c0] sm:$0xff]
    %v1484 = vld [vmem:[#allocation2 + $0x1c8] sm:$0xff]
    %v1485 = vld [vmem:[#allocation2 + $0x1d0] sm:$0xff]
    %v1486 = vld [vmem:[#allocation2 + $0x1d8] sm:$0xff]
    %v1487 = vld [vmem:[#allocation2 + $0x1e0] sm:$0xff]
    %v1488 = vld [vmem:[#allocation2 + $0x1e8] sm:$0xff]
    %v1489 = vld [vmem:[#allocation2 + $0x1f0] sm:$0xff]
    %v1490 = vld [vmem:[#allocation2 + $0x1f8] sm:$0xff]
    %v1491 = vld [vmem:[#allocation2 + $0x200] sm:$0xff]
    %v1492 = vld [vmem:[#allocation2 + $0x208] sm:$0xff]
    %v1493 = vld [vmem:[#allocation2 + $0x210] sm:$0xff]
    %v1494 = vld [vmem:[#allocation2 + $0x218] sm:$0xff]
    %v1495 = vld [vmem:[#allocation2 + $0x220] sm:$0xff]
    %v1496 = vld [vmem:[#allocation2 + $0x228] sm:$0xff]
    %v1497 = vld [vmem:[#allocation2 + $0x230] sm:$0xff]
    %v1498 = vld [vmem:[#allocation2 + $0x238] sm:$0xff]
    %v1499 = vld [vmem:[#allocation2 + $0x240] sm:$0xff]
    %v1500 = vld [vmem:[#allocation2 + $0x248] sm:$0xff]
    %v1501 = vld [vmem:[#allocation2 + $0x250] sm:$0xff]
    %v1502 = vld [vmem:[#allocation2 + $0x258] sm:$0xff]
    %v1503 = vld [vmem:[#allocation2 + $0x260] sm:$0xff]
    %v1504 = vld [vmem:[#allocation2 + $0x268] sm:$0xff]
    %v1505 = vld [vmem:[#allocation2 + $0x270] sm:$0xff]
    %v1506 = vld [vmem:[#allocation2 + $0x278] sm:$0xff]
    %v1507 = vld [vmem:[#allocation2 + $0x280] sm:$0xff]
    %v1508 = vld [vmem:[#allocation2 + $0x288] sm:$0xff]
    %v1509 = vld [vmem:[#allocation2 + $0x290] sm:$0xff]
    %v1510 = vld [vmem:[#allocation2 + $0x298] sm:$0xff]
    %v1511 = vld [vmem:[#allocation2 + $0x2a0] sm:$0xf]
    %v1512 = vld [vmem:[#allocation2 + $0x2a8] sm:$0xf]
    %v1513 = vld [vmem:[#allocation2 + $0x2b0] sm:$0xf]
    %v1514 = vld [vmem:[#allocation2 + $0x2b8] sm:$0xf]
    %v1515 = vld [vmem:[#allocation2 + $0x2c0] sm:$0xf]
    %v1516 = vld [vmem:[#allocation2 + $0x2c8] sm:$0xf]
    %v1517 = vld [vmem:[#allocation2 + $0x2d0] sm:$0xf]
    %v1518 = vld [vmem:[%s2] sm:$0x3f]
    %1520 = vset.pattern.permute.xlu0 0
    %1521 = vperm.xlu0 %1520, %v1518
    %v1522 = vpop.permute.xlu0 %1521
    %vm1524 = vcmask 818176
    %v1526 = vsel %vm1524, %v1426, 0
    %vm1528 = vcmask 1043456
    %v1530 = vsel %vm1528, %v1511, 0
    %v1533 = vsel %vm1528, %v1512, 0
    %v1536 = vsel %vm1528, %v1513, 0
    %v1539 = vsel %vm1528, %v1514, 0
    %v1542 = vsel %vm1528, %v1515, 0
    %v1545 = vsel %vm1528, %v1516, 0
    %v1548 = vsel %vm1528, %v1517, 0
    %1550 = vmatprep.subr.mxu0 %v1428
    %1551 = vmatpush1.msra.mxu0 %v1427
    %1552 = vmatprep.subr.mxu0 %v1435
    %1553 = vmatpush1.msra.mxu0 %v1434
    %1554 = vmatprep.subr.mxu0 %v1442
    %1555 = vmatpush1.msra.mxu0 %v1441
    %1556 = vmatprep.subr.mxu0 %v1449
    %1557 = vmatpush1.msra.mxu0 %v1448
    %1558 = vmatprep.subr.mxu0 %v1456
    %1559 = vmatpush1.msra.mxu0 %v1455
    %1560 = vmatprep.subr.mxu0 %v1463
    %1561 = vmatpush1.msra.mxu0 %v1462
    %1562 = vmatprep.subr.mxu0 %v1470
    %1563 = vmatpush1.msra.mxu0 %v1469
    %1564 = vmatprep.subr.mxu0 %v1477
    %1565 = vmatpush1.msra.mxu0 %v1476
    %1566 = vmatprep.subr.mxu0 %v1484
    %1567 = vmatpush1.msra.mxu0 %v1483
    %1568 = vmatprep.subr.mxu0 %v1491
    %1569 = vmatpush1.msra.mxu0 %v1490
    %1570 = vmatprep.subr.mxu0 %v1498
    %1571 = vmatpush1.msra.mxu0 %v1497
    %1572 = vmatprep.subr.mxu0 %v1505
    %1573 = vmatpush1.msra.mxu0 %v1504
    %1574 = vmatprep.subr.mxu0 %v1533
    %1575 = vmatpush1.msra.mxu0 %v1530
    %1576 = vmatprep.subr.mxu0 0.0
    %1577 = vmatpush1.msra.mxu0 0.0
    %1578 = vmatprep.subr.mxu0 0.0
    %1579 = vmatpush1.msra.mxu0 0.0
    %1580 = vmatprep.subr.mxu0 0.0
    %1581 = vmatpush1.msra.mxu0 0.0
    %1582 = vmatprep.subr.mxu0 0.0
    %1583 = vmatpush1.msra.mxu0 0.0
    %1584 = vmatprep.subr.mxu0 0.0
    %1585 = vmatpush1.msra.mxu0 0.0
    %1586 = vmatprep.subr.mxu0 0.0
    %1587 = vmatpush1.msra.mxu0 0.0
    %1588 = vmatprep.subr.mxu0 0.0
    %1589 = vmatpush1.msra.mxu0 0.0
    %1590 = vmatprep.subr.mxu0 0.0
    %1591 = vmatpush1.msra.mxu0 0.0
    %1592 = vmatprep.subr.mxu0 0.0
    %1593 = vmatpush1.msra.mxu0 0.0
    %1594 = vmatprep.subr.mxu0 0.0
    %1595 = vmatpush1.msra.mxu0 0.0
    %1596 = vmatprep.subr.mxu0 0.0
    %1597 = vmatpush1.msra.mxu0 0.0
    %1598 = vmatprep.subr.mxu0 0.0
    %1599 = vmatpush1.msra.mxu0 0.0
    %1600 = vmatprep.subr.mxu0 0.0
    %1601 = vmatpush1.msra.mxu0 0.0
    %1602 = vmatprep.subr.mxu0 0.0
    %1603 = vmatpush1.msra.mxu0 0.0
    %1604 = vmatprep.subr.mxu0 0.0
    %1605 = vmatpush1.msra.mxu0 0.0
    %1606 = vmatprep.subr.mxu0 0.0
    %1607 = vmatpush1.msra.mxu0 0.0
    %1608 = vmatprep.subr.mxu0 0.0
    %1609 = vmatpush1.msra.mxu0 0.0
    %1610 = vmatprep.subr.mxu0 0.0
    %1611 = vmatpush1.msra.mxu0 0.0
    %1612 = vmatprep.subr.mxu0 0.0
    %1613 = vmatpush1.msra.mxu0 0.0
    %1614 = vmatprep.mubr.f32.mxu0 0.0
    %1615 = vmatmul.mubr.f32.gmra.mrb[0].mxu0 %v1526
    %v1616 = vpop.f32.mrb[0].mxu0
    %v1617 = vadd.f32 %v1522, %v1616
    %v1618 = vpop.f32.mrb[0].mxu0
    %v1619 = vadd.f32 %v1522, %v1618
    %1620 = vdwg.mxu0
    %1621 = vmatprep.subr.mxu0 %v1430
    %1622 = vmatpush1.msra.mxu0 %v1429
    %1623 = vmatprep.subr.mxu0 %v1437
    %1624 = vmatpush1.msra.mxu0 %v1436
    %1625 = vmatprep.subr.mxu0 %v1444
    %1626 = vmatpush1.msra.mxu0 %v1443
    %1627 = vmatprep.subr.mxu0 %v1451
    %1628 = vmatpush1.msra.mxu0 %v1450
    %1629 = vmatprep.subr.mxu0 %v1458
    %1630 = vmatpush1.msra.mxu0 %v1457
    %1631 = vmatprep.subr.mxu0 %v1465
    %1632 = vmatpush1.msra.mxu0 %v1464
    %1633 = vmatprep.subr.mxu0 %v1472
    %1634 = vmatpush1.msra.mxu0 %v1471
    %1635 = vmatprep.subr.mxu0 %v1479
    %1636 = vmatpush1.msra.mxu0 %v1478
    %1637 = vmatprep.subr.mxu0 %v1486
    %1638 = vmatpush1.msra.mxu0 %v1485
    %1639 = vmatprep.subr.mxu0 %v1493
    %1640 = vmatpush1.msra.mxu0 %v1492
    %1641 = vmatprep.subr.mxu0 %v1500
    %1642 = vmatpush1.msra.mxu0 %v1499
    %1643 = vmatprep.subr.mxu0 %v1507
    %1644 = vmatpush1.msra.mxu0 %v1506
    %1645 = vmatprep.subr.mxu0 %v1539
    %1646 = vmatpush1.msra.mxu0 %v1536
    %1647 = vmatprep.subr.mxu0 0.0
    %1648 = vmatpush1.msra.mxu0 0.0
    %1649 = vmatprep.subr.mxu0 0.0
    %1650 = vmatpush1.msra.mxu0 0.0
    %1651 = vmatprep.subr.mxu0 0.0
    %1652 = vmatpush1.msra.mxu0 0.0
    %1653 = vmatprep.subr.mxu0 0.0
    %1654 = vmatpush1.msra.mxu0 0.0
    %1655 = vmatprep.subr.mxu0 0.0
    %1656 = vmatpush1.msra.mxu0 0.0
    %1657 = vmatprep.subr.mxu0 0.0
    %1658 = vmatpush1.msra.mxu0 0.0
    %1659 = vmatprep.subr.mxu0 0.0
    %1660 = vmatpush1.msra.mxu0 0.0
    %1661 = vmatprep.subr.mxu0 0.0
    %1662 = vmatpush1.msra.mxu0 0.0
    %1663 = vmatprep.subr.mxu0 0.0
    %1664 = vmatpush1.msra.mxu0 0.0
    %1665 = vmatprep.subr.mxu0 0.0
    %1666 = vmatpush1.msra.mxu0 0.0
    %1667 = vmatprep.subr.mxu0 0.0
    %1668 = vmatpush1.msra.mxu0 0.0
    %1669 = vmatprep.subr.mxu0 0.0
    %1670 = vmatpush1.msra.mxu0 0.0
    %1671 = vmatprep.subr.mxu0 0.0
    %1672 = vmatpush1.msra.mxu0 0.0
    %1673 = vmatprep.subr.mxu0 0.0
    %1674 = vmatpush1.msra.mxu0 0.0
    %1675 = vmatprep.subr.mxu0 0.0
    %1676 = vmatpush1.msra.mxu0 0.0
    %1677 = vmatprep.subr.mxu0 0.0
    %1678 = vmatpush1.msra.mxu0 0.0
    %1679 = vmatprep.subr.mxu0 0.0
    %1680 = vmatpush1.msra.mxu0 0.0
    %1681 = vmatprep.subr.mxu0 0.0
    %1682 = vmatpush1.msra.mxu0 0.0
    %1683 = vmatprep.subr.mxu0 0.0
    %1684 = vmatpush1.msra.mxu0 0.0
    %1685 = vmatprep.mubr.f32.mxu0 0.0
    %1686 = vmatmul.mubr.f32.gmra.mrb[0].mxu0 %v1526
    %v1687 = vpop.f32.mrb[0].mxu0
    %v1688 = vadd.f32 %v1522, %v1687
    %v1689 = vpop.f32.mrb[0].mxu0
    %v1690 = vadd.f32 %v1522, %v1689
    %1691 = vdwg.mxu0
    %1692 = vmatprep.subr.mxu0 %v1432
    %1693 = vmatpush1.msra.mxu0 %v1431
    %1694 = vmatprep.subr.mxu0 %v1439
    %1695 = vmatpush1.msra.mxu0 %v1438
    %1696 = vmatprep.subr.mxu0 %v1446
    %1697 = vmatpush1.msra.mxu0 %v1445
    %1698 = vmatprep.subr.mxu0 %v1453
    %1699 = vmatpush1.msra.mxu0 %v1452
    %1700 = vmatprep.subr.mxu0 %v1460
    %1701 = vmatpush1.msra.mxu0 %v1459
    %1702 = vmatprep.subr.mxu0 %v1467
    %1703 = vmatpush1.msra.mxu0 %v1466
    %1704 = vmatprep.subr.mxu0 %v1474
    %1705 = vmatpush1.msra.mxu0 %v1473
    %1706 = vmatprep.subr.mxu0 %v1481
    %1707 = vmatpush1.msra.mxu0 %v1480
    %1708 = vmatprep.subr.mxu0 %v1488
    %1709 = vmatpush1.msra.mxu0 %v1487
    %1710 = vmatprep.subr.mxu0 %v1495
    %1711 = vmatpush1.msra.mxu0 %v1494
    %1712 = vmatprep.subr.mxu0 %v1502
    %1713 = vmatpush1.msra.mxu0 %v1501
    %1714 = vmatprep.subr.mxu0 %v1509
    %1715 = vmatpush1.msra.mxu0 %v1508
    %1716 = vmatprep.subr.mxu0 %v1545
    %1717 = vmatpush1.msra.mxu0 %v1542
    %1718 = vmatprep.subr.mxu0 0.0
    %1719 = vmatpush1.msra.mxu0 0.0
    %1720 = vmatprep.subr.mxu0 0.0
    %1721 = vmatpush1.msra.mxu0 0.0
    %1722 = vmatprep.subr.mxu0 0.0
    %1723 = vmatpush1.msra.mxu0 0.0
    %1724 = vmatprep.subr.mxu0 0.0
    %1725 = vmatpush1.msra.mxu0 0.0
    %1726 = vmatprep.subr.mxu0 0.0
    %1727 = vmatpush1.msra.mxu0 0.0
    %1728 = vmatprep.subr.mxu0 0.0
    %1729 = vmatpush1.msra.mxu0 0.0
    %1730 = vmatprep.subr.mxu0 0.0
    %1731 = vmatpush1.msra.mxu0 0.0
    %1732 = vmatprep.subr.mxu0 0.0
    %1733 = vmatpush1.msra.mxu0 0.0
    %1734 = vmatprep.subr.mxu0 0.0
    %1735 = vmatpush1.msra.mxu0 0.0
    %1736 = vmatprep.subr.mxu0 0.0
    %1737 = vmatpush1.msra.mxu0 0.0
    %1738 = vmatprep.subr.mxu0 0.0
    %1739 = vmatpush1.msra.mxu0 0.0
    %1740 = vmatprep.subr.mxu0 0.0
    %1741 = vmatpush1.msra.mxu0 0.0
    %1742 = vmatprep.subr.mxu0 0.0
    %1743 = vmatpush1.msra.mxu0 0.0
    %1744 = vmatprep.subr.mxu0 0.0
    %1745 = vmatpush1.msra.mxu0 0.0
    %1746 = vmatprep.subr.mxu0 0.0
    %1747 = vmatpush1.msra.mxu0 0.0
    %1748 = vmatprep.subr.mxu0 0.0
    %1749 = vmatpush1.msra.mxu0 0.0
    %1750 = vmatprep.subr.mxu0 0.0
    %1751 = vmatpush1.msra.mxu0 0.0
    %1752 = vmatprep.subr.mxu0 0.0
    %1753 = vmatpush1.msra.mxu0 0.0
    %1754 = vmatprep.subr.mxu0 0.0
    %1755 = vmatpush1.msra.mxu0 0.0
    %1756 = vmatprep.mubr.f32.mxu0 0.0
    %1757 = vmatmul.mubr.f32.gmra.mrb[0].mxu0 %v1526
    %v1758 = vpop.f32.mrb[0].mxu0
    %v1759 = vadd.f32 %v1522, %v1758
    %v1760 = vpop.f32.mrb[0].mxu0
    %v1761 = vadd.f32 %v1522, %v1760
    %1762 = vdwg.mxu0
    %1763 = vmatprep.subr.mxu0 0.0
    %1764 = vmatpush1.msra.mxu0 %v1433
    %1765 = vmatprep.subr.mxu0 0.0
    %1766 = vmatpush1.msra.mxu0 %v1440
    %1767 = vmatprep.subr.mxu0 0.0
    %1768 = vmatpush1.msra.mxu0 %v1447
    %1769 = vmatprep.subr.mxu0 0.0
    %1770 = vmatpush1.msra.mxu0 %v1454
    %1771 = vmatprep.subr.mxu0 0.0
    %1772 = vmatpush1.msra.mxu0 %v1461
    %1773 = vmatprep.subr.mxu0 0.0
    %1774 = vmatpush1.msra.mxu0 %v1468
    %1775 = vmatprep.subr.mxu0 0.0
    %1776 = vmatpush1.msra.mxu0 %v1475
    %1777 = vmatprep.subr.mxu0 0.0
    %1778 = vmatpush1.msra.mxu0 %v1482
    %1779 = vmatprep.subr.mxu0 0.0
    %1780 = vmatpush1.msra.mxu0 %v1489
    %1781 = vmatprep.subr.mxu0 0.0
    %1782 = vmatpush1.msra.mxu0 %v1496
    %1783 = vmatprep.subr.mxu0 0.0
    %1784 = vmatpush1.msra.mxu0 %v1503
    %1785 = vmatprep.subr.mxu0 0.0
    %1786 = vmatpush1.msra.mxu0 %v1510
    %1787 = vmatprep.subr.mxu0 0.0
    %1788 = vmatpush1.msra.mxu0 %v1548
    %1789 = vmatprep.subr.mxu0 0.0
    %1790 = vmatpush1.msra.mxu0 0.0
    %1791 = vmatprep.subr.mxu0 0.0
    %1792 = vmatpush1.msra.mxu0 0.0
    %1793 = vmatprep.subr.mxu0 0.0
    %1794 = vmatpush1.msra.mxu0 0.0
    %1795 = vmatprep.subr.mxu0 0.0
    %1796 = vmatpush1.msra.mxu0 0.0
    %1797 = vmatprep.subr.mxu0 0.0
    %1798 = vmatpush1.msra.mxu0 0.0
    %1799 = vmatprep.subr.mxu0 0.0
    %1800 = vmatpush1.msra.mxu0 0.0
    %1801 = vmatprep.subr.mxu0 0.0
    %1802 = vmatpush1.msra.mxu0 0.0
    %1803 = vmatprep.subr.mxu0 0.0
    %1804 = vmatpush1.msra.mxu0 0.0
    %1805 = vmatprep.subr.mxu0 0.0
    %1806 = vmatpush1.msra.mxu0 0.0
    %1807 = vmatprep.subr.mxu0 0.0
    %1808 = vmatpush1.msra.mxu0 0.0
    %1809 = vmatprep.subr.mxu0 0.0
    %1810 = vmatpush1.msra.mxu0 0.0
    %1811 = vmatprep.subr.mxu0 0.0
    %1812 = vmatpush1.msra.mxu0 0.0
    %1813 = vmatprep.subr.mxu0 0.0
    %1814 = vmatpush1.msra.mxu0 0.0
    %1815 = vmatprep.subr.mxu0 0.0
    %1816 = vmatpush1.msra.mxu0 0.0
    %1817 = vmatprep.subr.mxu0 0.0
    %1818 = vmatpush1.msra.mxu0 0.0
    %1819 = vmatprep.subr.mxu0 0.0
    %1820 = vmatpush1.msra.mxu0 0.0
    %1821 = vmatprep.subr.mxu0 0.0
    %1822 = vmatpush1.msra.mxu0 0.0
    %1823 = vmatprep.subr.mxu0 0.0
    %1824 = vmatpush1.msra.mxu0 0.0
    %1825 = vmatprep.subr.mxu0 0.0
    %1826 = vmatpush1.msra.mxu0 0.0
    %1827 = vmatprep.mubr.f32.mxu0 0.0
    %1828 = vmatmul.mubr.f32.gmra.mrb[0].mxu0 %v1526
    %v1829 = vpop.f32.mrb[0].mxu0
    %v1830 = vadd.f32 %v1522, %v1829
    %v1831 = vpop.f32.mrb[0].mxu0
    %1832 = vdwg.mxu0
    %v1833 = vmax.f32 %v1617, 0.0
    %v1834 = vmax.f32 %v1619, 0.0
    %v1835 = vmax.f32 %v1688, 0.0
    %v1836 = vmax.f32 %v1690, 0.0
    %v1837 = vmax.f32 %v1759, 0.0
    %v1838 = vmax.f32 %v1761, 0.0
    %v1839 = vmax.f32 %v1830, 0.0
    %1847 = vrot.lane.b32.xlu0 %v1833, 127
    %v1848 = vpop.permute.xlu0 %1847
    %1849 = vrot.lane.b32.xlu0 %v1834, 127
    %v1850 = vpop.permute.xlu0 %1849
    %1851 = vrot.lane.b32.xlu0 %v1835, 127
    %v1852 = vpop.permute.xlu0 %1851
    %1853 = vrot.lane.b32.xlu0 %v1836, 127
    %v1854 = vpop.permute.xlu0 %1853
    %1855 = vrot.lane.b32.xlu0 %v1837, 127
    %v1856 = vpop.permute.xlu0 %1855
    %1857 = vrot.lane.b32.xlu0 %v1838, 127
    %v1858 = vpop.permute.xlu0 %1857
    %1859 = vrot.lane.b32.xlu0 %v1839, 127
    %v1860 = vpop.permute.xlu0 %1859
    %v1861 = vsel %vm314, %v1848, %v1850
    %v1862 = vsel %vm314, %v1850, %v1852
    %v1863 = vsel %vm314, %v1852, %v1854
    %v1864 = vsel %vm314, %v1854, %v1856
    %v1865 = vsel %vm314, %v1856, %v1858
    %v1866 = vsel %vm314, %v1858, %v1860
    %v1874 = vmax.f32 %v1833, %v1861
    %v1875 = vmax.f32 %v1834, %v1862
    %v1876 = vmax.f32 %v1835, %v1863
    %v1877 = vmax.f32 %v1836, %v1864
    %v1878 = vmax.f32 %v1837, %v1865
    %v1879 = vmax.f32 %v1838, %v1866
    %v1880 = vmax.f32 %v1839, %v1860
    %1888 = vrot.lane.b32.xlu0 %v1874, 96
    %v1889 = vpop.permute.xlu0 %1888
    %1890 = vrot.lane.b32.xlu0 %v1875, 96
    %v1891 = vpop.permute.xlu0 %1890
    %1892 = vrot.lane.b32.xlu0 %v1876, 96
    %v1893 = vpop.permute.xlu0 %1892
    %1894 = vrot.lane.b32.xlu0 %v1877, 96
    %v1895 = vpop.permute.xlu0 %1894
    %1896 = vrot.lane.b32.xlu0 %v1878, 96
    %v1897 = vpop.permute.xlu0 %1896
    %1898 = vrot.lane.b32.xlu0 %v1879, 96
    %v1899 = vpop.permute.xlu0 %1898
    %1900 = vrot.lane.b32.xlu0 %v1880, 96
    %v1901 = vpop.permute.xlu0 %1900
    %v1902 = vsel %vm502, %v1889, %v1891
    %v1903 = vsel %vm502, %v1891, %v1893
    %v1904 = vsel %vm502, %v1893, %v1895
    %v1905 = vsel %vm502, %v1895, %v1897
    %v1906 = vsel %vm502, %v1897, %v1899
    %v1907 = vsel %vm502, %v1899, %v1901
    %v1915 = vmax.f32 %v1874, %v1902
    %v1916 = vmax.f32 %v1875, %v1903
    %v1917 = vmax.f32 %v1876, %v1904
    %v1918 = vmax.f32 %v1877, %v1905
    %v1919 = vmax.f32 %v1878, %v1906
    %v1920 = vmax.f32 %v1879, %v1907
    %v1921 = vmax.f32 %v1880, %v1901
    %1922 = vst [vmem:[#allocation3] sm:$0x3f] %v1915
    %1923 = vst [vmem:[#allocation3 + $0x8] sm:$0x3f] %v1916
    %1924 = vst [vmem:[#allocation3 + $0x10] sm:$0x3f] %v1917
    %1925 = vst [vmem:[#allocation3 + $0x18] sm:$0x3f] %v1918
    %vm1926 = vcmask 676864
    %1927 = vst.msk [vmem:[#allocation3 + $0x20] sm:$0x3f] %vm1926, %v1919
    %1933 = vrot.lane.b32.xlu0 %v1915, 126
    %v1934 = vpop.permute.xlu0 %1933
    %1935 = vrot.lane.b32.xlu0 %v1916, 126
    %v1936 = vpop.permute.xlu0 %1935
    %1937 = vrot.lane.b32.xlu0 %v1917, 126
    %v1938 = vpop.permute.xlu0 %1937
    %1939 = vrot.lane.b32.xlu0 %v1918, 126
    %v1940 = vpop.permute.xlu0 %1939
    %1941 = vrot.lane.b32.xlu0 %v1919, 126
    %v1942 = vpop.permute.xlu0 %1941
    %v1943 = vsel %vm361, %v1934, %v1936
    %v1944 = vsel %vm361, %v1936, %v1938
    %v1945 = vsel %vm361, %v1938, %v1940
    %v1946 = vsel %vm361, %v1940, %v1942
    %1952 = vst [vmem:[#allocation3 + $0x28] sm:$0x3f] %v1943
    %1953 = vst [vmem:[#allocation3 + $0x30] sm:$0x3f] %v1944
    %1954 = vst [vmem:[#allocation3 + $0x38] sm:$0x3f] %v1945
    %1955 = vst [vmem:[#allocation3 + $0x40] sm:$0x3f] %v1946
    %1956 = vst.msk [vmem:[#allocation3 + $0x48] sm:$0x3f] %vm1926, %v1942
    %1957 = vrot.lane.b32.xlu0 %v1915, 124
    %v1958 = vpop.permute.xlu0 %1957
    %1959 = vrot.lane.b32.xlu0 %v1916, 124
    %v1960 = vpop.permute.xlu0 %1959
    %1961 = vrot.lane.b32.xlu0 %v1917, 124
    %v1962 = vpop.permute.xlu0 %1961
    %1963 = vrot.lane.b32.xlu0 %v1918, 124
    %v1964 = vpop.permute.xlu0 %1963
    %1965 = vrot.lane.b32.xlu0 %v1919, 124
    %v1966 = vpop.permute.xlu0 %1965
    %v1967 = vsel %vm54, %v1958, %v1960
    %v1968 = vsel %vm54, %v1960, %v1962
    %v1969 = vsel %vm54, %v1962, %v1964
    %v1970 = vsel %vm54, %v1964, %v1966
    %1976 = vst [vmem:[#allocation3 + $0x50] sm:$0x3f] %v1967
    %1977 = vst [vmem:[#allocation3 + $0x58] sm:$0x3f] %v1968
    %1978 = vst [vmem:[#allocation3 + $0x60] sm:$0x3f] %v1969
    %1979 = vst [vmem:[#allocation3 + $0x68] sm:$0x3f] %v1970
    %1980 = vst.msk [vmem:[#allocation3 + $0x70] sm:$0x3f] %vm1926, %v1966
    %1981 = vrot.lane.b32.xlu0 %v1915, 122
    %v1982 = vpop.permute.xlu0 %1981
    %1983 = vrot.lane.b32.xlu0 %v1916, 122
    %v1984 = vpop.permute.xlu0 %1983
    %1985 = vrot.lane.b32.xlu0 %v1917, 122
    %v1986 = vpop.permute.xlu0 %1985
    %1987 = vrot.lane.b32.xlu0 %v1918, 122
    %v1988 = vpop.permute.xlu0 %1987
    %1989 = vrot.lane.b32.xlu0 %v1919, 122
    %v1990 = vpop.permute.xlu0 %1989
    %vm1991 = vcmask 998400
    %v1992 = vsel %vm1991, %v1982, %v1984
    %v1993 = vsel %vm1991, %v1984, %v1986
    %v1994 = vsel %vm1991, %v1986, %v1988
    %v1995 = vsel %vm1991, %v1988, %v1990
    %2001 = vst [vmem:[#allocation3 + $0x78] sm:$0x3f] %v1992
    %2002 = vst [vmem:[#allocation3 + $0x80] sm:$0x3f] %v1993
    %2003 = vst [vmem:[#allocation3 + $0x88] sm:$0x3f] %v1994
    %2004 = vst [vmem:[#allocation3 + $0x90] sm:$0x3f] %v1995
    %2005 = vst.msk [vmem:[#allocation3 + $0x98] sm:$0x3f] %vm1926, %v1990
    %2006 = vrot.lane.b32.xlu0 %v1915, 120
    %v2007 = vpop.permute.xlu0 %2006
    %2008 = vrot.lane.b32.xlu0 %v1916, 120
    %v2009 = vpop.permute.xlu0 %2008
    %2010 = vrot.lane.b32.xlu0 %v1917, 120
    %v2011 = vpop.permute.xlu0 %2010
    %2012 = vrot.lane.b32.xlu0 %v1918, 120
    %v2013 = vpop.permute.xlu0 %2012
    %2014 = vrot.lane.b32.xlu0 %v1919, 120
    %v2015 = vpop.permute.xlu0 %2014
    %vm2016 = vcmask 982016
    %v2017 = vsel %vm2016, %v2007, %v2009
    %v2018 = vsel %vm2016, %v2009, %v2011
    %v2019 = vsel %vm2016, %v2011, %v2013
    %v2020 = vsel %vm2016, %v2013, %v2015
    %2026 = vst [vmem:[#allocation3 + $0xa0] sm:$0x3f] %v2017
    %2027 = vst [vmem:[#allocation3 + $0xa8] sm:$0x3f] %v2018
    %2028 = vst [vmem:[#allocation3 + $0xb0] sm:$0x3f] %v2019
    %2029 = vst [vmem:[#allocation3 + $0xb8] sm:$0x3f] %v2020
    %2030 = vst.msk [vmem:[#allocation3 + $0xc0] sm:$0x3f] %vm1926, %v2015
    %2032 = vrot.lane.b32.xlu0 %v1915, 64
    %v2033 = vpop.permute.xlu0 %2032
    %2034 = vrot.lane.b32.xlu0 %v1916, 64
    %v2035 = vpop.permute.xlu0 %2034
    %2036 = vrot.lane.b32.xlu0 %v1917, 64
    %v2037 = vpop.permute.xlu0 %2036
    %2038 = vrot.lane.b32.xlu0 %v1918, 64
    %v2039 = vpop.permute.xlu0 %2038
    %2040 = vrot.lane.b32.xlu0 %v1919, 64
    %v2041 = vpop.permute.xlu0 %2040
    %2042 = vrot.lane.b32.xlu0 %v1920, 64
    %v2043 = vpop.permute.xlu0 %2042
    %v2044 = vsel %vm752, %v2033, %v2035
    %v2045 = vsel %vm752, %v2035, %v2037
    %v2046 = vsel %vm752, %v2037, %v2039
    %v2047 = vsel %vm752, %v2039, %v2041
    %v2048 = vsel %vm752, %v2041, %v2043
    %2054 = vst [vmem:[#allocation3 + $0xc8] sm:$0x3f] %v2044
    %2055 = vst [vmem:[#allocation3 + $0xd0] sm:$0x3f] %v2045
    %2056 = vst [vmem:[#allocation3 + $0xd8] sm:$0x3f] %v2046
    %2057 = vst [vmem:[#allocation3 + $0xe0] sm:$0x3f] %v2047
    %2058 = vst.msk [vmem:[#allocation3 + $0xe8] sm:$0x3f] %vm1926, %v2048
    %2059 = vrot.lane.b32.xlu0 %v1915, 62
    %v2060 = vpop.permute.xlu0 %2059
    %2061 = vrot.lane.b32.xlu0 %v1916, 62
    %v2062 = vpop.permute.xlu0 %2061
    %2063 = vrot.lane.b32.xlu0 %v1917, 62
    %v2064 = vpop.permute.xlu0 %2063
    %2065 = vrot.lane.b32.xlu0 %v1918, 62
    %v2066 = vpop.permute.xlu0 %2065
    %2067 = vrot.lane.b32.xlu0 %v1919, 62
    %v2068 = vpop.permute.xlu0 %2067
    %2069 = vrot.lane.b32.xlu0 %v1920, 62
    %v2070 = vpop.permute.xlu0 %2069
    %v2071 = vsel %vm852, %v2060, %v2062
    %v2072 = vsel %vm852, %v2062, %v2064
    %v2073 = vsel %vm852, %v2064, %v2066
    %v2074 = vsel %vm852, %v2066, %v2068
    %v2075 = vsel %vm852, %v2068, %v2070
    %2081 = vst [vmem:[#allocation3 + $0xf0] sm:$0x3f] %v2071
    %2082 = vst [vmem:[#allocation3 + $0xf8] sm:$0x3f] %v2072
    %2083 = vst [vmem:[#allocation3 + $0x100] sm:$0x3f] %v2073
    %2084 = vst [vmem:[#allocation3 + $0x108] sm:$0x3f] %v2074
    %2085 = vst.msk [vmem:[#allocation3 + $0x110] sm:$0x3f] %vm1926, %v2075
    %2086 = vrot.lane.b32.xlu0 %v1915, 60
    %v2087 = vpop.permute.xlu0 %2086
    %2088 = vrot.lane.b32.xlu0 %v1916, 60
    %v2089 = vpop.permute.xlu0 %2088
    %2090 = vrot.lane.b32.xlu0 %v1917, 60
    %v2091 = vpop.permute.xlu0 %2090
    %2092 = vrot.lane.b32.xlu0 %v1918, 60
    %v2093 = vpop.permute.xlu0 %2092
    %2094 = vrot.lane.b32.xlu0 %v1919, 60
    %v2095 = vpop.permute.xlu0 %2094
    %2096 = vrot.lane.b32.xlu0 %v1920, 60
    %v2097 = vpop.permute.xlu0 %2096
    %v2098 = vsel %vm952, %v2087, %v2089
    %v2099 = vsel %vm952, %v2089, %v2091
    %v2100 = vsel %vm952, %v2091, %v2093
    %v2101 = vsel %vm952, %v2093, %v2095
    %v2102 = vsel %vm952, %v2095, %v2097
    %2108 = vst [vmem:[#allocation3 + $0x118] sm:$0x3f] %v2098
    %2109 = vst [vmem:[#allocation3 + $0x120] sm:$0x3f] %v2099
    %2110 = vst [vmem:[#allocation3 + $0x128] sm:$0x3f] %v2100
    %2111 = vst [vmem:[#allocation3 + $0x130] sm:$0x3f] %v2101
    %2112 = vst.msk [vmem:[#allocation3 + $0x138] sm:$0x3f] %vm1926, %v2102
    %2113 = vrot.lane.b32.xlu0 %v1915, 58
    %v2114 = vpop.permute.xlu0 %2113
    %2115 = vrot.lane.b32.xlu0 %v1916, 58
    %v2116 = vpop.permute.xlu0 %2115
    %2117 = vrot.lane.b32.xlu0 %v1917, 58
    %v2118 = vpop.permute.xlu0 %2117
    %2119 = vrot.lane.b32.xlu0 %v1918, 58
    %v2120 = vpop.permute.xlu0 %2119
    %2121 = vrot.lane.b32.xlu0 %v1919, 58
    %v2122 = vpop.permute.xlu0 %2121
    %2123 = vrot.lane.b32.xlu0 %v1920, 58
    %v2124 = vpop.permute.xlu0 %2123
    %vm2125 = vcmask 474112
    %v2126 = vsel %vm2125, %v2114, %v2116
    %v2127 = vsel %vm2125, %v2116, %v2118
    %v2128 = vsel %vm2125, %v2118, %v2120
    %v2129 = vsel %vm2125, %v2120, %v2122
    %v2130 = vsel %vm2125, %v2122, %v2124
    %2136 = vst [vmem:[#allocation3 + $0x140] sm:$0x3f] %v2126
    %2137 = vst [vmem:[#allocation3 + $0x148] sm:$0x3f] %v2127
    %2138 = vst [vmem:[#allocation3 + $0x150] sm:$0x3f] %v2128
    %2139 = vst [vmem:[#allocation3 + $0x158] sm:$0x3f] %v2129
    %2140 = vst.msk [vmem:[#allocation3 + $0x160] sm:$0x3f] %vm1926, %v2130
    %2141 = vrot.lane.b32.xlu0 %v1915, 56
    %v2142 = vpop.permute.xlu0 %2141
    %2143 = vrot.lane.b32.xlu0 %v1916, 56
    %v2144 = vpop.permute.xlu0 %2143
    %2145 = vrot.lane.b32.xlu0 %v1917, 56
    %v2146 = vpop.permute.xlu0 %2145
    %2147 = vrot.lane.b32.xlu0 %v1918, 56
    %v2148 = vpop.permute.xlu0 %2147
    %2149 = vrot.lane.b32.xlu0 %v1919, 56
    %v2150 = vpop.permute.xlu0 %2149
    %2151 = vrot.lane.b32.xlu0 %v1920, 56
    %v2152 = vpop.permute.xlu0 %2151
    %vm2153 = vcmask 457728
    %v2154 = vsel %vm2153, %v2142, %v2144
    %v2155 = vsel %vm2153, %v2144, %v2146
    %v2156 = vsel %vm2153, %v2146, %v2148
    %v2157 = vsel %vm2153, %v2148, %v2150
    %v2158 = vsel %vm2153, %v2150, %v2152
    %2164 = vst [vmem:[#allocation3 + $0x168] sm:$0x3f] %v2154
    %2165 = vst [vmem:[#allocation3 + $0x170] sm:$0x3f] %v2155
    %2166 = vst [vmem:[#allocation3 + $0x178] sm:$0x3f] %v2156
    %2167 = vst [vmem:[#allocation3 + $0x180] sm:$0x3f] %v2157
    %2168 = vst.msk [vmem:[#allocation3 + $0x188] sm:$0x3f] %vm1926, %v2158
    %2169 = vst [vmem:[#allocation3 + $0x190] sm:$0x3f] %v1916
    %2170 = vst [vmem:[#allocation3 + $0x198] sm:$0x3f] %v1917
    %2171 = vst [vmem:[#allocation3 + $0x1a0] sm:$0x3f] %v1918
    %2172 = vst [vmem:[#allocation3 + $0x1a8] sm:$0x3f] %v1919
    %2173 = vst.msk [vmem:[#allocation3 + $0x1b0] sm:$0x3f] %vm1926, %v1920
    %2174 = vrot.lane.b32.xlu0 %v1920, 126
    %v2175 = vpop.permute.xlu0 %2174
    %v2176 = vsel %vm361, %v1942, %v2175
    %2179 = vst [vmem:[#allocation3 + $0x1b8] sm:$0x3f] %v1944
    %2180 = vst [vmem:[#allocation3 + $0x1c0] sm:$0x3f] %v1945
    %2181 = vst [vmem:[#allocation3 + $0x1c8] sm:$0x3f] %v1946
    %2182 = vst [vmem:[#allocation3 + $0x1d0] sm:$0x3f] %v2176
    %2183 = vst.msk [vmem:[#allocation3 + $0x1d8] sm:$0x3f] %vm1926, %v2175
    %2184 = vrot.lane.b32.xlu0 %v1920, 124
    %v2185 = vpop.permute.xlu0 %2184
    %v2186 = vsel %vm54, %v1966, %v2185
    %2189 = vst [vmem:[#allocation3 + $0x1e0] sm:$0x3f] %v1968
    %2190 = vst [vmem:[#allocation3 + $0x1e8] sm:$0x3f] %v1969
    %2191 = vst [vmem:[#allocation3 + $0x1f0] sm:$0x3f] %v1970
    %2192 = vst [vmem:[#allocation3 + $0x1f8] sm:$0x3f] %v2186
    %2193 = vst.msk [vmem:[#allocation3 + $0x200] sm:$0x3f] %vm1926, %v2185
    %2194 = vrot.lane.b32.xlu0 %v1920, 122
    %v2195 = vpop.permute.xlu0 %2194
    %v2196 = vsel %vm1991, %v1990, %v2195
    %2199 = vst [vmem:[#allocation3 + $0x208] sm:$0x3f] %v1993
    %2200 = vst [vmem:[#allocation3 + $0x210] sm:$0x3f] %v1994
    %2201 = vst [vmem:[#allocation3 + $0x218] sm:$0x3f] %v1995
    %2202 = vst [vmem:[#allocation3 + $0x220] sm:$0x3f] %v2196
    %2203 = vst.msk [vmem:[#allocation3 + $0x228] sm:$0x3f] %vm1926, %v2195
    %2204 = vrot.lane.b32.xlu0 %v1920, 120
    %v2205 = vpop.permute.xlu0 %2204
    %v2206 = vsel %vm2016, %v2015, %v2205
    %2209 = vst [vmem:[#allocation3 + $0x230] sm:$0x3f] %v2018
    %2210 = vst [vmem:[#allocation3 + $0x238] sm:$0x3f] %v2019
    %2211 = vst [vmem:[#allocation3 + $0x240] sm:$0x3f] %v2020
    %2212 = vst [vmem:[#allocation3 + $0x248] sm:$0x3f] %v2206
    %2213 = vst.msk [vmem:[#allocation3 + $0x250] sm:$0x3f] %vm1926, %v2205
    %2215 = vrot.lane.b32.xlu0 %v1921, 64
    %v2216 = vpop.permute.xlu0 %2215
    %v2217 = vsel %vm752, %v2043, %v2216
    %2219 = vst [vmem:[#allocation3 + $0x258] sm:$0x3f] %v2045
    %2220 = vst [vmem:[#allocation3 + $0x260] sm:$0x3f] %v2046
    %2221 = vst [vmem:[#allocation3 + $0x268] sm:$0x3f] %v2047
    %2222 = vst [vmem:[#allocation3 + $0x270] sm:$0x3f] %v2048
    %2223 = vst.msk [vmem:[#allocation3 + $0x278] sm:$0x3f] %vm1926, %v2217
    %2224 = vrot.lane.b32.xlu0 %v1921, 62
    %v2225 = vpop.permute.xlu0 %2224
    %v2226 = vsel %vm852, %v2070, %v2225
    %2228 = vst [vmem:[#allocation3 + $0x280] sm:$0x3f] %v2072
    %2229 = vst [vmem:[#allocation3 + $0x288] sm:$0x3f] %v2073
    %2230 = vst [vmem:[#allocation3 + $0x290] sm:$0x3f] %v2074
    %2231 = vst [vmem:[#allocation3 + $0x298] sm:$0x3f] %v2075
    %2232 = vst.msk [vmem:[#allocation3 + $0x2a0] sm:$0x3f] %vm1926, %v2226
    %2233 = vrot.lane.b32.xlu0 %v1921, 60
    %v2234 = vpop.permute.xlu0 %2233
    %v2235 = vsel %vm952, %v2097, %v2234
    %2237 = vst [vmem:[#allocation3 + $0x2a8] sm:$0x3f] %v2099
    %2238 = vst [vmem:[#allocation3 + $0x2b0] sm:$0x3f] %v2100
    %2239 = vst [vmem:[#allocation3 + $0x2b8] sm:$0x3f] %v2101
    %2240 = vst [vmem:[#allocation3 + $0x2c0] sm:$0x3f] %v2102
    %2241 = vst.msk [vmem:[#allocation3 + $0x2c8] sm:$0x3f] %vm1926, %v2235
    %2242 = vrot.lane.b32.xlu0 %v1921, 58
    %v2243 = vpop.permute.xlu0 %2242
    %v2244 = vsel %vm2125, %v2124, %v2243
    %2246 = vst [vmem:[#allocation3 + $0x2d0] sm:$0x3f] %v2127
    %2247 = vst [vmem:[#allocation3 + $0x2d8] sm:$0x3f] %v2128
    %2248 = vst [vmem:[#allocation3 + $0x2e0] sm:$0x3f] %v2129
    %2249 = vst [vmem:[#allocation3 + $0x2e8] sm:$0x3f] %v2130
    %2250 = vst.msk [vmem:[#allocation3 + $0x2f0] sm:$0x3f] %vm1926, %v2244
    %2251 = vrot.lane.b32.xlu0 %v1921, 56
    %v2252 = vpop.permute.xlu0 %2251
    %v2253 = vsel %vm2153, %v2152, %v2252
    %2255 = vst [vmem:[#allocation3 + $0x2f8] sm:$0x3f] %v2155
    %2256 = vst [vmem:[#allocation3 + $0x300] sm:$0x3f] %v2156
    %2257 = vst [vmem:[#allocation3 + $0x308] sm:$0x3f] %v2157
    %2258 = vst [vmem:[#allocation3 + $0x310] sm:$0x3f] %v2158
    %2259 = vst.msk [vmem:[#allocation3 + $0x318] sm:$0x3f] %vm1926, %v2253
    %2260 = vst [vmem:[#allocation3 + $0x320] sm:$0x3f] %v1917
    %2261 = vst [vmem:[#allocation3 + $0x328] sm:$0x3f] %v1918
    %2262 = vst [vmem:[#allocation3 + $0x330] sm:$0x3f] %v1919
    %2263 = vst [vmem:[#allocation3 + $0x338] sm:$0x3f] %v1920
    %2264 = vst.msk [vmem:[#allocation3 + $0x340] sm:$0x3f] %vm1926, %v1921
    %2265 = vrot.lane.b32.xlu0 %v1921, 126
    %v2266 = vpop.permute.xlu0 %2265
    %v2267 = vsel %vm361, %v2175, %v2266
    %2270 = vst [vmem:[#allocation3 + $0x348] sm:$0x3f] %v1945
    %2271 = vst [vmem:[#allocation3 + $0x350] sm:$0x3f] %v1946
    %2272 = vst [vmem:[#allocation3 + $0x358] sm:$0x3f] %v2176
    %2273 = vst [vmem:[#allocation3 + $0x360] sm:$0x3f] %v2267
    %2274 = vst.msk [vmem:[#allocation3 + $0x368] sm:$0x3f] %vm1926, %v2266
    %2275 = vrot.lane.b32.xlu0 %v1921, 124
    %v2276 = vpop.permute.xlu0 %2275
    %v2277 = vsel %vm54, %v2185, %v2276
    %2280 = vst [vmem:[#allocation3 + $0x370] sm:$0x3f] %v1969
    %2281 = vst [vmem:[#allocation3 + $0x378] sm:$0x3f] %v1970
    %2282 = vst [vmem:[#allocation3 + $0x380] sm:$0x3f] %v2186
    %2283 = vst [vmem:[#allocation3 + $0x388] sm:$0x3f] %v2277
    %2284 = vst.msk [vmem:[#allocation3 + $0x390] sm:$0x3f] %vm1926, %v2276
    %2285 = vrot.lane.b32.xlu0 %v1921, 122
    %v2286 = vpop.permute.xlu0 %2285
    %v2287 = vsel %vm1991, %v2195, %v2286
    %2290 = vst [vmem:[#allocation3 + $0x398] sm:$0x3f] %v1994
    %2291 = vst [vmem:[#allocation3 + $0x3a0] sm:$0x3f] %v1995
    %2292 = vst [vmem:[#allocation3 + $0x3a8] sm:$0x3f] %v2196
    %2293 = vst [vmem:[#allocation3 + $0x3b0] sm:$0x3f] %v2287
    %2294 = vst.msk [vmem:[#allocation3 + $0x3b8] sm:$0x3f] %vm1926, %v2286
    %2295 = vrot.lane.b32.xlu0 %v1921, 120
    %v2296 = vpop.permute.xlu0 %2295
    %v2297 = vsel %vm2016, %v2205, %v2296
    %2300 = vst [vmem:[#allocation3 + $0x3c0] sm:$0x3f] %v2019
    %2301 = vst [vmem:[#allocation3 + $0x3c8] sm:$0x3f] %v2020
    %2302 = vst [vmem:[#allocation3 + $0x3d0] sm:$0x3f] %v2206
    %2303 = vst [vmem:[#allocation3 + $0x3d8] sm:$0x3f] %v2297
    %2304 = vst.msk [vmem:[#allocation3 + $0x3e0] sm:$0x3f] %vm1926, %v2296
    %v2305 = vld [vmem:[%s3] sm:$0xff]
    %v2306 = vld [vmem:[%s3 + $0x8] sm:$0xff]
    %v2307 = vld [vmem:[%s3 + $0x10] sm:$0xff]
    %v2308 = vld [vmem:[%s3 + $0x18] sm:$0xff]
    %v2309 = vld [vmem:[#allocation3] sm:$0xff]
    %v2310 = vld [vmem:[#allocation3 + $0x8] sm:$0xff]
    %v2311 = vld [vmem:[#allocation3 + $0x10] sm:$0xff]
    %v2312 = vld [vmem:[#allocation3 + $0x18] sm:$0xff]
    %v2313 = vld [vmem:[#allocation3 + $0x20] sm:$0xff]
    %v2314 = vld [vmem:[#allocation3 + $0x28] sm:$0xff]
    %v2315 = vld [vmem:[#allocation3 + $0x30] sm:$0xff]
    %v2316 = vld [vmem:[#allocation3 + $0x38] sm:$0xff]
    %v2317 = vld [vmem:[#allocation3 + $0x40] sm:$0xff]
    %v2318 = vld [vmem:[#allocation3 + $0x48] sm:$0xff]
    %v2319 = vld [vmem:[#allocation3 + $0x50] sm:$0xff]
    %v2320 = vld [vmem:[#allocation3 + $0x58] sm:$0xff]
    %v2321 = vld [vmem:[#allocation3 + $0x60] sm:$0xff]
    %v2322 = vld [vmem:[#allocation3 + $0x68] sm:$0xff]
    %v2323 = vld [vmem:[#allocation3 + $0x70] sm:$0xff]
    %v2324 = vld [vmem:[#allocation3 + $0x78] sm:$0xff]
    %v2325 = vld [vmem:[#allocation3 + $0x80] sm:$0xff]
    %v2326 = vld [vmem:[#allocation3 + $0x88] sm:$0xff]
    %v2327 = vld [vmem:[#allocation3 + $0x90] sm:$0xff]
    %v2328 = vld [vmem:[#allocation3 + $0x98] sm:$0xff]
    %v2329 = vld [vmem:[#allocation3 + $0xa0] sm:$0xff]
    %v2330 = vld [vmem:[#allocation3 + $0xa8] sm:$0xff]
    %v2331 = vld [vmem:[#allocation3 + $0xb0] sm:$0xff]
    %v2332 = vld [vmem:[#allocation3 + $0xb8] sm:$0xff]
    %v2333 = vld [vmem:[#allocation3 + $0xc0] sm:$0xff]
    %v2334 = vld [vmem:[#allocation3 + $0xc8] sm:$0xff]
    %v2335 = vld [vmem:[#allocation3 + $0xd0] sm:$0xff]
    %v2336 = vld [vmem:[#allocation3 + $0xd8] sm:$0xff]
    %v2337 = vld [vmem:[#allocation3 + $0xe0] sm:$0xff]
    %v2338 = vld [vmem:[#allocation3 + $0xe8] sm:$0xff]
    %v2339 = vld [vmem:[#allocation3 + $0xf0] sm:$0xff]
    %v2340 = vld [vmem:[#allocation3 + $0xf8] sm:$0xff]
    %v2341 = vld [vmem:[#allocation3 + $0x100] sm:$0xff]
    %v2342 = vld [vmem:[#allocation3 + $0x108] sm:$0xff]
    %v2343 = vld [vmem:[#allocation3 + $0x110] sm:$0xff]
    %v2344 = vld [vmem:[#allocation3 + $0x118] sm:$0xff]
    %v2345 = vld [vmem:[#allocation3 + $0x120] sm:$0xff]
    %v2346 = vld [vmem:[#allocation3 + $0x128] sm:$0xff]
    %v2347 = vld [vmem:[#allocation3 + $0x130] sm:$0xff]
    %v2348 = vld [vmem:[#allocation3 + $0x138] sm:$0xff]
    %v2349 = vld [vmem:[#allocation3 + $0x140] sm:$0xff]
    %v2350 = vld [vmem:[#allocation3 + $0x148] sm:$0xff]
    %v2351 = vld [vmem:[#allocation3 + $0x150] sm:$0xff]
    %v2352 = vld [vmem:[#allocation3 + $0x158] sm:$0xff]
    %v2353 = vld [vmem:[#allocation3 + $0x160] sm:$0xff]
    %v2354 = vld [vmem:[#allocation3 + $0x168] sm:$0xff]
    %v2355 = vld [vmem:[#allocation3 + $0x170] sm:$0xff]
    %v2356 = vld [vmem:[#allocation3 + $0x178] sm:$0xff]
    %v2357 = vld [vmem:[#allocation3 + $0x180] sm:$0xff]
    %v2358 = vld [vmem:[#allocation3 + $0x188] sm:$0xff]
    %v2359 = vld [vmem:[#allocation3 + $0x190] sm:$0xff]
    %v2360 = vld [vmem:[#allocation3 + $0x198] sm:$0xff]
    %v2361 = vld [vmem:[#allocation3 + $0x1a0] sm:$0xff]
    %v2362 = vld [vmem:[#allocation3 + $0x1a8] sm:$0xff]
    %v2363 = vld [vmem:[#allocation3 + $0x1b0] sm:$0xff]
    %v2364 = vld [vmem:[#allocation3 + $0x1b8] sm:$0xff]
    %v2365 = vld [vmem:[#allocation3 + $0x1c0] sm:$0xff]
    %v2366 = vld [vmem:[#allocation3 + $0x1c8] sm:$0xff]
    %v2367 = vld [vmem:[#allocation3 + $0x1d0] sm:$0xff]
    %v2368 = vld [vmem:[#allocation3 + $0x1d8] sm:$0xff]
    %v2369 = vld [vmem:[#allocation3 + $0x1e0] sm:$0xff]
    %v2370 = vld [vmem:[#allocation3 + $0x1e8] sm:$0xff]
    %v2371 = vld [vmem:[#allocation3 + $0x1f0] sm:$0xff]
    %v2372 = vld [vmem:[#allocation3 + $0x1f8] sm:$0xff]
    %v2373 = vld [vmem:[#allocation3 + $0x200] sm:$0xff]
    %v2374 = vld [vmem:[#allocation3 + $0x208] sm:$0xff]
    %v2375 = vld [vmem:[#allocation3 + $0x210] sm:$0xff]
    %v2376 = vld [vmem:[#allocation3 + $0x218] sm:$0xff]
    %v2377 = vld [vmem:[#allocation3 + $0x220] sm:$0xff]
    %v2378 = vld [vmem:[#allocation3 + $0x228] sm:$0xff]
    %v2379 = vld [vmem:[#allocation3 + $0x230] sm:$0xff]
    %v2380 = vld [vmem:[#allocation3 + $0x238] sm:$0xff]
    %v2381 = vld [vmem:[#allocation3 + $0x240] sm:$0xff]
    %v2382 = vld [vmem:[#allocation3 + $0x248] sm:$0xff]
    %v2383 = vld [vmem:[#allocation3 + $0x250] sm:$0xff]
    %v2384 = vld [vmem:[#allocation3 + $0x258] sm:$0xff]
    %v2385 = vld [vmem:[#allocation3 + $0x260] sm:$0xff]
    %v2386 = vld [vmem:[#allocation3 + $0x268] sm:$0xff]
    %v2387 = vld [vmem:[#allocation3 + $0x270] sm:$0xff]
    %v2388 = vld [vmem:[#allocation3 + $0x278] sm:$0xff]
    %v2389 = vld [vmem:[#allocation3 + $0x280] sm:$0xff]
    %v2390 = vld [vmem:[#allocation3 + $0x288] sm:$0xff]
    %v2391 = vld [vmem:[#allocation3 + $0x290] sm:$0xff]
    %v2392 = vld [vmem:[#allocation3 + $0x298] sm:$0xff]
    %v2393 = vld [vmem:[#allocation3 + $0x2a0] sm:$0xff]
    %v2394 = vld [vmem:[#allocation3 + $0x2a8] sm:$0xff]
    %v2395 = vld [vmem:[#allocation3 + $0x2b0] sm:$0xff]
    %v2396 = vld [vmem:[#allocation3 + $0x2b8] sm:$0xff]
    %v2397 = vld [vmem:[#allocation3 + $0x2c0] sm:$0xff]
    %v2398 = vld [vmem:[#allocation3 + $0x2c8] sm:$0xff]
    %v2399 = vld [vmem:[#allocation3 + $0x2d0] sm:$0xff]
    %v2400 = vld [vmem:[#allocation3 + $0x2d8] sm:$0xff]
    %v2401 = vld [vmem:[#allocation3 + $0x2e0] sm:$0xff]
    %v2402 = vld [vmem:[#allocation3 + $0x2e8] sm:$0xff]
    %v2403 = vld [vmem:[#allocation3 + $0x2f0] sm:$0xff]
    %v2404 = vld [vmem:[#allocation3 + $0x2f8] sm:$0xff]
    %v2405 = vld [vmem:[#allocation3 + $0x300] sm:$0xff]
    %v2406 = vld [vmem:[#allocation3 + $0x308] sm:$0xff]
    %v2407 = vld [vmem:[#allocation3 + $0x310] sm:$0xff]
    %v2408 = vld [vmem:[#allocation3 + $0x318] sm:$0xff]
    %v2409 = vld [vmem:[#allocation3 + $0x320] sm:$0xff]
    %v2410 = vld [vmem:[#allocation3 + $0x328] sm:$0xff]
    %v2411 = vld [vmem:[#allocation3 + $0x330] sm:$0xff]
    %v2412 = vld [vmem:[#allocation3 + $0x338] sm:$0xff]
    %v2413 = vld [vmem:[#allocation3 + $0x340] sm:$0xff]
    %v2414 = vld [vmem:[#allocation3 + $0x348] sm:$0xff]
    %v2415 = vld [vmem:[#allocation3 + $0x350] sm:$0xff]
    %v2416 = vld [vmem:[#allocation3 + $0x358] sm:$0xff]
    %v2417 = vld [vmem:[#allocation3 + $0x360] sm:$0xff]
    %v2418 = vld [vmem:[#allocation3 + $0x368] sm:$0xff]
    %v2419 = vld [vmem:[#allocation3 + $0x370] sm:$0xff]
    %v2420 = vld [vmem:[#allocation3 + $0x378] sm:$0xff]
    %v2421 = vld [vmem:[#allocation3 + $0x380] sm:$0xff]
    %v2422 = vld [vmem:[#allocation3 + $0x388] sm:$0xff]
    %v2423 = vld [vmem:[#allocation3 + $0x390] sm:$0xff]
    %v2424 = vld [vmem:[#allocation3 + $0x398] sm:$0xff]
    %v2425 = vld [vmem:[#allocation3 + $0x3a0] sm:$0xff]
    %v2426 = vld [vmem:[#allocation3 + $0x3a8] sm:$0xff]
    %v2427 = vld [vmem:[#allocation3 + $0x3b0] sm:$0xff]
    %v2428 = vld [vmem:[#allocation3 + $0x3b8] sm:$0xff]
    %v2429 = vld [vmem:[#allocation3 + $0x3c0] sm:$0xff]
    %v2430 = vld [vmem:[#allocation3 + $0x3c8] sm:$0xff]
    %v2431 = vld [vmem:[#allocation3 + $0x3d0] sm:$0xff]
    %v2432 = vld [vmem:[#allocation3 + $0x3d8] sm:$0xff]
    %v2433 = vld [vmem:[#allocation3 + $0x3e0] sm:$0xff]
    %v2434 = vld [vmem:[%s4] sm:$0xff]
    %v2435 = vld [vmem:[%s4 + $0x8] sm:$0xff]
    %2437 = vset.pattern.permute.xlu0 0
    %2438 = vperm.xlu0 %2437, %v2434
    %v2439 = vpop.permute.xlu0 %2438
    %2442 = vset.pattern.permute.xlu0 0
    %2443 = vperm.xlu0 %2442, %v2435
    %v2444 = vpop.permute.xlu0 %2443
    %vm2446 = vcmask 588800
    %v2448 = vsel %vm2446, %v2306, 0
    %v2451 = vsel %vm2446, %v2308, 0
    %2453 = vmatprep.subr.mxu0 %v2310
    %2454 = vmatpush1.msra.mxu0 %v2309
    %2455 = vmatprep.subr.mxu0 %v2315
    %2456 = vmatpush1.msra.mxu0 %v2314
    %2457 = vmatprep.subr.mxu0 %v2320
    %2458 = vmatpush1.msra.mxu0 %v2319
    %2459 = vmatprep.subr.mxu0 %v2325
    %2460 = vmatpush1.msra.mxu0 %v2324
    %2461 = vmatprep.subr.mxu0 %v2330
    %2462 = vmatpush1.msra.mxu0 %v2329
    %2463 = vmatprep.subr.mxu0 %v2335
    %2464 = vmatpush1.msra.mxu0 %v2334
    %2465 = vmatprep.subr.mxu0 %v2340
    %2466 = vmatpush1.msra.mxu0 %v2339
    %2467 = vmatprep.subr.mxu0 %v2345
    %2468 = vmatpush1.msra.mxu0 %v2344
    %2469 = vmatprep.subr.mxu0 %v2350
    %2470 = vmatpush1.msra.mxu0 %v2349
    %2471 = vmatprep.subr.mxu0 %v2355
    %2472 = vmatpush1.msra.mxu0 %v2354
    %2473 = vmatprep.subr.mxu0 %v2360
    %2474 = vmatpush1.msra.mxu0 %v2359
    %2475 = vmatprep.subr.mxu0 %v2365
    %2476 = vmatpush1.msra.mxu0 %v2364
    %2477 = vmatprep.subr.mxu0 %v2370
    %2478 = vmatpush1.msra.mxu0 %v2369
    %2479 = vmatprep.subr.mxu0 %v2375
    %2480 = vmatpush1.msra.mxu0 %v2374
    %2481 = vmatprep.subr.mxu0 %v2380
    %2482 = vmatpush1.msra.mxu0 %v2379
    %2483 = vmatprep.subr.mxu0 %v2385
    %2484 = vmatpush1.msra.mxu0 %v2384
    %2485 = vmatprep.subr.mxu0 %v2390
    %2486 = vmatpush1.msra.mxu0 %v2389
    %2487 = vmatprep.subr.mxu0 %v2395
    %2488 = vmatpush1.msra.mxu0 %v2394
    %2489 = vmatprep.subr.mxu0 %v2400
    %2490 = vmatpush1.msra.mxu0 %v2399
    %2491 = vmatprep.subr.mxu0 %v2405
    %2492 = vmatpush1.msra.mxu0 %v2404
    %2493 = vmatprep.subr.mxu0 %v2410
    %2494 = vmatpush1.msra.mxu0 %v2409
    %2495 = vmatprep.subr.mxu0 %v2415
    %2496 = vmatpush1.msra.mxu0 %v2414
    %2497 = vmatprep.subr.mxu0 %v2420
    %2498 = vmatpush1.msra.mxu0 %v2419
    %2499 = vmatprep.subr.mxu0 %v2425
    %2500 = vmatpush1.msra.mxu0 %v2424
    %2501 = vmatprep.subr.mxu0 %v2430
    %2502 = vmatpush1.msra.mxu0 %v2429
    %2503 = vmatprep.subr.mxu0 0.0
    %2504 = vmatpush1.msra.mxu0 0.0
    %2505 = vmatprep.subr.mxu0 0.0
    %2506 = vmatpush1.msra.mxu0 0.0
    %2507 = vmatprep.subr.mxu0 0.0
    %2508 = vmatpush1.msra.mxu0 0.0
    %2509 = vmatprep.subr.mxu0 0.0
    %2510 = vmatpush1.msra.mxu0 0.0
    %2511 = vmatprep.subr.mxu0 0.0
    %2512 = vmatpush1.msra.mxu0 0.0
    %2513 = vmatprep.subr.mxu0 0.0
    %2514 = vmatpush1.msra.mxu0 0.0
    %2515 = vmatprep.subr.mxu0 0.0
    %2516 = vmatpush1.msra.mxu0 0.0
    %2517 = vmatprep.mubr.f32.mxu0 %v2448
    %2518 = vmatmul.mubr.f32.gmra.mrb[0].mxu0 %v2305
    %v2519 = vpop.f32.mrb[0].mxu0
    %v2520 = vadd.f32 %v2439, %v2519
    %v2521 = vpop.f32.mrb[0].mxu0
    %v2522 = vadd.f32 %v2439, %v2521
    %2523 = vmatprep.mubr.f32.mxu0 %v2451
    %2524 = vmatmul.mubr.f32.gmra.mrb[0].mxu0 %v2307
    %v2525 = vpop.f32.mrb[0].mxu0
    %v2526 = vadd.f32 %v2444, %v2525
    %v2527 = vpop.f32.mrb[0].mxu0
    %v2528 = vadd.f32 %v2444, %v2527
    %2529 = vdwg.mxu0
    %2530 = vmatprep.subr.mxu0 %v2312
    %2531 = vmatpush1.msra.mxu0 %v2311
    %2532 = vmatprep.subr.mxu0 %v2317
    %2533 = vmatpush1.msra.mxu0 %v2316
    %2534 = vmatprep.subr.mxu0 %v2322
    %2535 = vmatpush1.msra.mxu0 %v2321
    %2536 = vmatprep.subr.mxu0 %v2327
    %2537 = vmatpush1.msra.mxu0 %v2326
    %2538 = vmatprep.subr.mxu0 %v2332
    %2539 = vmatpush1.msra.mxu0 %v2331
    %2540 = vmatprep.subr.mxu0 %v2337
    %2541 = vmatpush1.msra.mxu0 %v2336
    %2542 = vmatprep.subr.mxu0 %v2342
    %2543 = vmatpush1.msra.mxu0 %v2341
    %2544 = vmatprep.subr.mxu0 %v2347
    %2545 = vmatpush1.msra.mxu0 %v2346
    %2546 = vmatprep.subr.mxu0 %v2352
    %2547 = vmatpush1.msra.mxu0 %v2351
    %2548 = vmatprep.subr.mxu0 %v2357
    %2549 = vmatpush1.msra.mxu0 %v2356
    %2550 = vmatprep.subr.mxu0 %v2362
    %2551 = vmatpush1.msra.mxu0 %v2361
    %2552 = vmatprep.subr.mxu0 %v2367
    %2553 = vmatpush1.msra.mxu0 %v2366
    %2554 = vmatprep.subr.mxu0 %v2372
    %2555 = vmatpush1.msra.mxu0 %v2371
    %2556 = vmatprep.subr.mxu0 %v2377
    %2557 = vmatpush1.msra.mxu0 %v2376
    %2558 = vmatprep.subr.mxu0 %v2382
    %2559 = vmatpush1.msra.mxu0 %v2381
    %2560 = vmatprep.subr.mxu0 %v2387
    %2561 = vmatpush1.msra.mxu0 %v2386
    %2562 = vmatprep.subr.mxu0 %v2392
    %2563 = vmatpush1.msra.mxu0 %v2391
    %2564 = vmatprep.subr.mxu0 %v2397
    %2565 = vmatpush1.msra.mxu0 %v2396
    %2566 = vmatprep.subr.mxu0 %v2402
    %2567 = vmatpush1.msra.mxu0 %v2401
    %2568 = vmatprep.subr.mxu0 %v2407
    %2569 = vmatpush1.msra.mxu0 %v2406
    %2570 = vmatprep.subr.mxu0 %v2412
    %2571 = vmatpush1.msra.mxu0 %v2411
    %2572 = vmatprep.subr.mxu0 %v2417
    %2573 = vmatpush1.msra.mxu0 %v2416
    %2574 = vmatprep.subr.mxu0 %v2422
    %2575 = vmatpush1.msra.mxu0 %v2421
    %2576 = vmatprep.subr.mxu0 %v2427
    %2577 = vmatpush1.msra.mxu0 %v2426
    %2578 = vmatprep.subr.mxu0 %v2432
    %2579 = vmatpush1.msra.mxu0 %v2431
    %2580 = vmatprep.subr.mxu0 0.0
    %2581 = vmatpush1.msra.mxu0 0.0
    %2582 = vmatprep.subr.mxu0 0.0
    %2583 = vmatpush1.msra.mxu0 0.0
    %2584 = vmatprep.subr.mxu0 0.0
    %2585 = vmatpush1.msra.mxu0 0.0
    %2586 = vmatprep.subr.mxu0 0.0
    %2587 = vmatpush1.msra.mxu0 0.0
    %2588 = vmatprep.subr.mxu0 0.0
    %2589 = vmatpush1.msra.mxu0 0.0
    %2590 = vmatprep.subr.mxu0 0.0
    %2591 = vmatpush1.msra.mxu0 0.0
    %2592 = vmatprep.subr.mxu0 0.0
    %2593 = vmatpush1.msra.mxu0 0.0
    %2594 = vmatprep.mubr.f32.mxu0 %v2448
    %2595 = vmatmul.mubr.f32.gmra.mrb[0].mxu0 %v2305
    %v2596 = vpop.f32.mrb[0].mxu0
    %v2597 = vadd.f32 %v2439, %v2596
    %v2598 = vpop.f32.mrb[0].mxu0
    %v2599 = vadd.f32 %v2439, %v2598
    %2600 = vmatprep.mubr.f32.mxu0 %v2451
    %2601 = vmatmul.mubr.f32.gmra.mrb[0].mxu0 %v2307
    %v2602 = vpop.f32.mrb[0].mxu0
    %v2603 = vadd.f32 %v2444, %v2602
    %v2604 = vpop.f32.mrb[0].mxu0
    %v2605 = vadd.f32 %v2444, %v2604
    %2606 = vdwg.mxu0
    %2607 = vmatprep.subr.mxu0 0.0
    %2608 = vmatpush1.msra.mxu0 %v2313
    %2609 = vmatprep.subr.mxu0 0.0
    %2610 = vmatpush1.msra.mxu0 %v2318
    %2611 = vmatprep.subr.mxu0 0.0
    %2612 = vmatpush1.msra.mxu0 %v2323
    %2613 = vmatprep.subr.mxu0 0.0
    %2614 = vmatpush1.msra.mxu0 %v2328
    %2615 = vmatprep.subr.mxu0 0.0
    %2616 = vmatpush1.msra.mxu0 %v2333
    %2617 = vmatprep.subr.mxu0 0.0
    %2618 = vmatpush1.msra.mxu0 %v2338
    %2619 = vmatprep.subr.mxu0 0.0
    %2620 = vmatpush1.msra.mxu0 %v2343
    %2621 = vmatprep.subr.mxu0 0.0
    %2622 = vmatpush1.msra.mxu0 %v2348
    %2623 = vmatprep.subr.mxu0 0.0
    %2624 = vmatpush1.msra.mxu0 %v2353
    %2625 = vmatprep.subr.mxu0 0.0
    %2626 = vmatpush1.msra.mxu0 %v2358
    %2627 = vmatprep.subr.mxu0 0.0
    %2628 = vmatpush1.msra.mxu0 %v2363
    %2629 = vmatprep.subr.mxu0 0.0
    %2630 = vmatpush1.msra.mxu0 %v2368
    %2631 = vmatprep.subr.mxu0 0.0
    %2632 = vmatpush1.msra.mxu0 %v2373
    %2633 = vmatprep.subr.mxu0 0.0
    %2634 = vmatpush1.msra.mxu0 %v2378
    %2635 = vmatprep.subr.mxu0 0.0
    %2636 = vmatpush1.msra.mxu0 %v2383
    %2637 = vmatprep.subr.mxu0 0.0
    %2638 = vmatpush1.msra.mxu0 %v2388
    %2639 = vmatprep.subr.mxu0 0.0
    %2640 = vmatpush1.msra.mxu0 %v2393
    %2641 = vmatprep.subr.mxu0 0.0
    %2642 = vmatpush1.msra.mxu0 %v2398
    %2643 = vmatprep.subr.mxu0 0.0
    %2644 = vmatpush1.msra.mxu0 %v2403
    %2645 = vmatprep.subr.mxu0 0.0
    %2646 = vmatpush1.msra.mxu0 %v2408
    %2647 = vmatprep.subr.mxu0 0.0
    %2648 = vmatpush1.msra.mxu0 %v2413
    %2649 = vmatprep.subr.mxu0 0.0
    %2650 = vmatpush1.msra.mxu0 %v2418
    %2651 = vmatprep.subr.mxu0 0.0
    %2652 = vmatpush1.msra.mxu0 %v2423
    %2653 = vmatprep.subr.mxu0 0.0
    %2654 = vmatpush1.msra.mxu0 %v2428
    %2655 = vmatprep.subr.mxu0 0.0
    %2656 = vmatpush1.msra.mxu0 %v2433
    %2657 = vmatprep.subr.mxu0 0.0
    %2658 = vmatpush1.msra.mxu0 0.0
    %2659 = vmatprep.subr.mxu0 0.0
    %2660 = vmatpush1.msra.mxu0 0.0
    %2661 = vmatprep.subr.mxu0 0.0
    %2662 = vmatpush1.msra.mxu0 0.0
    %2663 = vmatprep.subr.mxu0 0.0
    %2664 = vmatpush1.msra.mxu0 0.0
    %2665 = vmatprep.subr.mxu0 0.0
    %2666 = vmatpush1.msra.mxu0 0.0
    %2667 = vmatprep.subr.mxu0 0.0
    %2668 = vmatpush1.msra.mxu0 0.0
    %2669 = vmatprep.subr.mxu0 0.0
    %2670 = vmatpush1.msra.mxu0 0.0
    %2671 = vmatprep.mubr.f32.mxu0 %v2448
    %2672 = vmatmul.mubr.f32.gmra.mrb[0].mxu0 %v2305
    %v2673 = vpop.f32.mrb[0].mxu0
    %v2674 = vadd.f32 %v2439, %v2673
    %v2675 = vpop.f32.mrb[0].mxu0
    %2676 = vmatprep.mubr.f32.mxu0 %v2451
    %2677 = vmatmul.mubr.f32.gmra.mrb[0].mxu0 %v2307
    %v2678 = vpop.f32.mrb[0].mxu0
    %v2679 = vadd.f32 %v2444, %v2678
    %v2680 = vpop.f32.mrb[0].mxu0
    %2681 = vdwg.mxu0
    %v2682 = vmax.f32 %v2520, 0.0
    %v2683 = vmax.f32 %v2522, 0.0
    %v2684 = vmax.f32 %v2597, 0.0
    %v2685 = vmax.f32 %v2599, 0.0
    %v2686 = vmax.f32 %v2674, 0.0
    %v2687 = vmax.f32 %v2526, 0.0
    %v2688 = vmax.f32 %v2528, 0.0
    %v2689 = vmax.f32 %v2603, 0.0
    %v2690 = vmax.f32 %v2605, 0.0
    %v2691 = vmax.f32 %v2679, 0.0
    %2702 = vrot.lane.b32.xlu0 %v2682, 126
    %v2703 = vpop.permute.xlu0 %2702
    %2704 = vrot.lane.b32.xlu0 %v2683, 126
    %v2705 = vpop.permute.xlu0 %2704
    %2706 = vrot.lane.b32.xlu0 %v2684, 126
    %v2707 = vpop.permute.xlu0 %2706
    %2708 = vrot.lane.b32.xlu0 %v2685, 126
    %v2709 = vpop.permute.xlu0 %2708
    %2710 = vrot.lane.b32.xlu0 %v2686, 126
    %v2711 = vpop.permute.xlu0 %2710
    %2712 = vrot.lane.b32.xlu0 %v2687, 126
    %v2713 = vpop.permute.xlu0 %2712
    %2714 = vrot.lane.b32.xlu0 %v2688, 126
    %v2715 = vpop.permute.xlu0 %2714
    %2716 = vrot.lane.b32.xlu0 %v2689, 126
    %v2717 = vpop.permute.xlu0 %2716
    %2718 = vrot.lane.b32.xlu0 %v2690, 126
    %v2719 = vpop.permute.xlu0 %2718
    %2720 = vrot.lane.b32.xlu0 %v2691, 126
    %v2721 = vpop.permute.xlu0 %2720
    %v2722 = vsel %vm361, %v2703, %v2705
    %v2723 = vsel %vm361, %v2705, %v2707
    %v2724 = vsel %vm361, %v2707, %v2709
    %v2725 = vsel %vm361, %v2709, %v2711
    %v2726 = vsel %vm361, %v2713, %v2715
    %v2727 = vsel %vm361, %v2715, %v2717
    %v2728 = vsel %vm361, %v2717, %v2719
    %v2729 = vsel %vm361, %v2719, %v2721
    %v2740 = vmax.f32 %v2682, %v2722
    %v2741 = vmax.f32 %v2683, %v2723
    %v2742 = vmax.f32 %v2684, %v2724
    %v2743 = vmax.f32 %v2685, %v2725
    %v2744 = vmax.f32 %v2686, %v2711
    %v2745 = vmax.f32 %v2687, %v2726
    %v2746 = vmax.f32 %v2688, %v2727
    %v2747 = vmax.f32 %v2689, %v2728
    %v2748 = vmax.f32 %v2690, %v2729
    %v2749 = vmax.f32 %v2691, %v2721
    %2760 = vrot.lane.b32.xlu0 %v2740, 64
    %v2761 = vpop.permute.xlu0 %2760
    %2762 = vrot.lane.b32.xlu0 %v2741, 64
    %v2763 = vpop.permute.xlu0 %2762
    %2764 = vrot.lane.b32.xlu0 %v2742, 64
    %v2765 = vpop.permute.xlu0 %2764
    %2766 = vrot.lane.b32.xlu0 %v2743, 64
    %v2767 = vpop.permute.xlu0 %2766
    %2768 = vrot.lane.b32.xlu0 %v2744, 64
    %v2769 = vpop.permute.xlu0 %2768
    %2770 = vrot.lane.b32.xlu0 %v2745, 64
    %v2771 = vpop.permute.xlu0 %2770
    %2772 = vrot.lane.b32.xlu0 %v2746, 64
    %v2773 = vpop.permute.xlu0 %2772
    %2774 = vrot.lane.b32.xlu0 %v2747, 64
    %v2775 = vpop.permute.xlu0 %2774
    %2776 = vrot.lane.b32.xlu0 %v2748, 64
    %v2777 = vpop.permute.xlu0 %2776
    %2778 = vrot.lane.b32.xlu0 %v2749, 64
    %v2779 = vpop.permute.xlu0 %2778
    %v2780 = vsel %vm752, %v2761, %v2763
    %v2781 = vsel %vm752, %v2763, %v2765
    %v2782 = vsel %vm752, %v2765, %v2767
    %v2783 = vsel %vm752, %v2767, %v2769
    %v2784 = vsel %vm752, %v2771, %v2773
    %v2785 = vsel %vm752, %v2773, %v2775
    %v2786 = vsel %vm752, %v2775, %v2777
    %v2787 = vsel %vm752, %v2777, %v2779
    %v2798 = vmax.f32 %v2740, %v2780
    %v2799 = vmax.f32 %v2741, %v2781
    %v2800 = vmax.f32 %v2742, %v2782
    %v2801 = vmax.f32 %v2743, %v2783
    %v2802 = vmax.f32 %v2744, %v2769
    %v2803 = vmax.f32 %v2745, %v2784
    %v2804 = vmax.f32 %v2746, %v2785
    %v2805 = vmax.f32 %v2747, %v2786
    %v2806 = vmax.f32 %v2748, %v2787
    %v2807 = vmax.f32 %v2749, %v2779
    %v2808 = vld [vmem:[%s5] sm:$0xff]
    %v2809 = vld [vmem:[%s5 + $0x8] sm:$0xff]
    %v2810 = vld [vmem:[%s5 + $0x10] sm:$0xff]
    %v2811 = vld [vmem:[%s5 + $0x18] sm:$0xff]
    %v2812 = vld [vmem:[%s5 + $0x20] sm:$0xff]
    %v2813 = vld [vmem:[%s5 + $0x28] sm:$0xff]
    %v2814 = vld [vmem:[%s5 + $0x30] sm:$0xff]
    %v2815 = vld [vmem:[%s5 + $0x38] sm:$0xff]
    %v2816 = vld [vmem:[%s5 + $0x40] sm:$0xff]
    %v2817 = vld [vmem:[%s5 + $0x48] sm:$0xff]
    %v2818 = vld [vmem:[%s5 + $0x50] sm:$0xff]
    %v2819 = vld [vmem:[%s5 + $0x58] sm:$0xff]
    %v2820 = vld [vmem:[%s5 + $0x60] sm:$0xff]
    %v2821 = vld [vmem:[%s5 + $0x68] sm:$0xff]
    %v2822 = vld [vmem:[%s5 + $0x70] sm:$0xff]
    %v2823 = vld [vmem:[%s5 + $0x78] sm:$0xff]
    %v2824 = vld [vmem:[%s5 + $0x80] sm:$0xff]
    %v2825 = vld [vmem:[%s5 + $0x88] sm:$0xff]
    %v2826 = vld [vmem:[%s5 + $0x90] sm:$0xff]
    %v2827 = vld [vmem:[%s5 + $0x98] sm:$0xff]
    %v2828 = vld [vmem:[%s5 + $0xa0] sm:$0xff]
    %v2829 = vld [vmem:[%s5 + $0xa8] sm:$0xff]
    %v2830 = vld [vmem:[%s5 + $0xb0] sm:$0xff]
    %v2831 = vld [vmem:[%s5 + $0xb8] sm:$0xff]
    %v2832 = vld [vmem:[%s5 + $0xc0] sm:$0xff]
    %v2833 = vld [vmem:[%s5 + $0xc8] sm:$0xff]
    %v2834 = vld [vmem:[%s5 + $0xd0] sm:$0xff]
    %v2835 = vld [vmem:[%s5 + $0xd8] sm:$0xff]
    %v2836 = vld [vmem:[%s5 + $0xe0] sm:$0xff]
    %v2837 = vld [vmem:[%s5 + $0xe8] sm:$0xff]
    %v2838 = vld [vmem:[%s5 + $0xf0] sm:$0xff]
    %v2839 = vld [vmem:[%s5 + $0xf8] sm:$0xff]
    %v2840 = vld [vmem:[%s5 + $0x100] sm:$0xff]
    %v2841 = vld [vmem:[%s5 + $0x108] sm:$0xff]
    %v2842 = vld [vmem:[%s5 + $0x110] sm:$0xff]
    %v2843 = vld [vmem:[%s5 + $0x118] sm:$0xff]
    %v2844 = vld [vmem:[%s5 + $0x120] sm:$0xff]
    %v2845 = vld [vmem:[%s5 + $0x128] sm:$0xff]
    %v2846 = vld [vmem:[%s5 + $0x130] sm:$0xff]
    %v2847 = vld [vmem:[%s5 + $0x138] sm:$0xff]
    %v2848 = vld [vmem:[%s5 + $0x140] sm:$0xff]
    %v2849 = vld [vmem:[%s5 + $0x148] sm:$0xff]
    %v2850 = vld [vmem:[%s5 + $0x150] sm:$0xff]
    %v2851 = vld [vmem:[%s5 + $0x158] sm:$0xff]
    %v2852 = vld [vmem:[%s5 + $0x160] sm:$0xff]
    %v2853 = vld [vmem:[%s5 + $0x168] sm:$0xff]
    %v2854 = vld [vmem:[%s5 + $0x170] sm:$0xff]
    %v2855 = vld [vmem:[%s5 + $0x178] sm:$0xff]
    %v2856 = vld [vmem:[%s5 + $0x180] sm:$0xff]
    %v2857 = vld [vmem:[%s5 + $0x188] sm:$0xff]
    %v2858 = vld [vmem:[%s5 + $0x190] sm:$0xff]
    %v2859 = vld [vmem:[%s5 + $0x198] sm:$0xff]
    %v2860 = vld [vmem:[%s5 + $0x1a0] sm:$0xff]
    %v2861 = vld [vmem:[%s5 + $0x1a8] sm:$0xff]
    %v2862 = vld [vmem:[%s5 + $0x1b0] sm:$0xff]
    %v2863 = vld [vmem:[%s5 + $0x1b8] sm:$0xff]
    %v2864 = vld [vmem:[%s5 + $0x1c0] sm:$0xff]
    %v2865 = vld [vmem:[%s5 + $0x1c8] sm:$0xff]
    %v2866 = vld [vmem:[%s5 + $0x1d0] sm:$0xff]
    %v2867 = vld [vmem:[%s5 + $0x1d8] sm:$0xff]
    %v2868 = vld [vmem:[%s5 + $0x1e0] sm:$0xff]
    %v2869 = vld [vmem:[%s5 + $0x1e8] sm:$0xff]
    %v2870 = vld [vmem:[%s5 + $0x1f0] sm:$0xff]
    %v2871 = vld [vmem:[%s5 + $0x1f8] sm:$0xff]
    %v2872 = vld [vmem:[%s5 + $0x200] sm:$0xff]
    %v2873 = vld [vmem:[%s5 + $0x208] sm:$0xff]
    %v2874 = vld [vmem:[%s5 + $0x210] sm:$0x1]
    %vm2875 = vcmask 138240
    %v2877 = vsel %vm2875, %v2802, 0
    %v2880 = vsel %vm2875, %v2807, 0
    %vm2882 = vcmask 1040384
    %v2884 = vsel %vm2882, %v2874, 0
    %2886 = vmatprep.subr.mxu0 0.0
    %2887 = vmatpush1.msra.mxu0 %v2808
    %2888 = vmatprep.subr.mxu0 0.0
    %2889 = vmatpush1.msra.mxu0 %v2809
    %2890 = vmatprep.subr.mxu0 0.0
    %2891 = vmatpush1.msra.mxu0 %v2810
    %2892 = vmatprep.subr.mxu0 0.0
    %2893 = vmatpush1.msra.mxu0 %v2811
    %2894 = vmatprep.subr.mxu0 0.0
    %2895 = vmatpush1.msra.mxu0 %v2812
    %2896 = vmatprep.subr.mxu0 0.0
    %2897 = vmatpush1.msra.mxu0 %v2813
    %2898 = vmatprep.subr.mxu0 0.0
    %2899 = vmatpush1.msra.mxu0 %v2814
    %2900 = vmatprep.subr.mxu0 0.0
    %2901 = vmatpush1.msra.mxu0 %v2815
    %2902 = vmatprep.subr.mxu0 0.0
    %2903 = vmatpush1.msra.mxu0 %v2816
    %2904 = vmatprep.subr.mxu0 0.0
    %2905 = vmatpush1.msra.mxu0 %v2817
    %2906 = vmatprep.subr.mxu0 0.0
    %2907 = vmatpush1.msra.mxu0 %v2818
    %2908 = vmatprep.subr.mxu0 0.0
    %2909 = vmatpush1.msra.mxu0 %v2819
    %2910 = vmatprep.subr.mxu0 0.0
    %2911 = vmatpush1.msra.mxu0 %v2820
    %2912 = vmatprep.subr.mxu0 0.0
    %2913 = vmatpush1.msra.mxu0 %v2821
    %2914 = vmatprep.subr.mxu0 0.0
    %2915 = vmatpush1.msra.mxu0 %v2822
    %2916 = vmatprep.subr.mxu0 0.0
    %2917 = vmatpush1.msra.mxu0 %v2823
    %2918 = vmatprep.subr.mxu0 0.0
    %2919 = vmatpush1.msra.mxu0 %v2824
    %2920 = vmatprep.subr.mxu0 0.0
    %2921 = vmatpush1.msra.mxu0 %v2825
    %2922 = vmatprep.subr.mxu0 0.0
    %2923 = vmatpush1.msra.mxu0 %v2826
    %2924 = vmatprep.subr.mxu0 0.0
    %2925 = vmatpush1.msra.mxu0 %v2827
    %2926 = vmatprep.subr.mxu0 0.0
    %2927 = vmatpush1.msra.mxu0 %v2828
    %2928 = vmatprep.subr.mxu0 0.0
    %2929 = vmatpush1.msra.mxu0 %v2829
    %2930 = vmatprep.subr.mxu0 0.0
    %2931 = vmatpush1.msra.mxu0 %v2830
    %2932 = vmatprep.subr.mxu0 0.0
    %2933 = vmatpush1.msra.mxu0 %v2831
    %2934 = vmatprep.subr.mxu0 0.0
    %2935 = vmatpush1.msra.mxu0 %v2832
    %2936 = vmatprep.subr.mxu0 0.0
    %2937 = vmatpush1.msra.mxu0 %v2833
    %2938 = vmatprep.subr.mxu0 0.0
    %2939 = vmatpush1.msra.mxu0 %v2834
    %2940 = vmatprep.subr.mxu0 0.0
    %2941 = vmatpush1.msra.mxu0 %v2835
    %2942 = vmatprep.subr.mxu0 0.0
    %2943 = vmatpush1.msra.mxu0 %v2836
    %2944 = vmatprep.subr.mxu0 0.0
    %2945 = vmatpush1.msra.mxu0 %v2837
    %2946 = vmatprep.subr.mxu0 0.0
    %2947 = vmatpush1.msra.mxu0 %v2838
    %2948 = vmatprep.subr.mxu0 0.0
    %2949 = vmatpush1.msra.mxu0 %v2839
    %2950 = vmatprep.mubr.f32.mxu0 %v2799
    %2951 = vmatmul.mubr.f32.gmra.mrb[0].mxu0 %v2798
    %v2952 = vpop.f32.mrb[0].mxu0
    %v2953 = vadd.f32 0.0, %v2952
    %v2954 = vpop.f32.mrb[0].mxu0
    %2955 = vmatprep.mubr.f32.mxu0 %v2804
    %2956 = vmatmul.mubr.f32.gmra.mrb[0].mxu0 %v2803
    %v2957 = vpop.f32.mrb[0].mxu0
    %v2958 = vadd.f32 0.0, %v2957
    %v2959 = vpop.f32.mrb[0].mxu0
    %2960 = vdwg.mxu0
    %2961 = vmatprep.subr.mxu0 0.0
    %2962 = vmatpush1.msra.mxu0 %v2840
    %2963 = vmatprep.subr.mxu0 0.0
    %2964 = vmatpush1.msra.mxu0 %v2841
    %2965 = vmatprep.subr.mxu0 0.0
    %2966 = vmatpush1.msra.mxu0 %v2842
    %2967 = vmatprep.subr.mxu0 0.0
    %2968 = vmatpush1.msra.mxu0 %v2843
    %2969 = vmatprep.subr.mxu0 0.0
    %2970 = vmatpush1.msra.mxu0 %v2844
    %2971 = vmatprep.subr.mxu0 0.0
    %2972 = vmatpush1.msra.mxu0 %v2845
    %2973 = vmatprep.subr.mxu0 0.0
    %2974 = vmatpush1.msra.mxu0 %v2846
    %2975 = vmatprep.subr.mxu0 0.0
    %2976 = vmatpush1.msra.mxu0 %v2847
    %2977 = vmatprep.subr.mxu0 0.0
    %2978 = vmatpush1.msra.mxu0 %v2848
    %2979 = vmatprep.subr.mxu0 0.0
    %2980 = vmatpush1.msra.mxu0 %v2849
    %2981 = vmatprep.subr.mxu0 0.0
    %2982 = vmatpush1.msra.mxu0 %v2850
    %2983 = vmatprep.subr.mxu0 0.0
    %2984 = vmatpush1.msra.mxu0 %v2851
    %2985 = vmatprep.subr.mxu0 0.0
    %2986 = vmatpush1.msra.mxu0 %v2852
    %2987 = vmatprep.subr.mxu0 0.0
    %2988 = vmatpush1.msra.mxu0 %v2853
    %2989 = vmatprep.subr.mxu0 0.0
    %2990 = vmatpush1.msra.mxu0 %v2854
    %2991 = vmatprep.subr.mxu0 0.0
    %2992 = vmatpush1.msra.mxu0 %v2855
    %2993 = vmatprep.subr.mxu0 0.0
    %2994 = vmatpush1.msra.mxu0 %v2856
    %2995 = vmatprep.subr.mxu0 0.0
    %2996 = vmatpush1.msra.mxu0 %v2857
    %2997 = vmatprep.subr.mxu0 0.0
    %2998 = vmatpush1.msra.mxu0 %v2858
    %2999 = vmatprep.subr.mxu0 0.0
    %3000 = vmatpush1.msra.mxu0 %v2859
    %3001 = vmatprep.subr.mxu0 0.0
    %3002 = vmatpush1.msra.mxu0 %v2860
    %3003 = vmatprep.subr.mxu0 0.0
    %3004 = vmatpush1.msra.mxu0 %v2861
    %3005 = vmatprep.subr.mxu0 0.0
    %3006 = vmatpush1.msra.mxu0 %v2862
    %3007 = vmatprep.subr.mxu0 0.0
    %3008 = vmatpush1.msra.mxu0 %v2863
    %3009 = vmatprep.subr.mxu0 0.0
    %3010 = vmatpush1.msra.mxu0 %v2864
    %3011 = vmatprep.subr.mxu0 0.0
    %3012 = vmatpush1.msra.mxu0 %v2865
    %3013 = vmatprep.subr.mxu0 0.0
    %3014 = vmatpush1.msra.mxu0 %v2866
    %3015 = vmatprep.subr.mxu0 0.0
    %3016 = vmatpush1.msra.mxu0 %v2867
    %3017 = vmatprep.subr.mxu0 0.0
    %3018 = vmatpush1.msra.mxu0 %v2868
    %3019 = vmatprep.subr.mxu0 0.0
    %3020 = vmatpush1.msra.mxu0 %v2869
    %3021 = vmatprep.subr.mxu0 0.0
    %3022 = vmatpush1.msra.mxu0 %v2870
    %3023 = vmatprep.subr.mxu0 0.0
    %3024 = vmatpush1.msra.mxu0 %v2871
    %3025 = vmatprep.mubr.f32.mxu0 %v2801
    %3026 = vmatmul.mubr.f32.gmra.mrb[0].mxu0 %v2800
    %v3027 = vpop.f32.mrb[0].mxu0
    %v3028 = vadd.f32 %v2953, %v3027
    %v3029 = vpop.f32.mrb[0].mxu0
    %3030 = vmatprep.mubr.f32.mxu0 %v2806
    %3031 = vmatmul.mubr.f32.gmra.mrb[0].mxu0 %v2805
    %v3032 = vpop.f32.mrb[0].mxu0
    %v3033 = vadd.f32 %v2958, %v3032
    %v3034 = vpop.f32.mrb[0].mxu0
    %3035 = vdwg.mxu0
    %3036 = vmatprep.subr.mxu0 0.0
    %3037 = vmatpush1.msra.mxu0 %v2872
    %3038 = vmatprep.subr.mxu0 0.0
    %3039 = vmatpush1.msra.mxu0 %v2873
    %3040 = vmatprep.subr.mxu0 0.0
    %3041 = vmatpush1.msra.mxu0 %v2884
    %3042 = vmatprep.subr.mxu0 0.0
    %3043 = vmatpush1.msra.mxu0 0.0
    %3044 = vmatprep.subr.mxu0 0.0
    %3045 = vmatpush1.msra.mxu0 0.0
    %3046 = vmatprep.subr.mxu0 0.0
    %3047 = vmatpush1.msra.mxu0 0.0
    %3048 = vmatprep.subr.mxu0 0.0
    %3049 = vmatpush1.msra.mxu0 0.0
    %3050 = vmatprep.subr.mxu0 0.0
    %3051 = vmatpush1.msra.mxu0 0.0
    %3052 = vmatprep.subr.mxu0 0.0
    %3053 = vmatpush1.msra.mxu0 0.0
    %3054 = vmatprep.subr.mxu0 0.0
    %3055 = vmatpush1.msra.mxu0 0.0
    %3056 = vmatprep.subr.mxu0 0.0
    %3057 = vmatpush1.msra.mxu0 0.0
    %3058 = vmatprep.subr.mxu0 0.0
    %3059 = vmatpush1.msra.mxu0 0.0
    %3060 = vmatprep.subr.mxu0 0.0
    %3061 = vmatpush1.msra.mxu0 0.0
    %3062 = vmatprep.subr.mxu0 0.0
    %3063 = vmatpush1.msra.mxu0 0.0
    %3064 = vmatprep.subr.mxu0 0.0
    %3065 = vmatpush1.msra.mxu0 0.0
    %3066 = vmatprep.subr.mxu0 0.0
    %3067 = vmatpush1.msra.mxu0 0.0
    %3068 = vmatprep.subr.mxu0 0.0
    %3069 = vmatpush1.msra.mxu0 0.0
    %3070 = vmatprep.subr.mxu0 0.0
    %3071 = vmatpush1.msra.mxu0 0.0
    %3072 = vmatprep.subr.mxu0 0.0
    %3073 = vmatpush1.msra.mxu0 0.0
    %3074 = vmatprep.subr.mxu0 0.0
    %3075 = vmatpush1.msra.mxu0 0.0
    %3076 = vmatprep.subr.mxu0 0.0
    %3077 = vmatpush1.msra.mxu0 0.0
    %3078 = vmatprep.subr.mxu0 0.0
    %3079 = vmatpush1.msra.mxu0 0.0
    %3080 = vmatprep.subr.mxu0 0.0
    %3081 = vmatpush1.msra.mxu0 0.0
    %3082 = vmatprep.subr.mxu0 0.0
    %3083 = vmatpush1.msra.mxu0 0.0
    %3084 = vmatprep.subr.mxu0 0.0
    %3085 = vmatpush1.msra.mxu0 0.0
    %3086 = vmatprep.subr.mxu0 0.0
    %3087 = vmatpush1.msra.mxu0 0.0
    %3088 = vmatprep.subr.mxu0 0.0
    %3089 = vmatpush1.msra.mxu0 0.0
    %3090 = vmatprep.subr.mxu0 0.0
    %3091 = vmatpush1.msra.mxu0 0.0
    %3092 = vmatprep.subr.mxu0 0.0
    %3093 = vmatpush1.msra.mxu0 0.0
    %3094 = vmatprep.subr.mxu0 0.0
    %3095 = vmatpush1.msra.mxu0 0.0
    %3096 = vmatprep.subr.mxu0 0.0
    %3097 = vmatpush1.msra.mxu0 0.0
    %3098 = vmatprep.subr.mxu0 0.0
    %3099 = vmatpush1.msra.mxu0 0.0
    %3100 = vmatprep.mubr.f32.mxu0 0.0
    %3101 = vmatmul.mubr.f32.gmra.mrb[0].mxu0 %v2877
    %v3102 = vpop.f32.mrb[0].mxu0
    %v3103 = vadd.f32 %v3028, %v3102
    %v3104 = vpop.f32.mrb[0].mxu0
    %3105 = vmatprep.mubr.f32.mxu0 0.0
    %3106 = vmatmul.mubr.f32.gmra.mrb[0].mxu0 %v2880
    %v3107 = vpop.f32.mrb[0].mxu0
    %v3108 = vadd.f32 %v3033, %v3107
    %v3109 = vpop.f32.mrb[0].mxu0
    %3110 = vdwg.mxu0
    %vm3111 = vcmask 196608
    %3112 = vst.msk [vmem:[#allocation4] sm:$0x1] %vm3111, %v3103
    %v3115 = vunpack.c.l.s4 1983009808
    %v3116 = vunpack.c.0.s8 %v3115
    %v3117 = vlaneseq
    %v3118 = vshrl.u32 %v3117, 7
    %v3119 = vsub.s32 %v3116, %v3118
    %v3120 = vrot.slane %v3103, %v3119
    %v3121 = vrot.slane %v3120, 7
    %v3122 = vrot.slane %v3121, 2
    %3123 = vrot.lane.b32.xlu0 %v3122, 25
    %v3124 = vpop.permute.xlu0 %3123
    %vm3126 = vcmask 401608
    %3127 = vst.msk [vmem:[#allocation4] sm:$0x1] %vm3126, %v3124
    %v3128 = vcombine.high %v3120, %v3120
    %3129 = vrot.lane.b32.xlu0 %v3128, 50
    %v3130 = vpop.permute.xlu0 %3129
    %vm3132 = vcmask 606608
    %3133 = vst.msk [vmem:[#allocation4] sm:$0x1] %vm3132, %v3130
    %v3134 = vrot.slane %v3128, 7
    %v3135 = vrot.slane %v3134, 2
    %3136 = vrot.lane.b32.xlu0 %v3135, 75
    %v3137 = vpop.permute.xlu0 %3136
    %vm3139 = vcmask 811608
    %3140 = vst.msk [vmem:[#allocation4] sm:$0x1] %vm3139, %v3137
    %v3141 = vcombine.high %v3103, %v3103
    %v3143 = vunpack.c.l.s4 1983009808
    %v3144 = vunpack.c.0.s8 %v3143
    %v3145 = vlaneseq
    %v3146 = vshrl.u32 %v3145, 7
    %v3147 = vsub.s32 %v3144, %v3146
    %v3148 = vrot.slane %v3141, %v3147
    %3149 = vrot.lane.b32.xlu0 %v3148, 100
    %v3150 = vpop.permute.xlu0 %3149
    %vm3152 = vcmask 1016608
    %3153 = vst.msk [vmem:[#allocation4] sm:$0x1] %vm3152, %v3150
    %v3154 = vrot.slane %v3148, 7
    %v3155 = vrot.slane %v3154, 2
    %3156 = vrot.lane.b32.xlu0 %v3155, 125
    %v3157 = vpop.permute.xlu0 %3156
    %v3158 = vrot.slane %v3157, 6
    %v3159 = vsel %vm408, %v3158, %v3157
    %vm3161 = vcmask 1041384
    %vm3162 = vcmask 174082
    %vm3163 = vmor %vm3162, %vm3161
    %3164 = vst.msk [vmem:[#allocation4] sm:$0x5] %vm3163, %v3159
    %v3165 = vcombine.high %v3148, %v3148
    %3166 = vrot.lane.b32.xlu0 %v3165, 22
    %v3167 = vpop.permute.xlu0 %3166
    %vm3169 = vcmask 377008
    %3170 = vst.msk [vmem:[#allocation4 + $0x2] sm:$0x1] %vm3169, %v3167
    %v3171 = vrot.slane %v3165, 7
    %v3172 = vrot.slane %v3171, 2
    %3173 = vrot.lane.b32.xlu0 %v3172, 47
    %v3174 = vpop.permute.xlu0 %3173
    %vm3176 = vcmask 582008
    %3177 = vst.msk [vmem:[#allocation4 + $0x2] sm:$0x1] %vm3176, %v3174
    %v3180 = vunpack.c.l.s4 1983009808
    %v3181 = vunpack.c.0.s8 %v3180
    %v3182 = vlaneseq
    %v3183 = vshrl.u32 %v3182, 7
    %v3184 = vsub.s32 %v3181, %v3183
    %v3185 = vrot.slane %v3108, %v3184
    %3186 = vrot.lane.b32.xlu0 %v3185, 72
    %v3187 = vpop.permute.xlu0 %3186
    %vm3189 = vcmask 787008
    %3190 = vst.msk [vmem:[#allocation4 + $0x2] sm:$0x1] %vm3189, %v3187
    %v3191 = vrot.slane %v3185, 7
    %v3192 = vrot.slane %v3191, 2
    %3193 = vrot.lane.b32.xlu0 %v3192, 97
    %v3194 = vpop.permute.xlu0 %3193
    %vm3196 = vcmask 992008
    %3197 = vst.msk [vmem:[#allocation4 + $0x2] sm:$0x1] %vm3196, %v3194
    %v3198 = vcombine.high %v3185, %v3185
    %3199 = vrot.lane.b32.xlu0 %v3198, 122
    %v3200 = vpop.permute.xlu0 %3199
    %v3201 = vrot.slane %v3200, 6
    %v3202 = vsel %vm1991, %v3201, %v3200
    %vm3204 = vcmask 1041360
    %vm3205 = vcmask 149506
    %vm3206 = vmor %vm3205, %vm3204
    %3207 = vst.msk [vmem:[#allocation4 + $0x2] sm:$0x5] %vm3206, %v3202
    %v3208 = vrot.slane %v3198, 7
    %v3209 = vrot.slane %v3208, 2
    %3210 = vrot.lane.b32.xlu0 %v3209, 19
    %v3211 = vpop.permute.xlu0 %3210
    %vm3213 = vcmask 352408
    %3214 = vst.msk [vmem:[#allocation4 + $0x4] sm:$0x1] %vm3213, %v3211
    %v3215 = vcombine.high %v3108, %v3108
    %v3217 = vunpack.c.l.s4 1983009808
    %v3218 = vunpack.c.0.s8 %v3217
    %v3219 = vlaneseq
    %v3220 = vshrl.u32 %v3219, 7
    %v3221 = vsub.s32 %v3218, %v3220
    %v3222 = vrot.slane %v3215, %v3221
    %3223 = vrot.lane.b32.xlu0 %v3222, 44
    %v3224 = vpop.permute.xlu0 %3223
    %vm3226 = vcmask 557408
    %3227 = vst.msk [vmem:[#allocation4 + $0x4] sm:$0x1] %vm3226, %v3224
    %v3228 = vrot.slane %v3222, 7
    %v3229 = vrot.slane %v3228, 2
    %3230 = vrot.lane.b32.xlu0 %v3229, 69
    %v3231 = vpop.permute.xlu0 %3230
    %vm3233 = vcmask 762408
    %3234 = vst.msk [vmem:[#allocation4 + $0x4] sm:$0x1] %vm3233, %v3231
    %v3235 = vcombine.high %v3222, %v3222
    %3236 = vrot.lane.b32.xlu0 %v3235, 94
    %v3237 = vpop.permute.xlu0 %3236
    %vm3239 = vcmask 967408
    %3240 = vst.msk [vmem:[#allocation4 + $0x4] sm:$0x1] %vm3239, %v3237
    %v3241 = vrot.slane %v3235, 7
    %v3242 = vrot.slane %v3241, 2
    %3243 = vrot.lane.b32.xlu0 %v3242, 119
    %v3244 = vpop.permute.xlu0 %3243
    %v3245 = vrot.slane %v3244, 6
    %vm3246 = vcmask 973824
    %v3247 = vsel %vm3246, %v3245, %v3244
    %vm3249 = vcmask 1041336
    %vm3250 = vcmask 124930
    %vm3251 = vmor %vm3250, %vm3249
    %3252 = vst.msk [vmem:[#allocation4 + $0x4] sm:$0x5] %vm3251, %v3247
    %s3253 = scalar_lea.vmem %s0, 32
    %v3254 = vld [vmem:[%s3253] sm:$0x77]
    %v3255 = vld [vmem:[%s3253 + $0x8] sm:$0x77]
    %v3256 = vld [vmem:[%s3253 + $0x10] sm:$0x77]
    %v3257 = vld [vmem:[%s3253 + $0x18] sm:$0x7]
    %v3261 = vcombine.high %v3254, %v3254
    %v3262 = vcombine.high %v3255, %v3255
    %v3263 = vcombine.high %v3256, %v3256
    %3267 = vst [vmem:[#allocation2] sm:$0x7] %v3254
    %3268 = vst [vmem:[#allocation2 + $0x8] sm:$0x7] %v3261
    %3269 = vst [vmem:[#allocation2 + $0x10] sm:$0x7] %v3255
    %3270 = vst [vmem:[#allocation2 + $0x18] sm:$0x7] %v3262
    %3271 = vst [vmem:[#allocation2 + $0x20] sm:$0x7] %v3256
    %3272 = vst [vmem:[#allocation2 + $0x28] sm:$0x7] %v3263
    %3273 = vst.msk [vmem:[#allocation2 + $0x30] sm:$0x7] %vm286, %v3257
    %v3274 = vld [vmem:[%s3253] sm:$0x77]
    %v3275 = vld [vmem:[%s3253 + $0x8] sm:$0x77]
    %v3276 = vld [vmem:[%s3253 + $0x10] sm:$0x77]
    %v3277 = vld [vmem:[%s3253 + $0x18] sm:$0x7]
    %v3282 = vcombine.low %v3274, %v3274
    %v3283 = vcombine.low %v3275, %v3275
    %v3284 = vcombine.low %v3276, %v3276
    %v3285 = vcombine.low %v3277, %v3277
    %3286 = vrot.lane.b32.xlu0 %v3282, 127
    %v3287 = vpop.permute.xlu0 %3286
    %3288 = vrot.lane.b32.xlu0 %v3274, 127
    %v3289 = vpop.permute.xlu0 %3288
    %3290 = vrot.lane.b32.xlu0 %v3283, 127
    %v3291 = vpop.permute.xlu0 %3290
    %3292 = vrot.lane.b32.xlu0 %v3275, 127
    %v3293 = vpop.permute.xlu0 %3292
    %3294 = vrot.lane.b32.xlu0 %v3284, 127
    %v3295 = vpop.permute.xlu0 %3294
    %3296 = vrot.lane.b32.xlu0 %v3276, 127
    %v3297 = vpop.permute.xlu0 %3296
    %3298 = vrot.lane.b32.xlu0 %v3285, 127
    %v3299 = vpop.permute.xlu0 %3298
    %v3300 = vsel %vm314, %v3287, %v3289
    %v3301 = vsel %vm314, %v3289, %v3291
    %v3302 = vsel %vm314, %v3291, %v3293
    %v3303 = vsel %vm314, %v3293, %v3295
    %v3304 = vsel %vm314, %v3295, %v3297
    %v3305 = vsel %vm314, %v3297, %v3299
    %3313 = vst [vmem:[#allocation2] sm:$0x70] %v3300
    %3314 = vst [vmem:[#allocation2 + $0x8] sm:$0x70] %v3301
    %3315 = vst [vmem:[#allocation2 + $0x10] sm:$0x70] %v3302
    %3316 = vst [vmem:[#allocation2 + $0x18] sm:$0x70] %v3303
    %3317 = vst [vmem:[#allocation2 + $0x20] sm:$0x70] %v3304
    %3318 = vst [vmem:[#allocation2 + $0x28] sm:$0x70] %v3305
    %3319 = vst.msk [vmem:[#allocation2 + $0x30] sm:$0x70] %vm334, %v3299
    %v3320 = vld [vmem:[%s3253] sm:$0x77]
    %v3321 = vld [vmem:[%s3253 + $0x8] sm:$0x77]
    %v3322 = vld [vmem:[%s3253 + $0x10] sm:$0x77]
    %v3323 = vld [vmem:[%s3253 + $0x18] sm:$0x7]
    %v3328 = vcombine.high %v3320, %v3320
    %v3329 = vcombine.high %v3321, %v3321
    %v3330 = vcombine.high %v3322, %v3322
    %3331 = vrot.lane.b32.xlu0 %v3320, 126
    %v3332 = vpop.permute.xlu0 %3331
    %3333 = vrot.lane.b32.xlu0 %v3328, 126
    %v3334 = vpop.permute.xlu0 %3333
    %3335 = vrot.lane.b32.xlu0 %v3321, 126
    %v3336 = vpop.permute.xlu0 %3335
    %3337 = vrot.lane.b32.xlu0 %v3329, 126
    %v3338 = vpop.permute.xlu0 %3337
    %3339 = vrot.lane.b32.xlu0 %v3322, 126
    %v3340 = vpop.permute.xlu0 %3339
    %3341 = vrot.lane.b32.xlu0 %v3330, 126
    %v3342 = vpop.permute.xlu0 %3341
    %3343 = vrot.lane.b32.xlu0 %v3323, 126
    %v3344 = vpop.permute.xlu0 %3343
    %v3345 = vsel %vm361, %v3332, %v3334
    %v3346 = vsel %vm361, %v3334, %v3336
    %v3347 = vsel %vm361, %v3336, %v3338
    %v3348 = vsel %vm361, %v3338, %v3340
    %v3349 = vsel %vm361, %v3340, %v3342
    %v3350 = vsel %vm361, %v3342, %v3344
    %3358 = vst [vmem:[#allocation2 + $0x38] sm:$0x7] %v3345
    %3359 = vst [vmem:[#allocation2 + $0x40] sm:$0x7] %v3346
    %3360 = vst [vmem:[#allocation2 + $0x48] sm:$0x7] %v3347
    %3361 = vst [vmem:[#allocation2 + $0x50] sm:$0x7] %v3348
    %3362 = vst [vmem:[#allocation2 + $0x58] sm:$0x7] %v3349
    %3363 = vst [vmem:[#allocation2 + $0x60] sm:$0x7] %v3350
    %3364 = vst.msk [vmem:[#allocation2 + $0x68] sm:$0x7] %vm286, %v3344
    %v3365 = vld [vmem:[%s3253] sm:$0x77]
    %v3366 = vld [vmem:[%s3253 + $0x8] sm:$0x77]
    %v3367 = vld [vmem:[%s3253 + $0x10] sm:$0x77]
    %v3368 = vld [vmem:[%s3253 + $0x18] sm:$0x7]
    %v3373 = vcombine.low %v3365, %v3365
    %v3374 = vcombine.low %v3366, %v3366
    %v3375 = vcombine.low %v3367, %v3367
    %v3376 = vcombine.low %v3368, %v3368
    %3377 = vrot.lane.b32.xlu0 %v3373, 125
    %v3378 = vpop.permute.xlu0 %3377
    %3379 = vrot.lane.b32.xlu0 %v3365, 125
    %v3380 = vpop.permute.xlu0 %3379
    %3381 = vrot.lane.b32.xlu0 %v3374, 125
    %v3382 = vpop.permute.xlu0 %3381
    %3383 = vrot.lane.b32.xlu0 %v3366, 125
    %v3384 = vpop.permute.xlu0 %3383
    %3385 = vrot.lane.b32.xlu0 %v3375, 125
    %v3386 = vpop.permute.xlu0 %3385
    %3387 = vrot.lane.b32.xlu0 %v3367, 125
    %v3388 = vpop.permute.xlu0 %3387
    %3389 = vrot.lane.b32.xlu0 %v3376, 125
    %v3390 = vpop.permute.xlu0 %3389
    %v3391 = vsel %vm408, %v3378, %v3380
    %v3392 = vsel %vm408, %v3380, %v3382
    %v3393 = vsel %vm408, %v3382, %v3384
    %v3394 = vsel %vm408, %v3384, %v3386
    %v3395 = vsel %vm408, %v3386, %v3388
    %v3396 = vsel %vm408, %v3388, %v3390
    %3404 = vst [vmem:[#allocation2 + $0x38] sm:$0x70] %v3391
    %3405 = vst [vmem:[#allocation2 + $0x40] sm:$0x70] %v3392
    %3406 = vst [vmem:[#allocation2 + $0x48] sm:$0x70] %v3393
    %3407 = vst [vmem:[#allocation2 + $0x50] sm:$0x70] %v3394
    %3408 = vst [vmem:[#allocation2 + $0x58] sm:$0x70] %v3395
    %3409 = vst [vmem:[#allocation2 + $0x60] sm:$0x70] %v3396
    %3410 = vst.msk [vmem:[#allocation2 + $0x68] sm:$0x70] %vm334, %v3390
    %v3411 = vld [vmem:[%s3253] sm:$0x77]
    %v3412 = vld [vmem:[%s3253 + $0x8] sm:$0x77]
    %v3413 = vld [vmem:[%s3253 + $0x10] sm:$0x77]
    %v3414 = vld [vmem:[%s3253 + $0x18] sm:$0x7]
    %v3419 = vcombine.high %v3411, %v3411
    %v3420 = vcombine.high %v3412, %v3412
    %v3421 = vcombine.high %v3413, %v3413
    %3422 = vrot.lane.b32.xlu0 %v3411, 124
    %v3423 = vpop.permute.xlu0 %3422
    %3424 = vrot.lane.b32.xlu0 %v3419, 124
    %v3425 = vpop.permute.xlu0 %3424
    %3426 = vrot.lane.b32.xlu0 %v3412, 124
    %v3427 = vpop.permute.xlu0 %3426
    %3428 = vrot.lane.b32.xlu0 %v3420, 124
    %v3429 = vpop.permute.xlu0 %3428
    %3430 = vrot.lane.b32.xlu0 %v3413, 124
    %v3431 = vpop.permute.xlu0 %3430
    %3432 = vrot.lane.b32.xlu0 %v3421, 124
    %v3433 = vpop.permute.xlu0 %3432
    %3434 = vrot.lane.b32.xlu0 %v3414, 124
    %v3435 = vpop.permute.xlu0 %3434
    %v3436 = vsel %vm54, %v3423, %v3425
    %v3437 = vsel %vm54, %v3425, %v3427
    %v3438 = vsel %vm54, %v3427, %v3429
    %v3439 = vsel %vm54, %v3429, %v3431
    %v3440 = vsel %vm54, %v3431, %v3433
    %v3441 = vsel %vm54, %v3433, %v3435
    %3449 = vst [vmem:[#allocation2 + $0x70] sm:$0x7] %v3436
    %3450 = vst [vmem:[#allocation2 + $0x78] sm:$0x7] %v3437
    %3451 = vst [vmem:[#allocation2 + $0x80] sm:$0x7] %v3438
    %3452 = vst [vmem:[#allocation2 + $0x88] sm:$0x7] %v3439
    %3453 = vst [vmem:[#allocation2 + $0x90] sm:$0x7] %v3440
    %3454 = vst [vmem:[#allocation2 + $0x98] sm:$0x7] %v3441
    %3455 = vst.msk [vmem:[#allocation2 + $0xa0] sm:$0x7] %vm286, %v3435
    %v3456 = vld [vmem:[%s3253] sm:$0x77]
    %v3457 = vld [vmem:[%s3253 + $0x8] sm:$0x77]
    %v3458 = vld [vmem:[%s3253 + $0x10] sm:$0x77]
    %v3459 = vld [vmem:[%s3253 + $0x18] sm:$0x77]
    %v3464 = vcombine.low %v3456, %v3456
    %v3465 = vcombine.low %v3457, %v3457
    %v3466 = vcombine.low %v3458, %v3458
    %v3467 = vcombine.low %v3459, %v3459
    %3468 = vrot.lane.b32.xlu0 %v3464, 96
    %v3469 = vpop.permute.xlu0 %3468
    %3470 = vrot.lane.b32.xlu0 %v3456, 96
    %v3471 = vpop.permute.xlu0 %3470
    %3472 = vrot.lane.b32.xlu0 %v3465, 96
    %v3473 = vpop.permute.xlu0 %3472
    %3474 = vrot.lane.b32.xlu0 %v3457, 96
    %v3475 = vpop.permute.xlu0 %3474
    %3476 = vrot.lane.b32.xlu0 %v3466, 96
    %v3477 = vpop.permute.xlu0 %3476
    %3478 = vrot.lane.b32.xlu0 %v3458, 96
    %v3479 = vpop.permute.xlu0 %3478
    %3480 = vrot.lane.b32.xlu0 %v3467, 96
    %v3481 = vpop.permute.xlu0 %3480
    %3482 = vrot.lane.b32.xlu0 %v3459, 96
    %v3483 = vpop.permute.xlu0 %3482
    %v3484 = vsel %vm502, %v3469, %v3471
    %v3485 = vsel %vm502, %v3471, %v3473
    %v3486 = vsel %vm502, %v3473, %v3475
    %v3487 = vsel %vm502, %v3475, %v3477
    %v3488 = vsel %vm502, %v3477, %v3479
    %v3489 = vsel %vm502, %v3479, %v3481
    %v3490 = vsel %vm502, %v3481, %v3483
    %3498 = vst [vmem:[#allocation2 + $0x70] sm:$0x70] %v3484
    %3499 = vst [vmem:[#allocation2 + $0x78] sm:$0x70] %v3485
    %3500 = vst [vmem:[#allocation2 + $0x80] sm:$0x70] %v3486
    %3501 = vst [vmem:[#allocation2 + $0x88] sm:$0x70] %v3487
    %3502 = vst [vmem:[#allocation2 + $0x90] sm:$0x70] %v3488
    %3503 = vst [vmem:[#allocation2 + $0x98] sm:$0x70] %v3489
    %3504 = vst.msk [vmem:[#allocation2 + $0xa0] sm:$0x70] %vm334, %v3490
    %v3505 = vld [vmem:[%s3253] sm:$0x77]
    %v3506 = vld [vmem:[%s3253 + $0x8] sm:$0x77]
    %v3507 = vld [vmem:[%s3253 + $0x10] sm:$0x77]
    %v3508 = vld [vmem:[%s3253 + $0x18] sm:$0x77]
    %v3513 = vcombine.high %v3505, %v3505
    %v3514 = vcombine.high %v3506, %v3506
    %v3515 = vcombine.high %v3507, %v3507
    %v3516 = vcombine.high %v3508, %v3508
    %3517 = vrot.lane.b32.xlu0 %v3505, 95
    %v3518 = vpop.permute.xlu0 %3517
    %3519 = vrot.lane.b32.xlu0 %v3513, 95
    %v3520 = vpop.permute.xlu0 %3519
    %3521 = vrot.lane.b32.xlu0 %v3506, 95
    %v3522 = vpop.permute.xlu0 %3521
    %3523 = vrot.lane.b32.xlu0 %v3514, 95
    %v3524 = vpop.permute.xlu0 %3523
    %3525 = vrot.lane.b32.xlu0 %v3507, 95
    %v3526 = vpop.permute.xlu0 %3525
    %3527 = vrot.lane.b32.xlu0 %v3515, 95
    %v3528 = vpop.permute.xlu0 %3527
    %3529 = vrot.lane.b32.xlu0 %v3508, 95
    %v3530 = vpop.permute.xlu0 %3529
    %3531 = vrot.lane.b32.xlu0 %v3516, 95
    %v3532 = vpop.permute.xlu0 %3531
    %v3533 = vsel %vm552, %v3518, %v3520
    %v3534 = vsel %vm552, %v3520, %v3522
    %v3535 = vsel %vm552, %v3522, %v3524
    %v3536 = vsel %vm552, %v3524, %v3526
    %v3537 = vsel %vm552, %v3526, %v3528
    %v3538 = vsel %vm552, %v3528, %v3530
    %v3539 = vsel %vm552, %v3530, %v3532
    %3547 = vst [vmem:[#allocation2 + $0xa8] sm:$0x7] %v3533
    %3548 = vst [vmem:[#allocation2 + $0xb0] sm:$0x7] %v3534
    %3549 = vst [vmem:[#allocation2 + $0xb8] sm:$0x7] %v3535
    %3550 = vst [vmem:[#allocation2 + $0xc0] sm:$0x7] %v3536
    %3551 = vst [vmem:[#allocation2 + $0xc8] sm:$0x7] %v3537
    %3552 = vst [vmem:[#allocation2 + $0xd0] sm:$0x7] %v3538
    %3553 = vst.msk [vmem:[#allocation2 + $0xd8] sm:$0x7] %vm286, %v3539
    %v3554 = vld [vmem:[%s3253] sm:$0x77]
    %v3555 = vld [vmem:[%s3253 + $0x8] sm:$0x77]
    %v3556 = vld [vmem:[%s3253 + $0x10] sm:$0x77]
    %v3557 = vld [vmem:[%s3253 + $0x18] sm:$0x77]
    %v3562 = vcombine.low %v3554, %v3554
    %v3563 = vcombine.low %v3555, %v3555
    %v3564 = vcombine.low %v3556, %v3556
    %v3565 = vcombine.low %v3557, %v3557
    %3566 = vrot.lane.b32.xlu0 %v3562, 94
    %v3567 = vpop.permute.xlu0 %3566
    %3568 = vrot.lane.b32.xlu0 %v3554, 94
    %v3569 = vpop.permute.xlu0 %3568
    %3570 = vrot.lane.b32.xlu0 %v3563, 94
    %v3571 = vpop.permute.xlu0 %3570
    %3572 = vrot.lane.b32.xlu0 %v3555, 94
    %v3573 = vpop.permute.xlu0 %3572
    %3574 = vrot.lane.b32.xlu0 %v3564, 94
    %v3575 = vpop.permute.xlu0 %3574
    %3576 = vrot.lane.b32.xlu0 %v3556, 94
    %v3577 = vpop.permute.xlu0 %3576
    %3578 = vrot.lane.b32.xlu0 %v3565, 94
    %v3579 = vpop.permute.xlu0 %3578
    %3580 = vrot.lane.b32.xlu0 %v3557, 94
    %v3581 = vpop.permute.xlu0 %3580
    %v3582 = vsel %vm602, %v3567, %v3569
    %v3583 = vsel %vm602, %v3569, %v3571
    %v3584 = vsel %vm602, %v3571, %v3573
    %v3585 = vsel %vm602, %v3573, %v3575
    %v3586 = vsel %vm602, %v3575, %v3577
    %v3587 = vsel %vm602, %v3577, %v3579
    %v3588 = vsel %vm602, %v3579, %v3581
    %3596 = vst [vmem:[#allocation2 + $0xa8] sm:$0x70] %v3582
    %3597 = vst [vmem:[#allocation2 + $0xb0] sm:$0x70] %v3583
    %3598 = vst [vmem:[#allocation2 + $0xb8] sm:$0x70] %v3584
    %3599 = vst [vmem:[#allocation2 + $0xc0] sm:$0x70] %v3585
    %3600 = vst [vmem:[#allocation2 + $0xc8] sm:$0x70] %v3586
    %3601 = vst [vmem:[#allocation2 + $0xd0] sm:$0x70] %v3587
    %3602 = vst.msk [vmem:[#allocation2 + $0xd8] sm:$0x70] %vm334, %v3588
    %v3603 = vld [vmem:[%s3253] sm:$0x77]
    %v3604 = vld [vmem:[%s3253 + $0x8] sm:$0x77]
    %v3605 = vld [vmem:[%s3253 + $0x10] sm:$0x77]
    %v3606 = vld [vmem:[%s3253 + $0x18] sm:$0x77]
    %v3611 = vcombine.high %v3603, %v3603
    %v3612 = vcombine.high %v3604, %v3604
    %v3613 = vcombine.high %v3605, %v3605
    %v3614 = vcombine.high %v3606, %v3606
    %3615 = vrot.lane.b32.xlu0 %v3603, 93
    %v3616 = vpop.permute.xlu0 %3615
    %3617 = vrot.lane.b32.xlu0 %v3611, 93
    %v3618 = vpop.permute.xlu0 %3617
    %3619 = vrot.lane.b32.xlu0 %v3604, 93
    %v3620 = vpop.permute.xlu0 %3619
    %3621 = vrot.lane.b32.xlu0 %v3612, 93
    %v3622 = vpop.permute.xlu0 %3621
    %3623 = vrot.lane.b32.xlu0 %v3605, 93
    %v3624 = vpop.permute.xlu0 %3623
    %3625 = vrot.lane.b32.xlu0 %v3613, 93
    %v3626 = vpop.permute.xlu0 %3625
    %3627 = vrot.lane.b32.xlu0 %v3606, 93
    %v3628 = vpop.permute.xlu0 %3627
    %3629 = vrot.lane.b32.xlu0 %v3614, 93
    %v3630 = vpop.permute.xlu0 %3629
    %v3631 = vsel %vm652, %v3616, %v3618
    %v3632 = vsel %vm652, %v3618, %v3620
    %v3633 = vsel %vm652, %v3620, %v3622
    %v3634 = vsel %vm652, %v3622, %v3624
    %v3635 = vsel %vm652, %v3624, %v3626
    %v3636 = vsel %vm652, %v3626, %v3628
    %v3637 = vsel %vm652, %v3628, %v3630
    %3645 = vst [vmem:[#allocation2 + $0xe0] sm:$0x7] %v3631
    %3646 = vst [vmem:[#allocation2 + $0xe8] sm:$0x7] %v3632
    %3647 = vst [vmem:[#allocation2 + $0xf0] sm:$0x7] %v3633
    %3648 = vst [vmem:[#allocation2 + $0xf8] sm:$0x7] %v3634
    %3649 = vst [vmem:[#allocation2 + $0x100] sm:$0x7] %v3635
    %3650 = vst [vmem:[#allocation2 + $0x108] sm:$0x7] %v3636
    %3651 = vst.msk [vmem:[#allocation2 + $0x110] sm:$0x7] %vm286, %v3637
    %v3652 = vld [vmem:[%s3253] sm:$0x77]
    %v3653 = vld [vmem:[%s3253 + $0x8] sm:$0x77]
    %v3654 = vld [vmem:[%s3253 + $0x10] sm:$0x77]
    %v3655 = vld [vmem:[%s3253 + $0x18] sm:$0x77]
    %v3660 = vcombine.low %v3652, %v3652
    %v3661 = vcombine.low %v3653, %v3653
    %v3662 = vcombine.low %v3654, %v3654
    %v3663 = vcombine.low %v3655, %v3655
    %3664 = vrot.lane.b32.xlu0 %v3660, 92
    %v3665 = vpop.permute.xlu0 %3664
    %3666 = vrot.lane.b32.xlu0 %v3652, 92
    %v3667 = vpop.permute.xlu0 %3666
    %3668 = vrot.lane.b32.xlu0 %v3661, 92
    %v3669 = vpop.permute.xlu0 %3668
    %3670 = vrot.lane.b32.xlu0 %v3653, 92
    %v3671 = vpop.permute.xlu0 %3670
    %3672 = vrot.lane.b32.xlu0 %v3662, 92
    %v3673 = vpop.permute.xlu0 %3672
    %3674 = vrot.lane.b32.xlu0 %v3654, 92
    %v3675 = vpop.permute.xlu0 %3674
    %3676 = vrot.lane.b32.xlu0 %v3663, 92
    %v3677 = vpop.permute.xlu0 %3676
    %3678 = vrot.lane.b32.xlu0 %v3655, 92
    %v3679 = vpop.permute.xlu0 %3678
    %v3680 = vsel %vm702, %v3665, %v3667
    %v3681 = vsel %vm702, %v3667, %v3669
    %v3682 = vsel %vm702, %v3669, %v3671
    %v3683 = vsel %vm702, %v3671, %v3673
    %v3684 = vsel %vm702, %v3673, %v3675
    %v3685 = vsel %vm702, %v3675, %v3677
    %v3686 = vsel %vm702, %v3677, %v3679
    %3694 = vst [vmem:[#allocation2 + $0xe0] sm:$0x70] %v3680
    %3695 = vst [vmem:[#allocation2 + $0xe8] sm:$0x70] %v3681
    %3696 = vst [vmem:[#allocation2 + $0xf0] sm:$0x70] %v3682
    %3697 = vst [vmem:[#allocation2 + $0xf8] sm:$0x70] %v3683
    %3698 = vst [vmem:[#allocation2 + $0x100] sm:$0x70] %v3684
    %3699 = vst [vmem:[#allocation2 + $0x108] sm:$0x70] %v3685
    %3700 = vst.msk [vmem:[#allocation2 + $0x110] sm:$0x70] %vm334, %v3686
    %v3701 = vld [vmem:[%s3253] sm:$0x77]
    %v3702 = vld [vmem:[%s3253 + $0x8] sm:$0x77]
    %v3703 = vld [vmem:[%s3253 + $0x10] sm:$0x77]
    %v3704 = vld [vmem:[%s3253 + $0x18] sm:$0x77]
    %v3709 = vcombine.high %v3701, %v3701
    %v3710 = vcombine.high %v3702, %v3702
    %v3711 = vcombine.high %v3703, %v3703
    %v3712 = vcombine.high %v3704, %v3704
    %3713 = vrot.lane.b32.xlu0 %v3701, 64
    %v3714 = vpop.permute.xlu0 %3713
    %3715 = vrot.lane.b32.xlu0 %v3709, 64
    %v3716 = vpop.permute.xlu0 %3715
    %3717 = vrot.lane.b32.xlu0 %v3702, 64
    %v3718 = vpop.permute.xlu0 %3717
    %3719 = vrot.lane.b32.xlu0 %v3710, 64
    %v3720 = vpop.permute.xlu0 %3719
    %3721 = vrot.lane.b32.xlu0 %v3703, 64
    %v3722 = vpop.permute.xlu0 %3721
    %3723 = vrot.lane.b32.xlu0 %v3711, 64
    %v3724 = vpop.permute.xlu0 %3723
    %3725 = vrot.lane.b32.xlu0 %v3704, 64
    %v3726 = vpop.permute.xlu0 %3725
    %3727 = vrot.lane.b32.xlu0 %v3712, 64
    %v3728 = vpop.permute.xlu0 %3727
    %v3729 = vsel %vm752, %v3714, %v3716
    %v3730 = vsel %vm752, %v3716, %v3718
    %v3731 = vsel %vm752, %v3718, %v3720
    %v3732 = vsel %vm752, %v3720, %v3722
    %v3733 = vsel %vm752, %v3722, %v3724
    %v3734 = vsel %vm752, %v3724, %v3726
    %v3735 = vsel %vm752, %v3726, %v3728
    %3743 = vst [vmem:[#allocation2 + $0x118] sm:$0x7] %v3729
    %3744 = vst [vmem:[#allocation2 + $0x120] sm:$0x7] %v3730
    %3745 = vst [vmem:[#allocation2 + $0x128] sm:$0x7] %v3731
    %3746 = vst [vmem:[#allocation2 + $0x130] sm:$0x7] %v3732
    %3747 = vst [vmem:[#allocation2 + $0x138] sm:$0x7] %v3733
    %3748 = vst [vmem:[#allocation2 + $0x140] sm:$0x7] %v3734
    %3749 = vst.msk [vmem:[#allocation2 + $0x148] sm:$0x7] %vm286, %v3735
    %v3750 = vld [vmem:[%s3253] sm:$0x77]
    %v3751 = vld [vmem:[%s3253 + $0x8] sm:$0x77]
    %v3752 = vld [vmem:[%s3253 + $0x10] sm:$0x77]
    %v3753 = vld [vmem:[%s3253 + $0x18] sm:$0x77]
    %v3758 = vcombine.low %v3750, %v3750
    %v3759 = vcombine.low %v3751, %v3751
    %v3760 = vcombine.low %v3752, %v3752
    %v3761 = vcombine.low %v3753, %v3753
    %3762 = vrot.lane.b32.xlu0 %v3758, 63
    %v3763 = vpop.permute.xlu0 %3762
    %3764 = vrot.lane.b32.xlu0 %v3750, 63
    %v3765 = vpop.permute.xlu0 %3764
    %3766 = vrot.lane.b32.xlu0 %v3759, 63
    %v3767 = vpop.permute.xlu0 %3766
    %3768 = vrot.lane.b32.xlu0 %v3751, 63
    %v3769 = vpop.permute.xlu0 %3768
    %3770 = vrot.lane.b32.xlu0 %v3760, 63
    %v3771 = vpop.permute.xlu0 %3770
    %3772 = vrot.lane.b32.xlu0 %v3752, 63
    %v3773 = vpop.permute.xlu0 %3772
    %3774 = vrot.lane.b32.xlu0 %v3761, 63
    %v3775 = vpop.permute.xlu0 %3774
    %3776 = vrot.lane.b32.xlu0 %v3753, 63
    %v3777 = vpop.permute.xlu0 %3776
    %v3778 = vsel %vm802, %v3763, %v3765
    %v3779 = vsel %vm802, %v3765, %v3767
    %v3780 = vsel %vm802, %v3767, %v3769
    %v3781 = vsel %vm802, %v3769, %v3771
    %v3782 = vsel %vm802, %v3771, %v3773
    %v3783 = vsel %vm802, %v3773, %v3775
    %v3784 = vsel %vm802, %v3775, %v3777
    %3792 = vst [vmem:[#allocation2 + $0x118] sm:$0x70] %v3778
    %3793 = vst [vmem:[#allocation2 + $0x120] sm:$0x70] %v3779
    %3794 = vst [vmem:[#allocation2 + $0x128] sm:$0x70] %v3780
    %3795 = vst [vmem:[#allocation2 + $0x130] sm:$0x70] %v3781
    %3796 = vst [vmem:[#allocation2 + $0x138] sm:$0x70] %v3782
    %3797 = vst [vmem:[#allocation2 + $0x140] sm:$0x70] %v3783
    %3798 = vst.msk [vmem:[#allocation2 + $0x148] sm:$0x70] %vm334, %v3784
    %v3799 = vld [vmem:[%s3253] sm:$0x77]
    %v3800 = vld [vmem:[%s3253 + $0x8] sm:$0x77]
    %v3801 = vld [vmem:[%s3253 + $0x10] sm:$0x77]
    %v3802 = vld [vmem:[%s3253 + $0x18] sm:$0x77]
    %v3807 = vcombine.high %v3799, %v3799
    %v3808 = vcombine.high %v3800, %v3800
    %v3809 = vcombine.high %v3801, %v3801
    %v3810 = vcombine.high %v3802, %v3802
    %3811 = vrot.lane.b32.xlu0 %v3799, 62
    %v3812 = vpop.permute.xlu0 %3811
    %3813 = vrot.lane.b32.xlu0 %v3807, 62
    %v3814 = vpop.permute.xlu0 %3813
    %3815 = vrot.lane.b32.xlu0 %v3800, 62
    %v3816 = vpop.permute.xlu0 %3815
    %3817 = vrot.lane.b32.xlu0 %v3808, 62
    %v3818 = vpop.permute.xlu0 %3817
    %3819 = vrot.lane.b32.xlu0 %v3801, 62
    %v3820 = vpop.permute.xlu0 %3819
    %3821 = vrot.lane.b32.xlu0 %v3809, 62
    %v3822 = vpop.permute.xlu0 %3821
    %3823 = vrot.lane.b32.xlu0 %v3802, 62
    %v3824 = vpop.permute.xlu0 %3823
    %3825 = vrot.lane.b32.xlu0 %v3810, 62
    %v3826 = vpop.permute.xlu0 %3825
    %v3827 = vsel %vm852, %v3812, %v3814
    %v3828 = vsel %vm852, %v3814, %v3816
    %v3829 = vsel %vm852, %v3816, %v3818
    %v3830 = vsel %vm852, %v3818, %v3820
    %v3831 = vsel %vm852, %v3820, %v3822
    %v3832 = vsel %vm852, %v3822, %v3824
    %v3833 = vsel %vm852, %v3824, %v3826
    %3841 = vst [vmem:[#allocation2 + $0x150] sm:$0x7] %v3827
    %3842 = vst [vmem:[#allocation2 + $0x158] sm:$0x7] %v3828
    %3843 = vst [vmem:[#allocation2 + $0x160] sm:$0x7] %v3829
    %3844 = vst [vmem:[#allocation2 + $0x168] sm:$0x7] %v3830
    %3845 = vst [vmem:[#allocation2 + $0x170] sm:$0x7] %v3831
    %3846 = vst [vmem:[#allocation2 + $0x178] sm:$0x7] %v3832
    %3847 = vst.msk [vmem:[#allocation2 + $0x180] sm:$0x7] %vm286, %v3833
    %v3848 = vld [vmem:[%s3253] sm:$0x77]
    %v3849 = vld [vmem:[%s3253 + $0x8] sm:$0x77]
    %v3850 = vld [vmem:[%s3253 + $0x10] sm:$0x77]
    %v3851 = vld [vmem:[%s3253 + $0x18] sm:$0x77]
    %v3856 = vcombine.low %v3848, %v3848
    %v3857 = vcombine.low %v3849, %v3849
    %v3858 = vcombine.low %v3850, %v3850
    %v3859 = vcombine.low %v3851, %v3851
    %3860 = vrot.lane.b32.xlu0 %v3856, 61
    %v3861 = vpop.permute.xlu0 %3860
    %3862 = vrot.lane.b32.xlu0 %v3848, 61
    %v3863 = vpop.permute.xlu0 %3862
    %3864 = vrot.lane.b32.xlu0 %v3857, 61
    %v3865 = vpop.permute.xlu0 %3864
    %3866 = vrot.lane.b32.xlu0 %v3849, 61
    %v3867 = vpop.permute.xlu0 %3866
    %3868 = vrot.lane.b32.xlu0 %v3858, 61
    %v3869 = vpop.permute.xlu0 %3868
    %3870 = vrot.lane.b32.xlu0 %v3850, 61
    %v3871 = vpop.permute.xlu0 %3870
    %3872 = vrot.lane.b32.xlu0 %v3859, 61
    %v3873 = vpop.permute.xlu0 %3872
    %3874 = vrot.lane.b32.xlu0 %v3851, 61
    %v3875 = vpop.permute.xlu0 %3874
    %v3876 = vsel %vm902, %v3861, %v3863
    %v3877 = vsel %vm902, %v3863, %v3865
    %v3878 = vsel %vm902, %v3865, %v3867
    %v3879 = vsel %vm902, %v3867, %v3869
    %v3880 = vsel %vm902, %v3869, %v3871
    %v3881 = vsel %vm902, %v3871, %v3873
    %v3882 = vsel %vm902, %v3873, %v3875
    %3890 = vst [vmem:[#allocation2 + $0x150] sm:$0x70] %v3876
    %3891 = vst [vmem:[#allocation2 + $0x158] sm:$0x70] %v3877
    %3892 = vst [vmem:[#allocation2 + $0x160] sm:$0x70] %v3878
    %3893 = vst [vmem:[#allocation2 + $0x168] sm:$0x70] %v3879
    %3894 = vst [vmem:[#allocation2 + $0x170] sm:$0x70] %v3880
    %3895 = vst [vmem:[#allocation2 + $0x178] sm:$0x70] %v3881
    %3896 = vst.msk [vmem:[#allocation2 + $0x180] sm:$0x70] %vm334, %v3882
    %v3897 = vld [vmem:[%s3253] sm:$0x77]
    %v3898 = vld [vmem:[%s3253 + $0x8] sm:$0x77]
    %v3899 = vld [vmem:[%s3253 + $0x10] sm:$0x77]
    %v3900 = vld [vmem:[%s3253 + $0x18] sm:$0x77]
    %v3905 = vcombine.high %v3897, %v3897
    %v3906 = vcombine.high %v3898, %v3898
    %v3907 = vcombine.high %v3899, %v3899
    %v3908 = vcombine.high %v3900, %v3900
    %3909 = vrot.lane.b32.xlu0 %v3897, 60
    %v3910 = vpop.permute.xlu0 %3909
    %3911 = vrot.lane.b32.xlu0 %v3905, 60
    %v3912 = vpop.permute.xlu0 %3911
    %3913 = vrot.lane.b32.xlu0 %v3898, 60
    %v3914 = vpop.permute.xlu0 %3913
    %3915 = vrot.lane.b32.xlu0 %v3906, 60
    %v3916 = vpop.permute.xlu0 %3915
    %3917 = vrot.lane.b32.xlu0 %v3899, 60
    %v3918 = vpop.permute.xlu0 %3917
    %3919 = vrot.lane.b32.xlu0 %v3907, 60
    %v3920 = vpop.permute.xlu0 %3919
    %3921 = vrot.lane.b32.xlu0 %v3900, 60
    %v3922 = vpop.permute.xlu0 %3921
    %3923 = vrot.lane.b32.xlu0 %v3908, 60
    %v3924 = vpop.permute.xlu0 %3923
    %v3925 = vsel %vm952, %v3910, %v3912
    %v3926 = vsel %vm952, %v3912, %v3914
    %v3927 = vsel %vm952, %v3914, %v3916
    %v3928 = vsel %vm952, %v3916, %v3918
    %v3929 = vsel %vm952, %v3918, %v3920
    %v3930 = vsel %vm952, %v3920, %v3922
    %v3931 = vsel %vm952, %v3922, %v3924
    %3939 = vst [vmem:[#allocation2 + $0x188] sm:$0x7] %v3925
    %3940 = vst [vmem:[#allocation2 + $0x190] sm:$0x7] %v3926
    %3941 = vst [vmem:[#allocation2 + $0x198] sm:$0x7] %v3927
    %3942 = vst [vmem:[#allocation2 + $0x1a0] sm:$0x7] %v3928
    %3943 = vst [vmem:[#allocation2 + $0x1a8] sm:$0x7] %v3929
    %3944 = vst [vmem:[#allocation2 + $0x1b0] sm:$0x7] %v3930
    %3945 = vst.msk [vmem:[#allocation2 + $0x1b8] sm:$0x7] %vm286, %v3931
    %v3946 = vld [vmem:[%s3253] sm:$0x77]
    %v3947 = vld [vmem:[%s3253 + $0x8] sm:$0x77]
    %v3948 = vld [vmem:[%s3253 + $0x10] sm:$0x77]
    %v3949 = vld [vmem:[%s3253 + $0x18] sm:$0x77]
    %v3954 = vcombine.low %v3946, %v3946
    %v3955 = vcombine.low %v3947, %v3947
    %v3956 = vcombine.low %v3948, %v3948
    %v3957 = vcombine.low %v3949, %v3949
    %3958 = vrot.lane.b32.xlu0 %v3954, 32
    %v3959 = vpop.permute.xlu0 %3958
    %3960 = vrot.lane.b32.xlu0 %v3946, 32
    %v3961 = vpop.permute.xlu0 %3960
    %3962 = vrot.lane.b32.xlu0 %v3955, 32
    %v3963 = vpop.permute.xlu0 %3962
    %3964 = vrot.lane.b32.xlu0 %v3947, 32
    %v3965 = vpop.permute.xlu0 %3964
    %3966 = vrot.lane.b32.xlu0 %v3956, 32
    %v3967 = vpop.permute.xlu0 %3966
    %3968 = vrot.lane.b32.xlu0 %v3948, 32
    %v3969 = vpop.permute.xlu0 %3968
    %3970 = vrot.lane.b32.xlu0 %v3957, 32
    %v3971 = vpop.permute.xlu0 %3970
    %3972 = vrot.lane.b32.xlu0 %v3949, 32
    %v3973 = vpop.permute.xlu0 %3972
    %v3974 = vsel %vm1002, %v3959, %v3961
    %v3975 = vsel %vm1002, %v3961, %v3963
    %v3976 = vsel %vm1002, %v3963, %v3965
    %v3977 = vsel %vm1002, %v3965, %v3967
    %v3978 = vsel %vm1002, %v3967, %v3969
    %v3979 = vsel %vm1002, %v3969, %v3971
    %v3980 = vsel %vm1002, %v3971, %v3973
    %3988 = vst [vmem:[#allocation2 + $0x188] sm:$0x70] %v3974
    %3989 = vst [vmem:[#allocation2 + $0x190] sm:$0x70] %v3975
    %3990 = vst [vmem:[#allocation2 + $0x198] sm:$0x70] %v3976
    %3991 = vst [vmem:[#allocation2 + $0x1a0] sm:$0x70] %v3977
    %3992 = vst [vmem:[#allocation2 + $0x1a8] sm:$0x70] %v3978
    %3993 = vst [vmem:[#allocation2 + $0x1b0] sm:$0x70] %v3979
    %3994 = vst.msk [vmem:[#allocation2 + $0x1b8] sm:$0x70] %vm334, %v3980
    %v3995 = vld [vmem:[%s3253] sm:$0x77]
    %v3996 = vld [vmem:[%s3253 + $0x8] sm:$0x77]
    %v3997 = vld [vmem:[%s3253 + $0x10] sm:$0x77]
    %v3998 = vld [vmem:[%s3253 + $0x18] sm:$0x77]
    %v4003 = vcombine.high %v3995, %v3995
    %v4004 = vcombine.high %v3996, %v3996
    %v4005 = vcombine.high %v3997, %v3997
    %v4006 = vcombine.high %v3998, %v3998
    %4007 = vrot.lane.b32.xlu0 %v3995, 31
    %v4008 = vpop.permute.xlu0 %4007
    %4009 = vrot.lane.b32.xlu0 %v4003, 31
    %v4010 = vpop.permute.xlu0 %4009
    %4011 = vrot.lane.b32.xlu0 %v3996, 31
    %v4012 = vpop.permute.xlu0 %4011
    %4013 = vrot.lane.b32.xlu0 %v4004, 31
    %v4014 = vpop.permute.xlu0 %4013
    %4015 = vrot.lane.b32.xlu0 %v3997, 31
    %v4016 = vpop.permute.xlu0 %4015
    %4017 = vrot.lane.b32.xlu0 %v4005, 31
    %v4018 = vpop.permute.xlu0 %4017
    %4019 = vrot.lane.b32.xlu0 %v3998, 31
    %v4020 = vpop.permute.xlu0 %4019
    %4021 = vrot.lane.b32.xlu0 %v4006, 31
    %v4022 = vpop.permute.xlu0 %4021
    %v4023 = vsel %vm1052, %v4008, %v4010
    %v4024 = vsel %vm1052, %v4010, %v4012
    %v4025 = vsel %vm1052, %v4012, %v4014
    %v4026 = vsel %vm1052, %v4014, %v4016
    %v4027 = vsel %vm1052, %v4016, %v4018
    %v4028 = vsel %vm1052, %v4018, %v4020
    %v4029 = vsel %vm1052, %v4020, %v4022
    %4037 = vst [vmem:[#allocation2 + $0x1c0] sm:$0x7] %v4023
    %4038 = vst [vmem:[#allocation2 + $0x1c8] sm:$0x7] %v4024
    %4039 = vst [vmem:[#allocation2 + $0x1d0] sm:$0x7] %v4025
    %4040 = vst [vmem:[#allocation2 + $0x1d8] sm:$0x7] %v4026
    %4041 = vst [vmem:[#allocation2 + $0x1e0] sm:$0x7] %v4027
    %4042 = vst [vmem:[#allocation2 + $0x1e8] sm:$0x7] %v4028
    %4043 = vst.msk [vmem:[#allocation2 + $0x1f0] sm:$0x7] %vm286, %v4029
    %v4044 = vld [vmem:[%s3253] sm:$0x77]
    %v4045 = vld [vmem:[%s3253 + $0x8] sm:$0x77]
    %v4046 = vld [vmem:[%s3253 + $0x10] sm:$0x77]
    %v4047 = vld [vmem:[%s3253 + $0x18] sm:$0x77]
    %v4052 = vcombine.low %v4044, %v4044
    %v4053 = vcombine.low %v4045, %v4045
    %v4054 = vcombine.low %v4046, %v4046
    %v4055 = vcombine.low %v4047, %v4047
    %4056 = vrot.lane.b32.xlu0 %v4052, 30
    %v4057 = vpop.permute.xlu0 %4056
    %4058 = vrot.lane.b32.xlu0 %v4044, 30
    %v4059 = vpop.permute.xlu0 %4058
    %4060 = vrot.lane.b32.xlu0 %v4053, 30
    %v4061 = vpop.permute.xlu0 %4060
    %4062 = vrot.lane.b32.xlu0 %v4045, 30
    %v4063 = vpop.permute.xlu0 %4062
    %4064 = vrot.lane.b32.xlu0 %v4054, 30
    %v4065 = vpop.permute.xlu0 %4064
    %4066 = vrot.lane.b32.xlu0 %v4046, 30
    %v4067 = vpop.permute.xlu0 %4066
    %4068 = vrot.lane.b32.xlu0 %v4055, 30
    %v4069 = vpop.permute.xlu0 %4068
    %4070 = vrot.lane.b32.xlu0 %v4047, 30
    %v4071 = vpop.permute.xlu0 %4070
    %v4072 = vsel %vm1102, %v4057, %v4059
    %v4073 = vsel %vm1102, %v4059, %v4061
    %v4074 = vsel %vm1102, %v4061, %v4063
    %v4075 = vsel %vm1102, %v4063, %v4065
    %v4076 = vsel %vm1102, %v4065, %v4067
    %v4077 = vsel %vm1102, %v4067, %v4069
    %v4078 = vsel %vm1102, %v4069, %v4071
    %4086 = vst [vmem:[#allocation2 + $0x1c0] sm:$0x70] %v4072
    %4087 = vst [vmem:[#allocation2 + $0x1c8] sm:$0x70] %v4073
    %4088 = vst [vmem:[#allocation2 + $0x1d0] sm:$0x70] %v4074
    %4089 = vst [vmem:[#allocation2 + $0x1d8] sm:$0x70] %v4075
    %4090 = vst [vmem:[#allocation2 + $0x1e0] sm:$0x70] %v4076
    %4091 = vst [vmem:[#allocation2 + $0x1e8] sm:$0x70] %v4077
    %4092 = vst.msk [vmem:[#allocation2 + $0x1f0] sm:$0x70] %vm334, %v4078
    %v4093 = vld [vmem:[%s3253] sm:$0x77]
    %v4094 = vld [vmem:[%s3253 + $0x8] sm:$0x77]
    %v4095 = vld [vmem:[%s3253 + $0x10] sm:$0x77]
    %v4096 = vld [vmem:[%s3253 + $0x18] sm:$0x77]
    %v4101 = vcombine.high %v4093, %v4093
    %v4102 = vcombine.high %v4094, %v4094
    %v4103 = vcombine.high %v4095, %v4095
    %v4104 = vcombine.high %v4096, %v4096
    %4105 = vrot.lane.b32.xlu0 %v4093, 29
    %v4106 = vpop.permute.xlu0 %4105
    %4107 = vrot.lane.b32.xlu0 %v4101, 29
    %v4108 = vpop.permute.xlu0 %4107
    %4109 = vrot.lane.b32.xlu0 %v4094, 29
    %v4110 = vpop.permute.xlu0 %4109
    %4111 = vrot.lane.b32.xlu0 %v4102, 29
    %v4112 = vpop.permute.xlu0 %4111
    %4113 = vrot.lane.b32.xlu0 %v4095, 29
    %v4114 = vpop.permute.xlu0 %4113
    %4115 = vrot.lane.b32.xlu0 %v4103, 29
    %v4116 = vpop.permute.xlu0 %4115
    %4117 = vrot.lane.b32.xlu0 %v4096, 29
    %v4118 = vpop.permute.xlu0 %4117
    %4119 = vrot.lane.b32.xlu0 %v4104, 29
    %v4120 = vpop.permute.xlu0 %4119
    %v4121 = vsel %vm1152, %v4106, %v4108
    %v4122 = vsel %vm1152, %v4108, %v4110
    %v4123 = vsel %vm1152, %v4110, %v4112
    %v4124 = vsel %vm1152, %v4112, %v4114
    %v4125 = vsel %vm1152, %v4114, %v4116
    %v4126 = vsel %vm1152, %v4116, %v4118
    %v4127 = vsel %vm1152, %v4118, %v4120
    %4135 = vst [vmem:[#allocation2 + $0x1f8] sm:$0x7] %v4121
    %4136 = vst [vmem:[#allocation2 + $0x200] sm:$0x7] %v4122
    %4137 = vst [vmem:[#allocation2 + $0x208] sm:$0x7] %v4123
    %4138 = vst [vmem:[#allocation2 + $0x210] sm:$0x7] %v4124
    %4139 = vst [vmem:[#allocation2 + $0x218] sm:$0x7] %v4125
    %4140 = vst [vmem:[#allocation2 + $0x220] sm:$0x7] %v4126
    %4141 = vst.msk [vmem:[#allocation2 + $0x228] sm:$0x7] %vm286, %v4127
    %v4142 = vld [vmem:[%s3253] sm:$0x77]
    %v4143 = vld [vmem:[%s3253 + $0x8] sm:$0x77]
    %v4144 = vld [vmem:[%s3253 + $0x10] sm:$0x77]
    %v4145 = vld [vmem:[%s3253 + $0x18] sm:$0x77]
    %v4150 = vcombine.low %v4142, %v4142
    %v4151 = vcombine.low %v4143, %v4143
    %v4152 = vcombine.low %v4144, %v4144
    %v4153 = vcombine.low %v4145, %v4145
    %4154 = vrot.lane.b32.xlu0 %v4150, 28
    %v4155 = vpop.permute.xlu0 %4154
    %4156 = vrot.lane.b32.xlu0 %v4142, 28
    %v4157 = vpop.permute.xlu0 %4156
    %4158 = vrot.lane.b32.xlu0 %v4151, 28
    %v4159 = vpop.permute.xlu0 %4158
    %4160 = vrot.lane.b32.xlu0 %v4143, 28
    %v4161 = vpop.permute.xlu0 %4160
    %4162 = vrot.lane.b32.xlu0 %v4152, 28
    %v4163 = vpop.permute.xlu0 %4162
    %4164 = vrot.lane.b32.xlu0 %v4144, 28
    %v4165 = vpop.permute.xlu0 %4164
    %4166 = vrot.lane.b32.xlu0 %v4153, 28
    %v4167 = vpop.permute.xlu0 %4166
    %4168 = vrot.lane.b32.xlu0 %v4145, 28
    %v4169 = vpop.permute.xlu0 %4168
    %v4170 = vsel %vm1202, %v4155, %v4157
    %v4171 = vsel %vm1202, %v4157, %v4159
    %v4172 = vsel %vm1202, %v4159, %v4161
    %v4173 = vsel %vm1202, %v4161, %v4163
    %v4174 = vsel %vm1202, %v4163, %v4165
    %v4175 = vsel %vm1202, %v4165, %v4167
    %v4176 = vsel %vm1202, %v4167, %v4169
    %4184 = vst [vmem:[#allocation2 + $0x1f8] sm:$0x70] %v4170
    %4185 = vst [vmem:[#allocation2 + $0x200] sm:$0x70] %v4171
    %4186 = vst [vmem:[#allocation2 + $0x208] sm:$0x70] %v4172
    %4187 = vst [vmem:[#allocation2 + $0x210] sm:$0x70] %v4173
    %4188 = vst [vmem:[#allocation2 + $0x218] sm:$0x70] %v4174
    %4189 = vst [vmem:[#allocation2 + $0x220] sm:$0x70] %v4175
    %4190 = vst.msk [vmem:[#allocation2 + $0x228] sm:$0x70] %vm334, %v4176
    %v4191 = vld [vmem:[%s3253 + $0x4] sm:$0x77]
    %v4192 = vld [vmem:[%s3253 + $0xc] sm:$0x77]
    %v4193 = vld [vmem:[%s3253 + $0x14] sm:$0x77]
    %v4194 = vld [vmem:[%s3253 + $0x1c] sm:$0x7]
    %v4198 = vcombine.high %v4191, %v4191
    %v4199 = vcombine.high %v4192, %v4192
    %v4200 = vcombine.high %v4193, %v4193
    %4204 = vst [vmem:[#allocation2 + $0x230] sm:$0x7] %v4191
    %4205 = vst [vmem:[#allocation2 + $0x238] sm:$0x7] %v4198
    %4206 = vst [vmem:[#allocation2 + $0x240] sm:$0x7] %v4192
    %4207 = vst [vmem:[#allocation2 + $0x248] sm:$0x7] %v4199
    %4208 = vst [vmem:[#allocation2 + $0x250] sm:$0x7] %v4193
    %4209 = vst [vmem:[#allocation2 + $0x258] sm:$0x7] %v4200
    %4210 = vst.msk [vmem:[#allocation2 + $0x260] sm:$0x7] %vm286, %v4194
    %v4211 = vld [vmem:[%s3253 + $0x4] sm:$0x77]
    %v4212 = vld [vmem:[%s3253 + $0xc] sm:$0x77]
    %v4213 = vld [vmem:[%s3253 + $0x14] sm:$0x77]
    %v4214 = vld [vmem:[%s3253 + $0x1c] sm:$0x7]
    %v4219 = vcombine.low %v4211, %v4211
    %v4220 = vcombine.low %v4212, %v4212
    %v4221 = vcombine.low %v4213, %v4213
    %v4222 = vcombine.low %v4214, %v4214
    %4223 = vrot.lane.b32.xlu0 %v4219, 127
    %v4224 = vpop.permute.xlu0 %4223
    %4225 = vrot.lane.b32.xlu0 %v4211, 127
    %v4226 = vpop.permute.xlu0 %4225
    %4227 = vrot.lane.b32.xlu0 %v4220, 127
    %v4228 = vpop.permute.xlu0 %4227
    %4229 = vrot.lane.b32.xlu0 %v4212, 127
    %v4230 = vpop.permute.xlu0 %4229
    %4231 = vrot.lane.b32.xlu0 %v4221, 127
    %v4232 = vpop.permute.xlu0 %4231
    %4233 = vrot.lane.b32.xlu0 %v4213, 127
    %v4234 = vpop.permute.xlu0 %4233
    %4235 = vrot.lane.b32.xlu0 %v4222, 127
    %v4236 = vpop.permute.xlu0 %4235
    %v4237 = vsel %vm314, %v4224, %v4226
    %v4238 = vsel %vm314, %v4226, %v4228
    %v4239 = vsel %vm314, %v4228, %v4230
    %v4240 = vsel %vm314, %v4230, %v4232
    %v4241 = vsel %vm314, %v4232, %v4234
    %v4242 = vsel %vm314, %v4234, %v4236
    %4250 = vst [vmem:[#allocation2 + $0x230] sm:$0x70] %v4237
    %4251 = vst [vmem:[#allocation2 + $0x238] sm:$0x70] %v4238
    %4252 = vst [vmem:[#allocation2 + $0x240] sm:$0x70] %v4239
    %4253 = vst [vmem:[#allocation2 + $0x248] sm:$0x70] %v4240
    %4254 = vst [vmem:[#allocation2 + $0x250] sm:$0x70] %v4241
    %4255 = vst [vmem:[#allocation2 + $0x258] sm:$0x70] %v4242
    %4256 = vst.msk [vmem:[#allocation2 + $0x260] sm:$0x70] %vm334, %v4236
    %v4257 = vld [vmem:[%s3253 + $0x4] sm:$0x77]
    %v4258 = vld [vmem:[%s3253 + $0xc] sm:$0x77]
    %v4259 = vld [vmem:[%s3253 + $0x14] sm:$0x77]
    %v4260 = vld [vmem:[%s3253 + $0x1c] sm:$0x7]
    %v4265 = vcombine.high %v4257, %v4257
    %v4266 = vcombine.high %v4258, %v4258
    %v4267 = vcombine.high %v4259, %v4259
    %4268 = vrot.lane.b32.xlu0 %v4257, 126
    %v4269 = vpop.permute.xlu0 %4268
    %4270 = vrot.lane.b32.xlu0 %v4265, 126
    %v4271 = vpop.permute.xlu0 %4270
    %4272 = vrot.lane.b32.xlu0 %v4258, 126
    %v4273 = vpop.permute.xlu0 %4272
    %4274 = vrot.lane.b32.xlu0 %v4266, 126
    %v4275 = vpop.permute.xlu0 %4274
    %4276 = vrot.lane.b32.xlu0 %v4259, 126
    %v4277 = vpop.permute.xlu0 %4276
    %4278 = vrot.lane.b32.xlu0 %v4267, 126
    %v4279 = vpop.permute.xlu0 %4278
    %4280 = vrot.lane.b32.xlu0 %v4260, 126
    %v4281 = vpop.permute.xlu0 %4280
    %v4282 = vsel %vm361, %v4269, %v4271
    %v4283 = vsel %vm361, %v4271, %v4273
    %v4284 = vsel %vm361, %v4273, %v4275
    %v4285 = vsel %vm361, %v4275, %v4277
    %v4286 = vsel %vm361, %v4277, %v4279
    %v4287 = vsel %vm361, %v4279, %v4281
    %4295 = vst [vmem:[#allocation2 + $0x268] sm:$0x7] %v4282
    %4296 = vst [vmem:[#allocation2 + $0x270] sm:$0x7] %v4283
    %4297 = vst [vmem:[#allocation2 + $0x278] sm:$0x7] %v4284
    %4298 = vst [vmem:[#allocation2 + $0x280] sm:$0x7] %v4285
    %4299 = vst [vmem:[#allocation2 + $0x288] sm:$0x7] %v4286
    %4300 = vst [vmem:[#allocation2 + $0x290] sm:$0x7] %v4287
    %4301 = vst.msk [vmem:[#allocation2 + $0x298] sm:$0x7] %vm286, %v4281
    %v4302 = vld [vmem:[%s3253 + $0x4] sm:$0x77]
    %v4303 = vld [vmem:[%s3253 + $0xc] sm:$0x77]
    %v4304 = vld [vmem:[%s3253 + $0x14] sm:$0x77]
    %v4305 = vld [vmem:[%s3253 + $0x1c] sm:$0x7]
    %v4310 = vcombine.low %v4302, %v4302
    %v4311 = vcombine.low %v4303, %v4303
    %v4312 = vcombine.low %v4304, %v4304
    %v4313 = vcombine.low %v4305, %v4305
    %4314 = vrot.lane.b32.xlu0 %v4310, 125
    %v4315 = vpop.permute.xlu0 %4314
    %4316 = vrot.lane.b32.xlu0 %v4302, 125
    %v4317 = vpop.permute.xlu0 %4316
    %4318 = vrot.lane.b32.xlu0 %v4311, 125
    %v4319 = vpop.permute.xlu0 %4318
    %4320 = vrot.lane.b32.xlu0 %v4303, 125
    %v4321 = vpop.permute.xlu0 %4320
    %4322 = vrot.lane.b32.xlu0 %v4312, 125
    %v4323 = vpop.permute.xlu0 %4322
    %4324 = vrot.lane.b32.xlu0 %v4304, 125
    %v4325 = vpop.permute.xlu0 %4324
    %4326 = vrot.lane.b32.xlu0 %v4313, 125
    %v4327 = vpop.permute.xlu0 %4326
    %v4328 = vsel %vm408, %v4315, %v4317
    %v4329 = vsel %vm408, %v4317, %v4319
    %v4330 = vsel %vm408, %v4319, %v4321
    %v4331 = vsel %vm408, %v4321, %v4323
    %v4332 = vsel %vm408, %v4323, %v4325
    %v4333 = vsel %vm408, %v4325, %v4327
    %4341 = vst [vmem:[#allocation2 + $0x268] sm:$0x70] %v4328
    %4342 = vst [vmem:[#allocation2 + $0x270] sm:$0x70] %v4329
    %4343 = vst [vmem:[#allocation2 + $0x278] sm:$0x70] %v4330
    %4344 = vst [vmem:[#allocation2 + $0x280] sm:$0x70] %v4331
    %4345 = vst [vmem:[#allocation2 + $0x288] sm:$0x70] %v4332
    %4346 = vst [vmem:[#allocation2 + $0x290] sm:$0x70] %v4333
    %4347 = vst.msk [vmem:[#allocation2 + $0x298] sm:$0x70] %vm334, %v4327
    %v4348 = vld [vmem:[%s3253 + $0x4] sm:$0x77]
    %v4349 = vld [vmem:[%s3253 + $0xc] sm:$0x77]
    %v4350 = vld [vmem:[%s3253 + $0x14] sm:$0x77]
    %v4351 = vld [vmem:[%s3253 + $0x1c] sm:$0x7]
    %v4356 = vcombine.high %v4348, %v4348
    %v4357 = vcombine.high %v4349, %v4349
    %v4358 = vcombine.high %v4350, %v4350
    %4359 = vrot.lane.b32.xlu0 %v4348, 124
    %v4360 = vpop.permute.xlu0 %4359
    %4361 = vrot.lane.b32.xlu0 %v4356, 124
    %v4362 = vpop.permute.xlu0 %4361
    %4363 = vrot.lane.b32.xlu0 %v4349, 124
    %v4364 = vpop.permute.xlu0 %4363
    %4365 = vrot.lane.b32.xlu0 %v4357, 124
    %v4366 = vpop.permute.xlu0 %4365
    %4367 = vrot.lane.b32.xlu0 %v4350, 124
    %v4368 = vpop.permute.xlu0 %4367
    %4369 = vrot.lane.b32.xlu0 %v4358, 124
    %v4370 = vpop.permute.xlu0 %4369
    %4371 = vrot.lane.b32.xlu0 %v4351, 124
    %v4372 = vpop.permute.xlu0 %4371
    %v4373 = vsel %vm54, %v4360, %v4362
    %v4374 = vsel %vm54, %v4362, %v4364
    %v4375 = vsel %vm54, %v4364, %v4366
    %v4376 = vsel %vm54, %v4366, %v4368
    %v4377 = vsel %vm54, %v4368, %v4370
    %v4378 = vsel %vm54, %v4370, %v4372
    %4386 = vst [vmem:[#allocation2 + $0x2a0] sm:$0x7] %v4373
    %4387 = vst [vmem:[#allocation2 + $0x2a8] sm:$0x7] %v4374
    %4388 = vst [vmem:[#allocation2 + $0x2b0] sm:$0x7] %v4375
    %4389 = vst [vmem:[#allocation2 + $0x2b8] sm:$0x7] %v4376
    %4390 = vst [vmem:[#allocation2 + $0x2c0] sm:$0x7] %v4377
    %4391 = vst [vmem:[#allocation2 + $0x2c8] sm:$0x7] %v4378
    %4392 = vst.msk [vmem:[#allocation2 + $0x2d0] sm:$0x7] %vm286, %v4372
    %v4393 = vld [vmem:[%s1] sm:$0x3f]
    %v4394 = vld [vmem:[#allocation2] sm:$0xff]
    %v4395 = vld [vmem:[#allocation2 + $0x8] sm:$0xff]
    %v4396 = vld [vmem:[#allocation2 + $0x10] sm:$0xff]
    %v4397 = vld [vmem:[#allocation2 + $0x18] sm:$0xff]
    %v4398 = vld [vmem:[#allocation2 + $0x20] sm:$0xff]
    %v4399 = vld [vmem:[#allocation2 + $0x28] sm:$0xff]
    %v4400 = vld [vmem:[#allocation2 + $0x30] sm:$0xff]
    %v4401 = vld [vmem:[#allocation2 + $0x38] sm:$0xff]
    %v4402 = vld [vmem:[#allocation2 + $0x40] sm:$0xff]
    %v4403 = vld [vmem:[#allocation2 + $0x48] sm:$0xff]
    %v4404 = vld [vmem:[#allocation2 + $0x50] sm:$0xff]
    %v4405 = vld [vmem:[#allocation2 + $0x58] sm:$0xff]
    %v4406 = vld [vmem:[#allocation2 + $0x60] sm:$0xff]
    %v4407 = vld [vmem:[#allocation2 + $0x68] sm:$0xff]
    %v4408 = vld [vmem:[#allocation2 + $0x70] sm:$0xff]
    %v4409 = vld [vmem:[#allocation2 + $0x78] sm:$0xff]
    %v4410 = vld [vmem:[#allocation2 + $0x80] sm:$0xff]
    %v4411 = vld [vmem:[#allocation2 + $0x88] sm:$0xff]
    %v4412 = vld [vmem:[#allocation2 + $0x90] sm:$0xff]
    %v4413 = vld [vmem:[#allocation2 + $0x98] sm:$0xff]
    %v4414 = vld [vmem:[#allocation2 + $0xa0] sm:$0xff]
    %v4415 = vld [vmem:[#allocation2 + $0xa8] sm:$0xff]
    %v4416 = vld [vmem:[#allocation2 + $0xb0] sm:$0xff]
    %v4417 = vld [vmem:[#allocation2 + $0xb8] sm:$0xff]
    %v4418 = vld [vmem:[#allocation2 + $0xc0] sm:$0xff]
    %v4419 = vld [vmem:[#allocation2 + $0xc8] sm:$0xff]
    %v4420 = vld [vmem:[#allocation2 + $0xd0] sm:$0xff]
    %v4421 = vld [vmem:[#allocation2 + $0xd8] sm:$0xff]
    %v4422 = vld [vmem:[#allocation2 + $0xe0] sm:$0xff]
    %v4423 = vld [vmem:[#allocation2 + $0xe8] sm:$0xff]
    %v4424 = vld [vmem:[#allocation2 + $0xf0] sm:$0xff]
    %v4425 = vld [vmem:[#allocation2 + $0xf8] sm:$0xff]
    %v4426 = vld [vmem:[#allocation2 + $0x100] sm:$0xff]
    %v4427 = vld [vmem:[#allocation2 + $0x108] sm:$0xff]
    %v4428 = vld [vmem:[#allocation2 + $0x110] sm:$0xff]
    %v4429 = vld [vmem:[#allocation2 + $0x118] sm:$0xff]
    %v4430 = vld [vmem:[#allocation2 + $0x120] sm:$0xff]
    %v4431 = vld [vmem:[#allocation2 + $0x128] sm:$0xff]
    %v4432 = vld [vmem:[#allocation2 + $0x130] sm:$0xff]
    %v4433 = vld [vmem:[#allocation2 + $0x138] sm:$0xff]
    %v4434 = vld [vmem:[#allocation2 + $0x140] sm:$0xff]
    %v4435 = vld [vmem:[#allocation2 + $0x148] sm:$0xff]
    %v4436 = vld [vmem:[#allocation2 + $0x150] sm:$0xff]
    %v4437 = vld [vmem:[#allocation2 + $0x158] sm:$0xff]
    %v4438 = vld [vmem:[#allocation2 + $0x160] sm:$0xff]
    %v4439 = vld [vmem:[#allocation2 + $0x168] sm:$0xff]
    %v4440 = vld [vmem:[#allocation2 + $0x170] sm:$0xff]
    %v4441 = vld [vmem:[#allocation2 + $0x178] sm:$0xff]
    %v4442 = vld [vmem:[#allocation2 + $0x180] sm:$0xff]
    %v4443 = vld [vmem:[#allocation2 + $0x188] sm:$0xff]
    %v4444 = vld [vmem:[#allocation2 + $0x190] sm:$0xff]
    %v4445 = vld [vmem:[#allocation2 + $0x198] sm:$0xff]
    %v4446 = vld [vmem:[#allocation2 + $0x1a0] sm:$0xff]
    %v4447 = vld [vmem:[#allocation2 + $0x1a8] sm:$0xff]
    %v4448 = vld [vmem:[#allocation2 + $0x1b0] sm:$0xff]
    %v4449 = vld [vmem:[#allocation2 + $0x1b8] sm:$0xff]
    %v4450 = vld [vmem:[#allocation2 + $0x1c0] sm:$0xff]
    %v4451 = vld [vmem:[#allocation2 + $0x1c8] sm:$0xff]
    %v4452 = vld [vmem:[#allocation2 + $0x1d0] sm:$0xff]
    %v4453 = vld [vmem:[#allocation2 + $0x1d8] sm:$0xff]
    %v4454 = vld [vmem:[#allocation2 + $0x1e0] sm:$0xff]
    %v4455 = vld [vmem:[#allocation2 + $0x1e8] sm:$0xff]
    %v4456 = vld [vmem:[#allocation2 + $0x1f0] sm:$0xff]
    %v4457 = vld [vmem:[#allocation2 + $0x1f8] sm:$0xff]
    %v4458 = vld [vmem:[#allocation2 + $0x200] sm:$0xff]
    %v4459 = vld [vmem:[#allocation2 + $0x208] sm:$0xff]
    %v4460 = vld [vmem:[#allocation2 + $0x210] sm:$0xff]
    %v4461 = vld [vmem:[#allocation2 + $0x218] sm:$0xff]
    %v4462 = vld [vmem:[#allocation2 + $0x220] sm:$0xff]
    %v4463 = vld [vmem:[#allocation2 + $0x228] sm:$0xff]
    %v4464 = vld [vmem:[#allocation2 + $0x230] sm:$0xff]
    %v4465 = vld [vmem:[#allocation2 + $0x238] sm:$0xff]
    %v4466 = vld [vmem:[#allocation2 + $0x240] sm:$0xff]
    %v4467 = vld [vmem:[#allocation2 + $0x248] sm:$0xff]
    %v4468 = vld [vmem:[#allocation2 + $0x250] sm:$0xff]
    %v4469 = vld [vmem:[#allocation2 + $0x258] sm:$0xff]
    %v4470 = vld [vmem:[#allocation2 + $0x260] sm:$0xff]
    %v4471 = vld [vmem:[#allocation2 + $0x268] sm:$0xff]
    %v4472 = vld [vmem:[#allocation2 + $0x270] sm:$0xff]
    %v4473 = vld [vmem:[#allocation2 + $0x278] sm:$0xff]
    %v4474 = vld [vmem:[#allocation2 + $0x280] sm:$0xff]
    %v4475 = vld [vmem:[#allocation2 + $0x288] sm:$0xff]
    %v4476 = vld [vmem:[#allocation2 + $0x290] sm:$0xff]
    %v4477 = vld [vmem:[#allocation2 + $0x298] sm:$0xff]
    %v4478 = vld [vmem:[#allocation2 + $0x2a0] sm:$0xf]
    %v4479 = vld [vmem:[#allocation2 + $0x2a8] sm:$0xf]
    %v4480 = vld [vmem:[#allocation2 + $0x2b0] sm:$0xf]
    %v4481 = vld [vmem:[#allocation2 + $0x2b8] sm:$0xf]
    %v4482 = vld [vmem:[#allocation2 + $0x2c0] sm:$0xf]
    %v4483 = vld [vmem:[#allocation2 + $0x2c8] sm:$0xf]
    %v4484 = vld [vmem:[#allocation2 + $0x2d0] sm:$0xf]
    %v4485 = vld [vmem:[%s2] sm:$0x3f]
    %4487 = vset.pattern.permute.xlu0 0
    %4488 = vperm.xlu0 %4487, %v4485
    %v4489 = vpop.permute.xlu0 %4488
    %v4492 = vsel %vm1524, %v4393, 0
    %v4495 = vsel %vm1528, %v4478, 0
    %v4498 = vsel %vm1528, %v4479, 0
    %v4501 = vsel %vm1528, %v4480, 0
    %v4504 = vsel %vm1528, %v4481, 0
    %v4507 = vsel %vm1528, %v4482, 0
    %v4510 = vsel %vm1528, %v4483, 0
    %v4513 = vsel %vm1528, %v4484, 0
    %4515 = vmatprep.subr.mxu0 %v4395
    %4516 = vmatpush1.msra.mxu0 %v4394
    %4517 = vmatprep.subr.mxu0 %v4402
    %4518 = vmatpush1.msra.mxu0 %v4401
    %4519 = vmatprep.subr.mxu0 %v4409
    %4520 = vmatpush1.msra.mxu0 %v4408
    %4521 = vmatprep.subr.mxu0 %v4416
    %4522 = vmatpush1.msra.mxu0 %v4415
    %4523 = vmatprep.subr.mxu0 %v4423
    %4524 = vmatpush1.msra.mxu0 %v4422
    %4525 = vmatprep.subr.mxu0 %v4430
    %4526 = vmatpush1.msra.mxu0 %v4429
    %4527 = vmatprep.subr.mxu0 %v4437
    %4528 = vmatpush1.msra.mxu0 %v4436
    %4529 = vmatprep.subr.mxu0 %v4444
    %4530 = vmatpush1.msra.mxu0 %v4443
    %4531 = vmatprep.subr.mxu0 %v4451
    %4532 = vmatpush1.msra.mxu0 %v4450
    %4533 = vmatprep.subr.mxu0 %v4458
    %4534 = vmatpush1.msra.mxu0 %v4457
    %4535 = vmatprep.subr.mxu0 %v4465
    %4536 = vmatpush1.msra.mxu0 %v4464
    %4537 = vmatprep.subr.mxu0 %v4472
    %4538 = vmatpush1.msra.mxu0 %v4471
    %4539 = vmatprep.subr.mxu0 %v4498
    %4540 = vmatpush1.msra.mxu0 %v4495
    %4541 = vmatprep.subr.mxu0 0.0
    %4542 = vmatpush1.msra.mxu0 0.0
    %4543 = vmatprep.subr.mxu0 0.0
    %4544 = vmatpush1.msra.mxu0 0.0
    %4545 = vmatprep.subr.mxu0 0.0
    %4546 = vmatpush1.msra.mxu0 0.0
    %4547 = vmatprep.subr.mxu0 0.0
    %4548 = vmatpush1.msra.mxu0 0.0
    %4549 = vmatprep.subr.mxu0 0.0
    %4550 = vmatpush1.msra.mxu0 0.0
    %4551 = vmatprep.subr.mxu0 0.0
    %4552 = vmatpush1.msra.mxu0 0.0
    %4553 = vmatprep.subr.mxu0 0.0
    %4554 = vmatpush1.msra.mxu0 0.0
    %4555 = vmatprep.subr.mxu0 0.0
    %4556 = vmatpush1.msra.mxu0 0.0
    %4557 = vmatprep.subr.mxu0 0.0
    %4558 = vmatpush1.msra.mxu0 0.0
    %4559 = vmatprep.subr.mxu0 0.0
    %4560 = vmatpush1.msra.mxu0 0.0
    %4561 = vmatprep.subr.mxu0 0.0
    %4562 = vmatpush1.msra.mxu0 0.0
    %4563 = vmatprep.subr.mxu0 0.0
    %4564 = vmatpush1.msra.mxu0 0.0
    %4565 = vmatprep.subr.mxu0 0.0
    %4566 = vmatpush1.msra.mxu0 0.0
    %4567 = vmatprep.subr.mxu0 0.0
    %4568 = vmatpush1.msra.mxu0 0.0
    %4569 = vmatprep.subr.mxu0 0.0
    %4570 = vmatpush1.msra.mxu0 0.0
    %4571 = vmatprep.subr.mxu0 0.0
    %4572 = vmatpush1.msra.mxu0 0.0
    %4573 = vmatprep.subr.mxu0 0.0
    %4574 = vmatpush1.msra.mxu0 0.0
    %4575 = vmatprep.subr.mxu0 0.0
    %4576 = vmatpush1.msra.mxu0 0.0
    %4577 = vmatprep.subr.mxu0 0.0
    %4578 = vmatpush1.msra.mxu0 0.0
    %4579 = vmatprep.mubr.f32.mxu0 0.0
    %4580 = vmatmul.mubr.f32.gmra.mrb[0].mxu0 %v4492
    %v4581 = vpop.f32.mrb[0].mxu0
    %v4582 = vadd.f32 %v4489, %v4581
    %v4583 = vpop.f32.mrb[0].mxu0
    %v4584 = vadd.f32 %v4489, %v4583
    %4585 = vdwg.mxu0
    %4586 = vmatprep.subr.mxu0 %v4397
    %4587 = vmatpush1.msra.mxu0 %v4396
    %4588 = vmatprep.subr.mxu0 %v4404
    %4589 = vmatpush1.msra.mxu0 %v4403
    %4590 = vmatprep.subr.mxu0 %v4411
    %4591 = vmatpush1.msra.mxu0 %v4410
    %4592 = vmatprep.subr.mxu0 %v4418
    %4593 = vmatpush1.msra.mxu0 %v4417
    %4594 = vmatprep.subr.mxu0 %v4425
    %4595 = vmatpush1.msra.mxu0 %v4424
    %4596 = vmatprep.subr.mxu0 %v4432
    %4597 = vmatpush1.msra.mxu0 %v4431
    %4598 = vmatprep.subr.mxu0 %v4439
    %4599 = vmatpush1.msra.mxu0 %v4438
    %4600 = vmatprep.subr.mxu0 %v4446
    %4601 = vmatpush1.msra.mxu0 %v4445
    %4602 = vmatprep.subr.mxu0 %v4453
    %4603 = vmatpush1.msra.mxu0 %v4452
    %4604 = vmatprep.subr.mxu0 %v4460
    %4605 = vmatpush1.msra.mxu0 %v4459
    %4606 = vmatprep.subr.mxu0 %v4467
    %4607 = vmatpush1.msra.mxu0 %v4466
    %4608 = vmatprep.subr.mxu0 %v4474
    %4609 = vmatpush1.msra.mxu0 %v4473
    %4610 = vmatprep.subr.mxu0 %v4504
    %4611 = vmatpush1.msra.mxu0 %v4501
    %4612 = vmatprep.subr.mxu0 0.0
    %4613 = vmatpush1.msra.mxu0 0.0
    %4614 = vmatprep.subr.mxu0 0.0
    %4615 = vmatpush1.msra.mxu0 0.0
    %4616 = vmatprep.subr.mxu0 0.0
    %4617 = vmatpush1.msra.mxu0 0.0
    %4618 = vmatprep.subr.mxu0 0.0
    %4619 = vmatpush1.msra.mxu0 0.0
    %4620 = vmatprep.subr.mxu0 0.0
    %4621 = vmatpush1.msra.mxu0 0.0
    %4622 = vmatprep.subr.mxu0 0.0
    %4623 = vmatpush1.msra.mxu0 0.0
    %4624 = vmatprep.subr.mxu0 0.0
    %4625 = vmatpush1.msra.mxu0 0.0
    %4626 = vmatprep.subr.mxu0 0.0
    %4627 = vmatpush1.msra.mxu0 0.0
    %4628 = vmatprep.subr.mxu0 0.0
    %4629 = vmatpush1.msra.mxu0 0.0
    %4630 = vmatprep.subr.mxu0 0.0
    %4631 = vmatpush1.msra.mxu0 0.0
    %4632 = vmatprep.subr.mxu0 0.0
    %4633 = vmatpush1.msra.mxu0 0.0
    %4634 = vmatprep.subr.mxu0 0.0
    %4635 = vmatpush1.msra.mxu0 0.0
    %4636 = vmatprep.subr.mxu0 0.0
    %4637 = vmatpush1.msra.mxu0 0.0
    %4638 = vmatprep.subr.mxu0 0.0
    %4639 = vmatpush1.msra.mxu0 0.0
    %4640 = vmatprep.subr.mxu0 0.0
    %4641 = vmatpush1.msra.mxu0 0.0
    %4642 = vmatprep.subr.mxu0 0.0
    %4643 = vmatpush1.msra.mxu0 0.0
    %4644 = vmatprep.subr.mxu0 0.0
    %4645 = vmatpush1.msra.mxu0 0.0
    %4646 = vmatprep.subr.mxu0 0.0
    %4647 = vmatpush1.msra.mxu0 0.0
    %4648 = vmatprep.subr.mxu0 0.0
    %4649 = vmatpush1.msra.mxu0 0.0
    %4650 = vmatprep.mubr.f32.mxu0 0.0
    %4651 = vmatmul.mubr.f32.gmra.mrb[0].mxu0 %v4492
    %v4652 = vpop.f32.mrb[0].mxu0
    %v4653 = vadd.f32 %v4489, %v4652
    %v4654 = vpop.f32.mrb[0].mxu0
    %v4655 = vadd.f32 %v4489, %v4654
    %4656 = vdwg.mxu0
    %4657 = vmatprep.subr.mxu0 %v4399
    %4658 = vmatpush1.msra.mxu0 %v4398
    %4659 = vmatprep.subr.mxu0 %v4406
    %4660 = vmatpush1.msra.mxu0 %v4405
    %4661 = vmatprep.subr.mxu0 %v4413
    %4662 = vmatpush1.msra.mxu0 %v4412
    %4663 = vmatprep.subr.mxu0 %v4420
    %4664 = vmatpush1.msra.mxu0 %v4419
    %4665 = vmatprep.subr.mxu0 %v4427
    %4666 = vmatpush1.msra.mxu0 %v4426
    %4667 = vmatprep.subr.mxu0 %v4434
    %4668 = vmatpush1.msra.mxu0 %v4433
    %4669 = vmatprep.subr.mxu0 %v4441
    %4670 = vmatpush1.msra.mxu0 %v4440
    %4671 = vmatprep.subr.mxu0 %v4448
    %4672 = vmatpush1.msra.mxu0 %v4447
    %4673 = vmatprep.subr.mxu0 %v4455
    %4674 = vmatpush1.msra.mxu0 %v4454
    %4675 = vmatprep.subr.mxu0 %v4462
    %4676 = vmatpush1.msra.mxu0 %v4461
    %4677 = vmatprep.subr.mxu0 %v4469
    %4678 = vmatpush1.msra.mxu0 %v4468
    %4679 = vmatprep.subr.mxu0 %v4476
    %4680 = vmatpush1.msra.mxu0 %v4475
    %4681 = vmatprep.subr.mxu0 %v4510
    %4682 = vmatpush1.msra.mxu0 %v4507
    %4683 = vmatprep.subr.mxu0 0.0
    %4684 = vmatpush1.msra.mxu0 0.0
    %4685 = vmatprep.subr.mxu0 0.0
    %4686 = vmatpush1.msra.mxu0 0.0
    %4687 = vmatprep.subr.mxu0 0.0
    %4688 = vmatpush1.msra.mxu0 0.0
    %4689 = vmatprep.subr.mxu0 0.0
    %4690 = vmatpush1.msra.mxu0 0.0
    %4691 = vmatprep.subr.mxu0 0.0
    %4692 = vmatpush1.msra.mxu0 0.0
    %4693 = vmatprep.subr.mxu0 0.0
    %4694 = vmatpush1.msra.mxu0 0.0
    %4695 = vmatprep.subr.mxu0 0.0
    %4696 = vmatpush1.msra.mxu0 0.0
    %4697 = vmatprep.subr.mxu0 0.0
    %4698 = vmatpush1.msra.mxu0 0.0
    %4699 = vmatprep.subr.mxu0 0.0
    %4700 = vmatpush1.msra.mxu0 0.0
    %4701 = vmatprep.subr.mxu0 0.0
    %4702 = vmatpush1.msra.mxu0 0.0
    %4703 = vmatprep.subr.mxu0 0.0
    %4704 = vmatpush1.msra.mxu0 0.0
    %4705 = vmatprep.subr.mxu0 0.0
    %4706 = vmatpush1.msra.mxu0 0.0
    %4707 = vmatprep.subr.mxu0 0.0
    %4708 = vmatpush1.msra.mxu0 0.0
    %4709 = vmatprep.subr.mxu0 0.0
    %4710 = vmatpush1.msra.mxu0 0.0
    %4711 = vmatprep.subr.mxu0 0.0
    %4712 = vmatpush1.msra.mxu0 0.0
    %4713 = vmatprep.subr.mxu0 0.0
    %4714 = vmatpush1.msra.mxu0 0.0
    %4715 = vmatprep.subr.mxu0 0.0
    %4716 = vmatpush1.msra.mxu0 0.0
    %4717 = vmatprep.subr.mxu0 0.0
    %4718 = vmatpush1.msra.mxu0 0.0
    %4719 = vmatprep.subr.mxu0 0.0
    %4720 = vmatpush1.msra.mxu0 0.0
    %4721 = vmatprep.mubr.f32.mxu0 0.0
    %4722 = vmatmul.mubr.f32.gmra.mrb[0].mxu0 %v4492
    %v4723 = vpop.f32.mrb[0].mxu0
    %v4724 = vadd.f32 %v4489, %v4723
    %v4725 = vpop.f32.mrb[0].mxu0
    %v4726 = vadd.f32 %v4489, %v4725
    %4727 = vdwg.mxu0
    %4728 = vmatprep.subr.mxu0 0.0
    %4729 = vmatpush1.msra.mxu0 %v4400
    %4730 = vmatprep.subr.mxu0 0.0
    %4731 = vmatpush1.msra.mxu0 %v4407
    %4732 = vmatprep.subr.mxu0 0.0
    %4733 = vmatpush1.msra.mxu0 %v4414
    %4734 = vmatprep.subr.mxu0 0.0
    %4735 = vmatpush1.msra.mxu0 %v4421
    %4736 = vmatprep.subr.mxu0 0.0
    %4737 = vmatpush1.msra.mxu0 %v4428
    %4738 = vmatprep.subr.mxu0 0.0
    %4739 = vmatpush1.msra.mxu0 %v4435
    %4740 = vmatprep.subr.mxu0 0.0
    %4741 = vmatpush1.msra.mxu0 %v4442
    %4742 = vmatprep.subr.mxu0 0.0
    %4743 = vmatpush1.msra.mxu0 %v4449
    %4744 = vmatprep.subr.mxu0 0.0
    %4745 = vmatpush1.msra.mxu0 %v4456
    %4746 = vmatprep.subr.mxu0 0.0
    %4747 = vmatpush1.msra.mxu0 %v4463
    %4748 = vmatprep.subr.mxu0 0.0
    %4749 = vmatpush1.msra.mxu0 %v4470
    %4750 = vmatprep.subr.mxu0 0.0
    %4751 = vmatpush1.msra.mxu0 %v4477
    %4752 = vmatprep.subr.mxu0 0.0
    %4753 = vmatpush1.msra.mxu0 %v4513
    %4754 = vmatprep.subr.mxu0 0.0
    %4755 = vmatpush1.msra.mxu0 0.0
    %4756 = vmatprep.subr.mxu0 0.0
    %4757 = vmatpush1.msra.mxu0 0.0
    %4758 = vmatprep.subr.mxu0 0.0
    %4759 = vmatpush1.msra.mxu0 0.0
    %4760 = vmatprep.subr.mxu0 0.0
    %4761 = vmatpush1.msra.mxu0 0.0
    %4762 = vmatprep.subr.mxu0 0.0
    %4763 = vmatpush1.msra.mxu0 0.0
    %4764 = vmatprep.subr.mxu0 0.0
    %4765 = vmatpush1.msra.mxu0 0.0
    %4766 = vmatprep.subr.mxu0 0.0
    %4767 = vmatpush1.msra.mxu0 0.0
    %4768 = vmatprep.subr.mxu0 0.0
    %4769 = vmatpush1.msra.mxu0 0.0
    %4770 = vmatprep.subr.mxu0 0.0
    %4771 = vmatpush1.msra.mxu0 0.0
    %4772 = vmatprep.subr.mxu0 0.0
    %4773 = vmatpush1.msra.mxu0 0.0
    %4774 = vmatprep.subr.mxu0 0.0
    %4775 = vmatpush1.msra.mxu0 0.0
    %4776 = vmatprep.subr.mxu0 0.0
    %4777 = vmatpush1.msra.mxu0 0.0
    %4778 = vmatprep.subr.mxu0 0.0
    %4779 = vmatpush1.msra.mxu0 0.0
    %4780 = vmatprep.subr.mxu0 0.0
    %4781 = vmatpush1.msra.mxu0 0.0
    %4782 = vmatprep.subr.mxu0 0.0
    %4783 = vmatpush1.msra.mxu0 0.0
    %4784 = vmatprep.subr.mxu0 0.0
    %4785 = vmatpush1.msra.mxu0 0.0
    %4786 = vmatprep.subr.mxu0 0.0
    %4787 = vmatpush1.msra.mxu0 0.0
    %4788 = vmatprep.subr.mxu0 0.0
    %4789 = vmatpush1.msra.mxu0 0.0
    %4790 = vmatprep.subr.mxu0 0.0
    %4791 = vmatpush1.msra.mxu0 0.0
    %4792 = vmatprep.mubr.f32.mxu0 0.0
    %4793 = vmatmul.mubr.f32.gmra.mrb[0].mxu0 %v4492
    %v4794 = vpop.f32.mrb[0].mxu0
    %v4795 = vadd.f32 %v4489, %v4794
    %v4796 = vpop.f32.mrb[0].mxu0
    %4797 = vdwg.mxu0
    %v4798 = vmax.f32 %v4582, 0.0
    %v4799 = vmax.f32 %v4584, 0.0
    %v4800 = vmax.f32 %v4653, 0.0
    %v4801 = vmax.f32 %v4655, 0.0
    %v4802 = vmax.f32 %v4724, 0.0
    %v4803 = vmax.f32 %v4726, 0.0
    %v4804 = vmax.f32 %v4795, 0.0
    %4812 = vrot.lane.b32.xlu0 %v4798, 127
    %v4813 = vpop.permute.xlu0 %4812
    %4814 = vrot.lane.b32.xlu0 %v4799, 127
    %v4815 = vpop.permute.xlu0 %4814
    %4816 = vrot.lane.b32.xlu0 %v4800, 127
    %v4817 = vpop.permute.xlu0 %4816
    %4818 = vrot.lane.b32.xlu0 %v4801, 127
    %v4819 = vpop.permute.xlu0 %4818
    %4820 = vrot.lane.b32.xlu0 %v4802, 127
    %v4821 = vpop.permute.xlu0 %4820
    %4822 = vrot.lane.b32.xlu0 %v4803, 127
    %v4823 = vpop.permute.xlu0 %4822
    %4824 = vrot.lane.b32.xlu0 %v4804, 127
    %v4825 = vpop.permute.xlu0 %4824
    %v4826 = vsel %vm314, %v4813, %v4815
    %v4827 = vsel %vm314, %v4815, %v4817
    %v4828 = vsel %vm314, %v4817, %v4819
    %v4829 = vsel %vm314, %v4819, %v4821
    %v4830 = vsel %vm314, %v4821, %v4823
    %v4831 = vsel %vm314, %v4823, %v4825
    %v4839 = vmax.f32 %v4798, %v4826
    %v4840 = vmax.f32 %v4799, %v4827
    %v4841 = vmax.f32 %v4800, %v4828
    %v4842 = vmax.f32 %v4801, %v4829
    %v4843 = vmax.f32 %v4802, %v4830
    %v4844 = vmax.f32 %v4803, %v4831
    %v4845 = vmax.f32 %v4804, %v4825
    %4853 = vrot.lane.b32.xlu0 %v4839, 96
    %v4854 = vpop.permute.xlu0 %4853
    %4855 = vrot.lane.b32.xlu0 %v4840, 96
    %v4856 = vpop.permute.xlu0 %4855
    %4857 = vrot.lane.b32.xlu0 %v4841, 96
    %v4858 = vpop.permute.xlu0 %4857
    %4859 = vrot.lane.b32.xlu0 %v4842, 96
    %v4860 = vpop.permute.xlu0 %4859
    %4861 = vrot.lane.b32.xlu0 %v4843, 96
    %v4862 = vpop.permute.xlu0 %4861
    %4863 = vrot.lane.b32.xlu0 %v4844, 96
    %v4864 = vpop.permute.xlu0 %4863
    %4865 = vrot.lane.b32.xlu0 %v4845, 96
    %v4866 = vpop.permute.xlu0 %4865
    %v4867 = vsel %vm502, %v4854, %v4856
    %v4868 = vsel %vm502, %v4856, %v4858
    %v4869 = vsel %vm502, %v4858, %v4860
    %v4870 = vsel %vm502, %v4860, %v4862
    %v4871 = vsel %vm502, %v4862, %v4864
    %v4872 = vsel %vm502, %v4864, %v4866
    %v4880 = vmax.f32 %v4839, %v4867
    %v4881 = vmax.f32 %v4840, %v4868
    %v4882 = vmax.f32 %v4841, %v4869
    %v4883 = vmax.f32 %v4842, %v4870
    %v4884 = vmax.f32 %v4843, %v4871
    %v4885 = vmax.f32 %v4844, %v4872
    %v4886 = vmax.f32 %v4845, %v4866
    %4887 = vst [vmem:[#allocation3] sm:$0x3f] %v4880
    %4888 = vst [vmem:[#allocation3 + $0x8] sm:$0x3f] %v4881
    %4889 = vst [vmem:[#allocation3 + $0x10] sm:$0x3f] %v4882
    %4890 = vst [vmem:[#allocation3 + $0x18] sm:$0x3f] %v4883
    %4891 = vst.msk [vmem:[#allocation3 + $0x20] sm:$0x3f] %vm1926, %v4884
    %4897 = vrot.lane.b32.xlu0 %v4880, 126
    %v4898 = vpop.permute.xlu0 %4897
    %4899 = vrot.lane.b32.xlu0 %v4881, 126
    %v4900 = vpop.permute.xlu0 %4899
    %4901 = vrot.lane.b32.xlu0 %v4882, 126
    %v4902 = vpop.permute.xlu0 %4901
    %4903 = vrot.lane.b32.xlu0 %v4883, 126
    %v4904 = vpop.permute.xlu0 %4903
    %4905 = vrot.lane.b32.xlu0 %v4884, 126
    %v4906 = vpop.permute.xlu0 %4905
    %v4907 = vsel %vm361, %v4898, %v4900
    %v4908 = vsel %vm361, %v4900, %v4902
    %v4909 = vsel %vm361, %v4902, %v4904
    %v4910 = vsel %vm361, %v4904, %v4906
    %4916 = vst [vmem:[#allocation3 + $0x28] sm:$0x3f] %v4907
    %4917 = vst [vmem:[#allocation3 + $0x30] sm:$0x3f] %v4908
    %4918 = vst [vmem:[#allocation3 + $0x38] sm:$0x3f] %v4909
    %4919 = vst [vmem:[#allocation3 + $0x40] sm:$0x3f] %v4910
    %4920 = vst.msk [vmem:[#allocation3 + $0x48] sm:$0x3f] %vm1926, %v4906
    %4921 = vrot.lane.b32.xlu0 %v4880, 124
    %v4922 = vpop.permute.xlu0 %4921
    %4923 = vrot.lane.b32.xlu0 %v4881, 124
    %v4924 = vpop.permute.xlu0 %4923
    %4925 = vrot.lane.b32.xlu0 %v4882, 124
    %v4926 = vpop.permute.xlu0 %4925
    %4927 = vrot.lane.b32.xlu0 %v4883, 124
    %v4928 = vpop.permute.xlu0 %4927
    %4929 = vrot.lane.b32.xlu0 %v4884, 124
    %v4930 = vpop.permute.xlu0 %4929
    %v4931 = vsel %vm54, %v4922, %v4924
    %v4932 = vsel %vm54, %v4924, %v4926
    %v4933 = vsel %vm54, %v4926, %v4928
    %v4934 = vsel %vm54, %v4928, %v4930
    %4940 = vst [vmem:[#allocation3 + $0x50] sm:$0x3f] %v4931
    %4941 = vst [vmem:[#allocation3 + $0x58] sm:$0x3f] %v4932
    %4942 = vst [vmem:[#allocation3 + $0x60] sm:$0x3f] %v4933
    %4943 = vst [vmem:[#allocation3 + $0x68] sm:$0x3f] %v4934
    %4944 = vst.msk [vmem:[#allocation3 + $0x70] sm:$0x3f] %vm1926, %v4930
    %4945 = vrot.lane.b32.xlu0 %v4880, 122
    %v4946 = vpop.permute.xlu0 %4945
    %4947 = vrot.lane.b32.xlu0 %v4881, 122
    %v4948 = vpop.permute.xlu0 %4947
    %4949 = vrot.lane.b32.xlu0 %v4882, 122
    %v4950 = vpop.permute.xlu0 %4949
    %4951 = vrot.lane.b32.xlu0 %v4883, 122
    %v4952 = vpop.permute.xlu0 %4951
    %4953 = vrot.lane.b32.xlu0 %v4884, 122
    %v4954 = vpop.permute.xlu0 %4953
    %v4955 = vsel %vm1991, %v4946, %v4948
    %v4956 = vsel %vm1991, %v4948, %v4950
    %v4957 = vsel %vm1991, %v4950, %v4952
    %v4958 = vsel %vm1991, %v4952, %v4954
    %4964 = vst [vmem:[#allocation3 + $0x78] sm:$0x3f] %v4955
    %4965 = vst [vmem:[#allocation3 + $0x80] sm:$0x3f] %v4956
    %4966 = vst [vmem:[#allocation3 + $0x88] sm:$0x3f] %v4957
    %4967 = vst [vmem:[#allocation3 + $0x90] sm:$0x3f] %v4958
    %4968 = vst.msk [vmem:[#allocation3 + $0x98] sm:$0x3f] %vm1926, %v4954
    %4969 = vrot.lane.b32.xlu0 %v4880, 120
    %v4970 = vpop.permute.xlu0 %4969
    %4971 = vrot.lane.b32.xlu0 %v4881, 120
    %v4972 = vpop.permute.xlu0 %4971
    %4973 = vrot.lane.b32.xlu0 %v4882, 120
    %v4974 = vpop.permute.xlu0 %4973
    %4975 = vrot.lane.b32.xlu0 %v4883, 120
    %v4976 = vpop.permute.xlu0 %4975
    %4977 = vrot.lane.b32.xlu0 %v4884, 120
    %v4978 = vpop.permute.xlu0 %4977
    %v4979 = vsel %vm2016, %v4970, %v4972
    %v4980 = vsel %vm2016, %v4972, %v4974
    %v4981 = vsel %vm2016, %v4974, %v4976
    %v4982 = vsel %vm2016, %v4976, %v4978
    %4988 = vst [vmem:[#allocation3 + $0xa0] sm:$0x3f] %v4979
    %4989 = vst [vmem:[#allocation3 + $0xa8] sm:$0x3f] %v4980
    %4990 = vst [vmem:[#allocation3 + $0xb0] sm:$0x3f] %v4981
    %4991 = vst [vmem:[#allocation3 + $0xb8] sm:$0x3f] %v4982
    %4992 = vst.msk [vmem:[#allocation3 + $0xc0] sm:$0x3f] %vm1926, %v4978
    %4994 = vrot.lane.b32.xlu0 %v4880, 64
    %v4995 = vpop.permute.xlu0 %4994
    %4996 = vrot.lane.b32.xlu0 %v4881, 64
    %v4997 = vpop.permute.xlu0 %4996
    %4998 = vrot.lane.b32.xlu0 %v4882, 64
    %v4999 = vpop.permute.xlu0 %4998
    %5000 = vrot.lane.b32.xlu0 %v4883, 64
    %v5001 = vpop.permute.xlu0 %5000
    %5002 = vrot.lane.b32.xlu0 %v4884, 64
    %v5003 = vpop.permute.xlu0 %5002
    %5004 = vrot.lane.b32.xlu0 %v4885, 64
    %v5005 = vpop.permute.xlu0 %5004
    %v5006 = vsel %vm752, %v4995, %v4997
    %v5007 = vsel %vm752, %v4997, %v4999
    %v5008 = vsel %vm752, %v4999, %v5001
    %v5009 = vsel %vm752, %v5001, %v5003
    %v5010 = vsel %vm752, %v5003, %v5005
    %5016 = vst [vmem:[#allocation3 + $0xc8] sm:$0x3f] %v5006
    %5017 = vst [vmem:[#allocation3 + $0xd0] sm:$0x3f] %v5007
    %5018 = vst [vmem:[#allocation3 + $0xd8] sm:$0x3f] %v5008
    %5019 = vst [vmem:[#allocation3 + $0xe0] sm:$0x3f] %v5009
    %5020 = vst.msk [vmem:[#allocation3 + $0xe8] sm:$0x3f] %vm1926, %v5010
    %5021 = vrot.lane.b32.xlu0 %v4880, 62
    %v5022 = vpop.permute.xlu0 %5021
    %5023 = vrot.lane.b32.xlu0 %v4881, 62
    %v5024 = vpop.permute.xlu0 %5023
    %5025 = vrot.lane.b32.xlu0 %v4882, 62
    %v5026 = vpop.permute.xlu0 %5025
    %5027 = vrot.lane.b32.xlu0 %v4883, 62
    %v5028 = vpop.permute.xlu0 %5027
    %5029 = vrot.lane.b32.xlu0 %v4884, 62
    %v5030 = vpop.permute.xlu0 %5029
    %5031 = vrot.lane.b32.xlu0 %v4885, 62
    %v5032 = vpop.permute.xlu0 %5031
    %v5033 = vsel %vm852, %v5022, %v5024
    %v5034 = vsel %vm852, %v5024, %v5026
    %v5035 = vsel %vm852, %v5026, %v5028
    %v5036 = vsel %vm852, %v5028, %v5030
    %v5037 = vsel %vm852, %v5030, %v5032
    %5043 = vst [vmem:[#allocation3 + $0xf0] sm:$0x3f] %v5033
    %5044 = vst [vmem:[#allocation3 + $0xf8] sm:$0x3f] %v5034
    %5045 = vst [vmem:[#allocation3 + $0x100] sm:$0x3f] %v5035
    %5046 = vst [vmem:[#allocation3 + $0x108] sm:$0x3f] %v5036
    %5047 = vst.msk [vmem:[#allocation3 + $0x110] sm:$0x3f] %vm1926, %v5037
    %5048 = vrot.lane.b32.xlu0 %v4880, 60
    %v5049 = vpop.permute.xlu0 %5048
    %5050 = vrot.lane.b32.xlu0 %v4881, 60
    %v5051 = vpop.permute.xlu0 %5050
    %5052 = vrot.lane.b32.xlu0 %v4882, 60
    %v5053 = vpop.permute.xlu0 %5052
    %5054 = vrot.lane.b32.xlu0 %v4883, 60
    %v5055 = vpop.permute.xlu0 %5054
    %5056 = vrot.lane.b32.xlu0 %v4884, 60
    %v5057 = vpop.permute.xlu0 %5056
    %5058 = vrot.lane.b32.xlu0 %v4885, 60
    %v5059 = vpop.permute.xlu0 %5058
    %v5060 = vsel %vm952, %v5049, %v5051
    %v5061 = vsel %vm952, %v5051, %v5053
    %v5062 = vsel %vm952, %v5053, %v5055
    %v5063 = vsel %vm952, %v5055, %v5057
    %v5064 = vsel %vm952, %v5057, %v5059
    %5070 = vst [vmem:[#allocation3 + $0x118] sm:$0x3f] %v5060
    %5071 = vst [vmem:[#allocation3 + $0x120] sm:$0x3f] %v5061
    %5072 = vst [vmem:[#allocation3 + $0x128] sm:$0x3f] %v5062
    %5073 = vst [vmem:[#allocation3 + $0x130] sm:$0x3f] %v5063
    %5074 = vst.msk [vmem:[#allocation3 + $0x138] sm:$0x3f] %vm1926, %v5064
    %5075 = vrot.lane.b32.xlu0 %v4880, 58
    %v5076 = vpop.permute.xlu0 %5075
    %5077 = vrot.lane.b32.xlu0 %v4881, 58
    %v5078 = vpop.permute.xlu0 %5077
    %5079 = vrot.lane.b32.xlu0 %v4882, 58
    %v5080 = vpop.permute.xlu0 %5079
    %5081 = vrot.lane.b32.xlu0 %v4883, 58
    %v5082 = vpop.permute.xlu0 %5081
    %5083 = vrot.lane.b32.xlu0 %v4884, 58
    %v5084 = vpop.permute.xlu0 %5083
    %5085 = vrot.lane.b32.xlu0 %v4885, 58
    %v5086 = vpop.permute.xlu0 %5085
    %v5087 = vsel %vm2125, %v5076, %v5078
    %v5088 = vsel %vm2125, %v5078, %v5080
    %v5089 = vsel %vm2125, %v5080, %v5082
    %v5090 = vsel %vm2125, %v5082, %v5084
    %v5091 = vsel %vm2125, %v5084, %v5086
    %5097 = vst [vmem:[#allocation3 + $0x140] sm:$0x3f] %v5087
    %5098 = vst [vmem:[#allocation3 + $0x148] sm:$0x3f] %v5088
    %5099 = vst [vmem:[#allocation3 + $0x150] sm:$0x3f] %v5089
    %5100 = vst [vmem:[#allocation3 + $0x158] sm:$0x3f] %v5090
    %5101 = vst.msk [vmem:[#allocation3 + $0x160] sm:$0x3f] %vm1926, %v5091
    %5102 = vrot.lane.b32.xlu0 %v4880, 56
    %v5103 = vpop.permute.xlu0 %5102
    %5104 = vrot.lane.b32.xlu0 %v4881, 56
    %v5105 = vpop.permute.xlu0 %5104
    %5106 = vrot.lane.b32.xlu0 %v4882, 56
    %v5107 = vpop.permute.xlu0 %5106
    %5108 = vrot.lane.b32.xlu0 %v4883, 56
    %v5109 = vpop.permute.xlu0 %5108
    %5110 = vrot.lane.b32.xlu0 %v4884, 56
    %v5111 = vpop.permute.xlu0 %5110
    %5112 = vrot.lane.b32.xlu0 %v4885, 56
    %v5113 = vpop.permute.xlu0 %5112
    %v5114 = vsel %vm2153, %v5103, %v5105
    %v5115 = vsel %vm2153, %v5105, %v5107
    %v5116 = vsel %vm2153, %v5107, %v5109
    %v5117 = vsel %vm2153, %v5109, %v5111
    %v5118 = vsel %vm2153, %v5111, %v5113
    %5124 = vst [vmem:[#allocation3 + $0x168] sm:$0x3f] %v5114
    %5125 = vst [vmem:[#allocation3 + $0x170] sm:$0x3f] %v5115
    %5126 = vst [vmem:[#allocation3 + $0x178] sm:$0x3f] %v5116
    %5127 = vst [vmem:[#allocation3 + $0x180] sm:$0x3f] %v5117
    %5128 = vst.msk [vmem:[#allocation3 + $0x188] sm:$0x3f] %vm1926, %v5118
    %5129 = vst [vmem:[#allocation3 + $0x190] sm:$0x3f] %v4881
    %5130 = vst [vmem:[#allocation3 + $0x198] sm:$0x3f] %v4882
    %5131 = vst [vmem:[#allocation3 + $0x1a0] sm:$0x3f] %v4883
    %5132 = vst [vmem:[#allocation3 + $0x1a8] sm:$0x3f] %v4884
    %5133 = vst.msk [vmem:[#allocation3 + $0x1b0] sm:$0x3f] %vm1926, %v4885
    %5134 = vrot.lane.b32.xlu0 %v4885, 126
    %v5135 = vpop.permute.xlu0 %5134
    %v5136 = vsel %vm361, %v4906, %v5135
    %5139 = vst [vmem:[#allocation3 + $0x1b8] sm:$0x3f] %v4908
    %5140 = vst [vmem:[#allocation3 + $0x1c0] sm:$0x3f] %v4909
    %5141 = vst [vmem:[#allocation3 + $0x1c8] sm:$0x3f] %v4910
    %5142 = vst [vmem:[#allocation3 + $0x1d0] sm:$0x3f] %v5136
    %5143 = vst.msk [vmem:[#allocation3 + $0x1d8] sm:$0x3f] %vm1926, %v5135
    %5144 = vrot.lane.b32.xlu0 %v4885, 124
    %v5145 = vpop.permute.xlu0 %5144
    %v5146 = vsel %vm54, %v4930, %v5145
    %5149 = vst [vmem:[#allocation3 + $0x1e0] sm:$0x3f] %v4932
    %5150 = vst [vmem:[#allocation3 + $0x1e8] sm:$0x3f] %v4933
    %5151 = vst [vmem:[#allocation3 + $0x1f0] sm:$0x3f] %v4934
    %5152 = vst [vmem:[#allocation3 + $0x1f8] sm:$0x3f] %v5146
    %5153 = vst.msk [vmem:[#allocation3 + $0x200] sm:$0x3f] %vm1926, %v5145
    %5154 = vrot.lane.b32.xlu0 %v4885, 122
    %v5155 = vpop.permute.xlu0 %5154
    %v5156 = vsel %vm1991, %v4954, %v5155
    %5159 = vst [vmem:[#allocation3 + $0x208] sm:$0x3f] %v4956
    %5160 = vst [vmem:[#allocation3 + $0x210] sm:$0x3f] %v4957
    %5161 = vst [vmem:[#allocation3 + $0x218] sm:$0x3f] %v4958
    %5162 = vst [vmem:[#allocation3 + $0x220] sm:$0x3f] %v5156
    %5163 = vst.msk [vmem:[#allocation3 + $0x228] sm:$0x3f] %vm1926, %v5155
    %5164 = vrot.lane.b32.xlu0 %v4885, 120
    %v5165 = vpop.permute.xlu0 %5164
    %v5166 = vsel %vm2016, %v4978, %v5165
    %5169 = vst [vmem:[#allocation3 + $0x230] sm:$0x3f] %v4980
    %5170 = vst [vmem:[#allocation3 + $0x238] sm:$0x3f] %v4981
    %5171 = vst [vmem:[#allocation3 + $0x240] sm:$0x3f] %v4982
    %5172 = vst [vmem:[#allocation3 + $0x248] sm:$0x3f] %v5166
    %5173 = vst.msk [vmem:[#allocation3 + $0x250] sm:$0x3f] %vm1926, %v5165
    %5175 = vrot.lane.b32.xlu0 %v4886, 64
    %v5176 = vpop.permute.xlu0 %5175
    %v5177 = vsel %vm752, %v5005, %v5176
    %5179 = vst [vmem:[#allocation3 + $0x258] sm:$0x3f] %v5007
    %5180 = vst [vmem:[#allocation3 + $0x260] sm:$0x3f] %v5008
    %5181 = vst [vmem:[#allocation3 + $0x268] sm:$0x3f] %v5009
    %5182 = vst [vmem:[#allocation3 + $0x270] sm:$0x3f] %v5010
    %5183 = vst.msk [vmem:[#allocation3 + $0x278] sm:$0x3f] %vm1926, %v5177
    %5184 = vrot.lane.b32.xlu0 %v4886, 62
    %v5185 = vpop.permute.xlu0 %5184
    %v5186 = vsel %vm852, %v5032, %v5185
    %5188 = vst [vmem:[#allocation3 + $0x280] sm:$0x3f] %v5034
    %5189 = vst [vmem:[#allocation3 + $0x288] sm:$0x3f] %v5035
    %5190 = vst [vmem:[#allocation3 + $0x290] sm:$0x3f] %v5036
    %5191 = vst [vmem:[#allocation3 + $0x298] sm:$0x3f] %v5037
    %5192 = vst.msk [vmem:[#allocation3 + $0x2a0] sm:$0x3f] %vm1926, %v5186
    %5193 = vrot.lane.b32.xlu0 %v4886, 60
    %v5194 = vpop.permute.xlu0 %5193
    %v5195 = vsel %vm952, %v5059, %v5194
    %5197 = vst [vmem:[#allocation3 + $0x2a8] sm:$0x3f] %v5061
    %5198 = vst [vmem:[#allocation3 + $0x2b0] sm:$0x3f] %v5062
    %5199 = vst [vmem:[#allocation3 + $0x2b8] sm:$0x3f] %v5063
    %5200 = vst [vmem:[#allocation3 + $0x2c0] sm:$0x3f] %v5064
    %5201 = vst.msk [vmem:[#allocation3 + $0x2c8] sm:$0x3f] %vm1926, %v5195
    %5202 = vrot.lane.b32.xlu0 %v4886, 58
    %v5203 = vpop.permute.xlu0 %5202
    %v5204 = vsel %vm2125, %v5086, %v5203
    %5206 = vst [vmem:[#allocation3 + $0x2d0] sm:$0x3f] %v5088
    %5207 = vst [vmem:[#allocation3 + $0x2d8] sm:$0x3f] %v5089
    %5208 = vst [vmem:[#allocation3 + $0x2e0] sm:$0x3f] %v5090
    %5209 = vst [vmem:[#allocation3 + $0x2e8] sm:$0x3f] %v5091
    %5210 = vst.msk [vmem:[#allocation3 + $0x2f0] sm:$0x3f] %vm1926, %v5204
    %5211 = vrot.lane.b32.xlu0 %v4886, 56
    %v5212 = vpop.permute.xlu0 %5211
    %v5213 = vsel %vm2153, %v5113, %v5212
    %5215 = vst [vmem:[#allocation3 + $0x2f8] sm:$0x3f] %v5115
    %5216 = vst [vmem:[#allocation3 + $0x300] sm:$0x3f] %v5116
    %5217 = vst [vmem:[#allocation3 + $0x308] sm:$0x3f] %v5117
    %5218 = vst [vmem:[#allocation3 + $0x310] sm:$0x3f] %v5118
    %5219 = vst.msk [vmem:[#allocation3 + $0x318] sm:$0x3f] %vm1926, %v5213
    %5220 = vst [vmem:[#allocation3 + $0x320] sm:$0x3f] %v4882
    %5221 = vst [vmem:[#allocation3 + $0x328] sm:$0x3f] %v4883
    %5222 = vst [vmem:[#allocation3 + $0x330] sm:$0x3f] %v4884
    %5223 = vst [vmem:[#allocation3 + $0x338] sm:$0x3f] %v4885
    %5224 = vst.msk [vmem:[#allocation3 + $0x340] sm:$0x3f] %vm1926, %v4886
    %5225 = vrot.lane.b32.xlu0 %v4886, 126
    %v5226 = vpop.permute.xlu0 %5225
    %v5227 = vsel %vm361, %v5135, %v5226
    %5230 = vst [vmem:[#allocation3 + $0x348] sm:$0x3f] %v4909
    %5231 = vst [vmem:[#allocation3 + $0x350] sm:$0x3f] %v4910
    %5232 = vst [vmem:[#allocation3 + $0x358] sm:$0x3f] %v5136
    %5233 = vst [vmem:[#allocation3 + $0x360] sm:$0x3f] %v5227
    %5234 = vst.msk [vmem:[#allocation3 + $0x368] sm:$0x3f] %vm1926, %v5226
    %5235 = vrot.lane.b32.xlu0 %v4886, 124
    %v5236 = vpop.permute.xlu0 %5235
    %v5237 = vsel %vm54, %v5145, %v5236
    %5240 = vst [vmem:[#allocation3 + $0x370] sm:$0x3f] %v4933
    %5241 = vst [vmem:[#allocation3 + $0x378] sm:$0x3f] %v4934
    %5242 = vst [vmem:[#allocation3 + $0x380] sm:$0x3f] %v5146
    %5243 = vst [vmem:[#allocation3 + $0x388] sm:$0x3f] %v5237
    %5244 = vst.msk [vmem:[#allocation3 + $0x390] sm:$0x3f] %vm1926, %v5236
    %5245 = vrot.lane.b32.xlu0 %v4886, 122
    %v5246 = vpop.permute.xlu0 %5245
    %v5247 = vsel %vm1991, %v5155, %v5246
    %5250 = vst [vmem:[#allocation3 + $0x398] sm:$0x3f] %v4957
    %5251 = vst [vmem:[#allocation3 + $0x3a0] sm:$0x3f] %v4958
    %5252 = vst [vmem:[#allocation3 + $0x3a8] sm:$0x3f] %v5156
    %5253 = vst [vmem:[#allocation3 + $0x3b0] sm:$0x3f] %v5247
    %5254 = vst.msk [vmem:[#allocation3 + $0x3b8] sm:$0x3f] %vm1926, %v5246
    %5255 = vrot.lane.b32.xlu0 %v4886, 120
    %v5256 = vpop.permute.xlu0 %5255
    %v5257 = vsel %vm2016, %v5165, %v5256
    %5260 = vst [vmem:[#allocation3 + $0x3c0] sm:$0x3f] %v4981
    %5261 = vst [vmem:[#allocation3 + $0x3c8] sm:$0x3f] %v4982
    %5262 = vst [vmem:[#allocation3 + $0x3d0] sm:$0x3f] %v5166
    %5263 = vst [vmem:[#allocation3 + $0x3d8] sm:$0x3f] %v5257
    %5264 = vst.msk [vmem:[#allocation3 + $0x3e0] sm:$0x3f] %vm1926, %v5256
    %v5265 = vld [vmem:[%s3] sm:$0xff]
    %v5266 = vld [vmem:[%s3 + $0x8] sm:$0xff]
    %v5267 = vld [vmem:[%s3 + $0x10] sm:$0xff]
    %v5268 = vld [vmem:[%s3 + $0x18] sm:$0xff]
    %v5269 = vld [vmem:[#allocation3] sm:$0xff]
    %v5270 = vld [vmem:[#allocation3 + $0x8] sm:$0xff]
    %v5271 = vld [vmem:[#allocation3 + $0x10] sm:$0xff]
    %v5272 = vld [vmem:[#allocation3 + $0x18] sm:$0xff]
    %v5273 = vld [vmem:[#allocation3 + $0x20] sm:$0xff]
    %v5274 = vld [vmem:[#allocation3 + $0x28] sm:$0xff]
    %v5275 = vld [vmem:[#allocation3 + $0x30] sm:$0xff]
    %v5276 = vld [vmem:[#allocation3 + $0x38] sm:$0xff]
    %v5277 = vld [vmem:[#allocation3 + $0x40] sm:$0xff]
    %v5278 = vld [vmem:[#allocation3 + $0x48] sm:$0xff]
    %v5279 = vld [vmem:[#allocation3 + $0x50] sm:$0xff]
    %v5280 = vld [vmem:[#allocation3 + $0x58] sm:$0xff]
    %v5281 = vld [vmem:[#allocation3 + $0x60] sm:$0xff]
    %v5282 = vld [vmem:[#allocation3 + $0x68] sm:$0xff]
    %v5283 = vld [vmem:[#allocation3 + $0x70] sm:$0xff]
    %v5284 = vld [vmem:[#allocation3 + $0x78] sm:$0xff]
    %v5285 = vld [vmem:[#allocation3 + $0x80] sm:$0xff]
    %v5286 = vld [vmem:[#allocation3 + $0x88] sm:$0xff]
    %v5287 = vld [vmem:[#allocation3 + $0x90] sm:$0xff]
    %v5288 = vld [vmem:[#allocation3 + $0x98] sm:$0xff]
    %v5289 = vld [vmem:[#allocation3 + $0xa0] sm:$0xff]
    %v5290 = vld [vmem:[#allocation3 + $0xa8] sm:$0xff]
    %v5291 = vld [vmem:[#allocation3 + $0xb0] sm:$0xff]
    %v5292 = vld [vmem:[#allocation3 + $0xb8] sm:$0xff]
    %v5293 = vld [vmem:[#allocation3 + $0xc0] sm:$0xff]
    %v5294 = vld [vmem:[#allocation3 + $0xc8] sm:$0xff]
    %v5295 = vld [vmem:[#allocation3 + $0xd0] sm:$0xff]
    %v5296 = vld [vmem:[#allocation3 + $0xd8] sm:$0xff]
    %v5297 = vld [vmem:[#allocation3 + $0xe0] sm:$0xff]
    %v5298 = vld [vmem:[#allocation3 + $0xe8] sm:$0xff]
    %v5299 = vld [vmem:[#allocation3 + $0xf0] sm:$0xff]
    %v5300 = vld [vmem:[#allocation3 + $0xf8] sm:$0xff]
    %v5301 = vld [vmem:[#allocation3 + $0x100] sm:$0xff]
    %v5302 = vld [vmem:[#allocation3 + $0x108] sm:$0xff]
    %v5303 = vld [vmem:[#allocation3 + $0x110] sm:$0xff]
    %v5304 = vld [vmem:[#allocation3 + $0x118] sm:$0xff]
    %v5305 = vld [vmem:[#allocation3 + $0x120] sm:$0xff]
    %v5306 = vld [vmem:[#allocation3 + $0x128] sm:$0xff]
    %v5307 = vld [vmem:[#allocation3 + $0x130] sm:$0xff]
    %v5308 = vld [vmem:[#allocation3 + $0x138] sm:$0xff]
    %v5309 = vld [vmem:[#allocation3 + $0x140] sm:$0xff]
    %v5310 = vld [vmem:[#allocation3 + $0x148] sm:$0xff]
    %v5311 = vld [vmem:[#allocation3 + $0x150] sm:$0xff]
    %v5312 = vld [vmem:[#allocation3 + $0x158] sm:$0xff]
    %v5313 = vld [vmem:[#allocation3 + $0x160] sm:$0xff]
    %v5314 = vld [vmem:[#allocation3 + $0x168] sm:$0xff]
    %v5315 = vld [vmem:[#allocation3 + $0x170] sm:$0xff]
    %v5316 = vld [vmem:[#allocation3 + $0x178] sm:$0xff]
    %v5317 = vld [vmem:[#allocation3 + $0x180] sm:$0xff]
    %v5318 = vld [vmem:[#allocation3 + $0x188] sm:$0xff]
    %v5319 = vld [vmem:[#allocation3 + $0x190] sm:$0xff]
    %v5320 = vld [vmem:[#allocation3 + $0x198] sm:$0xff]
    %v5321 = vld [vmem:[#allocation3 + $0x1a0] sm:$0xff]
    %v5322 = vld [vmem:[#allocation3 + $0x1a8] sm:$0xff]
    %v5323 = vld [vmem:[#allocation3 + $0x1b0] sm:$0xff]
    %v5324 = vld [vmem:[#allocation3 + $0x1b8] sm:$0xff]
    %v5325 = vld [vmem:[#allocation3 + $0x1c0] sm:$0xff]
    %v5326 = vld [vmem:[#allocation3 + $0x1c8] sm:$0xff]
    %v5327 = vld [vmem:[#allocation3 + $0x1d0] sm:$0xff]
    %v5328 = vld [vmem:[#allocation3 + $0x1d8] sm:$0xff]
    %v5329 = vld [vmem:[#allocation3 + $0x1e0] sm:$0xff]
    %v5330 = vld [vmem:[#allocation3 + $0x1e8] sm:$0xff]
    %v5331 = vld [vmem:[#allocation3 + $0x1f0] sm:$0xff]
    %v5332 = vld [vmem:[#allocation3 + $0x1f8] sm:$0xff]
    %v5333 = vld [vmem:[#allocation3 + $0x200] sm:$0xff]
    %v5334 = vld [vmem:[#allocation3 + $0x208] sm:$0xff]
    %v5335 = vld [vmem:[#allocation3 + $0x210] sm:$0xff]
    %v5336 = vld [vmem:[#allocation3 + $0x218] sm:$0xff]
    %v5337 = vld [vmem:[#allocation3 + $0x220] sm:$0xff]
    %v5338 = vld [vmem:[#allocation3 + $0x228] sm:$0xff]
    %v5339 = vld [vmem:[#allocation3 + $0x230] sm:$0xff]
    %v5340 = vld [vmem:[#allocation3 + $0x238] sm:$0xff]
    %v5341 = vld [vmem:[#allocation3 + $0x240] sm:$0xff]
    %v5342 = vld [vmem:[#allocation3 + $0x248] sm:$0xff]
    %v5343 = vld [vmem:[#allocation3 + $0x250] sm:$0xff]
    %v5344 = vld [vmem:[#allocation3 + $0x258] sm:$0xff]
    %v5345 = vld [vmem:[#allocation3 + $0x260] sm:$0xff]
    %v5346 = vld [vmem:[#allocation3 + $0x268] sm:$0xff]
    %v5347 = vld [vmem:[#allocation3 + $0x270] sm:$0xff]
    %v5348 = vld [vmem:[#allocation3 + $0x278] sm:$0xff]
    %v5349 = vld [vmem:[#allocation3 + $0x280] sm:$0xff]
    %v5350 = vld [vmem:[#allocation3 + $0x288] sm:$0xff]
    %v5351 = vld [vmem:[#allocation3 + $0x290] sm:$0xff]
    %v5352 = vld [vmem:[#allocation3 + $0x298] sm:$0xff]
    %v5353 = vld [vmem:[#allocation3 + $0x2a0] sm:$0xff]
    %v5354 = vld [vmem:[#allocation3 + $0x2a8] sm:$0xff]
    %v5355 = vld [vmem:[#allocation3 + $0x2b0] sm:$0xff]
    %v5356 = vld [vmem:[#allocation3 + $0x2b8] sm:$0xff]
    %v5357 = vld [vmem:[#allocation3 + $0x2c0] sm:$0xff]
    %v5358 = vld [vmem:[#allocation3 + $0x2c8] sm:$0xff]
    %v5359 = vld [vmem:[#allocation3 + $0x2d0] sm:$0xff]
    %v5360 = vld [vmem:[#allocation3 + $0x2d8] sm:$0xff]
    %v5361 = vld [vmem:[#allocation3 + $0x2e0] sm:$0xff]
    %v5362 = vld [vmem:[#allocation3 + $0x2e8] sm:$0xff]
    %v5363 = vld [vmem:[#allocation3 + $0x2f0] sm:$0xff]
    %v5364 = vld [vmem:[#allocation3 + $0x2f8] sm:$0xff]
    %v5365 = vld [vmem:[#allocation3 + $0x300] sm:$0xff]
    %v5366 = vld [vmem:[#allocation3 + $0x308] sm:$0xff]
    %v5367 = vld [vmem:[#allocation3 + $0x310] sm:$0xff]
    %v5368 = vld [vmem:[#allocation3 + $0x318] sm:$0xff]
    %v5369 = vld [vmem:[#allocation3 + $0x320] sm:$0xff]
    %v5370 = vld [vmem:[#allocation3 + $0x328] sm:$0xff]
    %v5371 = vld [vmem:[#allocation3 + $0x330] sm:$0xff]
    %v5372 = vld [vmem:[#allocation3 + $0x338] sm:$0xff]
    %v5373 = vld [vmem:[#allocation3 + $0x340] sm:$0xff]
    %v5374 = vld [vmem:[#allocation3 + $0x348] sm:$0xff]
    %v5375 = vld [vmem:[#allocation3 + $0x350] sm:$0xff]
    %v5376 = vld [vmem:[#allocation3 + $0x358] sm:$0xff]
    %v5377 = vld [vmem:[#allocation3 + $0x360] sm:$0xff]
    %v5378 = vld [vmem:[#allocation3 + $0x368] sm:$0xff]
    %v5379 = vld [vmem:[#allocation3 + $0x370] sm:$0xff]
    %v5380 = vld [vmem:[#allocation3 + $0x378] sm:$0xff]
    %v5381 = vld [vmem:[#allocation3 + $0x380] sm:$0xff]
    %v5382 = vld [vmem:[#allocation3 + $0x388] sm:$0xff]
    %v5383 = vld [vmem:[#allocation3 + $0x390] sm:$0xff]
    %v5384 = vld [vmem:[#allocation3 + $0x398] sm:$0xff]
    %v5385 = vld [vmem:[#allocation3 + $0x3a0] sm:$0xff]
    %v5386 = vld [vmem:[#allocation3 + $0x3a8] sm:$0xff]
    %v5387 = vld [vmem:[#allocation3 + $0x3b0] sm:$0xff]
    %v5388 = vld [vmem:[#allocation3 + $0x3b8] sm:$0xff]
    %v5389 = vld [vmem:[#allocation3 + $0x3c0] sm:$0xff]
    %v5390 = vld [vmem:[#allocation3 + $0x3c8] sm:$0xff]
    %v5391 = vld [vmem:[#allocation3 + $0x3d0] sm:$0xff]
    %v5392 = vld [vmem:[#allocation3 + $0x3d8] sm:$0xff]
    %v5393 = vld [vmem:[#allocation3 + $0x3e0] sm:$0xff]
    %v5394 = vld [vmem:[%s4] sm:$0xff]
    %v5395 = vld [vmem:[%s4 + $0x8] sm:$0xff]
    %5397 = vset.pattern.permute.xlu0 0
    %5398 = vperm.xlu0 %5397, %v5394
    %v5399 = vpop.permute.xlu0 %5398
    %5402 = vset.pattern.permute.xlu0 0
    %5403 = vperm.xlu0 %5402, %v5395
    %v5404 = vpop.permute.xlu0 %5403
    %v5407 = vsel %vm2446, %v5266, 0
    %v5410 = vsel %vm2446, %v5268, 0
    %5412 = vmatprep.subr.mxu0 %v5270
    %5413 = vmatpush1.msra.mxu0 %v5269
    %5414 = vmatprep.subr.mxu0 %v5275
    %5415 = vmatpush1.msra.mxu0 %v5274
    %5416 = vmatprep.subr.mxu0 %v5280
    %5417 = vmatpush1.msra.mxu0 %v5279
    %5418 = vmatprep.subr.mxu0 %v5285
    %5419 = vmatpush1.msra.mxu0 %v5284
    %5420 = vmatprep.subr.mxu0 %v5290
    %5421 = vmatpush1.msra.mxu0 %v5289
    %5422 = vmatprep.subr.mxu0 %v5295
    %5423 = vmatpush1.msra.mxu0 %v5294
    %5424 = vmatprep.subr.mxu0 %v5300
    %5425 = vmatpush1.msra.mxu0 %v5299
    %5426 = vmatprep.subr.mxu0 %v5305
    %5427 = vmatpush1.msra.mxu0 %v5304
    %5428 = vmatprep.subr.mxu0 %v5310
    %5429 = vmatpush1.msra.mxu0 %v5309
    %5430 = vmatprep.subr.mxu0 %v5315
    %5431 = vmatpush1.msra.mxu0 %v5314
    %5432 = vmatprep.subr.mxu0 %v5320
    %5433 = vmatpush1.msra.mxu0 %v5319
    %5434 = vmatprep.subr.mxu0 %v5325
    %5435 = vmatpush1.msra.mxu0 %v5324
    %5436 = vmatprep.subr.mxu0 %v5330
    %5437 = vmatpush1.msra.mxu0 %v5329
    %5438 = vmatprep.subr.mxu0 %v5335
    %5439 = vmatpush1.msra.mxu0 %v5334
    %5440 = vmatprep.subr.mxu0 %v5340
    %5441 = vmatpush1.msra.mxu0 %v5339
    %5442 = vmatprep.subr.mxu0 %v5345
    %5443 = vmatpush1.msra.mxu0 %v5344
    %5444 = vmatprep.subr.mxu0 %v5350
    %5445 = vmatpush1.msra.mxu0 %v5349
    %5446 = vmatprep.subr.mxu0 %v5355
    %5447 = vmatpush1.msra.mxu0 %v5354
    %5448 = vmatprep.subr.mxu0 %v5360
    %5449 = vmatpush1.msra.mxu0 %v5359
    %5450 = vmatprep.subr.mxu0 %v5365
    %5451 = vmatpush1.msra.mxu0 %v5364
    %5452 = vmatprep.subr.mxu0 %v5370
    %5453 = vmatpush1.msra.mxu0 %v5369
    %5454 = vmatprep.subr.mxu0 %v5375
    %5455 = vmatpush1.msra.mxu0 %v5374
    %5456 = vmatprep.subr.mxu0 %v5380
    %5457 = vmatpush1.msra.mxu0 %v5379
    %5458 = vmatprep.subr.mxu0 %v5385
    %5459 = vmatpush1.msra.mxu0 %v5384
    %5460 = vmatprep.subr.mxu0 %v5390
    %5461 = vmatpush1.msra.mxu0 %v5389
    %5462 = vmatprep.subr.mxu0 0.0
    %5463 = vmatpush1.msra.mxu0 0.0
    %5464 = vmatprep.subr.mxu0 0.0
    %5465 = vmatpush1.msra.mxu0 0.0
    %5466 = vmatprep.subr.mxu0 0.0
    %5467 = vmatpush1.msra.mxu0 0.0
    %5468 = vmatprep.subr.mxu0 0.0
    %5469 = vmatpush1.msra.mxu0 0.0
    %5470 = vmatprep.subr.mxu0 0.0
    %5471 = vmatpush1.msra.mxu0 0.0
    %5472 = vmatprep.subr.mxu0 0.0
    %5473 = vmatpush1.msra.mxu0 0.0
    %5474 = vmatprep.subr.mxu0 0.0
    %5475 = vmatpush1.msra.mxu0 0.0
    %5476 = vmatprep.mubr.f32.mxu0 %v5407
    %5477 = vmatmul.mubr.f32.gmra.mrb[0].mxu0 %v5265
    %v5478 = vpop.f32.mrb[0].mxu0
    %v5479 = vadd.f32 %v5399, %v5478
    %v5480 = vpop.f32.mrb[0].mxu0
    %v5481 = vadd.f32 %v5399, %v5480
    %5482 = vmatprep.mubr.f32.mxu0 %v5410
    %5483 = vmatmul.mubr.f32.gmra.mrb[0].mxu0 %v5267
    %v5484 = vpop.f32.mrb[0].mxu0
    %v5485 = vadd.f32 %v5404, %v5484
    %v5486 = vpop.f32.mrb[0].mxu0
    %v5487 = vadd.f32 %v5404, %v5486
    %5488 = vdwg.mxu0
    %5489 = vmatprep.subr.mxu0 %v5272
    %5490 = vmatpush1.msra.mxu0 %v5271
    %5491 = vmatprep.subr.mxu0 %v5277
    %5492 = vmatpush1.msra.mxu0 %v5276
    %5493 = vmatprep.subr.mxu0 %v5282
    %5494 = vmatpush1.msra.mxu0 %v5281
    %5495 = vmatprep.subr.mxu0 %v5287
    %5496 = vmatpush1.msra.mxu0 %v5286
    %5497 = vmatprep.subr.mxu0 %v5292
    %5498 = vmatpush1.msra.mxu0 %v5291
    %5499 = vmatprep.subr.mxu0 %v5297
    %5500 = vmatpush1.msra.mxu0 %v5296
    %5501 = vmatprep.subr.mxu0 %v5302
    %5502 = vmatpush1.msra.mxu0 %v5301
    %5503 = vmatprep.subr.mxu0 %v5307
    %5504 = vmatpush1.msra.mxu0 %v5306
    %5505 = vmatprep.subr.mxu0 %v5312
    %5506 = vmatpush1.msra.mxu0 %v5311
    %5507 = vmatprep.subr.mxu0 %v5317
    %5508 = vmatpush1.msra.mxu0 %v5316
    %5509 = vmatprep.subr.mxu0 %v5322
    %5510 = vmatpush1.msra.mxu0 %v5321
    %5511 = vmatprep.subr.mxu0 %v5327
    %5512 = vmatpush1.msra.mxu0 %v5326
    %5513 = vmatprep.subr.mxu0 %v5332
    %5514 = vmatpush1.msra.mxu0 %v5331
    %5515 = vmatprep.subr.mxu0 %v5337
    %5516 = vmatpush1.msra.mxu0 %v5336
    %5517 = vmatprep.subr.mxu0 %v5342
    %5518 = vmatpush1.msra.mxu0 %v5341
    %5519 = vmatprep.subr.mxu0 %v5347
    %5520 = vmatpush1.msra.mxu0 %v5346
    %5521 = vmatprep.subr.mxu0 %v5352
    %5522 = vmatpush1.msra.mxu0 %v5351
    %5523 = vmatprep.subr.mxu0 %v5357
    %5524 = vmatpush1.msra.mxu0 %v5356
    %5525 = vmatprep.subr.mxu0 %v5362
    %5526 = vmatpush1.msra.mxu0 %v5361
    %5527 = vmatprep.subr.mxu0 %v5367
    %5528 = vmatpush1.msra.mxu0 %v5366
    %5529 = vmatprep.subr.mxu0 %v5372
    %5530 = vmatpush1.msra.mxu0 %v5371
    %5531 = vmatprep.subr.mxu0 %v5377
    %5532 = vmatpush1.msra.mxu0 %v5376
    %5533 = vmatprep.subr.mxu0 %v5382
    %5534 = vmatpush1.msra.mxu0 %v5381
    %5535 = vmatprep.subr.mxu0 %v5387
    %5536 = vmatpush1.msra.mxu0 %v5386
    %5537 = vmatprep.subr.mxu0 %v5392
    %5538 = vmatpush1.msra.mxu0 %v5391
    %5539 = vmatprep.subr.mxu0 0.0
    %5540 = vmatpush1.msra.mxu0 0.0
    %5541 = vmatprep.subr.mxu0 0.0
    %5542 = vmatpush1.msra.mxu0 0.0
    %5543 = vmatprep.subr.mxu0 0.0
    %5544 = vmatpush1.msra.mxu0 0.0
    %5545 = vmatprep.subr.mxu0 0.0
    %5546 = vmatpush1.msra.mxu0 0.0
    %5547 = vmatprep.subr.mxu0 0.0
    %5548 = vmatpush1.msra.mxu0 0.0
    %5549 = vmatprep.subr.mxu0 0.0
    %5550 = vmatpush1.msra.mxu0 0.0
    %5551 = vmatprep.subr.mxu0 0.0
    %5552 = vmatpush1.msra.mxu0 0.0
    %5553 = vmatprep.mubr.f32.mxu0 %v5407
    %5554 = vmatmul.mubr.f32.gmra.mrb[0].mxu0 %v5265
    %v5555 = vpop.f32.mrb[0].mxu0
    %v5556 = vadd.f32 %v5399, %v5555
    %v5557 = vpop.f32.mrb[0].mxu0
    %v5558 = vadd.f32 %v5399, %v5557
    %5559 = vmatprep.mubr.f32.mxu0 %v5410
    %5560 = vmatmul.mubr.f32.gmra.mrb[0].mxu0 %v5267
    %v5561 = vpop.f32.mrb[0].mxu0
    %v5562 = vadd.f32 %v5404, %v5561
    %v5563 = vpop.f32.mrb[0].mxu0
    %v5564 = vadd.f32 %v5404, %v5563
    %5565 = vdwg.mxu0
    %5566 = vmatprep.subr.mxu0 0.0
    %5567 = vmatpush1.msra.mxu0 %v5273
    %5568 = vmatprep.subr.mxu0 0.0
    %5569 = vmatpush1.msra.mxu0 %v5278
    %5570 = vmatprep.subr.mxu0 0.0
    %5571 = vmatpush1.msra.mxu0 %v5283
    %5572 = vmatprep.subr.mxu0 0.0
    %5573 = vmatpush1.msra.mxu0 %v5288
    %5574 = vmatprep.subr.mxu0 0.0
    %5575 = vmatpush1.msra.mxu0 %v5293
    %5576 = vmatprep.subr.mxu0 0.0
    %5577 = vmatpush1.msra.mxu0 %v5298
    %5578 = vmatprep.subr.mxu0 0.0
    %5579 = vmatpush1.msra.mxu0 %v5303
    %5580 = vmatprep.subr.mxu0 0.0
    %5581 = vmatpush1.msra.mxu0 %v5308
    %5582 = vmatprep.subr.mxu0 0.0
    %5583 = vmatpush1.msra.mxu0 %v5313
    %5584 = vmatprep.subr.mxu0 0.0
    %5585 = vmatpush1.msra.mxu0 %v5318
    %5586 = vmatprep.subr.mxu0 0.0
    %5587 = vmatpush1.msra.mxu0 %v5323
    %5588 = vmatprep.subr.mxu0 0.0
    %5589 = vmatpush1.msra.mxu0 %v5328
    %5590 = vmatprep.subr.mxu0 0.0
    %5591 = vmatpush1.msra.mxu0 %v5333
    %5592 = vmatprep.subr.mxu0 0.0
    %5593 = vmatpush1.msra.mxu0 %v5338
    %5594 = vmatprep.subr.mxu0 0.0
    %5595 = vmatpush1.msra.mxu0 %v5343
    %5596 = vmatprep.subr.mxu0 0.0
    %5597 = vmatpush1.msra.mxu0 %v5348
    %5598 = vmatprep.subr.mxu0 0.0
    %5599 = vmatpush1.msra.mxu0 %v5353
    %5600 = vmatprep.subr.mxu0 0.0
    %5601 = vmatpush1.msra.mxu0 %v5358
    %5602 = vmatprep.subr.mxu0 0.0
    %5603 = vmatpush1.msra.mxu0 %v5363
    %5604 = vmatprep.subr.mxu0 0.0
    %5605 = vmatpush1.msra.mxu0 %v5368
    %5606 = vmatprep.subr.mxu0 0.0
    %5607 = vmatpush1.msra.mxu0 %v5373
    %5608 = vmatprep.subr.mxu0 0.0
    %5609 = vmatpush1.msra.mxu0 %v5378
    %5610 = vmatprep.subr.mxu0 0.0
    %5611 = vmatpush1.msra.mxu0 %v5383
    %5612 = vmatprep.subr.mxu0 0.0
    %5613 = vmatpush1.msra.mxu0 %v5388
    %5614 = vmatprep.subr.mxu0 0.0
    %5615 = vmatpush1.msra.mxu0 %v5393
    %5616 = vmatprep.subr.mxu0 0.0
    %5617 = vmatpush1.msra.mxu0 0.0
    %5618 = vmatprep.subr.mxu0 0.0
    %5619 = vmatpush1.msra.mxu0 0.0
    %5620 = vmatprep.subr.mxu0 0.0
    %5621 = vmatpush1.msra.mxu0 0.0
    %5622 = vmatprep.subr.mxu0 0.0
    %5623 = vmatpush1.msra.mxu0 0.0
    %5624 = vmatprep.subr.mxu0 0.0
    %5625 = vmatpush1.msra.mxu0 0.0
    %5626 = vmatprep.subr.mxu0 0.0
    %5627 = vmatpush1.msra.mxu0 0.0
    %5628 = vmatprep.subr.mxu0 0.0
    %5629 = vmatpush1.msra.mxu0 0.0
    %5630 = vmatprep.mubr.f32.mxu0 %v5407
    %5631 = vmatmul.mubr.f32.gmra.mrb[0].mxu0 %v5265
    %v5632 = vpop.f32.mrb[0].mxu0
    %v5633 = vadd.f32 %v5399, %v5632
    %v5634 = vpop.f32.mrb[0].mxu0
    %5635 = vmatprep.mubr.f32.mxu0 %v5410
    %5636 = vmatmul.mubr.f32.gmra.mrb[0].mxu0 %v5267
    %v5637 = vpop.f32.mrb[0].mxu0
    %v5638 = vadd.f32 %v5404, %v5637
    %v5639 = vpop.f32.mrb[0].mxu0
    %5640 = vdwg.mxu0
    %v5641 = vmax.f32 %v5479, 0.0
    %v5642 = vmax.f32 %v5481, 0.0
    %v5643 = vmax.f32 %v5556, 0.0
    %v5644 = vmax.f32 %v5558, 0.0
    %v5645 = vmax.f32 %v5633, 0.0
    %v5646 = vmax.f32 %v5485, 0.0
    %v5647 = vmax.f32 %v5487, 0.0
    %v5648 = vmax.f32 %v5562, 0.0
    %v5649 = vmax.f32 %v5564, 0.0
    %v5650 = vmax.f32 %v5638, 0.0
    %5661 = vrot.lane.b32.xlu0 %v5641, 126
    %v5662 = vpop.permute.xlu0 %5661
    %5663 = vrot.lane.b32.xlu0 %v5642, 126
    %v5664 = vpop.permute.xlu0 %5663
    %5665 = vrot.lane.b32.xlu0 %v5643, 126
    %v5666 = vpop.permute.xlu0 %5665
    %5667 = vrot.lane.b32.xlu0 %v5644, 126
    %v5668 = vpop.permute.xlu0 %5667
    %5669 = vrot.lane.b32.xlu0 %v5645, 126
    %v5670 = vpop.permute.xlu0 %5669
    %5671 = vrot.lane.b32.xlu0 %v5646, 126
    %v5672 = vpop.permute.xlu0 %5671
    %5673 = vrot.lane.b32.xlu0 %v5647, 126
    %v5674 = vpop.permute.xlu0 %5673
    %5675 = vrot.lane.b32.xlu0 %v5648, 126
    %v5676 = vpop.permute.xlu0 %5675
    %5677 = vrot.lane.b32.xlu0 %v5649, 126
    %v5678 = vpop.permute.xlu0 %5677
    %5679 = vrot.lane.b32.xlu0 %v5650, 126
    %v5680 = vpop.permute.xlu0 %5679
    %v5681 = vsel %vm361, %v5662, %v5664
    %v5682 = vsel %vm361, %v5664, %v5666
    %v5683 = vsel %vm361, %v5666, %v5668
    %v5684 = vsel %vm361, %v5668, %v5670
    %v5685 = vsel %vm361, %v5672, %v5674
    %v5686 = vsel %vm361, %v5674, %v5676
    %v5687 = vsel %vm361, %v5676, %v5678
    %v5688 = vsel %vm361, %v5678, %v5680
    %v5699 = vmax.f32 %v5641, %v5681
    %v5700 = vmax.f32 %v5642, %v5682
    %v5701 = vmax.f32 %v5643, %v5683
    %v5702 = vmax.f32 %v5644, %v5684
    %v5703 = vmax.f32 %v5645, %v5670
    %v5704 = vmax.f32 %v5646, %v5685
    %v5705 = vmax.f32 %v5647, %v5686
    %v5706 = vmax.f32 %v5648, %v5687
    %v5707 = vmax.f32 %v5649, %v5688
    %v5708 = vmax.f32 %v5650, %v5680
    %5719 = vrot.lane.b32.xlu0 %v5699, 64
    %v5720 = vpop.permute.xlu0 %5719
    %5721 = vrot.lane.b32.xlu0 %v5700, 64
    %v5722 = vpop.permute.xlu0 %5721
    %5723 = vrot.lane.b32.xlu0 %v5701, 64
    %v5724 = vpop.permute.xlu0 %5723
    %5725 = vrot.lane.b32.xlu0 %v5702, 64
    %v5726 = vpop.permute.xlu0 %5725
    %5727 = vrot.lane.b32.xlu0 %v5703, 64
    %v5728 = vpop.permute.xlu0 %5727
    %5729 = vrot.lane.b32.xlu0 %v5704, 64
    %v5730 = vpop.permute.xlu0 %5729
    %5731 = vrot.lane.b32.xlu0 %v5705, 64
    %v5732 = vpop.permute.xlu0 %5731
    %5733 = vrot.lane.b32.xlu0 %v5706, 64
    %v5734 = vpop.permute.xlu0 %5733
    %5735 = vrot.lane.b32.xlu0 %v5707, 64
    %v5736 = vpop.permute.xlu0 %5735
    %5737 = vrot.lane.b32.xlu0 %v5708, 64
    %v5738 = vpop.permute.xlu0 %5737
    %v5739 = vsel %vm752, %v5720, %v5722
    %v5740 = vsel %vm752, %v5722, %v5724
    %v5741 = vsel %vm752, %v5724, %v5726
    %v5742 = vsel %vm752, %v5726, %v5728
    %v5743 = vsel %vm752, %v5730, %v5732
    %v5744 = vsel %vm752, %v5732, %v5734
    %v5745 = vsel %vm752, %v5734, %v5736
    %v5746 = vsel %vm752, %v5736, %v5738
    %v5757 = vmax.f32 %v5699, %v5739
    %v5758 = vmax.f32 %v5700, %v5740
    %v5759 = vmax.f32 %v5701, %v5741
    %v5760 = vmax.f32 %v5702, %v5742
    %v5761 = vmax.f32 %v5703, %v5728
    %v5762 = vmax.f32 %v5704, %v5743
    %v5763 = vmax.f32 %v5705, %v5744
    %v5764 = vmax.f32 %v5706, %v5745
    %v5765 = vmax.f32 %v5707, %v5746
    %v5766 = vmax.f32 %v5708, %v5738
    %v5767 = vld [vmem:[%s5] sm:$0xff]
    %v5768 = vld [vmem:[%s5 + $0x8] sm:$0xff]
    %v5769 = vld [vmem:[%s5 + $0x10] sm:$0xff]
    %v5770 = vld [vmem:[%s5 + $0x18] sm:$0xff]
    %v5771 = vld [vmem:[%s5 + $0x20] sm:$0xff]
    %v5772 = vld [vmem:[%s5 + $0x28] sm:$0xff]
    %v5773 = vld [vmem:[%s5 + $0x30] sm:$0xff]
    %v5774 = vld [vmem:[%s5 + $0x38] sm:$0xff]
    %v5775 = vld [vmem:[%s5 + $0x40] sm:$0xff]
    %v5776 = vld [vmem:[%s5 + $0x48] sm:$0xff]
    %v5777 = vld [vmem:[%s5 + $0x50] sm:$0xff]
    %v5778 = vld [vmem:[%s5 + $0x58] sm:$0xff]
    %v5779 = vld [vmem:[%s5 + $0x60] sm:$0xff]
    %v5780 = vld [vmem:[%s5 + $0x68] sm:$0xff]
    %v5781 = vld [vmem:[%s5 + $0x70] sm:$0xff]
    %v5782 = vld [vmem:[%s5 + $0x78] sm:$0xff]
    %v5783 = vld [vmem:[%s5 + $0x80] sm:$0xff]
    %v5784 = vld [vmem:[%s5 + $0x88] sm:$0xff]
    %v5785 = vld [vmem:[%s5 + $0x90] sm:$0xff]
    %v5786 = vld [vmem:[%s5 + $0x98] sm:$0xff]
    %v5787 = vld [vmem:[%s5 + $0xa0] sm:$0xff]
    %v5788 = vld [vmem:[%s5 + $0xa8] sm:$0xff]
    %v5789 = vld [vmem:[%s5 + $0xb0] sm:$0xff]
    %v5790 = vld [vmem:[%s5 + $0xb8] sm:$0xff]
    %v5791 = vld [vmem:[%s5 + $0xc0] sm:$0xff]
    %v5792 = vld [vmem:[%s5 + $0xc8] sm:$0xff]
    %v5793 = vld [vmem:[%s5 + $0xd0] sm:$0xff]
    %v5794 = vld [vmem:[%s5 + $0xd8] sm:$0xff]
    %v5795 = vld [vmem:[%s5 + $0xe0] sm:$0xff]
    %v5796 = vld [vmem:[%s5 + $0xe8] sm:$0xff]
    %v5797 = vld [vmem:[%s5 + $0xf0] sm:$0xff]
    %v5798 = vld [vmem:[%s5 + $0xf8] sm:$0xff]
    %v5799 = vld [vmem:[%s5 + $0x100] sm:$0xff]
    %v5800 = vld [vmem:[%s5 + $0x108] sm:$0xff]
    %v5801 = vld [vmem:[%s5 + $0x110] sm:$0xff]
    %v5802 = vld [vmem:[%s5 + $0x118] sm:$0xff]
    %v5803 = vld [vmem:[%s5 + $0x120] sm:$0xff]
    %v5804 = vld [vmem:[%s5 + $0x128] sm:$0xff]
    %v5805 = vld [vmem:[%s5 + $0x130] sm:$0xff]
    %v5806 = vld [vmem:[%s5 + $0x138] sm:$0xff]
    %v5807 = vld [vmem:[%s5 + $0x140] sm:$0xff]
    %v5808 = vld [vmem:[%s5 + $0x148] sm:$0xff]
    %v5809 = vld [vmem:[%s5 + $0x150] sm:$0xff]
    %v5810 = vld [vmem:[%s5 + $0x158] sm:$0xff]
    %v5811 = vld [vmem:[%s5 + $0x160] sm:$0xff]
    %v5812 = vld [vmem:[%s5 + $0x168] sm:$0xff]
    %v5813 = vld [vmem:[%s5 + $0x170] sm:$0xff]
    %v5814 = vld [vmem:[%s5 + $0x178] sm:$0xff]
    %v5815 = vld [vmem:[%s5 + $0x180] sm:$0xff]
    %v5816 = vld [vmem:[%s5 + $0x188] sm:$0xff]
    %v5817 = vld [vmem:[%s5 + $0x190] sm:$0xff]
    %v5818 = vld [vmem:[%s5 + $0x198] sm:$0xff]
    %v5819 = vld [vmem:[%s5 + $0x1a0] sm:$0xff]
    %v5820 = vld [vmem:[%s5 + $0x1a8] sm:$0xff]
    %v5821 = vld [vmem:[%s5 + $0x1b0] sm:$0xff]
    %v5822 = vld [vmem:[%s5 + $0x1b8] sm:$0xff]
    %v5823 = vld [vmem:[%s5 + $0x1c0] sm:$0xff]
    %v5824 = vld [vmem:[%s5 + $0x1c8] sm:$0xff]
    %v5825 = vld [vmem:[%s5 + $0x1d0] sm:$0xff]
    %v5826 = vld [vmem:[%s5 + $0x1d8] sm:$0xff]
    %v5827 = vld [vmem:[%s5 + $0x1e0] sm:$0xff]
    %v5828 = vld [vmem:[%s5 + $0x1e8] sm:$0xff]
    %v5829 = vld [vmem:[%s5 + $0x1f0] sm:$0xff]
    %v5830 = vld [vmem:[%s5 + $0x1f8] sm:$0xff]
    %v5831 = vld [vmem:[%s5 + $0x200] sm:$0xff]
    %v5832 = vld [vmem:[%s5 + $0x208] sm:$0xff]
    %v5833 = vld [vmem:[%s5 + $0x210] sm:$0x1]
    %v5835 = vsel %vm2875, %v5761, 0
    %v5838 = vsel %vm2875, %v5766, 0
    %v5841 = vsel %vm2882, %v5833, 0
    %5843 = vmatprep.subr.mxu0 0.0
    %5844 = vmatpush1.msra.mxu0 %v5767
    %5845 = vmatprep.subr.mxu0 0.0
    %5846 = vmatpush1.msra.mxu0 %v5768
    %5847 = vmatprep.subr.mxu0 0.0
    %5848 = vmatpush1.msra.mxu0 %v5769
    %5849 = vmatprep.subr.mxu0 0.0
    %5850 = vmatpush1.msra.mxu0 %v5770
    %5851 = vmatprep.subr.mxu0 0.0
    %5852 = vmatpush1.msra.mxu0 %v5771
    %5853 = vmatprep.subr.mxu0 0.0
    %5854 = vmatpush1.msra.mxu0 %v5772
    %5855 = vmatprep.subr.mxu0 0.0
    %5856 = vmatpush1.msra.mxu0 %v5773
    %5857 = vmatprep.subr.mxu0 0.0
    %5858 = vmatpush1.msra.mxu0 %v5774
    %5859 = vmatprep.subr.mxu0 0.0
    %5860 = vmatpush1.msra.mxu0 %v5775
    %5861 = vmatprep.subr.mxu0 0.0
    %5862 = vmatpush1.msra.mxu0 %v5776
    %5863 = vmatprep.subr.mxu0 0.0
    %5864 = vmatpush1.msra.mxu0 %v5777
    %5865 = vmatprep.subr.mxu0 0.0
    %5866 = vmatpush1.msra.mxu0 %v5778
    %5867 = vmatprep.subr.mxu0 0.0
    %5868 = vmatpush1.msra.mxu0 %v5779
    %5869 = vmatprep.subr.mxu0 0.0
    %5870 = vmatpush1.msra.mxu0 %v5780
    %5871 = vmatprep.subr.mxu0 0.0
    %5872 = vmatpush1.msra.mxu0 %v5781
    %5873 = vmatprep.subr.mxu0 0.0
    %5874 = vmatpush1.msra.mxu0 %v5782
    %5875 = vmatprep.subr.mxu0 0.0
    %5876 = vmatpush1.msra.mxu0 %v5783
    %5877 = vmatprep.subr.mxu0 0.0
    %5878 = vmatpush1.msra.mxu0 %v5784
    %5879 = vmatprep.subr.mxu0 0.0
    %5880 = vmatpush1.msra.mxu0 %v5785
    %5881 = vmatprep.subr.mxu0 0.0
    %5882 = vmatpush1.msra.mxu0 %v5786
    %5883 = vmatprep.subr.mxu0 0.0
    %5884 = vmatpush1.msra.mxu0 %v5787
    %5885 = vmatprep.subr.mxu0 0.0
    %5886 = vmatpush1.msra.mxu0 %v5788
    %5887 = vmatprep.subr.mxu0 0.0
    %5888 = vmatpush1.msra.mxu0 %v5789
    %5889 = vmatprep.subr.mxu0 0.0
    %5890 = vmatpush1.msra.mxu0 %v5790
    %5891 = vmatprep.subr.mxu0 0.0
    %5892 = vmatpush1.msra.mxu0 %v5791
    %5893 = vmatprep.subr.mxu0 0.0
    %5894 = vmatpush1.msra.mxu0 %v5792
    %5895 = vmatprep.subr.mxu0 0.0
    %5896 = vmatpush1.msra.mxu0 %v5793
    %5897 = vmatprep.subr.mxu0 0.0
    %5898 = vmatpush1.msra.mxu0 %v5794
    %5899 = vmatprep.subr.mxu0 0.0
    %5900 = vmatpush1.msra.mxu0 %v5795
    %5901 = vmatprep.subr.mxu0 0.0
    %5902 = vmatpush1.msra.mxu0 %v5796
    %5903 = vmatprep.subr.mxu0 0.0
    %5904 = vmatpush1.msra.mxu0 %v5797
    %5905 = vmatprep.subr.mxu0 0.0
    %5906 = vmatpush1.msra.mxu0 %v5798
    %5907 = vmatprep.mubr.f32.mxu0 %v5758
    %5908 = vmatmul.mubr.f32.gmra.mrb[0].mxu0 %v5757
    %v5909 = vpop.f32.mrb[0].mxu0
    %v5910 = vadd.f32 0.0, %v5909
    %v5911 = vpop.f32.mrb[0].mxu0
    %5912 = vmatprep.mubr.f32.mxu0 %v5763
    %5913 = vmatmul.mubr.f32.gmra.mrb[0].mxu0 %v5762
    %v5914 = vpop.f32.mrb[0].mxu0
    %v5915 = vadd.f32 0.0, %v5914
    %v5916 = vpop.f32.mrb[0].mxu0
    %5917 = vdwg.mxu0
    %5918 = vmatprep.subr.mxu0 0.0
    %5919 = vmatpush1.msra.mxu0 %v5799
    %5920 = vmatprep.subr.mxu0 0.0
    %5921 = vmatpush1.msra.mxu0 %v5800
    %5922 = vmatprep.subr.mxu0 0.0
    %5923 = vmatpush1.msra.mxu0 %v5801
    %5924 = vmatprep.subr.mxu0 0.0
    %5925 = vmatpush1.msra.mxu0 %v5802
    %5926 = vmatprep.subr.mxu0 0.0
    %5927 = vmatpush1.msra.mxu0 %v5803
    %5928 = vmatprep.subr.mxu0 0.0
    %5929 = vmatpush1.msra.mxu0 %v5804
    %5930 = vmatprep.subr.mxu0 0.0
    %5931 = vmatpush1.msra.mxu0 %v5805
    %5932 = vmatprep.subr.mxu0 0.0
    %5933 = vmatpush1.msra.mxu0 %v5806
    %5934 = vmatprep.subr.mxu0 0.0
    %5935 = vmatpush1.msra.mxu0 %v5807
    %5936 = vmatprep.subr.mxu0 0.0
    %5937 = vmatpush1.msra.mxu0 %v5808
    %5938 = vmatprep.subr.mxu0 0.0
    %5939 = vmatpush1.msra.mxu0 %v5809
    %5940 = vmatprep.subr.mxu0 0.0
    %5941 = vmatpush1.msra.mxu0 %v5810
    %5942 = vmatprep.subr.mxu0 0.0
    %5943 = vmatpush1.msra.mxu0 %v5811
    %5944 = vmatprep.subr.mxu0 0.0
    %5945 = vmatpush1.msra.mxu0 %v5812
    %5946 = vmatprep.subr.mxu0 0.0
    %5947 = vmatpush1.msra.mxu0 %v5813
    %5948 = vmatprep.subr.mxu0 0.0
    %5949 = vmatpush1.msra.mxu0 %v5814
    %5950 = vmatprep.subr.mxu0 0.0
    %5951 = vmatpush1.msra.mxu0 %v5815
    %5952 = vmatprep.subr.mxu0 0.0
    %5953 = vmatpush1.msra.mxu0 %v5816
    %5954 = vmatprep.subr.mxu0 0.0
    %5955 = vmatpush1.msra.mxu0 %v5817
    %5956 = vmatprep.subr.mxu0 0.0
    %5957 = vmatpush1.msra.mxu0 %v5818
    %5958 = vmatprep.subr.mxu0 0.0
    %5959 = vmatpush1.msra.mxu0 %v5819
    %5960 = vmatprep.subr.mxu0 0.0
    %5961 = vmatpush1.msra.mxu0 %v5820
    %5962 = vmatprep.subr.mxu0 0.0
    %5963 = vmatpush1.msra.mxu0 %v5821
    %5964 = vmatprep.subr.mxu0 0.0
    %5965 = vmatpush1.msra.mxu0 %v5822
    %5966 = vmatprep.subr.mxu0 0.0
    %5967 = vmatpush1.msra.mxu0 %v5823
    %5968 = vmatprep.subr.mxu0 0.0
    %5969 = vmatpush1.msra.mxu0 %v5824
    %5970 = vmatprep.subr.mxu0 0.0
    %5971 = vmatpush1.msra.mxu0 %v5825
    %5972 = vmatprep.subr.mxu0 0.0
    %5973 = vmatpush1.msra.mxu0 %v5826
    %5974 = vmatprep.subr.mxu0 0.0
    %5975 = vmatpush1.msra.mxu0 %v5827
    %5976 = vmatprep.subr.mxu0 0.0
    %5977 = vmatpush1.msra.mxu0 %v5828
    %5978 = vmatprep.subr.mxu0 0.0
    %5979 = vmatpush1.msra.mxu0 %v5829
    %5980 = vmatprep.subr.mxu0 0.0
    %5981 = vmatpush1.msra.mxu0 %v5830
    %5982 = vmatprep.mubr.f32.mxu0 %v5760
    %5983 = vmatmul.mubr.f32.gmra.mrb[0].mxu0 %v5759
    %v5984 = vpop.f32.mrb[0].mxu0
    %v5985 = vadd.f32 %v5910, %v5984
    %v5986 = vpop.f32.mrb[0].mxu0
    %5987 = vmatprep.mubr.f32.mxu0 %v5765
    %5988 = vmatmul.mubr.f32.gmra.mrb[0].mxu0 %v5764
    %v5989 = vpop.f32.mrb[0].mxu0
    %v5990 = vadd.f32 %v5915, %v5989
    %v5991 = vpop.f32.mrb[0].mxu0
    %5992 = vdwg.mxu0
    %5993 = vmatprep.subr.mxu0 0.0
    %5994 = vmatpush1.msra.mxu0 %v5831
    %5995 = vmatprep.subr.mxu0 0.0
    %5996 = vmatpush1.msra.mxu0 %v5832
    %5997 = vmatprep.subr.mxu0 0.0
    %5998 = vmatpush1.msra.mxu0 %v5841
    %5999 = vmatprep.subr.mxu0 0.0
    %6000 = vmatpush1.msra.mxu0 0.0
    %6001 = vmatprep.subr.mxu0 0.0
    %6002 = vmatpush1.msra.mxu0 0.0
    %6003 = vmatprep.subr.mxu0 0.0
    %6004 = vmatpush1.msra.mxu0 0.0
    %6005 = vmatprep.subr.mxu0 0.0
    %6006 = vmatpush1.msra.mxu0 0.0
    %6007 = vmatprep.subr.mxu0 0.0
    %6008 = vmatpush1.msra.mxu0 0.0
    %6009 = vmatprep.subr.mxu0 0.0
    %6010 = vmatpush1.msra.mxu0 0.0
    %6011 = vmatprep.subr.mxu0 0.0
    %6012 = vmatpush1.msra.mxu0 0.0
    %6013 = vmatprep.subr.mxu0 0.0
    %6014 = vmatpush1.msra.mxu0 0.0
    %6015 = vmatprep.subr.mxu0 0.0
    %6016 = vmatpush1.msra.mxu0 0.0
    %6017 = vmatprep.subr.mxu0 0.0
    %6018 = vmatpush1.msra.mxu0 0.0
    %6019 = vmatprep.subr.mxu0 0.0
    %6020 = vmatpush1.msra.mxu0 0.0
    %6021 = vmatprep.subr.mxu0 0.0
    %6022 = vmatpush1.msra.mxu0 0.0
    %6023 = vmatprep.subr.mxu0 0.0
    %6024 = vmatpush1.msra.mxu0 0.0
    %6025 = vmatprep.subr.mxu0 0.0
    %6026 = vmatpush1.msra.mxu0 0.0
    %6027 = vmatprep.subr.mxu0 0.0
    %6028 = vmatpush1.msra.mxu0 0.0
    %6029 = vmatprep.subr.mxu0 0.0
    %6030 = vmatpush1.msra.mxu0 0.0
    %6031 = vmatprep.subr.mxu0 0.0
    %6032 = vmatpush1.msra.mxu0 0.0
    %6033 = vmatprep.subr.mxu0 0.0
    %6034 = vmatpush1.msra.mxu0 0.0
    %6035 = vmatprep.subr.mxu0 0.0
    %6036 = vmatpush1.msra.mxu0 0.0
    %6037 = vmatprep.subr.mxu0 0.0
    %6038 = vmatpush1.msra.mxu0 0.0
    %6039 = vmatprep.subr.mxu0 0.0
    %6040 = vmatpush1.msra.mxu0 0.0
    %6041 = vmatprep.subr.mxu0 0.0
    %6042 = vmatpush1.msra.mxu0 0.0
    %6043 = vmatprep.subr.mxu0 0.0
    %6044 = vmatpush1.msra.mxu0 0.0
    %6045 = vmatprep.subr.mxu0 0.0
    %6046 = vmatpush1.msra.mxu0 0.0
    %6047 = vmatprep.subr.mxu0 0.0
    %6048 = vmatpush1.msra.mxu0 0.0
    %6049 = vmatprep.subr.mxu0 0.0
    %6050 = vmatpush1.msra.mxu0 0.0
    %6051 = vmatprep.subr.mxu0 0.0
    %6052 = vmatpush1.msra.mxu0 0.0
    %6053 = vmatprep.subr.mxu0 0.0
    %6054 = vmatpush1.msra.mxu0 0.0
    %6055 = vmatprep.subr.mxu0 0.0
    %6056 = vmatpush1.msra.mxu0 0.0
    %6057 = vmatprep.mubr.f32.mxu0 0.0
    %6058 = vmatmul.mubr.f32.gmra.mrb[0].mxu0 %v5835
    %v6059 = vpop.f32.mrb[0].mxu0
    %v6060 = vadd.f32 %v5985, %v6059
    %v6061 = vpop.f32.mrb[0].mxu0
    %6062 = vmatprep.mubr.f32.mxu0 0.0
    %6063 = vmatmul.mubr.f32.gmra.mrb[0].mxu0 %v5838
    %v6064 = vpop.f32.mrb[0].mxu0
    %v6065 = vadd.f32 %v5990, %v6064
    %v6066 = vpop.f32.mrb[0].mxu0
    %6067 = vdwg.mxu0
    %6068 = vst.msk [vmem:[#allocation4 + $0x1] sm:$0x1] %vm3111, %v6060
    %v6071 = vunpack.c.l.s4 1983009808
    %v6072 = vunpack.c.0.s8 %v6071
    %v6073 = vlaneseq
    %v6074 = vshrl.u32 %v6073, 7
    %v6075 = vsub.s32 %v6072, %v6074
    %v6076 = vrot.slane %v6060, %v6075
    %v6077 = vrot.slane %v6076, 7
    %v6078 = vrot.slane %v6077, 2
    %6079 = vrot.lane.b32.xlu0 %v6078, 25
    %v6080 = vpop.permute.xlu0 %6079
    %6082 = vst.msk [vmem:[#allocation4 + $0x1] sm:$0x1] %vm3126, %v6080
    %v6083 = vcombine.high %v6076, %v6076
    %6084 = vrot.lane.b32.xlu0 %v6083, 50
    %v6085 = vpop.permute.xlu0 %6084
    %6087 = vst.msk [vmem:[#allocation4 + $0x1] sm:$0x1] %vm3132, %v6085
    %v6088 = vrot.slane %v6083, 7
    %v6089 = vrot.slane %v6088, 2
    %6090 = vrot.lane.b32.xlu0 %v6089, 75
    %v6091 = vpop.permute.xlu0 %6090
    %6093 = vst.msk [vmem:[#allocation4 + $0x1] sm:$0x1] %vm3139, %v6091
    %v6094 = vcombine.high %v6060, %v6060
    %v6096 = vunpack.c.l.s4 1983009808
    %v6097 = vunpack.c.0.s8 %v6096
    %v6098 = vlaneseq
    %v6099 = vshrl.u32 %v6098, 7
    %v6100 = vsub.s32 %v6097, %v6099
    %v6101 = vrot.slane %v6094, %v6100
    %6102 = vrot.lane.b32.xlu0 %v6101, 100
    %v6103 = vpop.permute.xlu0 %6102
    %6105 = vst.msk [vmem:[#allocation4 + $0x1] sm:$0x1] %vm3152, %v6103
    %v6106 = vrot.slane %v6101, 7
    %v6107 = vrot.slane %v6106, 2
    %6108 = vrot.lane.b32.xlu0 %v6107, 125
    %v6109 = vpop.permute.xlu0 %6108
    %v6110 = vrot.slane %v6109, 6
    %v6111 = vsel %vm408, %v6110, %v6109
    %6113 = vst.msk [vmem:[#allocation4 + $0x1] sm:$0x5] %vm3163, %v6111
    %v6114 = vcombine.high %v6101, %v6101
    %6115 = vrot.lane.b32.xlu0 %v6114, 22
    %v6116 = vpop.permute.xlu0 %6115
    %6118 = vst.msk [vmem:[#allocation4 + $0x3] sm:$0x1] %vm3169, %v6116
    %v6119 = vrot.slane %v6114, 7
    %v6120 = vrot.slane %v6119, 2
    %6121 = vrot.lane.b32.xlu0 %v6120, 47
    %v6122 = vpop.permute.xlu0 %6121
    %6124 = vst.msk [vmem:[#allocation4 + $0x3] sm:$0x1] %vm3176, %v6122
    %v6127 = vunpack.c.l.s4 1983009808
    %v6128 = vunpack.c.0.s8 %v6127
    %v6129 = vlaneseq
    %v6130 = vshrl.u32 %v6129, 7
    %v6131 = vsub.s32 %v6128, %v6130
    %v6132 = vrot.slane %v6065, %v6131
    %6133 = vrot.lane.b32.xlu0 %v6132, 72
    %v6134 = vpop.permute.xlu0 %6133
    %6136 = vst.msk [vmem:[#allocation4 + $0x3] sm:$0x1] %vm3189, %v6134
    %v6137 = vrot.slane %v6132, 7
    %v6138 = vrot.slane %v6137, 2
    %6139 = vrot.lane.b32.xlu0 %v6138, 97
    %v6140 = vpop.permute.xlu0 %6139
    %6142 = vst.msk [vmem:[#allocation4 + $0x3] sm:$0x1] %vm3196, %v6140
    %v6143 = vcombine.high %v6132, %v6132
    %6144 = vrot.lane.b32.xlu0 %v6143, 122
    %v6145 = vpop.permute.xlu0 %6144
    %v6146 = vrot.slane %v6145, 6
    %v6147 = vsel %vm1991, %v6146, %v6145
    %6149 = vst.msk [vmem:[#allocation4 + $0x3] sm:$0x5] %vm3206, %v6147
    %v6150 = vrot.slane %v6143, 7
    %v6151 = vrot.slane %v6150, 2
    %6152 = vrot.lane.b32.xlu0 %v6151, 19
    %v6153 = vpop.permute.xlu0 %6152
    %6155 = vst.msk [vmem:[#allocation4 + $0x5] sm:$0x1] %vm3213, %v6153
    %v6156 = vcombine.high %v6065, %v6065
    %v6158 = vunpack.c.l.s4 1983009808
    %v6159 = vunpack.c.0.s8 %v6158
    %v6160 = vlaneseq
    %v6161 = vshrl.u32 %v6160, 7
    %v6162 = vsub.s32 %v6159, %v6161
    %v6163 = vrot.slane %v6156, %v6162
    %6164 = vrot.lane.b32.xlu0 %v6163, 44
    %v6165 = vpop.permute.xlu0 %6164
    %6167 = vst.msk [vmem:[#allocation4 + $0x5] sm:$0x1] %vm3226, %v6165
    %v6168 = vrot.slane %v6163, 7
    %v6169 = vrot.slane %v6168, 2
    %6170 = vrot.lane.b32.xlu0 %v6169, 69
    %v6171 = vpop.permute.xlu0 %6170
    %6173 = vst.msk [vmem:[#allocation4 + $0x5] sm:$0x1] %vm3233, %v6171
    %v6174 = vcombine.high %v6163, %v6163
    %6175 = vrot.lane.b32.xlu0 %v6174, 94
    %v6176 = vpop.permute.xlu0 %6175
    %6178 = vst.msk [vmem:[#allocation4 + $0x5] sm:$0x1] %vm3239, %v6176
    %v6179 = vrot.slane %v6174, 7
    %v6180 = vrot.slane %v6179, 2
    %6181 = vrot.lane.b32.xlu0 %v6180, 119
    %v6182 = vpop.permute.xlu0 %6181
    %v6183 = vrot.slane %v6182, 6
    %v6184 = vsel %vm3246, %v6183, %v6182
    %6186 = vst.msk [vmem:[#allocation4 + $0x5] sm:$0x5] %vm3251, %v6184
    %v6187 = vld [vmem:[#allocation4] sm:$0xff]
    %v6188 = vld [vmem:[%s6] sm:$0xff]
    %v6189 = vld [vmem:[%s6 + $0x8] sm:$0xff]
    %v6190 = vld [vmem:[%s6 + $0x10] sm:$0xff]
    %v6191 = vld [vmem:[%s6 + $0x18] sm:$0xff]
    %v6192 = vld [vmem:[%s6 + $0x20] sm:$0xff]
    %v6193 = vld [vmem:[%s6 + $0x28] sm:$0xff]
    %v6194 = vld [vmem:[%s6 + $0x30] sm:$0xff]
    %v6195 = vld [vmem:[%s6 + $0x38] sm:$0xff]
    %v6196 = vld [vmem:[%s6 + $0x40] sm:$0xff]
    %v6197 = vld [vmem:[%s6 + $0x48] sm:$0xff]
    %v6198 = vld [vmem:[%s6 + $0x50] sm:$0xff]
    %v6199 = vld [vmem:[%s6 + $0x58] sm:$0xff]
    %v6200 = vld [vmem:[%s6 + $0x60] sm:$0xff]
    %v6201 = vld [vmem:[%s6 + $0x68] sm:$0xff]
    %v6202 = vld [vmem:[%s6 + $0x70] sm:$0xff]
    %v6203 = vld [vmem:[%s6 + $0x78] sm:$0xff]
    %v6204 = vld [vmem:[%s6 + $0x80] sm:$0xff]
    %v6205 = vld [vmem:[%s6 + $0x88] sm:$0xff]
    %v6206 = vld [vmem:[%s6 + $0x90] sm:$0xff]
    %v6207 = vld [vmem:[%s6 + $0x98] sm:$0xff]
    %v6208 = vld [vmem:[%s6 + $0xa0] sm:$0xff]
    %v6209 = vld [vmem:[%s6 + $0xa8] sm:$0xff]
    %v6210 = vld [vmem:[%s6 + $0xb0] sm:$0xff]
    %v6211 = vld [vmem:[%s6 + $0xb8] sm:$0xff]
    %v6212 = vld [vmem:[%s6 + $0xc0] sm:$0xff]
    %v6213 = vld [vmem:[%s6 + $0xc8] sm:$0xff]
    %v6214 = vld [vmem:[%s6 + $0xd0] sm:$0xff]
    %v6215 = vld [vmem:[%s6 + $0xd8] sm:$0xff]
    %v6216 = vld [vmem:[%s6 + $0xe0] sm:$0xff]
    %v6217 = vld [vmem:[%s6 + $0xe8] sm:$0xff]
    %v6218 = vld [vmem:[%s6 + $0xf0] sm:$0xff]
    %v6219 = vld [vmem:[%s6 + $0xf8] sm:$0xff]
    %v6220 = vld [vmem:[%s6 + $0x100] sm:$0xff]
    %v6221 = vld [vmem:[%s6 + $0x108] sm:$0xff]
    %v6222 = vld [vmem:[%s6 + $0x110] sm:$0xff]
    %v6223 = vld [vmem:[%s6 + $0x118] sm:$0xff]
    %v6224 = vld [vmem:[%s6 + $0x120] sm:$0xff]
    %v6225 = vld [vmem:[%s6 + $0x128] sm:$0xff]
    %v6226 = vld [vmem:[%s6 + $0x130] sm:$0xff]
    %v6227 = vld [vmem:[%s6 + $0x138] sm:$0xff]
    %v6228 = vld [vmem:[%s6 + $0x140] sm:$0xff]
    %v6229 = vld [vmem:[%s6 + $0x148] sm:$0xff]
    %v6230 = vld [vmem:[%s6 + $0x150] sm:$0xff]
    %v6231 = vld [vmem:[%s6 + $0x158] sm:$0xff]
    %v6232 = vld [vmem:[%s6 + $0x160] sm:$0xff]
    %v6233 = vld [vmem:[%s6 + $0x168] sm:$0xff]
    %v6234 = vld [vmem:[%s6 + $0x170] sm:$0xff]
    %v6235 = vld [vmem:[%s6 + $0x178] sm:$0xff]
    %v6236 = vld [vmem:[%s6 + $0x180] sm:$0xff]
    %v6237 = vld [vmem:[%s6 + $0x188] sm:$0xff]
    %v6238 = vld [vmem:[%s7] sm:$0x1]
    %v6240 = vlaneseq
    %v6241 = vshrl.u32 %v6240, 7
    %v6242 = vsub.s32 0, %v6241
    %v6243 = vrot.slane %v6238, %v6242
    %v6246 = vcombine.high %v6187, %v6187
    %v6248 = vunpack.c.l.s4 1983009808
    %v6249 = vunpack.c.0.s8 %v6248
    %v6250 = vlaneseq
    %v6251 = vshrl.u32 %v6250, 7
    %v6252 = vsub.s32 %v6249, %v6251
    %v6253 = vrot.slane %v6187, %v6252
    %v6255 = vunpack.c.l.s4 1983009808
    %v6256 = vunpack.c.0.s8 %v6255
    %v6257 = vlaneseq
    %v6258 = vshrl.u32 %v6257, 7
    %v6259 = vsub.s32 %v6256, %v6258
    %v6260 = vrot.slane %v6246, %v6259
    %v6261 = vcombine.high %v6253, %v6253
    %v6262 = vcombine.high %v6260, %v6260
    %vm6266 = vcmask 130048
    %v6267 = vsel %vm6266, %v6262, 0
    %6269 = vmatprep.subr.mxu0 0.0
    %6270 = vmatpush1.msra.mxu0 %v6188
    %6271 = vmatprep.subr.mxu0 0.0
    %6272 = vmatpush1.msra.mxu0 %v6189
    %6273 = vmatprep.subr.mxu0 0.0
    %6274 = vmatpush1.msra.mxu0 %v6190
    %6275 = vmatprep.subr.mxu0 0.0
    %6276 = vmatpush1.msra.mxu0 %v6191
    %6277 = vmatprep.subr.mxu0 0.0
    %6278 = vmatpush1.msra.mxu0 %v6192
    %6279 = vmatprep.subr.mxu0 0.0
    %6280 = vmatpush1.msra.mxu0 %v6193
    %6281 = vmatprep.subr.mxu0 0.0
    %6282 = vmatpush1.msra.mxu0 %v6194
    %6283 = vmatprep.subr.mxu0 0.0
    %6284 = vmatpush1.msra.mxu0 %v6195
    %6285 = vmatprep.subr.mxu0 0.0
    %6286 = vmatpush1.msra.mxu0 %v6196
    %6287 = vmatprep.subr.mxu0 0.0
    %6288 = vmatpush1.msra.mxu0 %v6197
    %6289 = vmatprep.subr.mxu0 0.0
    %6290 = vmatpush1.msra.mxu0 %v6198
    %6291 = vmatprep.subr.mxu0 0.0
    %6292 = vmatpush1.msra.mxu0 %v6199
    %6293 = vmatprep.subr.mxu0 0.0
    %6294 = vmatpush1.msra.mxu0 %v6200
    %6295 = vmatprep.subr.mxu0 0.0
    %6296 = vmatpush1.msra.mxu0 %v6201
    %6297 = vmatprep.subr.mxu0 0.0
    %6298 = vmatpush1.msra.mxu0 %v6202
    %6299 = vmatprep.subr.mxu0 0.0
    %6300 = vmatpush1.msra.mxu0 %v6203
    %6301 = vmatprep.subr.mxu0 0.0
    %6302 = vmatpush1.msra.mxu0 %v6204
    %6303 = vmatprep.subr.mxu0 0.0
    %6304 = vmatpush1.msra.mxu0 %v6205
    %6305 = vmatprep.subr.mxu0 0.0
    %6306 = vmatpush1.msra.mxu0 %v6206
    %6307 = vmatprep.subr.mxu0 0.0
    %6308 = vmatpush1.msra.mxu0 %v6207
    %6309 = vmatprep.subr.mxu0 0.0
    %6310 = vmatpush1.msra.mxu0 %v6208
    %6311 = vmatprep.subr.mxu0 0.0
    %6312 = vmatpush1.msra.mxu0 %v6209
    %6313 = vmatprep.subr.mxu0 0.0
    %6314 = vmatpush1.msra.mxu0 %v6210
    %6315 = vmatprep.subr.mxu0 0.0
    %6316 = vmatpush1.msra.mxu0 %v6211
    %6317 = vmatprep.subr.mxu0 0.0
    %6318 = vmatpush1.msra.mxu0 %v6212
    %6319 = vmatprep.subr.mxu0 0.0
    %6320 = vmatpush1.msra.mxu0 %v6213
    %6321 = vmatprep.subr.mxu0 0.0
    %6322 = vmatpush1.msra.mxu0 %v6214
    %6323 = vmatprep.subr.mxu0 0.0
    %6324 = vmatpush1.msra.mxu0 %v6215
    %6325 = vmatprep.subr.mxu0 0.0
    %6326 = vmatpush1.msra.mxu0 %v6216
    %6327 = vmatprep.subr.mxu0 0.0
    %6328 = vmatpush1.msra.mxu0 %v6217
    %6329 = vmatprep.subr.mxu0 0.0
    %6330 = vmatpush1.msra.mxu0 %v6218
    %6331 = vmatprep.subr.mxu0 0.0
    %6332 = vmatpush1.msra.mxu0 %v6219
    %6333 = vmatprep.mubr.f32.mxu0 %v6261
    %6334 = vmatmul.mubr.f32.gmra.mrb[0].mxu0 %v6253
    %v6335 = vpop.f32.mrb[0].mxu0
    %v6336 = vadd.f32 %v6243, %v6335
    %v6337 = vpop.f32.mrb[0].mxu0
    %6338 = vdwg.mxu0
    %6339 = vmatprep.subr.mxu0 0.0
    %6340 = vmatpush1.msra.mxu0 %v6220
    %6341 = vmatprep.subr.mxu0 0.0
    %6342 = vmatpush1.msra.mxu0 %v6221
    %6343 = vmatprep.subr.mxu0 0.0
    %6344 = vmatpush1.msra.mxu0 %v6222
    %6345 = vmatprep.subr.mxu0 0.0
    %6346 = vmatpush1.msra.mxu0 %v6223
    %6347 = vmatprep.subr.mxu0 0.0
    %6348 = vmatpush1.msra.mxu0 %v6224
    %6349 = vmatprep.subr.mxu0 0.0
    %6350 = vmatpush1.msra.mxu0 %v6225
    %6351 = vmatprep.subr.mxu0 0.0
    %6352 = vmatpush1.msra.mxu0 %v6226
    %6353 = vmatprep.subr.mxu0 0.0
    %6354 = vmatpush1.msra.mxu0 %v6227
    %6355 = vmatprep.subr.mxu0 0.0
    %6356 = vmatpush1.msra.mxu0 %v6228
    %6357 = vmatprep.subr.mxu0 0.0
    %6358 = vmatpush1.msra.mxu0 %v6229
    %6359 = vmatprep.subr.mxu0 0.0
    %6360 = vmatpush1.msra.mxu0 %v6230
    %6361 = vmatprep.subr.mxu0 0.0
    %6362 = vmatpush1.msra.mxu0 %v6231
    %6363 = vmatprep.subr.mxu0 0.0
    %6364 = vmatpush1.msra.mxu0 %v6232
    %6365 = vmatprep.subr.mxu0 0.0
    %6366 = vmatpush1.msra.mxu0 %v6233
    %6367 = vmatprep.subr.mxu0 0.0
    %6368 = vmatpush1.msra.mxu0 %v6234
    %6369 = vmatprep.subr.mxu0 0.0
    %6370 = vmatpush1.msra.mxu0 %v6235
    %6371 = vmatprep.subr.mxu0 0.0
    %6372 = vmatpush1.msra.mxu0 %v6236
    %6373 = vmatprep.subr.mxu0 0.0
    %6374 = vmatpush1.msra.mxu0 %v6237
    %6375 = vmatprep.subr.mxu0 0.0
    %6376 = vmatpush1.msra.mxu0 0.0
    %6377 = vmatprep.subr.mxu0 0.0
    %6378 = vmatpush1.msra.mxu0 0.0
    %6379 = vmatprep.subr.mxu0 0.0
    %6380 = vmatpush1.msra.mxu0 0.0
    %6381 = vmatprep.subr.mxu0 0.0
    %6382 = vmatpush1.msra.mxu0 0.0
    %6383 = vmatprep.subr.mxu0 0.0
    %6384 = vmatpush1.msra.mxu0 0.0
    %6385 = vmatprep.subr.mxu0 0.0
    %6386 = vmatpush1.msra.mxu0 0.0
    %6387 = vmatprep.subr.mxu0 0.0
    %6388 = vmatpush1.msra.mxu0 0.0
    %6389 = vmatprep.subr.mxu0 0.0
    %6390 = vmatpush1.msra.mxu0 0.0
    %6391 = vmatprep.subr.mxu0 0.0
    %6392 = vmatpush1.msra.mxu0 0.0
    %6393 = vmatprep.subr.mxu0 0.0
    %6394 = vmatpush1.msra.mxu0 0.0
    %6395 = vmatprep.subr.mxu0 0.0
    %6396 = vmatpush1.msra.mxu0 0.0
    %6397 = vmatprep.subr.mxu0 0.0
    %6398 = vmatpush1.msra.mxu0 0.0
    %6399 = vmatprep.subr.mxu0 0.0
    %6400 = vmatpush1.msra.mxu0 0.0
    %6401 = vmatprep.subr.mxu0 0.0
    %6402 = vmatpush1.msra.mxu0 0.0
    %6403 = vmatprep.mubr.f32.mxu0 %v6267
    %6404 = vmatmul.mubr.f32.gmra.mrb[0].mxu0 %v6260
    %v6405 = vpop.f32.mrb[0].mxu0
    %v6406 = vadd.f32 %v6336, %v6405
    %v6407 = vpop.f32.mrb[0].mxu0
    %6408 = vdwg.mxu0
    %v6409 = vmax.f32 %v6406, 0.0
    %v6410 = vld [vmem:[%s8] sm:$0xff]
    %v6411 = vld [vmem:[%s8 + $0x8] sm:$0xff]
    %v6412 = vld [vmem:[%s8 + $0x10] sm:$0xff]
    %v6413 = vld [vmem:[%s8 + $0x18] sm:$0xff]
    %v6414 = vld [vmem:[%s8 + $0x20] sm:$0xff]
    %v6415 = vld [vmem:[%s8 + $0x28] sm:$0xff]
    %v6416 = vld [vmem:[%s8 + $0x30] sm:$0xff]
    %v6417 = vld [vmem:[%s8 + $0x38] sm:$0xff]
    %v6418 = vld [vmem:[%s8 + $0x40] sm:$0xff]
    %v6419 = vld [vmem:[%s8 + $0x48] sm:$0xff]
    %v6420 = vld [vmem:[%s8 + $0x50] sm:$0xff]
    %v6421 = vld [vmem:[%s8 + $0x58] sm:$0xff]
    %v6422 = vld [vmem:[%s8 + $0x60] sm:$0xff]
    %v6423 = vld [vmem:[%s8 + $0x68] sm:$0xff]
    %v6424 = vld [vmem:[%s8 + $0x70] sm:$0xff]
    %v6425 = vld [vmem:[%s9] sm:$0x1]
    %v6427 = vlaneseq
    %v6428 = vshrl.u32 %v6427, 7
    %v6429 = vsub.s32 0, %v6428
    %v6430 = vrot.slane %v6425, %v6429
    %v6433 = vsel %vm2016, %v6409, 0
    %6435 = vmatprep.subr.mxu0 0.0
    %6436 = vmatpush1.msra.mxu0 %v6410
    %6437 = vmatprep.subr.mxu0 0.0
    %6438 = vmatpush1.msra.mxu0 %v6411
    %6439 = vmatprep.subr.mxu0 0.0
    %6440 = vmatpush1.msra.mxu0 %v6412
    %6441 = vmatprep.subr.mxu0 0.0
    %6442 = vmatpush1.msra.mxu0 %v6413
    %6443 = vmatprep.subr.mxu0 0.0
    %6444 = vmatpush1.msra.mxu0 %v6414
    %6445 = vmatprep.subr.mxu0 0.0
    %6446 = vmatpush1.msra.mxu0 %v6415
    %6447 = vmatprep.subr.mxu0 0.0
    %6448 = vmatpush1.msra.mxu0 %v6416
    %6449 = vmatprep.subr.mxu0 0.0
    %6450 = vmatpush1.msra.mxu0 %v6417
    %6451 = vmatprep.subr.mxu0 0.0
    %6452 = vmatpush1.msra.mxu0 %v6418
    %6453 = vmatprep.subr.mxu0 0.0
    %6454 = vmatpush1.msra.mxu0 %v6419
    %6455 = vmatprep.subr.mxu0 0.0
    %6456 = vmatpush1.msra.mxu0 %v6420
    %6457 = vmatprep.subr.mxu0 0.0
    %6458 = vmatpush1.msra.mxu0 %v6421
    %6459 = vmatprep.subr.mxu0 0.0
    %6460 = vmatpush1.msra.mxu0 %v6422
    %6461 = vmatprep.subr.mxu0 0.0
    %6462 = vmatpush1.msra.mxu0 %v6423
    %6463 = vmatprep.subr.mxu0 0.0
    %6464 = vmatpush1.msra.mxu0 %v6424
    %6465 = vmatprep.subr.mxu0 0.0
    %6466 = vmatpush1.msra.mxu0 0.0
    %6467 = vmatprep.subr.mxu0 0.0
    %6468 = vmatpush1.msra.mxu0 0.0
    %6469 = vmatprep.subr.mxu0 0.0
    %6470 = vmatpush1.msra.mxu0 0.0
    %6471 = vmatprep.subr.mxu0 0.0
    %6472 = vmatpush1.msra.mxu0 0.0
    %6473 = vmatprep.subr.mxu0 0.0
    %6474 = vmatpush1.msra.mxu0 0.0
    %6475 = vmatprep.subr.mxu0 0.0
    %6476 = vmatpush1.msra.mxu0 0.0
    %6477 = vmatprep.subr.mxu0 0.0
    %6478 = vmatpush1.msra.mxu0 0.0
    %6479 = vmatprep.subr.mxu0 0.0
    %6480 = vmatpush1.msra.mxu0 0.0
    %6481 = vmatprep.subr.mxu0 0.0
    %6482 = vmatpush1.msra.mxu0 0.0
    %6483 = vmatprep.subr.mxu0 0.0
    %6484 = vmatpush1.msra.mxu0 0.0
    %6485 = vmatprep.subr.mxu0 0.0
    %6486 = vmatpush1.msra.mxu0 0.0
    %6487 = vmatprep.subr.mxu0 0.0
    %6488 = vmatpush1.msra.mxu0 0.0
    %6489 = vmatprep.subr.mxu0 0.0
    %6490 = vmatpush1.msra.mxu0 0.0
    %6491 = vmatprep.subr.mxu0 0.0
    %6492 = vmatpush1.msra.mxu0 0.0
    %6493 = vmatprep.subr.mxu0 0.0
    %6494 = vmatpush1.msra.mxu0 0.0
    %6495 = vmatprep.subr.mxu0 0.0
    %6496 = vmatpush1.msra.mxu0 0.0
    %6497 = vmatprep.subr.mxu0 0.0
    %6498 = vmatpush1.msra.mxu0 0.0
    %6499 = vmatprep.mubr.f32.mxu0 0.0
    %6500 = vmatmul.mubr.f32.gmra.mrb[0].mxu0 %v6433
    %v6501 = vpop.f32.mrb[0].mxu0
    %v6502 = vadd.f32 %v6430, %v6501
    %v6503 = vpop.f32.mrb[0].mxu0
    %6504 = vdwg.mxu0
    %v6505 = vmax.f32 %v6502, 0.0
    %v6506 = vld [vmem:[%s10] sm:$0xff]
    %v6507 = vld [vmem:[%s10 + $0x8] sm:$0xff]
    %v6508 = vld [vmem:[%s10 + $0x10] sm:$0xff]
    %v6509 = vld [vmem:[%s10 + $0x18] sm:$0xff]
    %v6510 = vld [vmem:[%s10 + $0x20] sm:$0xff]
    %v6511 = vld [vmem:[%s10 + $0x28] sm:$0xff]
    %v6512 = vld [vmem:[%s10 + $0x30] sm:$0xff]
    %v6513 = vld [vmem:[%s10 + $0x38] sm:$0xff]
    %v6514 = vld [vmem:[%s10 + $0x40] sm:$0xff]
    %v6515 = vld [vmem:[%s10 + $0x48] sm:$0xff]
    %v6516 = vld [vmem:[%s10 + $0x50] sm:$0xf]
    %v6517 = vld [vmem:[%s11] sm:$0x1]
    %v6519 = vlaneseq
    %v6520 = vshrl.u32 %v6519, 7
    %v6521 = vsub.s32 0, %v6520
    %v6522 = vrot.slane %v6517, %v6521
    %vm6524 = vcmask 687104
    %v6526 = vsel %vm6524, %v6505, 0
    %v6529 = vsel %vm1528, %v6516, 0
    %6531 = vmatprep.subr.mxu0 0.0
    %6532 = vmatpush1.msra.mxu0 %v6506
    %6533 = vmatprep.subr.mxu0 0.0
    %6534 = vmatpush1.msra.mxu0 %v6507
    %6535 = vmatprep.subr.mxu0 0.0
    %6536 = vmatpush1.msra.mxu0 %v6508
    %6537 = vmatprep.subr.mxu0 0.0
    %6538 = vmatpush1.msra.mxu0 %v6509
    %6539 = vmatprep.subr.mxu0 0.0
    %6540 = vmatpush1.msra.mxu0 %v6510
    %6541 = vmatprep.subr.mxu0 0.0
    %6542 = vmatpush1.msra.mxu0 %v6511
    %6543 = vmatprep.subr.mxu0 0.0
    %6544 = vmatpush1.msra.mxu0 %v6512
    %6545 = vmatprep.subr.mxu0 0.0
    %6546 = vmatpush1.msra.mxu0 %v6513
    %6547 = vmatprep.subr.mxu0 0.0
    %6548 = vmatpush1.msra.mxu0 %v6514
    %6549 = vmatprep.subr.mxu0 0.0
    %6550 = vmatpush1.msra.mxu0 %v6515
    %6551 = vmatprep.subr.mxu0 0.0
    %6552 = vmatpush1.msra.mxu0 %v6529
    %6553 = vmatprep.subr.mxu0 0.0
    %6554 = vmatpush1.msra.mxu0 0.0
    %6555 = vmatprep.subr.mxu0 0.0
    %6556 = vmatpush1.msra.mxu0 0.0
    %6557 = vmatprep.subr.mxu0 0.0
    %6558 = vmatpush1.msra.mxu0 0.0
    %6559 = vmatprep.subr.mxu0 0.0
    %6560 = vmatpush1.msra.mxu0 0.0
    %6561 = vmatprep.subr.mxu0 0.0
    %6562 = vmatpush1.msra.mxu0 0.0
    %6563 = vmatprep.subr.mxu0 0.0
    %6564 = vmatpush1.msra.mxu0 0.0
    %6565 = vmatprep.subr.mxu0 0.0
    %6566 = vmatpush1.msra.mxu0 0.0
    %6567 = vmatprep.subr.mxu0 0.0
    %6568 = vmatpush1.msra.mxu0 0.0
    %6569 = vmatprep.subr.mxu0 0.0
    %6570 = vmatpush1.msra.mxu0 0.0
    %6571 = vmatprep.subr.mxu0 0.0
    %6572 = vmatpush1.msra.mxu0 0.0
    %6573 = vmatprep.subr.mxu0 0.0
    %6574 = vmatpush1.msra.mxu0 0.0
    %6575 = vmatprep.subr.mxu0 0.0
    %6576 = vmatpush1.msra.mxu0 0.0
    %6577 = vmatprep.subr.mxu0 0.0
    %6578 = vmatpush1.msra.mxu0 0.0
    %6579 = vmatprep.subr.mxu0 0.0
    %6580 = vmatpush1.msra.mxu0 0.0
    %6581 = vmatprep.subr.mxu0 0.0
    %6582 = vmatpush1.msra.mxu0 0.0
    %6583 = vmatprep.subr.mxu0 0.0
    %6584 = vmatpush1.msra.mxu0 0.0
    %6585 = vmatprep.subr.mxu0 0.0
    %6586 = vmatpush1.msra.mxu0 0.0
    %6587 = vmatprep.subr.mxu0 0.0
    %6588 = vmatpush1.msra.mxu0 0.0
    %6589 = vmatprep.subr.mxu0 0.0
    %6590 = vmatpush1.msra.mxu0 0.0
    %6591 = vmatprep.subr.mxu0 0.0
    %6592 = vmatpush1.msra.mxu0 0.0
    %6593 = vmatprep.subr.mxu0 0.0
    %6594 = vmatpush1.msra.mxu0 0.0
    %6595 = vmatprep.mubr.f32.mxu0 0.0
    %6596 = vmatmul.mubr.f32.gmra.mrb[0].mxu0 %v6526
    %v6597 = vpop.f32.mrb[0].mxu0
    %v6598 = vadd.f32 %v6522, %v6597
    %v6599 = vpop.f32.mrb[0].mxu0
    %6600 = vdwg.mxu0
    %v6601 = vmax.f32 %v6598, 0.0
    %v6602 = vld [vmem:[%s12] sm:$0xff]
    %v6603 = vld [vmem:[%s12 + $0x8] sm:$0x3]
    %v6604 = vld [vmem:[%s13] sm:$0x1]
    %v6606 = vlaneseq
    %v6607 = vshrl.u32 %v6606, 7
    %v6608 = vsub.s32 0, %v6607
    %v6609 = vrot.slane %v6604, %v6608
    %vm6611 = vcmask 80896
    %v6613 = vsel %vm6611, %v6601, 0
    %vm6615 = vcmask 1041408
    %v6617 = vsel %vm6615, %v6603, 0
    %6619 = vmatprep.subr.mxu0 0.0
    %6620 = vmatpush1.msra.mxu0 %v6602
    %6621 = vmatprep.subr.mxu0 0.0
    %6622 = vmatpush1.msra.mxu0 %v6617
    %6623 = vmatprep.subr.mxu0 0.0
    %6624 = vmatpush1.msra.mxu0 0.0
    %6625 = vmatprep.subr.mxu0 0.0
    %6626 = vmatpush1.msra.mxu0 0.0
    %6627 = vmatprep.subr.mxu0 0.0
    %6628 = vmatpush1.msra.mxu0 0.0
    %6629 = vmatprep.subr.mxu0 0.0
    %6630 = vmatpush1.msra.mxu0 0.0
    %6631 = vmatprep.subr.mxu0 0.0
    %6632 = vmatpush1.msra.mxu0 0.0
    %6633 = vmatprep.subr.mxu0 0.0
    %6634 = vmatpush1.msra.mxu0 0.0
    %6635 = vmatprep.subr.mxu0 0.0
    %6636 = vmatpush1.msra.mxu0 0.0
    %6637 = vmatprep.subr.mxu0 0.0
    %6638 = vmatpush1.msra.mxu0 0.0
    %6639 = vmatprep.subr.mxu0 0.0
    %6640 = vmatpush1.msra.mxu0 0.0
    %6641 = vmatprep.subr.mxu0 0.0
    %6642 = vmatpush1.msra.mxu0 0.0
    %6643 = vmatprep.subr.mxu0 0.0
    %6644 = vmatpush1.msra.mxu0 0.0
    %6645 = vmatprep.subr.mxu0 0.0
    %6646 = vmatpush1.msra.mxu0 0.0
    %6647 = vmatprep.subr.mxu0 0.0
    %6648 = vmatpush1.msra.mxu0 0.0
    %6649 = vmatprep.subr.mxu0 0.0
    %6650 = vmatpush1.msra.mxu0 0.0
    %6651 = vmatprep.subr.mxu0 0.0
    %6652 = vmatpush1.msra.mxu0 0.0
    %6653 = vmatprep.subr.mxu0 0.0
    %6654 = vmatpush1.msra.mxu0 0.0
    %6655 = vmatprep.subr.mxu0 0.0
    %6656 = vmatpush1.msra.mxu0 0.0
    %6657 = vmatprep.subr.mxu0 0.0
    %6658 = vmatpush1.msra.mxu0 0.0
    %6659 = vmatprep.subr.mxu0 0.0
    %6660 = vmatpush1.msra.mxu0 0.0
    %6661 = vmatprep.subr.mxu0 0.0
    %6662 = vmatpush1.msra.mxu0 0.0
    %6663 = vmatprep.subr.mxu0 0.0
    %6664 = vmatpush1.msra.mxu0 0.0
    %6665 = vmatprep.subr.mxu0 0.0
    %6666 = vmatpush1.msra.mxu0 0.0
    %6667 = vmatprep.subr.mxu0 0.0
    %6668 = vmatpush1.msra.mxu0 0.0
    %6669 = vmatprep.subr.mxu0 0.0
    %6670 = vmatpush1.msra.mxu0 0.0
    %6671 = vmatprep.subr.mxu0 0.0
    %6672 = vmatpush1.msra.mxu0 0.0
    %6673 = vmatprep.subr.mxu0 0.0
    %6674 = vmatpush1.msra.mxu0 0.0
    %6675 = vmatprep.subr.mxu0 0.0
    %6676 = vmatpush1.msra.mxu0 0.0
    %6677 = vmatprep.subr.mxu0 0.0
    %6678 = vmatpush1.msra.mxu0 0.0
    %6679 = vmatprep.subr.mxu0 0.0
    %6680 = vmatpush1.msra.mxu0 0.0
    %6681 = vmatprep.subr.mxu0 0.0
    %6682 = vmatpush1.msra.mxu0 0.0
    %6683 = vmatprep.mubr.f32.mxu0 0.0
    %6684 = vmatmul.mubr.f32.gmra.mrb[0].mxu0 %v6613
    %v6685 = vpop.f32.mrb[0].mxu0
    %v6686 = vadd.f32 %v6609, %v6685
    %v6687 = vpop.f32.mrb[0].mxu0
    %6688 = vdwg.mxu0
    %vm6689 = vcmask 33792
    %6690 = vst.msk [vmem:[#allocation5] sm:$0x3] %vm6689, %v6686
    // Predicated region
    $region58: #{lenet_forward.1} parent=1 // pred_check
      _
    $region59: #{lenet_forward.1} parent=1 // pred_check_branch
      %6692 = sbr.rel (0) target = $region61
    $region60: #{lenet_forward.1} parent=1 // pred_region
      %s6694 = ssub.s32 32, 32
      %6695 = vsyncadd [#allocation6], %s6694
      %s6697 = sshll.u32 [#allocation5], 4
      %s6698 = int_to_ptr.vmem [resolvable:$true] %s6697
      %6700 = dma.vmem_to_hbm [thread:$0]  %s6698, 32, %s14, [#allocation6]
    $region61: #{lenet_forward.1} parent=1 // pred_fallthru
      _
    // Predicated region
    $region62: #{lenet_forward.1} parent=1 // pred_check
      _
    $region63: #{lenet_forward.1} parent=1 // pred_check_branch
      %6702 = sbr.rel (0) target = $region65
    $region64: #{lenet_forward.1} parent=1 // pred_region
      %6703 = dma.done [#allocation6], 32
    $region65: #{lenet_forward.1} parent=1 // pred_fallthru
      _
    %6704 = vsyncpa [#allocation6], 1

</llo_original>
